<compile_context>
chip_gen: v7x
topology: tpu7x:2x2x1
jax: 0.10.0
libtpu: 0.0.40
codegen_flags: <defaults>
</compile_context>

<pallas_src>
import itertools

import numpy as np
import jax
import jax.numpy as jnp
from jax.experimental import pallas as pl
from jax.experimental.pallas import tpu as pltpu


# --------------------------- erf-based GELU ---------------------------------
def _erf(x):
    # Abramowitz & Stegun 7.1.26 rational approximation of erf.  The divide is
    # evaluated with pl.reciprocal(approx=True) on the otherwise-idle EUP slot,
    # so the overall absolute error is ~1e-4 (vs ~1.5e-7 with an exact divide);
    # that is far inside the kernel's bf16-matmul error budget.
    p = np.float32(0.3275911)
    a1 = np.float32(0.254829592)
    a2 = np.float32(-0.284496736)
    a3 = np.float32(1.421413741)
    a4 = np.float32(-1.453152027)
    a5 = np.float32(1.061405429)
    ax = jnp.abs(x)
    t = pl.reciprocal(1.0 + p * ax, approx=True)
    poly = ((((a5 * t + a4) * t + a3) * t + a2) * t + a1) * t
    y = 1.0 - poly * jnp.exp(-ax * ax)
    return jnp.where(x < 0, -y, y)


def _gelu_erf(x):
    # Matches torch.nn.functional.gelu default (erf based); f32 math so the
    # same code lowers on v5e (no bf16 VPU/EUP).
    # TODO(synk): gate a bf16 GELU path on chip version for v6e/v7x (bf16 VPU/EUP).
    return 0.5 * x * (1.0 + _erf(x * np.float32(1.0 / np.sqrt(2.0))))


# ------------------------------ Pallas kernel -------------------------------
def make_conv_block_kernel(b_tile, L, Cin, Cout, K, dilation, pad,
                           has_projector, use_im2col, bf16_shift):
    M = b_tile * L
    shifts = [j * dilation - pad for j in range(K)]   # tap j reads a[t + shifts[j]]

    def kernel(*refs):
        if has_projector:
            (x_ref, w1_ref, b1_ref, w2_ref, b2_ref, wp_ref, bp_ref, out_ref) = refs
        else:
            (x_ref, w1_ref, b1_ref, w2_ref, b2_ref, out_ref) = refs

        # Per-tap validity masks (computed once, shared by both convs).
        # t = position of a row inside its own batch element; a tap is valid iff
        # t + s stays in [0, L).  This implements the conv's zero padding AND
        # blocks taps from crossing batch-element boundaries, which legalises
        # flattening b_tile batch elements into one (b_tile*L, C) matmul M dim
        # (and makes garbage rows of a ragged last block harmless).
        t = jax.lax.broadcasted_iota(jnp.int32, (M, 1), 0) % L
        masks = [jnp.logical_and(t + s >= 0, t + s < L) for s in shifts]

        def taps_of(a_f32):
            # Produce the K masked/shifted taps in bf16.  Shifts stay on the
            # XLU slot (pltpu.roll); bf16 halves roll/select/vreg traffic.
            a = a_f32.astype(jnp.bfloat16) if bf16_shift else a_f32
            taps = []
            for j, s in enumerate(shifts):
                sh = (-s) % M
                shifted = a if sh == 0 else pltpu.roll(a, sh, 0)
                if not bf16_shift:
                    shifted = shifted.astype(jnp.bfloat16)
                taps.append(jnp.where(masks[j], shifted, 0))
            return taps

        def dilated_conv(a_f32, w_ref, b_ref):
            taps = taps_of(a_f32)
            if use_im2col:
                # One MXU pass with a K*C-deep contraction (fills the MXU and,
                # on v7x, collapses K result pops into one MRB accumulate).
                op = taps[0] if K == 1 else jnp.concatenate(taps, axis=1)
                acc = jnp.dot(op, w_ref[...], preferred_element_type=jnp.float32)
            else:
                # Fallback structure: K shallow dots, acc initialised from the
                # first tap's dot (no zeros materialisation).
                acc = jnp.dot(taps[0], w_ref[0], preferred_element_type=jnp.float32)
                for j in range(1, K):
                    acc = acc + jnp.dot(taps[j], w_ref[j],
                                        preferred_element_type=jnp.float32)
            return acc + b_ref[...]

        x = x_ref[...].reshape(M, Cin).astype(jnp.float32)
        h = dilated_conv(_gelu_erf(x), w1_ref, b1_ref)
        h = dilated_conv(_gelu_erf(h), w2_ref, b2_ref)

        # Residual computed after both convs (shorter live range): 1x1 projector
        # (in_channels != out_channels or final=True) or identity re-read.
        if has_projector:
            xr = x_ref[...].reshape(M, Cin).astype(jnp.bfloat16)
            residual = (jnp.dot(xr, wp_ref[...],
                                preferred_element_type=jnp.float32)
                        + bp_ref[...])
        else:
            residual = x_ref[...].reshape(M, Cin).astype(jnp.float32)

        out_ref[...] = (h + residual).reshape(b_tile, L, Cout).astype(out_ref.dtype)

    return kernel


# ------------------------------ wrapper --------------------------------------
def _default_vmem_limit_bytes():
    # Per-generation scoped-VMEM budget: ~3/4 of physical VMEM (64 MiB on v7x,
    # 128 MiB on v5e/v6e).  Fall back to a conservative 32 MiB if unavailable.
    try:
        phys = int(pltpu.get_tpu_info().vmem_capacity_bytes)
        return max(32 << 20, min((phys * 3) // 4, 112 << 20))
    except Exception:
        return 32 << 20


def conv_block_pallas(x_nlc, w1, b1, w2, b2, kernel_size, dilation,
                      wp=None, bp=None, *, b_tile=None, vmem_limit_bytes=None):
    """ConvBlock forward on a channels-last (N, L, Cin) input.

    w1: (K, Cin, Cout), w2: (K, Cout, Cout), wp: (Cin, Cout) or None (identity
    residual, requires Cin == Cout), b1/b2/bp: (Cout,).  Returns (N, L, Cout)
    in x_nlc.dtype (pass bf16 activations to halve HBM traffic; GELU math and
    matmul accumulation stay f32 inside the kernel).
    """
    N, L, Cin = x_nlc.shape
    K = kernel_size
    Cout = w1.shape[-1]
    receptive_field = (K - 1) * dilation + 1
    pad = receptive_field // 2
    has_projector = wp is not None

    # TODO(synk): for long-L inputs add an L-tile grid axis; because BOTH convs
    # are fused, each L tile needs a halo of 2*pad input rows (or the pad edge
    # rows of h must be recomputed per tile) -- a single-pad halo would corrupt
    # tile edges.  That axis is also the natural one to shard across v7x's 2 TCs.
    # TODO(synk): if production channel widths are really 4-8 (not >=128),
    # restructure to a lane-dense layout (L on lanes, VPU channel contraction)
    # instead of an 8-lane-wide MXU matmul; channels-last at C=4-8 wastes
    # 16-32x vreg/VMEM/DMA and forces masked stores.
    if L % 8 != 0:
        raise ValueError("this kernel assumes L is a multiple of 8")
    if not has_projector and Cin != Cout:
        raise ValueError("identity residual requires Cin == Cout")

    if vmem_limit_bytes is None:
        vmem_limit_bytes = _default_vmem_limit_bytes()

    if b_tile is None:
        x_bytes = jnp.dtype(x_nlc.dtype).itemsize
        # Resident bytes per flattened activation row: double-buffered in/out
        # blocks + f32 temporaries (x, GELU, h, residual) + bf16 im2col operands.
        per_row = (2 * Cin * x_bytes + 2 * Cout * x_bytes
                   + 4 * (2 * Cin + 3 * Cout)
                   + 2 * 2 * K * max(Cin, Cout))
        rows = max(L, (vmem_limit_bytes // 2) // max(per_row, 1))
        b_tile = max(1, min(N, rows // L))
        if N >= 2:
            # Keep >= 2 "parallel" grid steps so both v7x TensorCores get work.
            b_tile = min(b_tile, (N + 1) // 2)
    grid = (pl.cdiv(N, b_tile),)
    # Ragged tails (N % b_tile != 0) are safe: the per-tap masks zero any row
    # whose tap would leave its own batch element, so garbage rows of a partial
    # block never leak into rows that are actually stored.

    b1_ = jnp.asarray(b1, jnp.float32).reshape(1, Cout)
    b2_ = jnp.asarray(b2, jnp.float32).reshape(1, Cout)

    def build_and_run(use_im2col, bf16_shift, single_buf_consts):
        def const_spec(shape):
            ndim = len(shape)
            idx = lambda n, _nd=ndim: (0,) * _nd
            if single_buf_consts:
                # Constant index_map -> single buffer (default double-buffering
                # would waste a second VMEM copy of every weight/bias).
                return pl.BlockSpec(shape, idx, pipeline_mode=pl.Buffered(1))
            return pl.BlockSpec(shape, idx)

        if use_im2col:
            # bf16 weights reshaped for the fused (M, K*C) x (K*C, Cout) matmul.
            w1_arg = w1.reshape(K * Cin, Cout).astype(jnp.bfloat16)
            w2_arg = w2.reshape(K * Cout, Cout).astype(jnp.bfloat16)
            w1_spec = const_spec((K * Cin, Cout))
            w2_spec = const_spec((K * Cout, Cout))
        else:
            w1_arg = w1.astype(jnp.bfloat16)
            w2_arg = w2.astype(jnp.bfloat16)
            w1_spec = const_spec((K, Cin, Cout))
            w2_spec = const_spec((K, Cout, Cout))

        in_specs = [
            pl.BlockSpec((b_tile, L, Cin), lambda n: (n, 0, 0)),
            w1_spec, const_spec((1, Cout)), w2_spec, const_spec((1, Cout)),
        ]
        args = [x_nlc, w1_arg, b1_, w2_arg, b2_]
        if has_projector:
            in_specs += [const_spec((Cin, Cout)), const_spec((1, Cout))]
            args += [wp.astype(jnp.bfloat16),
                     jnp.asarray(bp, jnp.float32).reshape(1, Cout)]

        kernel = make_conv_block_kernel(b_tile, L, Cin, Cout, K, dilation, pad,
                                        has_projector, use_im2col, bf16_shift)
        out = pl.pallas_call(
            kernel,
            out_shape=jax.ShapeDtypeStruct((N, L, Cout), x_nlc.dtype),
            grid_spec=pltpu.PrefetchScalarGridSpec(
                num_scalar_prefetch=0,
                grid=grid,
                in_specs=in_specs,
                out_specs=pl.BlockSpec((b_tile, L, Cout), lambda n: (n, 0, 0)),
            ),
            compiler_params=pltpu.CompilerParams(
                dimension_semantics=("parallel",),
                vmem_limit_bytes=vmem_limit_bytes,
            ),
        )(*args)
        return jax.block_until_ready(out)

    # Probe the fast paths from most to least aggressive; fall back to the
    # previous known-good structure if a Mosaic lowering is unavailable.
    last_err = None
    for use_im2col, bf16_shift, single_buf in itertools.product((True, False),
                                                                repeat=3):
        try:
            return build_and_run(use_im2col, bf16_shift, single_buf)
        except Exception as e:          # lowering/compile failure -> next config
            last_err = e
    raise last_err


# ----------------------------- pure-JAX reference ----------------------------
def _same_pad_conv_ref(x_ncl, w_oik, b, dilation):
    K = w_oik.shape[-1]
    rf = (K - 1) * dilation + 1
    pad = rf // 2
    out = jax.lax.conv_general_dilated(
        x_ncl, w_oik, window_strides=(1,), padding=[(pad, pad)],
        rhs_dilation=(dilation,), dimension_numbers=('NCH', 'OIH', 'NCH'))
    out = out + b[None, :, None]
    if rf % 2 == 0:
        out = out[:, :, :-1]
    return out


def conv_block_ref(x_ncl, w1_t, b1, w2_t, b2, dilation, wp_t=None, bp=None):
    if wp_t is None:
        residual = x_ncl
    else:
        residual = jax.lax.conv_general_dilated(
            x_ncl, wp_t, (1,), [(0, 0)],
            dimension_numbers=('NCH', 'OIH', 'NCH')) + bp[None, :, None]
    h = jax.nn.gelu(x_ncl, approximate=False)
    h = _same_pad_conv_ref(h, w1_t, b1, dilation)
    h = jax.nn.gelu(h, approximate=False)
    h = _same_pad_conv_ref(h, w2_t, b2, dilation)
    return h + residual


# ------------------------------------ main -----------------------------------
def _run_case(name, key, N, Cin, Cout, L, K, dilation, final=False):
    has_proj = (Cin != Cout) or final
    ks = jax.random.split(key, 7)
    # PyTorch-layout parameters (deterministic synthetic init).
    x_ncl = jax.random.normal(ks[0], (N, Cin, L), jnp.float32)           # NCL input
    w1_t = jax.random.normal(ks[1], (Cout, Cin, K), jnp.float32) * 0.2   # conv1.weight
    b1 = jax.random.normal(ks[2], (Cout,), jnp.float32) * 0.1            # conv1.bias
    w2_t = jax.random.normal(ks[3], (Cout, Cout, K), jnp.float32) * 0.2  # conv2.weight
    b2 = jax.random.normal(ks[4], (Cout,), jnp.float32) * 0.1            # conv2.bias
    if has_proj:
        wp_t = jax.random.normal(ks[5], (Cout, Cin, 1), jnp.float32) * 0.2
        bp = jax.random.normal(ks[6], (Cout,), jnp.float32) * 0.1
    else:
        wp_t, bp = None, None

    # Kernel layout: channels-last activations, (K, Cin, Cout) weight taps.
    x_nlc = jnp.transpose(x_ncl, (0, 2, 1))
    w1_k = jnp.transpose(w1_t, (2, 1, 0))
    w2_k = jnp.transpose(w2_t, (2, 1, 0))
    wp_k = None if wp_t is None else jnp.transpose(wp_t[:, :, 0], (1, 0))

    out_nlc = conv_block_pallas(x_nlc, w1_k, b1, w2_k, b2, K, dilation,
                                wp=wp_k, bp=bp)
    out_ncl = jnp.transpose(out_nlc, (0, 2, 1))   # back to PyTorch NCL layout
    jax.block_until_ready(out_ncl)

    ref_ncl = conv_block_ref(x_ncl, w1_t, b1, w2_t, b2, dilation, wp_t, bp)
    # bf16 MXU operands + approx-reciprocal erf -> loosened tolerance (still far
    # tighter than any shift/mask/GELU bug would produce).
    np.testing.assert_allclose(np.asarray(out_ncl), np.asarray(ref_ncl),
                               atol=5e-2, rtol=5e-2, err_msg=name)


if __name__ == "__main__":
    root = jax.random.PRNGKey(0)
    # Odd receptive field, 1x1 projector residual (in_channels != out_channels).
    _run_case("proj_odd_rf", jax.random.fold_in(root, 0),
              N=2, Cin=4, Cout=8, L=16, K=3, dilation=2)
    # Even receptive field (SamePadConv trims last sample) + identity residual.
    _run_case("identity_even_rf", jax.random.fold_in(root, 1),
              N=2, Cin=8, Cout=8, L=16, K=2, dilation=1)
    # Multi-batch tile (b_tile > 1) + multi-step parallel grid.
    _run_case("multi_batch_tile", jax.random.fold_in(root, 2),
              N=4, Cin=8, Cout=8, L=32, K=3, dilation=1)
    print("KERNEL_OK")
</pallas_src>

<mosaic_0001>
module attributes {stable_mosaic.version = 11 : i64} {
  func.func @kernel(%arg0: i32, %arg1: memref<1x16x4xf32, #tpu.memory_space<vmem>>, %arg2: memref<12x8xbf16, #tpu.memory_space<vmem>>, %arg3: memref<1x8xf32, #tpu.memory_space<vmem>>, %arg4: memref<24x8xbf16, #tpu.memory_space<vmem>>, %arg5: memref<1x8xf32, #tpu.memory_space<vmem>>, %arg6: memref<4x8xbf16, #tpu.memory_space<vmem>>, %arg7: memref<1x8xf32, #tpu.memory_space<vmem>>, %arg8: memref<1x16x8xf32, #tpu.memory_space<vmem>>) attributes {dimension_semantics = [#tpu.dimension_semantics<parallel>], iteration_bounds = array<i64: 2>, scalar_prefetch = 0 : i64, scratch_operands = 0 : i64, tpu.core_type = #tpu.core_type<tc>, window_params = [{transform_indices = @transform_0, window_bounds = array<i64: 1, 16, 4>}, {pipeline_mode = #tpu.pipeline_mode<synchronous>, transform_indices = @transform_1, window_bounds = array<i64: 12, 8>}, {pipeline_mode = #tpu.pipeline_mode<synchronous>, transform_indices = @transform_2, window_bounds = array<i64: 1, 8>}, {pipeline_mode = #tpu.pipeline_mode<synchronous>, transform_indices = @transform_3, window_bounds = array<i64: 24, 8>}, {pipeline_mode = #tpu.pipeline_mode<synchronous>, transform_indices = @transform_4, window_bounds = array<i64: 1, 8>}, {pipeline_mode = #tpu.pipeline_mode<synchronous>, transform_indices = @transform_5, window_bounds = array<i64: 4, 8>}, {pipeline_mode = #tpu.pipeline_mode<synchronous>, transform_indices = @transform_6, window_bounds = array<i64: 1, 8>}, {transform_indices = @transform_7, window_bounds = array<i64: 1, 16, 8>}]} {
    %0 = tpu.iota {dimensions = array<i32: 0>} : vector<16x1xi32>
    %c16_i32 = arith.constant 16 : i32
    %c0_i32 = arith.constant 0 : i32
    %1 = arith.cmpi eq, %c16_i32, %c0_i32 : i32
    %c1_i32 = arith.constant 1 : i32
    %2 = arith.select %1, %c1_i32, %c16_i32 : i32
    %3 = vector.broadcast %2 : i32 to vector<16x1xi32>
    %4 = arith.remsi %0, %3 : vector<16x1xi32>
    %c0_i32_0 = arith.constant 0 : i32
    %5 = vector.broadcast %c0_i32_0 : i32 to vector<16x1xi32>
    %6 = arith.cmpi ne, %4, %5 : vector<16x1xi32>
    %c0_i32_1 = arith.constant 0 : i32
    %7 = vector.broadcast %c0_i32_1 : i32 to vector<16x1xi32>
    %8 = arith.cmpi slt, %4, %7 : vector<16x1xi32>
    %c0_i32_2 = arith.constant 0 : i32
    %9 = arith.cmpi slt, %2, %c0_i32_2 : i32
    %10 = vector.broadcast %9 : i1 to vector<16x1xi1>
    %11 = vector.broadcast %10 : vector<16x1xi1> to vector<16x1xi1>
    %12 = arith.xori %8, %11 : vector<16x1xi1>
    %13 = arith.andi %12, %6 : vector<16x1xi1>
    %14 = vector.broadcast %2 : i32 to vector<16x1xi32>
    %15 = arith.addi %4, %14 : vector<16x1xi32>
    %16 = arith.select %13, %15, %4 : vector<16x1xi1>, vector<16x1xi32>
    %c-2_i32 = arith.constant -2 : i32
    %17 = vector.broadcast %c-2_i32 : i32 to vector<16x1xi32>
    %18 = arith.addi %16, %17 : vector<16x1xi32>
    %c0_i32_3 = arith.constant 0 : i32
    %19 = vector.broadcast %c0_i32_3 : i32 to vector<16x1xi32>
    %20 = arith.cmpi sge, %18, %19 : vector<16x1xi32>
    %c-2_i32_4 = arith.constant -2 : i32
    %21 = vector.broadcast %c-2_i32_4 : i32 to vector<16x1xi32>
    %22 = arith.addi %16, %21 : vector<16x1xi32>
    %c16_i32_5 = arith.constant 16 : i32
    %23 = vector.broadcast %c16_i32_5 : i32 to vector<16x1xi32>
    %24 = arith.cmpi slt, %22, %23 : vector<16x1xi32>
    %25 = arith.andi %20, %24 : vector<16x1xi1>
    %c0_i32_6 = arith.constant 0 : i32
    %26 = vector.broadcast %c0_i32_6 : i32 to vector<16x1xi32>
    %27 = arith.addi %16, %26 : vector<16x1xi32>
    %c0_i32_7 = arith.constant 0 : i32
    %28 = vector.broadcast %c0_i32_7 : i32 to vector<16x1xi32>
    %29 = arith.cmpi sge, %27, %28 : vector<16x1xi32>
    %c0_i32_8 = arith.constant 0 : i32
    %30 = vector.broadcast %c0_i32_8 : i32 to vector<16x1xi32>
    %31 = arith.addi %16, %30 : vector<16x1xi32>
    %c16_i32_9 = arith.constant 16 : i32
    %32 = vector.broadcast %c16_i32_9 : i32 to vector<16x1xi32>
    %33 = arith.cmpi slt, %31, %32 : vector<16x1xi32>
    %34 = arith.andi %29, %33 : vector<16x1xi1>
    %c2_i32 = arith.constant 2 : i32
    %35 = vector.broadcast %c2_i32 : i32 to vector<16x1xi32>
    %36 = arith.addi %16, %35 : vector<16x1xi32>
    %c0_i32_10 = arith.constant 0 : i32
    %37 = vector.broadcast %c0_i32_10 : i32 to vector<16x1xi32>
    %38 = arith.cmpi sge, %36, %37 : vector<16x1xi32>
    %c2_i32_11 = arith.constant 2 : i32
    %39 = vector.broadcast %c2_i32_11 : i32 to vector<16x1xi32>
    %40 = arith.addi %16, %39 : vector<16x1xi32>
    %c16_i32_12 = arith.constant 16 : i32
    %41 = vector.broadcast %c16_i32_12 : i32 to vector<16x1xi32>
    %42 = arith.cmpi slt, %40, %41 : vector<16x1xi32>
    %43 = arith.andi %38, %42 : vector<16x1xi1>
    %c0 = arith.constant 0 : index
    %c0_13 = arith.constant 0 : index
    %c0_14 = arith.constant 0 : index
    %44 = vector.load %arg1[%c0, %c0_13, %c0_14] : memref<1x16x4xf32, #tpu.memory_space<vmem>>, vector<1x16x4xf32>
    %45 = vector.shape_cast %44 : vector<1x16x4xf32> to vector<16x4xf32>
    %cst = arith.constant 5.000000e-01 : f32
    %46 = vector.broadcast %cst : f32 to vector<16x4xf32>
    %47 = arith.mulf %46, %45 : vector<16x4xf32>
    %cst_15 = arith.constant 0.707106769 : f32
    %48 = vector.broadcast %cst_15 : f32 to vector<16x4xf32>
    %49 = arith.mulf %45, %48 : vector<16x4xf32>
    %50 = math.absf %49 : vector<16x4xf32>
    %cst_16 = arith.constant 0.327591091 : f32
    %51 = vector.broadcast %cst_16 : f32 to vector<16x4xf32>
    %52 = arith.mulf %51, %50 : vector<16x4xf32>
    %cst_17 = arith.constant 1.000000e+00 : f32
    %53 = vector.broadcast %cst_17 : f32 to vector<16x4xf32>
    %54 = arith.addf %53, %52 : vector<16x4xf32>
    %55 = tpu.reciprocal %54 {approx = true} : vector<16x4xf32> -> vector<16x4xf32>
    %cst_18 = arith.constant 1.06140542 : f32
    %56 = vector.broadcast %cst_18 : f32 to vector<16x4xf32>
    %57 = arith.mulf %56, %55 : vector<16x4xf32>
    %cst_19 = arith.constant -1.45315206 : f32
    %58 = vector.broadcast %cst_19 : f32 to vector<16x4xf32>
    %59 = arith.addf %57, %58 : vector<16x4xf32>
    %60 = arith.mulf %59, %55 : vector<16x4xf32>
    %cst_20 = arith.constant 1.42141378 : f32
    %61 = vector.broadcast %cst_20 : f32 to vector<16x4xf32>
    %62 = arith.addf %60, %61 : vector<16x4xf32>
    %63 = arith.mulf %62, %55 : vector<16x4xf32>
    %cst_21 = arith.constant -0.284496725 : f32
    %64 = vector.broadcast %cst_21 : f32 to vector<16x4xf32>
    %65 = arith.addf %63, %64 : vector<16x4xf32>
    %66 = arith.mulf %65, %55 : vector<16x4xf32>
    %cst_22 = arith.constant 0.254829586 : f32
    %67 = vector.broadcast %cst_22 : f32 to vector<16x4xf32>
    %68 = arith.addf %66, %67 : vector<16x4xf32>
    %69 = arith.mulf %68, %55 : vector<16x4xf32>
    %cst_23 = arith.constant 0.000000e+00 : f32
    %70 = vector.broadcast %cst_23 : f32 to vector<16x4xf32>
    %71 = arith.subf %70, %50 : vector<16x4xf32>
    %72 = arith.mulf %71, %50 : vector<16x4xf32>
    %73 = math.exp %72 : vector<16x4xf32>
    %74 = arith.mulf %69, %73 : vector<16x4xf32>
    %cst_24 = arith.constant 1.000000e+00 : f32
    %75 = vector.broadcast %cst_24 : f32 to vector<16x4xf32>
    %76 = arith.subf %75, %74 : vector<16x4xf32>
    %cst_25 = arith.constant 0.000000e+00 : f32
    %77 = vector.broadcast %cst_25 : f32 to vector<16x4xf32>
    %78 = arith.cmpf olt, %49, %77 : vector<16x4xf32>
    %cst_26 = arith.constant 0.000000e+00 : f32
    %79 = vector.broadcast %cst_26 : f32 to vector<16x4xf32>
    %80 = arith.subf %79, %76 : vector<16x4xf32>
    %81 = arith.select %78, %80, %76 : vector<16x4xi1>, vector<16x4xf32>
    %cst_27 = arith.constant 1.000000e+00 : f32
    %82 = vector.broadcast %cst_27 : f32 to vector<16x4xf32>
    %83 = arith.addf %82, %81 : vector<16x4xf32>
    %84 = arith.mulf %47, %83 : vector<16x4xf32>
    %85 = arith.truncf %84 : vector<16x4xf32> to vector<16x4xbf16>
    %c2_i32_28 = arith.constant 2 : i32
    %86 = tpu.dynamic_rotate %85 by %c2_i32_28 dim 0 : vector<16x4xbf16>, i32 -> vector<16x4xbf16>
    %c0_i32_29 = arith.constant 0 : i32
    %87 = arith.sitofp %c0_i32_29 : i32 to bf16
    %88 = vector.shape_cast %25 : vector<16x1xi1> to vector<16x1xi1>
    %89 = vector.broadcast %88 : vector<16x1xi1> to vector<16x4xi1>
    %90 = vector.broadcast %87 : bf16 to vector<16x4xbf16>
    %91 = arith.select %89, %86, %90 : vector<16x4xi1>, vector<16x4xbf16>
    %c0_i32_30 = arith.constant 0 : i32
    %92 = arith.sitofp %c0_i32_30 : i32 to bf16
    %93 = vector.shape_cast %34 : vector<16x1xi1> to vector<16x1xi1>
    %94 = vector.broadcast %93 : vector<16x1xi1> to vector<16x4xi1>
    %95 = vector.broadcast %92 : bf16 to vector<16x4xbf16>
    %96 = arith.select %94, %85, %95 : vector<16x4xi1>, vector<16x4xbf16>
    %c14_i32 = arith.constant 14 : i32
    %97 = tpu.dynamic_rotate %85 by %c14_i32 dim 0 : vector<16x4xbf16>, i32 -> vector<16x4xbf16>
    %c0_i32_31 = arith.constant 0 : i32
    %98 = arith.sitofp %c0_i32_31 : i32 to bf16
    %99 = vector.shape_cast %43 : vector<16x1xi1> to vector<16x1xi1>
    %100 = vector.broadcast %99 : vector<16x1xi1> to vector<16x4xi1>
    %101 = vector.broadcast %98 : bf16 to vector<16x4xbf16>
    %102 = arith.select %100, %97, %101 : vector<16x4xi1>, vector<16x4xbf16>
    %103 = tpu.concatenate %91, %96, %102 in 1 : vector<16x4xbf16>, vector<16x4xbf16>, vector<16x4xbf16> -> vector<16x12xbf16>
    %c0_32 = arith.constant 0 : index
    %c0_33 = arith.constant 0 : index
    %104 = vector.load %arg2[%c0_32, %c0_33] : memref<12x8xbf16, #tpu.memory_space<vmem>>, vector<12x8xbf16>
    %cst_34 = arith.constant dense<0.000000e+00> : vector<16x8xf32>
    %105 = tpu.matmul %103, %104, %cst_34 {dimension_numbers = #tpu.dot_dimension_numbers<[1], [0], [0], [1], [0, 0, 1, 1], [], []>} : vector<16x12xbf16>, vector<12x8xbf16>, vector<16x8xf32> -> vector<16x8xf32>
    %c0_35 = arith.constant 0 : index
    %c0_36 = arith.constant 0 : index
    %106 = vector.load %arg3[%c0_35, %c0_36] : memref<1x8xf32, #tpu.memory_space<vmem>>, vector<1x8xf32>
    %107 = vector.broadcast %106 : vector<1x8xf32> to vector<16x8xf32>
    %108 = arith.addf %105, %107 : vector<16x8xf32>
    %cst_37 = arith.constant 5.000000e-01 : f32
    %109 = vector.broadcast %cst_37 : f32 to vector<16x8xf32>
    %110 = arith.mulf %109, %108 : vector<16x8xf32>
    %cst_38 = arith.constant 0.707106769 : f32
    %111 = vector.broadcast %cst_38 : f32 to vector<16x8xf32>
    %112 = arith.mulf %108, %111 : vector<16x8xf32>
    %113 = math.absf %112 : vector<16x8xf32>
    %cst_39 = arith.constant 0.327591091 : f32
    %114 = vector.broadcast %cst_39 : f32 to vector<16x8xf32>
    %115 = arith.mulf %114, %113 : vector<16x8xf32>
    %cst_40 = arith.constant 1.000000e+00 : f32
    %116 = vector.broadcast %cst_40 : f32 to vector<16x8xf32>
    %117 = arith.addf %116, %115 : vector<16x8xf32>
    %118 = tpu.reciprocal %117 {approx = true} : vector<16x8xf32> -> vector<16x8xf32>
    %cst_41 = arith.constant 1.06140542 : f32
    %119 = vector.broadcast %cst_41 : f32 to vector<16x8xf32>
    %120 = arith.mulf %119, %118 : vector<16x8xf32>
    %cst_42 = arith.constant -1.45315206 : f32
    %121 = vector.broadcast %cst_42 : f32 to vector<16x8xf32>
    %122 = arith.addf %120, %121 : vector<16x8xf32>
    %123 = arith.mulf %122, %118 : vector<16x8xf32>
    %cst_43 = arith.constant 1.42141378 : f32
    %124 = vector.broadcast %cst_43 : f32 to vector<16x8xf32>
    %125 = arith.addf %123, %124 : vector<16x8xf32>
    %126 = arith.mulf %125, %118 : vector<16x8xf32>
    %cst_44 = arith.constant -0.284496725 : f32
    %127 = vector.broadcast %cst_44 : f32 to vector<16x8xf32>
    %128 = arith.addf %126, %127 : vector<16x8xf32>
    %129 = arith.mulf %128, %118 : vector<16x8xf32>
    %cst_45 = arith.constant 0.254829586 : f32
    %130 = vector.broadcast %cst_45 : f32 to vector<16x8xf32>
    %131 = arith.addf %129, %130 : vector<16x8xf32>
    %132 = arith.mulf %131, %118 : vector<16x8xf32>
    %cst_46 = arith.constant 0.000000e+00 : f32
    %133 = vector.broadcast %cst_46 : f32 to vector<16x8xf32>
    %134 = arith.subf %133, %113 : vector<16x8xf32>
    %135 = arith.mulf %134, %113 : vector<16x8xf32>
    %136 = math.exp %135 : vector<16x8xf32>
    %137 = arith.mulf %132, %136 : vector<16x8xf32>
    %cst_47 = arith.constant 1.000000e+00 : f32
    %138 = vector.broadcast %cst_47 : f32 to vector<16x8xf32>
    %139 = arith.subf %138, %137 : vector<16x8xf32>
    %cst_48 = arith.constant 0.000000e+00 : f32
    %140 = vector.broadcast %cst_48 : f32 to vector<16x8xf32>
    %141 = arith.cmpf olt, %112, %140 : vector<16x8xf32>
    %cst_49 = arith.constant 0.000000e+00 : f32
    %142 = vector.broadcast %cst_49 : f32 to vector<16x8xf32>
    %143 = arith.subf %142, %139 : vector<16x8xf32>
    %144 = arith.select %141, %143, %139 : vector<16x8xi1>, vector<16x8xf32>
    %cst_50 = arith.constant 1.000000e+00 : f32
    %145 = vector.broadcast %cst_50 : f32 to vector<16x8xf32>
    %146 = arith.addf %145, %144 : vector<16x8xf32>
    %147 = arith.mulf %110, %146 : vector<16x8xf32>
    %148 = arith.truncf %147 : vector<16x8xf32> to vector<16x8xbf16>
    %c2_i32_51 = arith.constant 2 : i32
    %149 = tpu.dynamic_rotate %148 by %c2_i32_51 dim 0 : vector<16x8xbf16>, i32 -> vector<16x8xbf16>
    %c0_i32_52 = arith.constant 0 : i32
    %150 = arith.sitofp %c0_i32_52 : i32 to bf16
    %151 = vector.shape_cast %25 : vector<16x1xi1> to vector<16x1xi1>
    %152 = vector.broadcast %151 : vector<16x1xi1> to vector<16x8xi1>
    %153 = vector.broadcast %150 : bf16 to vector<16x8xbf16>
    %154 = arith.select %152, %149, %153 : vector<16x8xi1>, vector<16x8xbf16>
    %c0_i32_53 = arith.constant 0 : i32
    %155 = arith.sitofp %c0_i32_53 : i32 to bf16
    %156 = vector.shape_cast %34 : vector<16x1xi1> to vector<16x1xi1>
    %157 = vector.broadcast %156 : vector<16x1xi1> to vector<16x8xi1>
    %158 = vector.broadcast %155 : bf16 to vector<16x8xbf16>
    %159 = arith.select %157, %148, %158 : vector<16x8xi1>, vector<16x8xbf16>
    %c14_i32_54 = arith.constant 14 : i32
    %160 = tpu.dynamic_rotate %148 by %c14_i32_54 dim 0 : vector<16x8xbf16>, i32 -> vector<16x8xbf16>
    %c0_i32_55 = arith.constant 0 : i32
    %161 = arith.sitofp %c0_i32_55 : i32 to bf16
    %162 = vector.shape_cast %43 : vector<16x1xi1> to vector<16x1xi1>
    %163 = vector.broadcast %162 : vector<16x1xi1> to vector<16x8xi1>
    %164 = vector.broadcast %161 : bf16 to vector<16x8xbf16>
    %165 = arith.select %163, %160, %164 : vector<16x8xi1>, vector<16x8xbf16>
    %166 = tpu.concatenate %154, %159, %165 in 1 : vector<16x8xbf16>, vector<16x8xbf16>, vector<16x8xbf16> -> vector<16x24xbf16>
    %c0_56 = arith.constant 0 : index
    %c0_57 = arith.constant 0 : index
    %167 = vector.load %arg4[%c0_56, %c0_57] : memref<24x8xbf16, #tpu.memory_space<vmem>>, vector<24x8xbf16>
    %cst_58 = arith.constant dense<0.000000e+00> : vector<16x8xf32>
    %168 = tpu.matmul %166, %167, %cst_58 {dimension_numbers = #tpu.dot_dimension_numbers<[1], [0], [0], [1], [0, 0, 1, 1], [], []>} : vector<16x24xbf16>, vector<24x8xbf16>, vector<16x8xf32> -> vector<16x8xf32>
    %c0_59 = arith.constant 0 : index
    %c0_60 = arith.constant 0 : index
    %169 = vector.load %arg5[%c0_59, %c0_60] : memref<1x8xf32, #tpu.memory_space<vmem>>, vector<1x8xf32>
    %170 = vector.broadcast %169 : vector<1x8xf32> to vector<16x8xf32>
    %171 = arith.addf %168, %170 : vector<16x8xf32>
    %c0_61 = arith.constant 0 : index
    %c0_62 = arith.constant 0 : index
    %c0_63 = arith.constant 0 : index
    %172 = vector.load %arg1[%c0_61, %c0_62, %c0_63] : memref<1x16x4xf32, #tpu.memory_space<vmem>>, vector<1x16x4xf32>
    %173 = vector.shape_cast %172 : vector<1x16x4xf32> to vector<16x4xf32>
    %174 = arith.truncf %173 : vector<16x4xf32> to vector<16x4xbf16>
    %c0_64 = arith.constant 0 : index
    %c0_65 = arith.constant 0 : index
    %175 = vector.load %arg6[%c0_64, %c0_65] : memref<4x8xbf16, #tpu.memory_space<vmem>>, vector<4x8xbf16>
    %cst_66 = arith.constant dense<0.000000e+00> : vector<16x8xf32>
    %176 = tpu.matmul %174, %175, %cst_66 {dimension_numbers = #tpu.dot_dimension_numbers<[1], [0], [0], [1], [0, 0, 1, 1], [], []>} : vector<16x4xbf16>, vector<4x8xbf16>, vector<16x8xf32> -> vector<16x8xf32>
    %c0_67 = arith.constant 0 : index
    %c0_68 = arith.constant 0 : index
    %177 = vector.load %arg7[%c0_67, %c0_68] : memref<1x8xf32, #tpu.memory_space<vmem>>, vector<1x8xf32>
    %178 = vector.broadcast %177 : vector<1x8xf32> to vector<16x8xf32>
    %179 = arith.addf %176, %178 : vector<16x8xf32>
    %180 = arith.addf %171, %179 : vector<16x8xf32>
    %181 = vector.shape_cast %180 : vector<16x8xf32> to vector<1x16x8xf32>
    %c0_69 = arith.constant 0 : index
    %c0_70 = arith.constant 0 : index
    %c0_71 = arith.constant 0 : index
    %182 = vector.load %arg8[%c0_69, %c0_70, %c0_71] : memref<1x16x8xf32, #tpu.memory_space<vmem>>, vector<1x16x8xf32>
    tpu.vector_store %arg8[%c0_69, %c0_70, %c0_71], %181 {strides = array<i32>} : memref<1x16x8xf32, #tpu.memory_space<vmem>>, vector<1x16x8xf32>,
    return
  }
  func.func @transform_0(%arg0: i32) -> (i32, i32, i32) {
    %c0_i32 = arith.constant 0 : i32
    %c0_i32_0 = arith.constant 0 : i32
    %c0_i32_1 = arith.constant 0 : i32
    return %arg0, %c0_i32, %c0_i32_0 : i32, i32, i32
  }
  func.func @transform_1(%arg0: i32) -> (i32, i32) {
    %c0_i32 = arith.constant 0 : i32
    %c0_i32_0 = arith.constant 0 : i32
    %c0_i32_1 = arith.constant 0 : i32
    return %c0_i32, %c0_i32_0 : i32, i32
  }
  func.func @transform_2(%arg0: i32) -> (i32, i32) {
    %c0_i32 = arith.constant 0 : i32
    %c0_i32_0 = arith.constant 0 : i32
    %c0_i32_1 = arith.constant 0 : i32
    return %c0_i32, %c0_i32_0 : i32, i32
  }
  func.func @transform_3(%arg0: i32) -> (i32, i32) {
    %c0_i32 = arith.constant 0 : i32
    %c0_i32_0 = arith.constant 0 : i32
    %c0_i32_1 = arith.constant 0 : i32
    return %c0_i32, %c0_i32_0 : i32, i32
  }
  func.func @transform_4(%arg0: i32) -> (i32, i32) {
    %c0_i32 = arith.constant 0 : i32
    %c0_i32_0 = arith.constant 0 : i32
    %c0_i32_1 = arith.constant 0 : i32
    return %c0_i32, %c0_i32_0 : i32, i32
  }
  func.func @transform_5(%arg0: i32) -> (i32, i32) {
    %c0_i32 = arith.constant 0 : i32
    %c0_i32_0 = arith.constant 0 : i32
    %c0_i32_1 = arith.constant 0 : i32
    return %c0_i32, %c0_i32_0 : i32, i32
  }
  func.func @transform_6(%arg0: i32) -> (i32, i32) {
    %c0_i32 = arith.constant 0 : i32
    %c0_i32_0 = arith.constant 0 : i32
    %c0_i32_1 = arith.constant 0 : i32
    return %c0_i32, %c0_i32_0 : i32, i32
  }
  func.func @transform_7(%arg0: i32) -> (i32, i32, i32) {
    %c0_i32 = arith.constant 0 : i32
    %c0_i32_0 = arith.constant 0 : i32
    %c0_i32_1 = arith.constant 0 : i32
    return %arg0, %c0_i32, %c0_i32_0 : i32, i32, i32
  }
}

module attributes {stable_mosaic.version = 11 : i64} {
  func.func @kernel(%arg0: i32, %arg1: memref<1x16x4xf32, #tpu.memory_space<vmem>>, %arg2: memref<12x8xbf16, #tpu.memory_space<vmem>>, %arg3: memref<1x8xf32, #tpu.memory_space<vmem>>, %arg4: memref<24x8xbf16, #tpu.memory_space<vmem>>, %arg5: memref<1x8xf32, #tpu.memory_space<vmem>>, %arg6: memref<4x8xbf16, #tpu.memory_space<vmem>>, %arg7: memref<1x8xf32, #tpu.memory_space<vmem>>, %arg8: memref<1x16x8xf32, #tpu.memory_space<vmem>>) attributes {dimension_semantics = [#tpu.dimension_semantics<parallel>], iteration_bounds = array<i64: 2>, scalar_prefetch = 0 : i64, scratch_operands = 0 : i64, tpu.core_type = #tpu.core_type<tc>, window_params = [{transform_indices = @transform_0, window_bounds = array<i64: 1, 16, 4>}, {pipeline_mode = #tpu.pipeline_mode<synchronous>, transform_indices = @transform_1, window_bounds = array<i64: 12, 8>}, {pipeline_mode = #tpu.pipeline_mode<synchronous>, transform_indices = @transform_2, window_bounds = array<i64: 1, 8>}, {pipeline_mode = #tpu.pipeline_mode<synchronous>, transform_indices = @transform_3, window_bounds = array<i64: 24, 8>}, {pipeline_mode = #tpu.pipeline_mode<synchronous>, transform_indices = @transform_4, window_bounds = array<i64: 1, 8>}, {pipeline_mode = #tpu.pipeline_mode<synchronous>, transform_indices = @transform_5, window_bounds = array<i64: 4, 8>}, {pipeline_mode = #tpu.pipeline_mode<synchronous>, transform_indices = @transform_6, window_bounds = array<i64: 1, 8>}, {transform_indices = @transform_7, window_bounds = array<i64: 1, 16, 8>}]} {
    %0 = tpu.iota {dimensions = array<i32: 0>} : vector<16x1xi32>
    %c16_i32 = arith.constant 16 : i32
    %c0_i32 = arith.constant 0 : i32
    %1 = arith.cmpi eq, %c16_i32, %c0_i32 : i32
    %c1_i32 = arith.constant 1 : i32
    %2 = arith.select %1, %c1_i32, %c16_i32 : i32
    %3 = vector.broadcast %2 : i32 to vector<16x1xi32>
    %4 = arith.remsi %0, %3 : vector<16x1xi32>
    %c0_i32_0 = arith.constant 0 : i32
    %5 = vector.broadcast %c0_i32_0 : i32 to vector<16x1xi32>
    %6 = arith.cmpi ne, %4, %5 : vector<16x1xi32>
    %c0_i32_1 = arith.constant 0 : i32
    %7 = vector.broadcast %c0_i32_1 : i32 to vector<16x1xi32>
    %8 = arith.cmpi slt, %4, %7 : vector<16x1xi32>
    %c0_i32_2 = arith.constant 0 : i32
    %9 = arith.cmpi slt, %2, %c0_i32_2 : i32
    %10 = vector.broadcast %9 : i1 to vector<16x1xi1>
    %11 = vector.broadcast %10 : vector<16x1xi1> to vector<16x1xi1>
    %12 = arith.xori %8, %11 : vector<16x1xi1>
    %13 = arith.andi %12, %6 : vector<16x1xi1>
    %14 = vector.broadcast %2 : i32 to vector<16x1xi32>
    %15 = arith.addi %4, %14 : vector<16x1xi32>
    %16 = arith.select %13, %15, %4 : vector<16x1xi1>, vector<16x1xi32>
    %c-2_i32 = arith.constant -2 : i32
    %17 = vector.broadcast %c-2_i32 : i32 to vector<16x1xi32>
    %18 = arith.addi %16, %17 : vector<16x1xi32>
    %c0_i32_3 = arith.constant 0 : i32
    %19 = vector.broadcast %c0_i32_3 : i32 to vector<16x1xi32>
    %20 = arith.cmpi sge, %18, %19 : vector<16x1xi32>
    %c-2_i32_4 = arith.constant -2 : i32
    %21 = vector.broadcast %c-2_i32_4 : i32 to vector<16x1xi32>
    %22 = arith.addi %16, %21 : vector<16x1xi32>
    %c16_i32_5 = arith.constant 16 : i32
    %23 = vector.broadcast %c16_i32_5 : i32 to vector<16x1xi32>
    %24 = arith.cmpi slt, %22, %23 : vector<16x1xi32>
    %25 = arith.andi %20, %24 : vector<16x1xi1>
    %c0_i32_6 = arith.constant 0 : i32
    %26 = vector.broadcast %c0_i32_6 : i32 to vector<16x1xi32>
    %27 = arith.addi %16, %26 : vector<16x1xi32>
    %c0_i32_7 = arith.constant 0 : i32
    %28 = vector.broadcast %c0_i32_7 : i32 to vector<16x1xi32>
    %29 = arith.cmpi sge, %27, %28 : vector<16x1xi32>
    %c0_i32_8 = arith.constant 0 : i32
    %30 = vector.broadcast %c0_i32_8 : i32 to vector<16x1xi32>
    %31 = arith.addi %16, %30 : vector<16x1xi32>
    %c16_i32_9 = arith.constant 16 : i32
    %32 = vector.broadcast %c16_i32_9 : i32 to vector<16x1xi32>
    %33 = arith.cmpi slt, %31, %32 : vector<16x1xi32>
    %34 = arith.andi %29, %33 : vector<16x1xi1>
    %c2_i32 = arith.constant 2 : i32
    %35 = vector.broadcast %c2_i32 : i32 to vector<16x1xi32>
    %36 = arith.addi %16, %35 : vector<16x1xi32>
    %c0_i32_10 = arith.constant 0 : i32
    %37 = vector.broadcast %c0_i32_10 : i32 to vector<16x1xi32>
    %38 = arith.cmpi sge, %36, %37 : vector<16x1xi32>
    %c2_i32_11 = arith.constant 2 : i32
    %39 = vector.broadcast %c2_i32_11 : i32 to vector<16x1xi32>
    %40 = arith.addi %16, %39 : vector<16x1xi32>
    %c16_i32_12 = arith.constant 16 : i32
    %41 = vector.broadcast %c16_i32_12 : i32 to vector<16x1xi32>
    %42 = arith.cmpi slt, %40, %41 : vector<16x1xi32>
    %43 = arith.andi %38, %42 : vector<16x1xi1>
    %c0 = arith.constant 0 : index
    %c0_13 = arith.constant 0 : index
    %c0_14 = arith.constant 0 : index
    %44 = vector.load %arg1[%c0, %c0_13, %c0_14] : memref<1x16x4xf32, #tpu.memory_space<vmem>>, vector<1x16x4xf32>
    %45 = vector.shape_cast %44 : vector<1x16x4xf32> to vector<16x4xf32>
    %cst = arith.constant 5.000000e-01 : f32
    %46 = vector.broadcast %cst : f32 to vector<16x4xf32>
    %47 = arith.mulf %46, %45 : vector<16x4xf32>
    %cst_15 = arith.constant 0.707106769 : f32
    %48 = vector.broadcast %cst_15 : f32 to vector<16x4xf32>
    %49 = arith.mulf %45, %48 : vector<16x4xf32>
    %50 = math.absf %49 : vector<16x4xf32>
    %cst_16 = arith.constant 0.327591091 : f32
    %51 = vector.broadcast %cst_16 : f32 to vector<16x4xf32>
    %52 = arith.mulf %51, %50 : vector<16x4xf32>
    %cst_17 = arith.constant 1.000000e+00 : f32
    %53 = vector.broadcast %cst_17 : f32 to vector<16x4xf32>
    %54 = arith.addf %53, %52 : vector<16x4xf32>
    %55 = tpu.reciprocal %54 {approx = true} : vector<16x4xf32> -> vector<16x4xf32>
    %cst_18 = arith.constant 1.06140542 : f32
    %56 = vector.broadcast %cst_18 : f32 to vector<16x4xf32>
    %57 = arith.mulf %56, %55 : vector<16x4xf32>
    %cst_19 = arith.constant -1.45315206 : f32
    %58 = vector.broadcast %cst_19 : f32 to vector<16x4xf32>
    %59 = arith.addf %57, %58 : vector<16x4xf32>
    %60 = arith.mulf %59, %55 : vector<16x4xf32>
    %cst_20 = arith.constant 1.42141378 : f32
    %61 = vector.broadcast %cst_20 : f32 to vector<16x4xf32>
    %62 = arith.addf %60, %61 : vector<16x4xf32>
    %63 = arith.mulf %62, %55 : vector<16x4xf32>
    %cst_21 = arith.constant -0.284496725 : f32
    %64 = vector.broadcast %cst_21 : f32 to vector<16x4xf32>
    %65 = arith.addf %63, %64 : vector<16x4xf32>
    %66 = arith.mulf %65, %55 : vector<16x4xf32>
    %cst_22 = arith.constant 0.254829586 : f32
    %67 = vector.broadcast %cst_22 : f32 to vector<16x4xf32>
    %68 = arith.addf %66, %67 : vector<16x4xf32>
    %69 = arith.mulf %68, %55 : vector<16x4xf32>
    %cst_23 = arith.constant 0.000000e+00 : f32
    %70 = vector.broadcast %cst_23 : f32 to vector<16x4xf32>
    %71 = arith.subf %70, %50 : vector<16x4xf32>
    %72 = arith.mulf %71, %50 : vector<16x4xf32>
    %73 = math.exp %72 : vector<16x4xf32>
    %74 = arith.mulf %69, %73 : vector<16x4xf32>
    %cst_24 = arith.constant 1.000000e+00 : f32
    %75 = vector.broadcast %cst_24 : f32 to vector<16x4xf32>
    %76 = arith.subf %75, %74 : vector<16x4xf32>
    %cst_25 = arith.constant 0.000000e+00 : f32
    %77 = vector.broadcast %cst_25 : f32 to vector<16x4xf32>
    %78 = arith.cmpf olt, %49, %77 : vector<16x4xf32>
    %cst_26 = arith.constant 0.000000e+00 : f32
    %79 = vector.broadcast %cst_26 : f32 to vector<16x4xf32>
    %80 = arith.subf %79, %76 : vector<16x4xf32>
    %81 = arith.select %78, %80, %76 : vector<16x4xi1>, vector<16x4xf32>
    %cst_27 = arith.constant 1.000000e+00 : f32
    %82 = vector.broadcast %cst_27 : f32 to vector<16x4xf32>
    %83 = arith.addf %82, %81 : vector<16x4xf32>
    %84 = arith.mulf %47, %83 : vector<16x4xf32>
    %85 = arith.truncf %84 : vector<16x4xf32> to vector<16x4xbf16>
    %c2_i32_28 = arith.constant 2 : i32
    %86 = tpu.dynamic_rotate %85 by %c2_i32_28 dim 0 : vector<16x4xbf16>, i32 -> vector<16x4xbf16>
    %c0_i32_29 = arith.constant 0 : i32
    %87 = arith.sitofp %c0_i32_29 : i32 to bf16
    %88 = vector.shape_cast %25 : vector<16x1xi1> to vector<16x1xi1>
    %89 = vector.broadcast %88 : vector<16x1xi1> to vector<16x4xi1>
    %90 = vector.broadcast %87 : bf16 to vector<16x4xbf16>
    %91 = arith.select %89, %86, %90 : vector<16x4xi1>, vector<16x4xbf16>
    %c0_i32_30 = arith.constant 0 : i32
    %92 = arith.sitofp %c0_i32_30 : i32 to bf16
    %93 = vector.shape_cast %34 : vector<16x1xi1> to vector<16x1xi1>
    %94 = vector.broadcast %93 : vector<16x1xi1> to vector<16x4xi1>
    %95 = vector.broadcast %92 : bf16 to vector<16x4xbf16>
    %96 = arith.select %94, %85, %95 : vector<16x4xi1>, vector<16x4xbf16>
    %c14_i32 = arith.constant 14 : i32
    %97 = tpu.dynamic_rotate %85 by %c14_i32 dim 0 : vector<16x4xbf16>, i32 -> vector<16x4xbf16>
    %c0_i32_31 = arith.constant 0 : i32
    %98 = arith.sitofp %c0_i32_31 : i32 to bf16
    %99 = vector.shape_cast %43 : vector<16x1xi1> to vector<16x1xi1>
    %100 = vector.broadcast %99 : vector<16x1xi1> to vector<16x4xi1>
    %101 = vector.broadcast %98 : bf16 to vector<16x4xbf16>
    %102 = arith.select %100, %97, %101 : vector<16x4xi1>, vector<16x4xbf16>
    %103 = tpu.concatenate %91, %96, %102 in 1 : vector<16x4xbf16>, vector<16x4xbf16>, vector<16x4xbf16> -> vector<16x12xbf16>
    %c0_32 = arith.constant 0 : index
    %c0_33 = arith.constant 0 : index
    %104 = vector.load %arg2[%c0_32, %c0_33] : memref<12x8xbf16, #tpu.memory_space<vmem>>, vector<12x8xbf16>
    %cst_34 = arith.constant dense<0.000000e+00> : vector<16x8xf32>
    %105 = tpu.matmul %103, %104, %cst_34 {dimension_numbers = #tpu.dot_dimension_numbers<[1], [0], [0], [1], [0, 0, 1, 1], [], []>} : vector<16x12xbf16>, vector<12x8xbf16>, vector<16x8xf32> -> vector<16x8xf32>
    %c0_35 = arith.constant 0 : index
    %c0_36 = arith.constant 0 : index
    %106 = vector.load %arg3[%c0_35, %c0_36] : memref<1x8xf32, #tpu.memory_space<vmem>>, vector<1x8xf32>
    %107 = vector.broadcast %106 : vector<1x8xf32> to vector<16x8xf32>
    %108 = arith.addf %105, %107 : vector<16x8xf32>
    %cst_37 = arith.constant 5.000000e-01 : f32
    %109 = vector.broadcast %cst_37 : f32 to vector<16x8xf32>
    %110 = arith.mulf %109, %108 : vector<16x8xf32>
    %cst_38 = arith.constant 0.707106769 : f32
    %111 = vector.broadcast %cst_38 : f32 to vector<16x8xf32>
    %112 = arith.mulf %108, %111 : vector<16x8xf32>
    %113 = math.absf %112 : vector<16x8xf32>
    %cst_39 = arith.constant 0.327591091 : f32
    %114 = vector.broadcast %cst_39 : f32 to vector<16x8xf32>
    %115 = arith.mulf %114, %113 : vector<16x8xf32>
    %cst_40 = arith.constant 1.000000e+00 : f32
    %116 = vector.broadcast %cst_40 : f32 to vector<16x8xf32>
    %117 = arith.addf %116, %115 : vector<16x8xf32>
    %118 = tpu.reciprocal %117 {approx = true} : vector<16x8xf32> -> vector<16x8xf32>
    %cst_41 = arith.constant 1.06140542 : f32
    %119 = vector.broadcast %cst_41 : f32 to vector<16x8xf32>
    %120 = arith.mulf %119, %118 : vector<16x8xf32>
    %cst_42 = arith.constant -1.45315206 : f32
    %121 = vector.broadcast %cst_42 : f32 to vector<16x8xf32>
    %122 = arith.addf %120, %121 : vector<16x8xf32>
    %123 = arith.mulf %122, %118 : vector<16x8xf32>
    %cst_43 = arith.constant 1.42141378 : f32
    %124 = vector.broadcast %cst_43 : f32 to vector<16x8xf32>
    %125 = arith.addf %123, %124 : vector<16x8xf32>
    %126 = arith.mulf %125, %118 : vector<16x8xf32>
    %cst_44 = arith.constant -0.284496725 : f32
    %127 = vector.broadcast %cst_44 : f32 to vector<16x8xf32>
    %128 = arith.addf %126, %127 : vector<16x8xf32>
    %129 = arith.mulf %128, %118 : vector<16x8xf32>
    %cst_45 = arith.constant 0.254829586 : f32
    %130 = vector.broadcast %cst_45 : f32 to vector<16x8xf32>
    %131 = arith.addf %129, %130 : vector<16x8xf32>
    %132 = arith.mulf %131, %118 : vector<16x8xf32>
    %cst_46 = arith.constant 0.000000e+00 : f32
    %133 = vector.broadcast %cst_46 : f32 to vector<16x8xf32>
    %134 = arith.subf %133, %113 : vector<16x8xf32>
    %135 = arith.mulf %134, %113 : vector<16x8xf32>
    %136 = math.exp %135 : vector<16x8xf32>
    %137 = arith.mulf %132, %136 : vector<16x8xf32>
    %cst_47 = arith.constant 1.000000e+00 : f32
    %138 = vector.broadcast %cst_47 : f32 to vector<16x8xf32>
    %139 = arith.subf %138, %137 : vector<16x8xf32>
    %cst_48 = arith.constant 0.000000e+00 : f32
    %140 = vector.broadcast %cst_48 : f32 to vector<16x8xf32>
    %141 = arith.cmpf olt, %112, %140 : vector<16x8xf32>
    %cst_49 = arith.constant 0.000000e+00 : f32
    %142 = vector.broadcast %cst_49 : f32 to vector<16x8xf32>
    %143 = arith.subf %142, %139 : vector<16x8xf32>
    %144 = arith.select %141, %143, %139 : vector<16x8xi1>, vector<16x8xf32>
    %cst_50 = arith.constant 1.000000e+00 : f32
    %145 = vector.broadcast %cst_50 : f32 to vector<16x8xf32>
    %146 = arith.addf %145, %144 : vector<16x8xf32>
    %147 = arith.mulf %110, %146 : vector<16x8xf32>
    %148 = arith.truncf %147 : vector<16x8xf32> to vector<16x8xbf16>
    %c2_i32_51 = arith.constant 2 : i32
    %149 = tpu.dynamic_rotate %148 by %c2_i32_51 dim 0 : vector<16x8xbf16>, i32 -> vector<16x8xbf16>
    %c0_i32_52 = arith.constant 0 : i32
    %150 = arith.sitofp %c0_i32_52 : i32 to bf16
    %151 = vector.shape_cast %25 : vector<16x1xi1> to vector<16x1xi1>
    %152 = vector.broadcast %151 : vector<16x1xi1> to vector<16x8xi1>
    %153 = vector.broadcast %150 : bf16 to vector<16x8xbf16>
    %154 = arith.select %152, %149, %153 : vector<16x8xi1>, vector<16x8xbf16>
    %c0_i32_53 = arith.constant 0 : i32
    %155 = arith.sitofp %c0_i32_53 : i32 to bf16
    %156 = vector.shape_cast %34 : vector<16x1xi1> to vector<16x1xi1>
    %157 = vector.broadcast %156 : vector<16x1xi1> to vector<16x8xi1>
    %158 = vector.broadcast %155 : bf16 to vector<16x8xbf16>
    %159 = arith.select %157, %148, %158 : vector<16x8xi1>, vector<16x8xbf16>
    %c14_i32_54 = arith.constant 14 : i32
    %160 = tpu.dynamic_rotate %148 by %c14_i32_54 dim 0 : vector<16x8xbf16>, i32 -> vector<16x8xbf16>
    %c0_i32_55 = arith.constant 0 : i32
    %161 = arith.sitofp %c0_i32_55 : i32 to bf16
    %162 = vector.shape_cast %43 : vector<16x1xi1> to vector<16x1xi1>
    %163 = vector.broadcast %162 : vector<16x1xi1> to vector<16x8xi1>
    %164 = vector.broadcast %161 : bf16 to vector<16x8xbf16>
    %165 = arith.select %163, %160, %164 : vector<16x8xi1>, vector<16x8xbf16>
    %166 = tpu.concatenate %154, %159, %165 in 1 : vector<16x8xbf16>, vector<16x8xbf16>, vector<16x8xbf16> -> vector<16x24xbf16>
    %c0_56 = arith.constant 0 : index
    %c0_57 = arith.constant 0 : index
    %167 = vector.load %arg4[%c0_56, %c0_57] : memref<24x8xbf16, #tpu.memory_space<vmem>>, vector<24x8xbf16>
    %cst_58 = arith.constant dense<0.000000e+00> : vector<16x8xf32>
    %168 = tpu.matmul %166, %167, %cst_58 {dimension_numbers = #tpu.dot_dimension_numbers<[1], [0], [0], [1], [0, 0, 1, 1], [], []>} : vector<16x24xbf16>, vector<24x8xbf16>, vector<16x8xf32> -> vector<16x8xf32>
    %c0_59 = arith.constant 0 : index
    %c0_60 = arith.constant 0 : index
    %169 = vector.load %arg5[%c0_59, %c0_60] : memref<1x8xf32, #tpu.memory_space<vmem>>, vector<1x8xf32>
    %170 = vector.broadcast %169 : vector<1x8xf32> to vector<16x8xf32>
    %171 = arith.addf %168, %170 : vector<16x8xf32>
    %c0_61 = arith.constant 0 : index
    %c0_62 = arith.constant 0 : index
    %c0_63 = arith.constant 0 : index
    %172 = vector.load %arg1[%c0_61, %c0_62, %c0_63] : memref<1x16x4xf32, #tpu.memory_space<vmem>>, vector<1x16x4xf32>
    %173 = vector.shape_cast %172 : vector<1x16x4xf32> to vector<16x4xf32>
    %174 = arith.truncf %173 : vector<16x4xf32> to vector<16x4xbf16>
    %c0_64 = arith.constant 0 : index
    %c0_65 = arith.constant 0 : index
    %175 = vector.load %arg6[%c0_64, %c0_65] : memref<4x8xbf16, #tpu.memory_space<vmem>>, vector<4x8xbf16>
    %cst_66 = arith.constant dense<0.000000e+00> : vector<16x8xf32>
    %176 = tpu.matmul %174, %175, %cst_66 {dimension_numbers = #tpu.dot_dimension_numbers<[1], [0], [0], [1], [0, 0, 1, 1], [], []>} : vector<16x4xbf16>, vector<4x8xbf16>, vector<16x8xf32> -> vector<16x8xf32>
    %c0_67 = arith.constant 0 : index
    %c0_68 = arith.constant 0 : index
    %177 = vector.load %arg7[%c0_67, %c0_68] : memref<1x8xf32, #tpu.memory_space<vmem>>, vector<1x8xf32>
    %178 = vector.broadcast %177 : vector<1x8xf32> to vector<16x8xf32>
    %179 = arith.addf %176, %178 : vector<16x8xf32>
    %180 = arith.addf %171, %179 : vector<16x8xf32>
    %181 = vector.shape_cast %180 : vector<16x8xf32> to vector<1x16x8xf32>
    %c0_69 = arith.constant 0 : index
    %c0_70 = arith.constant 0 : index
    %c0_71 = arith.constant 0 : index
    %182 = vector.load %arg8[%c0_69, %c0_70, %c0_71] : memref<1x16x8xf32, #tpu.memory_space<vmem>>, vector<1x16x8xf32>
    tpu.vector_store %arg8[%c0_69, %c0_70, %c0_71], %181 {strides = array<i32>} : memref<1x16x8xf32, #tpu.memory_space<vmem>>, vector<1x16x8xf32>,
    return
  }
  func.func @transform_0(%arg0: i32) -> (i32, i32, i32) {
    %c0_i32 = arith.constant 0 : i32
    %c0_i32_0 = arith.constant 0 : i32
    %c0_i32_1 = arith.constant 0 : i32
    return %arg0, %c0_i32, %c0_i32_0 : i32, i32, i32
  }
  func.func @transform_1(%arg0: i32) -> (i32, i32) {
    %c0_i32 = arith.constant 0 : i32
    %c0_i32_0 = arith.constant 0 : i32
    %c0_i32_1 = arith.constant 0 : i32
    return %c0_i32, %c0_i32_0 : i32, i32
  }
  func.func @transform_2(%arg0: i32) -> (i32, i32) {
    %c0_i32 = arith.constant 0 : i32
    %c0_i32_0 = arith.constant 0 : i32
    %c0_i32_1 = arith.constant 0 : i32
    return %c0_i32, %c0_i32_0 : i32, i32
  }
  func.func @transform_3(%arg0: i32) -> (i32, i32) {
    %c0_i32 = arith.constant 0 : i32
    %c0_i32_0 = arith.constant 0 : i32
    %c0_i32_1 = arith.constant 0 : i32
    return %c0_i32, %c0_i32_0 : i32, i32
  }
  func.func @transform_4(%arg0: i32) -> (i32, i32) {
    %c0_i32 = arith.constant 0 : i32
    %c0_i32_0 = arith.constant 0 : i32
    %c0_i32_1 = arith.constant 0 : i32
    return %c0_i32, %c0_i32_0 : i32, i32
  }
  func.func @transform_5(%arg0: i32) -> (i32, i32) {
    %c0_i32 = arith.constant 0 : i32
    %c0_i32_0 = arith.constant 0 : i32
    %c0_i32_1 = arith.constant 0 : i32
    return %c0_i32, %c0_i32_0 : i32, i32
  }
  func.func @transform_6(%arg0: i32) -> (i32, i32) {
    %c0_i32 = arith.constant 0 : i32
    %c0_i32_0 = arith.constant 0 : i32
    %c0_i32_1 = arith.constant 0 : i32
    return %c0_i32, %c0_i32_0 : i32, i32
  }
  func.func @transform_7(%arg0: i32) -> (i32, i32, i32) {
    %c0_i32 = arith.constant 0 : i32
    %c0_i32_0 = arith.constant 0 : i32
    %c0_i32_1 = arith.constant 0 : i32
    return %arg0, %c0_i32, %c0_i32_0 : i32, i32, i32
  }
}

module attributes {stable_mosaic.version = 11 : i64} {
  func.func @kernel(%arg0: i32, %arg1: memref<1x16x4xf32, #tpu.memory_space<vmem>>, %arg2: memref<12x8xbf16, #tpu.memory_space<vmem>>, %arg3: memref<1x8xf32, #tpu.memory_space<vmem>>, %arg4: memref<24x8xbf16, #tpu.memory_space<vmem>>, %arg5: memref<1x8xf32, #tpu.memory_space<vmem>>, %arg6: memref<4x8xbf16, #tpu.memory_space<vmem>>, %arg7: memref<1x8xf32, #tpu.memory_space<vmem>>, %arg8: memref<1x16x8xf32, #tpu.memory_space<vmem>>) attributes {dimension_semantics = [#tpu.dimension_semantics<parallel>], iteration_bounds = array<i64: 2>, scalar_prefetch = 0 : i64, scratch_operands = 0 : i64, tpu.core_type = #tpu.core_type<tc>, window_params = [{transform_indices = @transform_0, window_bounds = array<i64: 1, 16, 4>}, {pipeline_mode = #tpu.pipeline_mode<synchronous>, transform_indices = @transform_1, window_bounds = array<i64: 12, 8>}, {pipeline_mode = #tpu.pipeline_mode<synchronous>, transform_indices = @transform_2, window_bounds = array<i64: 1, 8>}, {pipeline_mode = #tpu.pipeline_mode<synchronous>, transform_indices = @transform_3, window_bounds = array<i64: 24, 8>}, {pipeline_mode = #tpu.pipeline_mode<synchronous>, transform_indices = @transform_4, window_bounds = array<i64: 1, 8>}, {pipeline_mode = #tpu.pipeline_mode<synchronous>, transform_indices = @transform_5, window_bounds = array<i64: 4, 8>}, {pipeline_mode = #tpu.pipeline_mode<synchronous>, transform_indices = @transform_6, window_bounds = array<i64: 1, 8>}, {transform_indices = @transform_7, window_bounds = array<i64: 1, 16, 8>}]} {
    %0 = tpu.iota {dimensions = array<i32: 0>} : vector<16x1xi32>
    %c16_i32 = arith.constant 16 : i32
    %c0_i32 = arith.constant 0 : i32
    %1 = arith.cmpi eq, %c16_i32, %c0_i32 : i32
    %c1_i32 = arith.constant 1 : i32
    %2 = arith.select %1, %c1_i32, %c16_i32 : i32
    %3 = vector.broadcast %2 : i32 to vector<16x1xi32>
    %4 = arith.remsi %0, %3 : vector<16x1xi32>
    %c0_i32_0 = arith.constant 0 : i32
    %5 = vector.broadcast %c0_i32_0 : i32 to vector<16x1xi32>
    %6 = arith.cmpi ne, %4, %5 : vector<16x1xi32>
    %c0_i32_1 = arith.constant 0 : i32
    %7 = vector.broadcast %c0_i32_1 : i32 to vector<16x1xi32>
    %8 = arith.cmpi slt, %4, %7 : vector<16x1xi32>
    %c0_i32_2 = arith.constant 0 : i32
    %9 = arith.cmpi slt, %2, %c0_i32_2 : i32
    %10 = vector.broadcast %9 : i1 to vector<16x1xi1>
    %11 = vector.broadcast %10 : vector<16x1xi1> to vector<16x1xi1>
    %12 = arith.xori %8, %11 : vector<16x1xi1>
    %13 = arith.andi %12, %6 : vector<16x1xi1>
    %14 = vector.broadcast %2 : i32 to vector<16x1xi32>
    %15 = arith.addi %4, %14 : vector<16x1xi32>
    %16 = arith.select %13, %15, %4 : vector<16x1xi1>, vector<16x1xi32>
    %c-2_i32 = arith.constant -2 : i32
    %17 = vector.broadcast %c-2_i32 : i32 to vector<16x1xi32>
    %18 = arith.addi %16, %17 : vector<16x1xi32>
    %c0_i32_3 = arith.constant 0 : i32
    %19 = vector.broadcast %c0_i32_3 : i32 to vector<16x1xi32>
    %20 = arith.cmpi sge, %18, %19 : vector<16x1xi32>
    %c-2_i32_4 = arith.constant -2 : i32
    %21 = vector.broadcast %c-2_i32_4 : i32 to vector<16x1xi32>
    %22 = arith.addi %16, %21 : vector<16x1xi32>
    %c16_i32_5 = arith.constant 16 : i32
    %23 = vector.broadcast %c16_i32_5 : i32 to vector<16x1xi32>
    %24 = arith.cmpi slt, %22, %23 : vector<16x1xi32>
    %25 = arith.andi %20, %24 : vector<16x1xi1>
    %c0_i32_6 = arith.constant 0 : i32
    %26 = vector.broadcast %c0_i32_6 : i32 to vector<16x1xi32>
    %27 = arith.addi %16, %26 : vector<16x1xi32>
    %c0_i32_7 = arith.constant 0 : i32
    %28 = vector.broadcast %c0_i32_7 : i32 to vector<16x1xi32>
    %29 = arith.cmpi sge, %27, %28 : vector<16x1xi32>
    %c0_i32_8 = arith.constant 0 : i32
    %30 = vector.broadcast %c0_i32_8 : i32 to vector<16x1xi32>
    %31 = arith.addi %16, %30 : vector<16x1xi32>
    %c16_i32_9 = arith.constant 16 : i32
    %32 = vector.broadcast %c16_i32_9 : i32 to vector<16x1xi32>
    %33 = arith.cmpi slt, %31, %32 : vector<16x1xi32>
    %34 = arith.andi %29, %33 : vector<16x1xi1>
    %c2_i32 = arith.constant 2 : i32
    %35 = vector.broadcast %c2_i32 : i32 to vector<16x1xi32>
    %36 = arith.addi %16, %35 : vector<16x1xi32>
    %c0_i32_10 = arith.constant 0 : i32
    %37 = vector.broadcast %c0_i32_10 : i32 to vector<16x1xi32>
    %38 = arith.cmpi sge, %36, %37 : vector<16x1xi32>
    %c2_i32_11 = arith.constant 2 : i32
    %39 = vector.broadcast %c2_i32_11 : i32 to vector<16x1xi32>
    %40 = arith.addi %16, %39 : vector<16x1xi32>
    %c16_i32_12 = arith.constant 16 : i32
    %41 = vector.broadcast %c16_i32_12 : i32 to vector<16x1xi32>
    %42 = arith.cmpi slt, %40, %41 : vector<16x1xi32>
    %43 = arith.andi %38, %42 : vector<16x1xi1>
    %c0 = arith.constant 0 : index
    %c0_13 = arith.constant 0 : index
    %c0_14 = arith.constant 0 : index
    %44 = vector.load %arg1[%c0, %c0_13, %c0_14] : memref<1x16x4xf32, #tpu.memory_space<vmem>>, vector<1x16x4xf32>
    %45 = vector.shape_cast %44 : vector<1x16x4xf32> to vector<16x4xf32>
    %cst = arith.constant 5.000000e-01 : f32
    %46 = vector.broadcast %cst : f32 to vector<16x4xf32>
    %47 = arith.mulf %46, %45 : vector<16x4xf32>
    %cst_15 = arith.constant 0.707106769 : f32
    %48 = vector.broadcast %cst_15 : f32 to vector<16x4xf32>
    %49 = arith.mulf %45, %48 : vector<16x4xf32>
    %50 = math.absf %49 : vector<16x4xf32>
    %cst_16 = arith.constant 0.327591091 : f32
    %51 = vector.broadcast %cst_16 : f32 to vector<16x4xf32>
    %52 = arith.mulf %51, %50 : vector<16x4xf32>
    %cst_17 = arith.constant 1.000000e+00 : f32
    %53 = vector.broadcast %cst_17 : f32 to vector<16x4xf32>
    %54 = arith.addf %53, %52 : vector<16x4xf32>
    %55 = tpu.reciprocal %54 {approx = true} : vector<16x4xf32> -> vector<16x4xf32>
    %cst_18 = arith.constant 1.06140542 : f32
    %56 = vector.broadcast %cst_18 : f32 to vector<16x4xf32>
    %57 = arith.mulf %56, %55 : vector<16x4xf32>
    %cst_19 = arith.constant -1.45315206 : f32
    %58 = vector.broadcast %cst_19 : f32 to vector<16x4xf32>
    %59 = arith.addf %57, %58 : vector<16x4xf32>
    %60 = arith.mulf %59, %55 : vector<16x4xf32>
    %cst_20 = arith.constant 1.42141378 : f32
    %61 = vector.broadcast %cst_20 : f32 to vector<16x4xf32>
    %62 = arith.addf %60, %61 : vector<16x4xf32>
    %63 = arith.mulf %62, %55 : vector<16x4xf32>
    %cst_21 = arith.constant -0.284496725 : f32
    %64 = vector.broadcast %cst_21 : f32 to vector<16x4xf32>
    %65 = arith.addf %63, %64 : vector<16x4xf32>
    %66 = arith.mulf %65, %55 : vector<16x4xf32>
    %cst_22 = arith.constant 0.254829586 : f32
    %67 = vector.broadcast %cst_22 : f32 to vector<16x4xf32>
    %68 = arith.addf %66, %67 : vector<16x4xf32>
    %69 = arith.mulf %68, %55 : vector<16x4xf32>
    %cst_23 = arith.constant 0.000000e+00 : f32
    %70 = vector.broadcast %cst_23 : f32 to vector<16x4xf32>
    %71 = arith.subf %70, %50 : vector<16x4xf32>
    %72 = arith.mulf %71, %50 : vector<16x4xf32>
    %73 = math.exp %72 : vector<16x4xf32>
    %74 = arith.mulf %69, %73 : vector<16x4xf32>
    %cst_24 = arith.constant 1.000000e+00 : f32
    %75 = vector.broadcast %cst_24 : f32 to vector<16x4xf32>
    %76 = arith.subf %75, %74 : vector<16x4xf32>
    %cst_25 = arith.constant 0.000000e+00 : f32
    %77 = vector.broadcast %cst_25 : f32 to vector<16x4xf32>
    %78 = arith.cmpf olt, %49, %77 : vector<16x4xf32>
    %cst_26 = arith.constant 0.000000e+00 : f32
    %79 = vector.broadcast %cst_26 : f32 to vector<16x4xf32>
    %80 = arith.subf %79, %76 : vector<16x4xf32>
    %81 = arith.select %78, %80, %76 : vector<16x4xi1>, vector<16x4xf32>
    %cst_27 = arith.constant 1.000000e+00 : f32
    %82 = vector.broadcast %cst_27 : f32 to vector<16x4xf32>
    %83 = arith.addf %82, %81 : vector<16x4xf32>
    %84 = arith.mulf %47, %83 : vector<16x4xf32>
    %c2_i32_28 = arith.constant 2 : i32
    %85 = tpu.dynamic_rotate %84 by %c2_i32_28 dim 0 : vector<16x4xf32>, i32 -> vector<16x4xf32>
    %86 = arith.truncf %85 : vector<16x4xf32> to vector<16x4xbf16>
    %c0_i32_29 = arith.constant 0 : i32
    %87 = arith.sitofp %c0_i32_29 : i32 to bf16
    %88 = vector.shape_cast %25 : vector<16x1xi1> to vector<16x1xi1>
    %89 = vector.broadcast %88 : vector<16x1xi1> to vector<16x4xi1>
    %90 = vector.broadcast %87 : bf16 to vector<16x4xbf16>
    %91 = arith.select %89, %86, %90 : vector<16x4xi1>, vector<16x4xbf16>
    %92 = arith.truncf %84 : vector<16x4xf32> to vector<16x4xbf16>
    %c0_i32_30 = arith.constant 0 : i32
    %93 = arith.sitofp %c0_i32_30 : i32 to bf16
    %94 = vector.shape_cast %34 : vector<16x1xi1> to vector<16x1xi1>
    %95 = vector.broadcast %94 : vector<16x1xi1> to vector<16x4xi1>
    %96 = vector.broadcast %93 : bf16 to vector<16x4xbf16>
    %97 = arith.select %95, %92, %96 : vector<16x4xi1>, vector<16x4xbf16>
    %c14_i32 = arith.constant 14 : i32
    %98 = tpu.dynamic_rotate %84 by %c14_i32 dim 0 : vector<16x4xf32>, i32 -> vector<16x4xf32>
    %99 = arith.truncf %98 : vector<16x4xf32> to vector<16x4xbf16>
    %c0_i32_31 = arith.constant 0 : i32
    %100 = arith.sitofp %c0_i32_31 : i32 to bf16
    %101 = vector.shape_cast %43 : vector<16x1xi1> to vector<16x1xi1>
    %102 = vector.broadcast %101 : vector<16x1xi1> to vector<16x4xi1>
    %103 = vector.broadcast %100 : bf16 to vector<16x4xbf16>
    %104 = arith.select %102, %99, %103 : vector<16x4xi1>, vector<16x4xbf16>
    %105 = tpu.concatenate %91, %97, %104 in 1 : vector<16x4xbf16>, vector<16x4xbf16>, vector<16x4xbf16> -> vector<16x12xbf16>
    %c0_32 = arith.constant 0 : index
    %c0_33 = arith.constant 0 : index
    %106 = vector.load %arg2[%c0_32, %c0_33] : memref<12x8xbf16, #tpu.memory_space<vmem>>, vector<12x8xbf16>
    %cst_34 = arith.constant dense<0.000000e+00> : vector<16x8xf32>
    %107 = tpu.matmul %105, %106, %cst_34 {dimension_numbers = #tpu.dot_dimension_numbers<[1], [0], [0], [1], [0, 0, 1, 1], [], []>} : vector<16x12xbf16>, vector<12x8xbf16>, vector<16x8xf32> -> vector<16x8xf32>
    %c0_35 = arith.constant 0 : index
    %c0_36 = arith.constant 0 : index
    %108 = vector.load %arg3[%c0_35, %c0_36] : memref<1x8xf32, #tpu.memory_space<vmem>>, vector<1x8xf32>
    %109 = vector.broadcast %108 : vector<1x8xf32> to vector<16x8xf32>
    %110 = arith.addf %107, %109 : vector<16x8xf32>
    %cst_37 = arith.constant 5.000000e-01 : f32
    %111 = vector.broadcast %cst_37 : f32 to vector<16x8xf32>
    %112 = arith.mulf %111, %110 : vector<16x8xf32>
    %cst_38 = arith.constant 0.707106769 : f32
    %113 = vector.broadcast %cst_38 : f32 to vector<16x8xf32>
    %114 = arith.mulf %110, %113 : vector<16x8xf32>
    %115 = math.absf %114 : vector<16x8xf32>
    %cst_39 = arith.constant 0.327591091 : f32
    %116 = vector.broadcast %cst_39 : f32 to vector<16x8xf32>
    %117 = arith.mulf %116, %115 : vector<16x8xf32>
    %cst_40 = arith.constant 1.000000e+00 : f32
    %118 = vector.broadcast %cst_40 : f32 to vector<16x8xf32>
    %119 = arith.addf %118, %117 : vector<16x8xf32>
    %120 = tpu.reciprocal %119 {approx = true} : vector<16x8xf32> -> vector<16x8xf32>
    %cst_41 = arith.constant 1.06140542 : f32
    %121 = vector.broadcast %cst_41 : f32 to vector<16x8xf32>
    %122 = arith.mulf %121, %120 : vector<16x8xf32>
    %cst_42 = arith.constant -1.45315206 : f32
    %123 = vector.broadcast %cst_42 : f32 to vector<16x8xf32>
    %124 = arith.addf %122, %123 : vector<16x8xf32>
    %125 = arith.mulf %124, %120 : vector<16x8xf32>
    %cst_43 = arith.constant 1.42141378 : f32
    %126 = vector.broadcast %cst_43 : f32 to vector<16x8xf32>
    %127 = arith.addf %125, %126 : vector<16x8xf32>
    %128 = arith.mulf %127, %120 : vector<16x8xf32>
    %cst_44 = arith.constant -0.284496725 : f32
    %129 = vector.broadcast %cst_44 : f32 to vector<16x8xf32>
    %130 = arith.addf %128, %129 : vector<16x8xf32>
    %131 = arith.mulf %130, %120 : vector<16x8xf32>
    %cst_45 = arith.constant 0.254829586 : f32
    %132 = vector.broadcast %cst_45 : f32 to vector<16x8xf32>
    %133 = arith.addf %131, %132 : vector<16x8xf32>
    %134 = arith.mulf %133, %120 : vector<16x8xf32>
    %cst_46 = arith.constant 0.000000e+00 : f32
    %135 = vector.broadcast %cst_46 : f32 to vector<16x8xf32>
    %136 = arith.subf %135, %115 : vector<16x8xf32>
    %137 = arith.mulf %136, %115 : vector<16x8xf32>
    %138 = math.exp %137 : vector<16x8xf32>
    %139 = arith.mulf %134, %138 : vector<16x8xf32>
    %cst_47 = arith.constant 1.000000e+00 : f32
    %140 = vector.broadcast %cst_47 : f32 to vector<16x8xf32>
    %141 = arith.subf %140, %139 : vector<16x8xf32>
    %cst_48 = arith.constant 0.000000e+00 : f32
    %142 = vector.broadcast %cst_48 : f32 to vector<16x8xf32>
    %143 = arith.cmpf olt, %114, %142 : vector<16x8xf32>
    %cst_49 = arith.constant 0.000000e+00 : f32
    %144 = vector.broadcast %cst_49 : f32 to vector<16x8xf32>
    %145 = arith.subf %144, %141 : vector<16x8xf32>
    %146 = arith.select %143, %145, %141 : vector<16x8xi1>, vector<16x8xf32>
    %cst_50 = arith.constant 1.000000e+00 : f32
    %147 = vector.broadcast %cst_50 : f32 to vector<16x8xf32>
    %148 = arith.addf %147, %146 : vector<16x8xf32>
    %149 = arith.mulf %112, %148 : vector<16x8xf32>
    %c2_i32_51 = arith.constant 2 : i32
    %150 = tpu.dynamic_rotate %149 by %c2_i32_51 dim 0 : vector<16x8xf32>, i32 -> vector<16x8xf32>
    %151 = arith.truncf %150 : vector<16x8xf32> to vector<16x8xbf16>
    %c0_i32_52 = arith.constant 0 : i32
    %152 = arith.sitofp %c0_i32_52 : i32 to bf16
    %153 = vector.shape_cast %25 : vector<16x1xi1> to vector<16x1xi1>
    %154 = vector.broadcast %153 : vector<16x1xi1> to vector<16x8xi1>
    %155 = vector.broadcast %152 : bf16 to vector<16x8xbf16>
    %156 = arith.select %154, %151, %155 : vector<16x8xi1>, vector<16x8xbf16>
    %157 = arith.truncf %149 : vector<16x8xf32> to vector<16x8xbf16>
    %c0_i32_53 = arith.constant 0 : i32
    %158 = arith.sitofp %c0_i32_53 : i32 to bf16
    %159 = vector.shape_cast %34 : vector<16x1xi1> to vector<16x1xi1>
    %160 = vector.broadcast %159 : vector<16x1xi1> to vector<16x8xi1>
    %161 = vector.broadcast %158 : bf16 to vector<16x8xbf16>
    %162 = arith.select %160, %157, %161 : vector<16x8xi1>, vector<16x8xbf16>
    %c14_i32_54 = arith.constant 14 : i32
    %163 = tpu.dynamic_rotate %149 by %c14_i32_54 dim 0 : vector<16x8xf32>, i32 -> vector<16x8xf32>
    %164 = arith.truncf %163 : vector<16x8xf32> to vector<16x8xbf16>
    %c0_i32_55 = arith.constant 0 : i32
    %165 = arith.sitofp %c0_i32_55 : i32 to bf16
    %166 = vector.shape_cast %43 : vector<16x1xi1> to vector<16x1xi1>
    %167 = vector.broadcast %166 : vector<16x1xi1> to vector<16x8xi1>
    %168 = vector.broadcast %165 : bf16 to vector<16x8xbf16>
    %169 = arith.select %167, %164, %168 : vector<16x8xi1>, vector<16x8xbf16>
    %170 = tpu.concatenate %156, %162, %169 in 1 : vector<16x8xbf16>, vector<16x8xbf16>, vector<16x8xbf16> -> vector<16x24xbf16>
    %c0_56 = arith.constant 0 : index
    %c0_57 = arith.constant 0 : index
    %171 = vector.load %arg4[%c0_56, %c0_57] : memref<24x8xbf16, #tpu.memory_space<vmem>>, vector<24x8xbf16>
    %cst_58 = arith.constant dense<0.000000e+00> : vector<16x8xf32>
    %172 = tpu.matmul %170, %171, %cst_58 {dimension_numbers = #tpu.dot_dimension_numbers<[1], [0], [0], [1], [0, 0, 1, 1], [], []>} : vector<16x24xbf16>, vector<24x8xbf16>, vector<16x8xf32> -> vector<16x8xf32>
    %c0_59 = arith.constant 0 : index
    %c0_60 = arith.constant 0 : index
    %173 = vector.load %arg5[%c0_59, %c0_60] : memref<1x8xf32, #tpu.memory_space<vmem>>, vector<1x8xf32>
    %174 = vector.broadcast %173 : vector<1x8xf32> to vector<16x8xf32>
    %175 = arith.addf %172, %174 : vector<16x8xf32>
    %c0_61 = arith.constant 0 : index
    %c0_62 = arith.constant 0 : index
    %c0_63 = arith.constant 0 : index
    %176 = vector.load %arg1[%c0_61, %c0_62, %c0_63] : memref<1x16x4xf32, #tpu.memory_space<vmem>>, vector<1x16x4xf32>
    %177 = vector.shape_cast %176 : vector<1x16x4xf32> to vector<16x4xf32>
    %178 = arith.truncf %177 : vector<16x4xf32> to vector<16x4xbf16>
    %c0_64 = arith.constant 0 : index
    %c0_65 = arith.constant 0 : index
    %179 = vector.load %arg6[%c0_64, %c0_65] : memref<4x8xbf16, #tpu.memory_space<vmem>>, vector<4x8xbf16>
    %cst_66 = arith.constant dense<0.000000e+00> : vector<16x8xf32>
    %180 = tpu.matmul %178, %179, %cst_66 {dimension_numbers = #tpu.dot_dimension_numbers<[1], [0], [0], [1], [0, 0, 1, 1], [], []>} : vector<16x4xbf16>, vector<4x8xbf16>, vector<16x8xf32> -> vector<16x8xf32>
    %c0_67 = arith.constant 0 : index
    %c0_68 = arith.constant 0 : index
    %181 = vector.load %arg7[%c0_67, %c0_68] : memref<1x8xf32, #tpu.memory_space<vmem>>, vector<1x8xf32>
    %182 = vector.broadcast %181 : vector<1x8xf32> to vector<16x8xf32>
    %183 = arith.addf %180, %182 : vector<16x8xf32>
    %184 = arith.addf %175, %183 : vector<16x8xf32>
    %185 = vector.shape_cast %184 : vector<16x8xf32> to vector<1x16x8xf32>
    %c0_69 = arith.constant 0 : index
    %c0_70 = arith.constant 0 : index
    %c0_71 = arith.constant 0 : index
    %186 = vector.load %arg8[%c0_69, %c0_70, %c0_71] : memref<1x16x8xf32, #tpu.memory_space<vmem>>, vector<1x16x8xf32>
    tpu.vector_store %arg8[%c0_69, %c0_70, %c0_71], %185 {strides = array<i32>} : memref<1x16x8xf32, #tpu.memory_space<vmem>>, vector<1x16x8xf32>,
    return
  }
  func.func @transform_0(%arg0: i32) -> (i32, i32, i32) {
    %c0_i32 = arith.constant 0 : i32
    %c0_i32_0 = arith.constant 0 : i32
    %c0_i32_1 = arith.constant 0 : i32
    return %arg0, %c0_i32, %c0_i32_0 : i32, i32, i32
  }
  func.func @transform_1(%arg0: i32) -> (i32, i32) {
    %c0_i32 = arith.constant 0 : i32
    %c0_i32_0 = arith.constant 0 : i32
    %c0_i32_1 = arith.constant 0 : i32
    return %c0_i32, %c0_i32_0 : i32, i32
  }
  func.func @transform_2(%arg0: i32) -> (i32, i32) {
    %c0_i32 = arith.constant 0 : i32
    %c0_i32_0 = arith.constant 0 : i32
    %c0_i32_1 = arith.constant 0 : i32
    return %c0_i32, %c0_i32_0 : i32, i32
  }
  func.func @transform_3(%arg0: i32) -> (i32, i32) {
    %c0_i32 = arith.constant 0 : i32
    %c0_i32_0 = arith.constant 0 : i32
    %c0_i32_1 = arith.constant 0 : i32
    return %c0_i32, %c0_i32_0 : i32, i32
  }
  func.func @transform_4(%arg0: i32) -> (i32, i32) {
    %c0_i32 = arith.constant 0 : i32
    %c0_i32_0 = arith.constant 0 : i32
    %c0_i32_1 = arith.constant 0 : i32
    return %c0_i32, %c0_i32_0 : i32, i32
  }
  func.func @transform_5(%arg0: i32) -> (i32, i32) {
    %c0_i32 = arith.constant 0 : i32
    %c0_i32_0 = arith.constant 0 : i32
    %c0_i32_1 = arith.constant 0 : i32
    return %c0_i32, %c0_i32_0 : i32, i32
  }
  func.func @transform_6(%arg0: i32) -> (i32, i32) {
    %c0_i32 = arith.constant 0 : i32
    %c0_i32_0 = arith.constant 0 : i32
    %c0_i32_1 = arith.constant 0 : i32
    return %c0_i32, %c0_i32_0 : i32, i32
  }
  func.func @transform_7(%arg0: i32) -> (i32, i32, i32) {
    %c0_i32 = arith.constant 0 : i32
    %c0_i32_0 = arith.constant 0 : i32
    %c0_i32_1 = arith.constant 0 : i32
    return %arg0, %c0_i32, %c0_i32_0 : i32, i32, i32
  }
}

module attributes {stable_mosaic.version = 11 : i64} {
  func.func @kernel(%arg0: i32, %arg1: memref<1x16x4xf32, #tpu.memory_space<vmem>>, %arg2: memref<12x8xbf16, #tpu.memory_space<vmem>>, %arg3: memref<1x8xf32, #tpu.memory_space<vmem>>, %arg4: memref<24x8xbf16, #tpu.memory_space<vmem>>, %arg5: memref<1x8xf32, #tpu.memory_space<vmem>>, %arg6: memref<4x8xbf16, #tpu.memory_space<vmem>>, %arg7: memref<1x8xf32, #tpu.memory_space<vmem>>, %arg8: memref<1x16x8xf32, #tpu.memory_space<vmem>>) attributes {dimension_semantics = [#tpu.dimension_semantics<parallel>], iteration_bounds = array<i64: 2>, scalar_prefetch = 0 : i64, scratch_operands = 0 : i64, tpu.core_type = #tpu.core_type<tc>, window_params = [{transform_indices = @transform_0, window_bounds = array<i64: 1, 16, 4>}, {pipeline_mode = #tpu.pipeline_mode<synchronous>, transform_indices = @transform_1, window_bounds = array<i64: 12, 8>}, {pipeline_mode = #tpu.pipeline_mode<synchronous>, transform_indices = @transform_2, window_bounds = array<i64: 1, 8>}, {pipeline_mode = #tpu.pipeline_mode<synchronous>, transform_indices = @transform_3, window_bounds = array<i64: 24, 8>}, {pipeline_mode = #tpu.pipeline_mode<synchronous>, transform_indices = @transform_4, window_bounds = array<i64: 1, 8>}, {pipeline_mode = #tpu.pipeline_mode<synchronous>, transform_indices = @transform_5, window_bounds = array<i64: 4, 8>}, {pipeline_mode = #tpu.pipeline_mode<synchronous>, transform_indices = @transform_6, window_bounds = array<i64: 1, 8>}, {transform_indices = @transform_7, window_bounds = array<i64: 1, 16, 8>}]} {
    %0 = tpu.iota {dimensions = array<i32: 0>} : vector<16x1xi32>
    %c16_i32 = arith.constant 16 : i32
    %c0_i32 = arith.constant 0 : i32
    %1 = arith.cmpi eq, %c16_i32, %c0_i32 : i32
    %c1_i32 = arith.constant 1 : i32
    %2 = arith.select %1, %c1_i32, %c16_i32 : i32
    %3 = vector.broadcast %2 : i32 to vector<16x1xi32>
    %4 = arith.remsi %0, %3 : vector<16x1xi32>
    %c0_i32_0 = arith.constant 0 : i32
    %5 = vector.broadcast %c0_i32_0 : i32 to vector<16x1xi32>
    %6 = arith.cmpi ne, %4, %5 : vector<16x1xi32>
    %c0_i32_1 = arith.constant 0 : i32
    %7 = vector.broadcast %c0_i32_1 : i32 to vector<16x1xi32>
    %8 = arith.cmpi slt, %4, %7 : vector<16x1xi32>
    %c0_i32_2 = arith.constant 0 : i32
    %9 = arith.cmpi slt, %2, %c0_i32_2 : i32
    %10 = vector.broadcast %9 : i1 to vector<16x1xi1>
    %11 = vector.broadcast %10 : vector<16x1xi1> to vector<16x1xi1>
    %12 = arith.xori %8, %11 : vector<16x1xi1>
    %13 = arith.andi %12, %6 : vector<16x1xi1>
    %14 = vector.broadcast %2 : i32 to vector<16x1xi32>
    %15 = arith.addi %4, %14 : vector<16x1xi32>
    %16 = arith.select %13, %15, %4 : vector<16x1xi1>, vector<16x1xi32>
    %c-2_i32 = arith.constant -2 : i32
    %17 = vector.broadcast %c-2_i32 : i32 to vector<16x1xi32>
    %18 = arith.addi %16, %17 : vector<16x1xi32>
    %c0_i32_3 = arith.constant 0 : i32
    %19 = vector.broadcast %c0_i32_3 : i32 to vector<16x1xi32>
    %20 = arith.cmpi sge, %18, %19 : vector<16x1xi32>
    %c-2_i32_4 = arith.constant -2 : i32
    %21 = vector.broadcast %c-2_i32_4 : i32 to vector<16x1xi32>
    %22 = arith.addi %16, %21 : vector<16x1xi32>
    %c16_i32_5 = arith.constant 16 : i32
    %23 = vector.broadcast %c16_i32_5 : i32 to vector<16x1xi32>
    %24 = arith.cmpi slt, %22, %23 : vector<16x1xi32>
    %25 = arith.andi %20, %24 : vector<16x1xi1>
    %c0_i32_6 = arith.constant 0 : i32
    %26 = vector.broadcast %c0_i32_6 : i32 to vector<16x1xi32>
    %27 = arith.addi %16, %26 : vector<16x1xi32>
    %c0_i32_7 = arith.constant 0 : i32
    %28 = vector.broadcast %c0_i32_7 : i32 to vector<16x1xi32>
    %29 = arith.cmpi sge, %27, %28 : vector<16x1xi32>
    %c0_i32_8 = arith.constant 0 : i32
    %30 = vector.broadcast %c0_i32_8 : i32 to vector<16x1xi32>
    %31 = arith.addi %16, %30 : vector<16x1xi32>
    %c16_i32_9 = arith.constant 16 : i32
    %32 = vector.broadcast %c16_i32_9 : i32 to vector<16x1xi32>
    %33 = arith.cmpi slt, %31, %32 : vector<16x1xi32>
    %34 = arith.andi %29, %33 : vector<16x1xi1>
    %c2_i32 = arith.constant 2 : i32
    %35 = vector.broadcast %c2_i32 : i32 to vector<16x1xi32>
    %36 = arith.addi %16, %35 : vector<16x1xi32>
    %c0_i32_10 = arith.constant 0 : i32
    %37 = vector.broadcast %c0_i32_10 : i32 to vector<16x1xi32>
    %38 = arith.cmpi sge, %36, %37 : vector<16x1xi32>
    %c2_i32_11 = arith.constant 2 : i32
    %39 = vector.broadcast %c2_i32_11 : i32 to vector<16x1xi32>
    %40 = arith.addi %16, %39 : vector<16x1xi32>
    %c16_i32_12 = arith.constant 16 : i32
    %41 = vector.broadcast %c16_i32_12 : i32 to vector<16x1xi32>
    %42 = arith.cmpi slt, %40, %41 : vector<16x1xi32>
    %43 = arith.andi %38, %42 : vector<16x1xi1>
    %c0 = arith.constant 0 : index
    %c0_13 = arith.constant 0 : index
    %c0_14 = arith.constant 0 : index
    %44 = vector.load %arg1[%c0, %c0_13, %c0_14] : memref<1x16x4xf32, #tpu.memory_space<vmem>>, vector<1x16x4xf32>
    %45 = vector.shape_cast %44 : vector<1x16x4xf32> to vector<16x4xf32>
    %cst = arith.constant 5.000000e-01 : f32
    %46 = vector.broadcast %cst : f32 to vector<16x4xf32>
    %47 = arith.mulf %46, %45 : vector<16x4xf32>
    %cst_15 = arith.constant 0.707106769 : f32
    %48 = vector.broadcast %cst_15 : f32 to vector<16x4xf32>
    %49 = arith.mulf %45, %48 : vector<16x4xf32>
    %50 = math.absf %49 : vector<16x4xf32>
    %cst_16 = arith.constant 0.327591091 : f32
    %51 = vector.broadcast %cst_16 : f32 to vector<16x4xf32>
    %52 = arith.mulf %51, %50 : vector<16x4xf32>
    %cst_17 = arith.constant 1.000000e+00 : f32
    %53 = vector.broadcast %cst_17 : f32 to vector<16x4xf32>
    %54 = arith.addf %53, %52 : vector<16x4xf32>
    %55 = tpu.reciprocal %54 {approx = true} : vector<16x4xf32> -> vector<16x4xf32>
    %cst_18 = arith.constant 1.06140542 : f32
    %56 = vector.broadcast %cst_18 : f32 to vector<16x4xf32>
    %57 = arith.mulf %56, %55 : vector<16x4xf32>
    %cst_19 = arith.constant -1.45315206 : f32
    %58 = vector.broadcast %cst_19 : f32 to vector<16x4xf32>
    %59 = arith.addf %57, %58 : vector<16x4xf32>
    %60 = arith.mulf %59, %55 : vector<16x4xf32>
    %cst_20 = arith.constant 1.42141378 : f32
    %61 = vector.broadcast %cst_20 : f32 to vector<16x4xf32>
    %62 = arith.addf %60, %61 : vector<16x4xf32>
    %63 = arith.mulf %62, %55 : vector<16x4xf32>
    %cst_21 = arith.constant -0.284496725 : f32
    %64 = vector.broadcast %cst_21 : f32 to vector<16x4xf32>
    %65 = arith.addf %63, %64 : vector<16x4xf32>
    %66 = arith.mulf %65, %55 : vector<16x4xf32>
    %cst_22 = arith.constant 0.254829586 : f32
    %67 = vector.broadcast %cst_22 : f32 to vector<16x4xf32>
    %68 = arith.addf %66, %67 : vector<16x4xf32>
    %69 = arith.mulf %68, %55 : vector<16x4xf32>
    %cst_23 = arith.constant 0.000000e+00 : f32
    %70 = vector.broadcast %cst_23 : f32 to vector<16x4xf32>
    %71 = arith.subf %70, %50 : vector<16x4xf32>
    %72 = arith.mulf %71, %50 : vector<16x4xf32>
    %73 = math.exp %72 : vector<16x4xf32>
    %74 = arith.mulf %69, %73 : vector<16x4xf32>
    %cst_24 = arith.constant 1.000000e+00 : f32
    %75 = vector.broadcast %cst_24 : f32 to vector<16x4xf32>
    %76 = arith.subf %75, %74 : vector<16x4xf32>
    %cst_25 = arith.constant 0.000000e+00 : f32
    %77 = vector.broadcast %cst_25 : f32 to vector<16x4xf32>
    %78 = arith.cmpf olt, %49, %77 : vector<16x4xf32>
    %cst_26 = arith.constant 0.000000e+00 : f32
    %79 = vector.broadcast %cst_26 : f32 to vector<16x4xf32>
    %80 = arith.subf %79, %76 : vector<16x4xf32>
    %81 = arith.select %78, %80, %76 : vector<16x4xi1>, vector<16x4xf32>
    %cst_27 = arith.constant 1.000000e+00 : f32
    %82 = vector.broadcast %cst_27 : f32 to vector<16x4xf32>
    %83 = arith.addf %82, %81 : vector<16x4xf32>
    %84 = arith.mulf %47, %83 : vector<16x4xf32>
    %c2_i32_28 = arith.constant 2 : i32
    %85 = tpu.dynamic_rotate %84 by %c2_i32_28 dim 0 : vector<16x4xf32>, i32 -> vector<16x4xf32>
    %86 = arith.truncf %85 : vector<16x4xf32> to vector<16x4xbf16>
    %c0_i32_29 = arith.constant 0 : i32
    %87 = arith.sitofp %c0_i32_29 : i32 to bf16
    %88 = vector.shape_cast %25 : vector<16x1xi1> to vector<16x1xi1>
    %89 = vector.broadcast %88 : vector<16x1xi1> to vector<16x4xi1>
    %90 = vector.broadcast %87 : bf16 to vector<16x4xbf16>
    %91 = arith.select %89, %86, %90 : vector<16x4xi1>, vector<16x4xbf16>
    %92 = arith.truncf %84 : vector<16x4xf32> to vector<16x4xbf16>
    %c0_i32_30 = arith.constant 0 : i32
    %93 = arith.sitofp %c0_i32_30 : i32 to bf16
    %94 = vector.shape_cast %34 : vector<16x1xi1> to vector<16x1xi1>
    %95 = vector.broadcast %94 : vector<16x1xi1> to vector<16x4xi1>
    %96 = vector.broadcast %93 : bf16 to vector<16x4xbf16>
    %97 = arith.select %95, %92, %96 : vector<16x4xi1>, vector<16x4xbf16>
    %c14_i32 = arith.constant 14 : i32
    %98 = tpu.dynamic_rotate %84 by %c14_i32 dim 0 : vector<16x4xf32>, i32 -> vector<16x4xf32>
    %99 = arith.truncf %98 : vector<16x4xf32> to vector<16x4xbf16>
    %c0_i32_31 = arith.constant 0 : i32
    %100 = arith.sitofp %c0_i32_31 : i32 to bf16
    %101 = vector.shape_cast %43 : vector<16x1xi1> to vector<16x1xi1>
    %102 = vector.broadcast %101 : vector<16x1xi1> to vector<16x4xi1>
    %103 = vector.broadcast %100 : bf16 to vector<16x4xbf16>
    %104 = arith.select %102, %99, %103 : vector<16x4xi1>, vector<16x4xbf16>
    %105 = tpu.concatenate %91, %97, %104 in 1 : vector<16x4xbf16>, vector<16x4xbf16>, vector<16x4xbf16> -> vector<16x12xbf16>
    %c0_32 = arith.constant 0 : index
    %c0_33 = arith.constant 0 : index
    %106 = vector.load %arg2[%c0_32, %c0_33] : memref<12x8xbf16, #tpu.memory_space<vmem>>, vector<12x8xbf16>
    %cst_34 = arith.constant dense<0.000000e+00> : vector<16x8xf32>
    %107 = tpu.matmul %105, %106, %cst_34 {dimension_numbers = #tpu.dot_dimension_numbers<[1], [0], [0], [1], [0, 0, 1, 1], [], []>} : vector<16x12xbf16>, vector<12x8xbf16>, vector<16x8xf32> -> vector<16x8xf32>
    %c0_35 = arith.constant 0 : index
    %c0_36 = arith.constant 0 : index
    %108 = vector.load %arg3[%c0_35, %c0_36] : memref<1x8xf32, #tpu.memory_space<vmem>>, vector<1x8xf32>
    %109 = vector.broadcast %108 : vector<1x8xf32> to vector<16x8xf32>
    %110 = arith.addf %107, %109 : vector<16x8xf32>
    %cst_37 = arith.constant 5.000000e-01 : f32
    %111 = vector.broadcast %cst_37 : f32 to vector<16x8xf32>
    %112 = arith.mulf %111, %110 : vector<16x8xf32>
    %cst_38 = arith.constant 0.707106769 : f32
    %113 = vector.broadcast %cst_38 : f32 to vector<16x8xf32>
    %114 = arith.mulf %110, %113 : vector<16x8xf32>
    %115 = math.absf %114 : vector<16x8xf32>
    %cst_39 = arith.constant 0.327591091 : f32
    %116 = vector.broadcast %cst_39 : f32 to vector<16x8xf32>
    %117 = arith.mulf %116, %115 : vector<16x8xf32>
    %cst_40 = arith.constant 1.000000e+00 : f32
    %118 = vector.broadcast %cst_40 : f32 to vector<16x8xf32>
    %119 = arith.addf %118, %117 : vector<16x8xf32>
    %120 = tpu.reciprocal %119 {approx = true} : vector<16x8xf32> -> vector<16x8xf32>
    %cst_41 = arith.constant 1.06140542 : f32
    %121 = vector.broadcast %cst_41 : f32 to vector<16x8xf32>
    %122 = arith.mulf %121, %120 : vector<16x8xf32>
    %cst_42 = arith.constant -1.45315206 : f32
    %123 = vector.broadcast %cst_42 : f32 to vector<16x8xf32>
    %124 = arith.addf %122, %123 : vector<16x8xf32>
    %125 = arith.mulf %124, %120 : vector<16x8xf32>
    %cst_43 = arith.constant 1.42141378 : f32
    %126 = vector.broadcast %cst_43 : f32 to vector<16x8xf32>
    %127 = arith.addf %125, %126 : vector<16x8xf32>
    %128 = arith.mulf %127, %120 : vector<16x8xf32>
    %cst_44 = arith.constant -0.284496725 : f32
    %129 = vector.broadcast %cst_44 : f32 to vector<16x8xf32>
    %130 = arith.addf %128, %129 : vector<16x8xf32>
    %131 = arith.mulf %130, %120 : vector<16x8xf32>
    %cst_45 = arith.constant 0.254829586 : f32
    %132 = vector.broadcast %cst_45 : f32 to vector<16x8xf32>
    %133 = arith.addf %131, %132 : vector<16x8xf32>
    %134 = arith.mulf %133, %120 : vector<16x8xf32>
    %cst_46 = arith.constant 0.000000e+00 : f32
    %135 = vector.broadcast %cst_46 : f32 to vector<16x8xf32>
    %136 = arith.subf %135, %115 : vector<16x8xf32>
    %137 = arith.mulf %136, %115 : vector<16x8xf32>
    %138 = math.exp %137 : vector<16x8xf32>
    %139 = arith.mulf %134, %138 : vector<16x8xf32>
    %cst_47 = arith.constant 1.000000e+00 : f32
    %140 = vector.broadcast %cst_47 : f32 to vector<16x8xf32>
    %141 = arith.subf %140, %139 : vector<16x8xf32>
    %cst_48 = arith.constant 0.000000e+00 : f32
    %142 = vector.broadcast %cst_48 : f32 to vector<16x8xf32>
    %143 = arith.cmpf olt, %114, %142 : vector<16x8xf32>
    %cst_49 = arith.constant 0.000000e+00 : f32
    %144 = vector.broadcast %cst_49 : f32 to vector<16x8xf32>
    %145 = arith.subf %144, %141 : vector<16x8xf32>
    %146 = arith.select %143, %145, %141 : vector<16x8xi1>, vector<16x8xf32>
    %cst_50 = arith.constant 1.000000e+00 : f32
    %147 = vector.broadcast %cst_50 : f32 to vector<16x8xf32>
    %148 = arith.addf %147, %146 : vector<16x8xf32>
    %149 = arith.mulf %112, %148 : vector<16x8xf32>
    %c2_i32_51 = arith.constant 2 : i32
    %150 = tpu.dynamic_rotate %149 by %c2_i32_51 dim 0 : vector<16x8xf32>, i32 -> vector<16x8xf32>
    %151 = arith.truncf %150 : vector<16x8xf32> to vector<16x8xbf16>
    %c0_i32_52 = arith.constant 0 : i32
    %152 = arith.sitofp %c0_i32_52 : i32 to bf16
    %153 = vector.shape_cast %25 : vector<16x1xi1> to vector<16x1xi1>
    %154 = vector.broadcast %153 : vector<16x1xi1> to vector<16x8xi1>
    %155 = vector.broadcast %152 : bf16 to vector<16x8xbf16>
    %156 = arith.select %154, %151, %155 : vector<16x8xi1>, vector<16x8xbf16>
    %157 = arith.truncf %149 : vector<16x8xf32> to vector<16x8xbf16>
    %c0_i32_53 = arith.constant 0 : i32
    %158 = arith.sitofp %c0_i32_53 : i32 to bf16
    %159 = vector.shape_cast %34 : vector<16x1xi1> to vector<16x1xi1>
    %160 = vector.broadcast %159 : vector<16x1xi1> to vector<16x8xi1>
    %161 = vector.broadcast %158 : bf16 to vector<16x8xbf16>
    %162 = arith.select %160, %157, %161 : vector<16x8xi1>, vector<16x8xbf16>
    %c14_i32_54 = arith.constant 14 : i32
    %163 = tpu.dynamic_rotate %149 by %c14_i32_54 dim 0 : vector<16x8xf32>, i32 -> vector<16x8xf32>
    %164 = arith.truncf %163 : vector<16x8xf32> to vector<16x8xbf16>
    %c0_i32_55 = arith.constant 0 : i32
    %165 = arith.sitofp %c0_i32_55 : i32 to bf16
    %166 = vector.shape_cast %43 : vector<16x1xi1> to vector<16x1xi1>
    %167 = vector.broadcast %166 : vector<16x1xi1> to vector<16x8xi1>
    %168 = vector.broadcast %165 : bf16 to vector<16x8xbf16>
    %169 = arith.select %167, %164, %168 : vector<16x8xi1>, vector<16x8xbf16>
    %170 = tpu.concatenate %156, %162, %169 in 1 : vector<16x8xbf16>, vector<16x8xbf16>, vector<16x8xbf16> -> vector<16x24xbf16>
    %c0_56 = arith.constant 0 : index
    %c0_57 = arith.constant 0 : index
    %171 = vector.load %arg4[%c0_56, %c0_57] : memref<24x8xbf16, #tpu.memory_space<vmem>>, vector<24x8xbf16>
    %cst_58 = arith.constant dense<0.000000e+00> : vector<16x8xf32>
    %172 = tpu.matmul %170, %171, %cst_58 {dimension_numbers = #tpu.dot_dimension_numbers<[1], [0], [0], [1], [0, 0, 1, 1], [], []>} : vector<16x24xbf16>, vector<24x8xbf16>, vector<16x8xf32> -> vector<16x8xf32>
    %c0_59 = arith.constant 0 : index
    %c0_60 = arith.constant 0 : index
    %173 = vector.load %arg5[%c0_59, %c0_60] : memref<1x8xf32, #tpu.memory_space<vmem>>, vector<1x8xf32>
    %174 = vector.broadcast %173 : vector<1x8xf32> to vector<16x8xf32>
    %175 = arith.addf %172, %174 : vector<16x8xf32>
    %c0_61 = arith.constant 0 : index
    %c0_62 = arith.constant 0 : index
    %c0_63 = arith.constant 0 : index
    %176 = vector.load %arg1[%c0_61, %c0_62, %c0_63] : memref<1x16x4xf32, #tpu.memory_space<vmem>>, vector<1x16x4xf32>
    %177 = vector.shape_cast %176 : vector<1x16x4xf32> to vector<16x4xf32>
    %178 = arith.truncf %177 : vector<16x4xf32> to vector<16x4xbf16>
    %c0_64 = arith.constant 0 : index
    %c0_65 = arith.constant 0 : index
    %179 = vector.load %arg6[%c0_64, %c0_65] : memref<4x8xbf16, #tpu.memory_space<vmem>>, vector<4x8xbf16>
    %cst_66 = arith.constant dense<0.000000e+00> : vector<16x8xf32>
    %180 = tpu.matmul %178, %179, %cst_66 {dimension_numbers = #tpu.dot_dimension_numbers<[1], [0], [0], [1], [0, 0, 1, 1], [], []>} : vector<16x4xbf16>, vector<4x8xbf16>, vector<16x8xf32> -> vector<16x8xf32>
    %c0_67 = arith.constant 0 : index
    %c0_68 = arith.constant 0 : index
    %181 = vector.load %arg7[%c0_67, %c0_68] : memref<1x8xf32, #tpu.memory_space<vmem>>, vector<1x8xf32>
    %182 = vector.broadcast %181 : vector<1x8xf32> to vector<16x8xf32>
    %183 = arith.addf %180, %182 : vector<16x8xf32>
    %184 = arith.addf %175, %183 : vector<16x8xf32>
    %185 = vector.shape_cast %184 : vector<16x8xf32> to vector<1x16x8xf32>
    %c0_69 = arith.constant 0 : index
    %c0_70 = arith.constant 0 : index
    %c0_71 = arith.constant 0 : index
    %186 = vector.load %arg8[%c0_69, %c0_70, %c0_71] : memref<1x16x8xf32, #tpu.memory_space<vmem>>, vector<1x16x8xf32>
    tpu.vector_store %arg8[%c0_69, %c0_70, %c0_71], %185 {strides = array<i32>} : memref<1x16x8xf32, #tpu.memory_space<vmem>>, vector<1x16x8xf32>,
    return
  }
  func.func @transform_0(%arg0: i32) -> (i32, i32, i32) {
    %c0_i32 = arith.constant 0 : i32
    %c0_i32_0 = arith.constant 0 : i32
    %c0_i32_1 = arith.constant 0 : i32
    return %arg0, %c0_i32, %c0_i32_0 : i32, i32, i32
  }
  func.func @transform_1(%arg0: i32) -> (i32, i32) {
    %c0_i32 = arith.constant 0 : i32
    %c0_i32_0 = arith.constant 0 : i32
    %c0_i32_1 = arith.constant 0 : i32
    return %c0_i32, %c0_i32_0 : i32, i32
  }
  func.func @transform_2(%arg0: i32) -> (i32, i32) {
    %c0_i32 = arith.constant 0 : i32
    %c0_i32_0 = arith.constant 0 : i32
    %c0_i32_1 = arith.constant 0 : i32
    return %c0_i32, %c0_i32_0 : i32, i32
  }
  func.func @transform_3(%arg0: i32) -> (i32, i32) {
    %c0_i32 = arith.constant 0 : i32
    %c0_i32_0 = arith.constant 0 : i32
    %c0_i32_1 = arith.constant 0 : i32
    return %c0_i32, %c0_i32_0 : i32, i32
  }
  func.func @transform_4(%arg0: i32) -> (i32, i32) {
    %c0_i32 = arith.constant 0 : i32
    %c0_i32_0 = arith.constant 0 : i32
    %c0_i32_1 = arith.constant 0 : i32
    return %c0_i32, %c0_i32_0 : i32, i32
  }
  func.func @transform_5(%arg0: i32) -> (i32, i32) {
    %c0_i32 = arith.constant 0 : i32
    %c0_i32_0 = arith.constant 0 : i32
    %c0_i32_1 = arith.constant 0 : i32
    return %c0_i32, %c0_i32_0 : i32, i32
  }
  func.func @transform_6(%arg0: i32) -> (i32, i32) {
    %c0_i32 = arith.constant 0 : i32
    %c0_i32_0 = arith.constant 0 : i32
    %c0_i32_1 = arith.constant 0 : i32
    return %c0_i32, %c0_i32_0 : i32, i32
  }
  func.func @transform_7(%arg0: i32) -> (i32, i32, i32) {
    %c0_i32 = arith.constant 0 : i32
    %c0_i32_0 = arith.constant 0 : i32
    %c0_i32_1 = arith.constant 0 : i32
    return %arg0, %c0_i32, %c0_i32_0 : i32, i32, i32
  }
}

module attributes {stable_mosaic.version = 11 : i64} {
  func.func @kernel(%arg0: i32, %arg1: memref<1x16x4xf32, #tpu.memory_space<vmem>>, %arg2: memref<3x4x8xbf16, #tpu.memory_space<vmem>>, %arg3: memref<1x8xf32, #tpu.memory_space<vmem>>, %arg4: memref<3x8x8xbf16, #tpu.memory_space<vmem>>, %arg5: memref<1x8xf32, #tpu.memory_space<vmem>>, %arg6: memref<4x8xbf16, #tpu.memory_space<vmem>>, %arg7: memref<1x8xf32, #tpu.memory_space<vmem>>, %arg8: memref<1x16x8xf32, #tpu.memory_space<vmem>>) attributes {dimension_semantics = [#tpu.dimension_semantics<parallel>], iteration_bounds = array<i64: 2>, scalar_prefetch = 0 : i64, scratch_operands = 0 : i64, tpu.core_type = #tpu.core_type<tc>, window_params = [{transform_indices = @transform_0, window_bounds = array<i64: 1, 16, 4>}, {pipeline_mode = #tpu.pipeline_mode<synchronous>, transform_indices = @transform_1, window_bounds = array<i64: 3, 4, 8>}, {pipeline_mode = #tpu.pipeline_mode<synchronous>, transform_indices = @transform_2, window_bounds = array<i64: 1, 8>}, {pipeline_mode = #tpu.pipeline_mode<synchronous>, transform_indices = @transform_3, window_bounds = array<i64: 3, 8, 8>}, {pipeline_mode = #tpu.pipeline_mode<synchronous>, transform_indices = @transform_4, window_bounds = array<i64: 1, 8>}, {pipeline_mode = #tpu.pipeline_mode<synchronous>, transform_indices = @transform_5, window_bounds = array<i64: 4, 8>}, {pipeline_mode = #tpu.pipeline_mode<synchronous>, transform_indices = @transform_6, window_bounds = array<i64: 1, 8>}, {transform_indices = @transform_7, window_bounds = array<i64: 1, 16, 8>}]} {
    %0 = tpu.iota {dimensions = array<i32: 0>} : vector<16x1xi32>
    %c16_i32 = arith.constant 16 : i32
    %c0_i32 = arith.constant 0 : i32
    %1 = arith.cmpi eq, %c16_i32, %c0_i32 : i32
    %c1_i32 = arith.constant 1 : i32
    %2 = arith.select %1, %c1_i32, %c16_i32 : i32
    %3 = vector.broadcast %2 : i32 to vector<16x1xi32>
    %4 = arith.remsi %0, %3 : vector<16x1xi32>
    %c0_i32_0 = arith.constant 0 : i32
    %5 = vector.broadcast %c0_i32_0 : i32 to vector<16x1xi32>
    %6 = arith.cmpi ne, %4, %5 : vector<16x1xi32>
    %c0_i32_1 = arith.constant 0 : i32
    %7 = vector.broadcast %c0_i32_1 : i32 to vector<16x1xi32>
    %8 = arith.cmpi slt, %4, %7 : vector<16x1xi32>
    %c0_i32_2 = arith.constant 0 : i32
    %9 = arith.cmpi slt, %2, %c0_i32_2 : i32
    %10 = vector.broadcast %9 : i1 to vector<16x1xi1>
    %11 = vector.broadcast %10 : vector<16x1xi1> to vector<16x1xi1>
    %12 = arith.xori %8, %11 : vector<16x1xi1>
    %13 = arith.andi %12, %6 : vector<16x1xi1>
    %14 = vector.broadcast %2 : i32 to vector<16x1xi32>
    %15 = arith.addi %4, %14 : vector<16x1xi32>
    %16 = arith.select %13, %15, %4 : vector<16x1xi1>, vector<16x1xi32>
    %c-2_i32 = arith.constant -2 : i32
    %17 = vector.broadcast %c-2_i32 : i32 to vector<16x1xi32>
    %18 = arith.addi %16, %17 : vector<16x1xi32>
    %c0_i32_3 = arith.constant 0 : i32
    %19 = vector.broadcast %c0_i32_3 : i32 to vector<16x1xi32>
    %20 = arith.cmpi sge, %18, %19 : vector<16x1xi32>
    %c-2_i32_4 = arith.constant -2 : i32
    %21 = vector.broadcast %c-2_i32_4 : i32 to vector<16x1xi32>
    %22 = arith.addi %16, %21 : vector<16x1xi32>
    %c16_i32_5 = arith.constant 16 : i32
    %23 = vector.broadcast %c16_i32_5 : i32 to vector<16x1xi32>
    %24 = arith.cmpi slt, %22, %23 : vector<16x1xi32>
    %25 = arith.andi %20, %24 : vector<16x1xi1>
    %c0_i32_6 = arith.constant 0 : i32
    %26 = vector.broadcast %c0_i32_6 : i32 to vector<16x1xi32>
    %27 = arith.addi %16, %26 : vector<16x1xi32>
    %c0_i32_7 = arith.constant 0 : i32
    %28 = vector.broadcast %c0_i32_7 : i32 to vector<16x1xi32>
    %29 = arith.cmpi sge, %27, %28 : vector<16x1xi32>
    %c0_i32_8 = arith.constant 0 : i32
    %30 = vector.broadcast %c0_i32_8 : i32 to vector<16x1xi32>
    %31 = arith.addi %16, %30 : vector<16x1xi32>
    %c16_i32_9 = arith.constant 16 : i32
    %32 = vector.broadcast %c16_i32_9 : i32 to vector<16x1xi32>
    %33 = arith.cmpi slt, %31, %32 : vector<16x1xi32>
    %34 = arith.andi %29, %33 : vector<16x1xi1>
    %c2_i32 = arith.constant 2 : i32
    %35 = vector.broadcast %c2_i32 : i32 to vector<16x1xi32>
    %36 = arith.addi %16, %35 : vector<16x1xi32>
    %c0_i32_10 = arith.constant 0 : i32
    %37 = vector.broadcast %c0_i32_10 : i32 to vector<16x1xi32>
    %38 = arith.cmpi sge, %36, %37 : vector<16x1xi32>
    %c2_i32_11 = arith.constant 2 : i32
    %39 = vector.broadcast %c2_i32_11 : i32 to vector<16x1xi32>
    %40 = arith.addi %16, %39 : vector<16x1xi32>
    %c16_i32_12 = arith.constant 16 : i32
    %41 = vector.broadcast %c16_i32_12 : i32 to vector<16x1xi32>
    %42 = arith.cmpi slt, %40, %41 : vector<16x1xi32>
    %43 = arith.andi %38, %42 : vector<16x1xi1>
    %c0 = arith.constant 0 : index
    %c0_13 = arith.constant 0 : index
    %c0_14 = arith.constant 0 : index
    %44 = vector.load %arg1[%c0, %c0_13, %c0_14] : memref<1x16x4xf32, #tpu.memory_space<vmem>>, vector<1x16x4xf32>
    %45 = vector.shape_cast %44 : vector<1x16x4xf32> to vector<16x4xf32>
    %cst = arith.constant 5.000000e-01 : f32
    %46 = vector.broadcast %cst : f32 to vector<16x4xf32>
    %47 = arith.mulf %46, %45 : vector<16x4xf32>
    %cst_15 = arith.constant 0.707106769 : f32
    %48 = vector.broadcast %cst_15 : f32 to vector<16x4xf32>
    %49 = arith.mulf %45, %48 : vector<16x4xf32>
    %50 = math.absf %49 : vector<16x4xf32>
    %cst_16 = arith.constant 0.327591091 : f32
    %51 = vector.broadcast %cst_16 : f32 to vector<16x4xf32>
    %52 = arith.mulf %51, %50 : vector<16x4xf32>
    %cst_17 = arith.constant 1.000000e+00 : f32
    %53 = vector.broadcast %cst_17 : f32 to vector<16x4xf32>
    %54 = arith.addf %53, %52 : vector<16x4xf32>
    %55 = tpu.reciprocal %54 {approx = true} : vector<16x4xf32> -> vector<16x4xf32>
    %cst_18 = arith.constant 1.06140542 : f32
    %56 = vector.broadcast %cst_18 : f32 to vector<16x4xf32>
    %57 = arith.mulf %56, %55 : vector<16x4xf32>
    %cst_19 = arith.constant -1.45315206 : f32
    %58 = vector.broadcast %cst_19 : f32 to vector<16x4xf32>
    %59 = arith.addf %57, %58 : vector<16x4xf32>
    %60 = arith.mulf %59, %55 : vector<16x4xf32>
    %cst_20 = arith.constant 1.42141378 : f32
    %61 = vector.broadcast %cst_20 : f32 to vector<16x4xf32>
    %62 = arith.addf %60, %61 : vector<16x4xf32>
    %63 = arith.mulf %62, %55 : vector<16x4xf32>
    %cst_21 = arith.constant -0.284496725 : f32
    %64 = vector.broadcast %cst_21 : f32 to vector<16x4xf32>
    %65 = arith.addf %63, %64 : vector<16x4xf32>
    %66 = arith.mulf %65, %55 : vector<16x4xf32>
    %cst_22 = arith.constant 0.254829586 : f32
    %67 = vector.broadcast %cst_22 : f32 to vector<16x4xf32>
    %68 = arith.addf %66, %67 : vector<16x4xf32>
    %69 = arith.mulf %68, %55 : vector<16x4xf32>
    %cst_23 = arith.constant 0.000000e+00 : f32
    %70 = vector.broadcast %cst_23 : f32 to vector<16x4xf32>
    %71 = arith.subf %70, %50 : vector<16x4xf32>
    %72 = arith.mulf %71, %50 : vector<16x4xf32>
    %73 = math.exp %72 : vector<16x4xf32>
    %74 = arith.mulf %69, %73 : vector<16x4xf32>
    %cst_24 = arith.constant 1.000000e+00 : f32
    %75 = vector.broadcast %cst_24 : f32 to vector<16x4xf32>
    %76 = arith.subf %75, %74 : vector<16x4xf32>
    %cst_25 = arith.constant 0.000000e+00 : f32
    %77 = vector.broadcast %cst_25 : f32 to vector<16x4xf32>
    %78 = arith.cmpf olt, %49, %77 : vector<16x4xf32>
    %cst_26 = arith.constant 0.000000e+00 : f32
    %79 = vector.broadcast %cst_26 : f32 to vector<16x4xf32>
    %80 = arith.subf %79, %76 : vector<16x4xf32>
    %81 = arith.select %78, %80, %76 : vector<16x4xi1>, vector<16x4xf32>
    %cst_27 = arith.constant 1.000000e+00 : f32
    %82 = vector.broadcast %cst_27 : f32 to vector<16x4xf32>
    %83 = arith.addf %82, %81 : vector<16x4xf32>
    %84 = arith.mulf %47, %83 : vector<16x4xf32>
    %85 = arith.truncf %84 : vector<16x4xf32> to vector<16x4xbf16>
    %c2_i32_28 = arith.constant 2 : i32
    %86 = tpu.dynamic_rotate %85 by %c2_i32_28 dim 0 : vector<16x4xbf16>, i32 -> vector<16x4xbf16>
    %c0_i32_29 = arith.constant 0 : i32
    %87 = arith.sitofp %c0_i32_29 : i32 to bf16
    %88 = vector.shape_cast %25 : vector<16x1xi1> to vector<16x1xi1>
    %89 = vector.broadcast %88 : vector<16x1xi1> to vector<16x4xi1>
    %90 = vector.broadcast %87 : bf16 to vector<16x4xbf16>
    %91 = arith.select %89, %86, %90 : vector<16x4xi1>, vector<16x4xbf16>
    %c0_i32_30 = arith.constant 0 : i32
    %92 = arith.sitofp %c0_i32_30 : i32 to bf16
    %93 = vector.shape_cast %34 : vector<16x1xi1> to vector<16x1xi1>
    %94 = vector.broadcast %93 : vector<16x1xi1> to vector<16x4xi1>
    %95 = vector.broadcast %92 : bf16 to vector<16x4xbf16>
    %96 = arith.select %94, %85, %95 : vector<16x4xi1>, vector<16x4xbf16>
    %c14_i32 = arith.constant 14 : i32
    %97 = tpu.dynamic_rotate %85 by %c14_i32 dim 0 : vector<16x4xbf16>, i32 -> vector<16x4xbf16>
    %c0_i32_31 = arith.constant 0 : i32
    %98 = arith.sitofp %c0_i32_31 : i32 to bf16
    %99 = vector.shape_cast %43 : vector<16x1xi1> to vector<16x1xi1>
    %100 = vector.broadcast %99 : vector<16x1xi1> to vector<16x4xi1>
    %101 = vector.broadcast %98 : bf16 to vector<16x4xbf16>
    %102 = arith.select %100, %97, %101 : vector<16x4xi1>, vector<16x4xbf16>
    %c0_32 = arith.constant 0 : index
    %c0_33 = arith.constant 0 : index
    %c0_34 = arith.constant 0 : index
    %103 = vector.load %arg2[%c0_32, %c0_33, %c0_34] : memref<3x4x8xbf16, #tpu.memory_space<vmem>>, vector<1x4x8xbf16>
    %104 = vector.shape_cast %103 : vector<1x4x8xbf16> to vector<4x8xbf16>
    %cst_35 = arith.constant dense<0.000000e+00> : vector<16x8xf32>
    %105 = tpu.matmul %91, %104, %cst_35 {dimension_numbers = #tpu.dot_dimension_numbers<[1], [0], [0], [1], [0, 0, 1, 1], [], []>} : vector<16x4xbf16>, vector<4x8xbf16>, vector<16x8xf32> -> vector<16x8xf32>
    %c1 = arith.constant 1 : index
    %c0_36 = arith.constant 0 : index
    %c0_37 = arith.constant 0 : index
    %106 = vector.load %arg2[%c1, %c0_36, %c0_37] : memref<3x4x8xbf16, #tpu.memory_space<vmem>>, vector<1x4x8xbf16>
    %107 = vector.shape_cast %106 : vector<1x4x8xbf16> to vector<4x8xbf16>
    %cst_38 = arith.constant dense<0.000000e+00> : vector<16x8xf32>
    %108 = tpu.matmul %96, %107, %cst_38 {dimension_numbers = #tpu.dot_dimension_numbers<[1], [0], [0], [1], [0, 0, 1, 1], [], []>} : vector<16x4xbf16>, vector<4x8xbf16>, vector<16x8xf32> -> vector<16x8xf32>
    %109 = arith.addf %105, %108 : vector<16x8xf32>
    %c2 = arith.constant 2 : index
    %c0_39 = arith.constant 0 : index
    %c0_40 = arith.constant 0 : index
    %110 = vector.load %arg2[%c2, %c0_39, %c0_40] : memref<3x4x8xbf16, #tpu.memory_space<vmem>>, vector<1x4x8xbf16>
    %111 = vector.shape_cast %110 : vector<1x4x8xbf16> to vector<4x8xbf16>
    %cst_41 = arith.constant dense<0.000000e+00> : vector<16x8xf32>
    %112 = tpu.matmul %102, %111, %cst_41 {dimension_numbers = #tpu.dot_dimension_numbers<[1], [0], [0], [1], [0, 0, 1, 1], [], []>} : vector<16x4xbf16>, vector<4x8xbf16>, vector<16x8xf32> -> vector<16x8xf32>
    %113 = arith.addf %109, %112 : vector<16x8xf32>
    %c0_42 = arith.constant 0 : index
    %c0_43 = arith.constant 0 : index
    %114 = vector.load %arg3[%c0_42, %c0_43] : memref<1x8xf32, #tpu.memory_space<vmem>>, vector<1x8xf32>
    %115 = vector.broadcast %114 : vector<1x8xf32> to vector<16x8xf32>
    %116 = arith.addf %113, %115 : vector<16x8xf32>
    %cst_44 = arith.constant 5.000000e-01 : f32
    %117 = vector.broadcast %cst_44 : f32 to vector<16x8xf32>
    %118 = arith.mulf %117, %116 : vector<16x8xf32>
    %cst_45 = arith.constant 0.707106769 : f32
    %119 = vector.broadcast %cst_45 : f32 to vector<16x8xf32>
    %120 = arith.mulf %116, %119 : vector<16x8xf32>
    %121 = math.absf %120 : vector<16x8xf32>
    %cst_46 = arith.constant 0.327591091 : f32
    %122 = vector.broadcast %cst_46 : f32 to vector<16x8xf32>
    %123 = arith.mulf %122, %121 : vector<16x8xf32>
    %cst_47 = arith.constant 1.000000e+00 : f32
    %124 = vector.broadcast %cst_47 : f32 to vector<16x8xf32>
    %125 = arith.addf %124, %123 : vector<16x8xf32>
    %126 = tpu.reciprocal %125 {approx = true} : vector<16x8xf32> -> vector<16x8xf32>
    %cst_48 = arith.constant 1.06140542 : f32
    %127 = vector.broadcast %cst_48 : f32 to vector<16x8xf32>
    %128 = arith.mulf %127, %126 : vector<16x8xf32>
    %cst_49 = arith.constant -1.45315206 : f32
    %129 = vector.broadcast %cst_49 : f32 to vector<16x8xf32>
    %130 = arith.addf %128, %129 : vector<16x8xf32>
    %131 = arith.mulf %130, %126 : vector<16x8xf32>
    %cst_50 = arith.constant 1.42141378 : f32
    %132 = vector.broadcast %cst_50 : f32 to vector<16x8xf32>
    %133 = arith.addf %131, %132 : vector<16x8xf32>
    %134 = arith.mulf %133, %126 : vector<16x8xf32>
    %cst_51 = arith.constant -0.284496725 : f32
    %135 = vector.broadcast %cst_51 : f32 to vector<16x8xf32>
    %136 = arith.addf %134, %135 : vector<16x8xf32>
    %137 = arith.mulf %136, %126 : vector<16x8xf32>
    %cst_52 = arith.constant 0.254829586 : f32
    %138 = vector.broadcast %cst_52 : f32 to vector<16x8xf32>
    %139 = arith.addf %137, %138 : vector<16x8xf32>
    %140 = arith.mulf %139, %126 : vector<16x8xf32>
    %cst_53 = arith.constant 0.000000e+00 : f32
    %141 = vector.broadcast %cst_53 : f32 to vector<16x8xf32>
    %142 = arith.subf %141, %121 : vector<16x8xf32>
    %143 = arith.mulf %142, %121 : vector<16x8xf32>
    %144 = math.exp %143 : vector<16x8xf32>
    %145 = arith.mulf %140, %144 : vector<16x8xf32>
    %cst_54 = arith.constant 1.000000e+00 : f32
    %146 = vector.broadcast %cst_54 : f32 to vector<16x8xf32>
    %147 = arith.subf %146, %145 : vector<16x8xf32>
    %cst_55 = arith.constant 0.000000e+00 : f32
    %148 = vector.broadcast %cst_55 : f32 to vector<16x8xf32>
    %149 = arith.cmpf olt, %120, %148 : vector<16x8xf32>
    %cst_56 = arith.constant 0.000000e+00 : f32
    %150 = vector.broadcast %cst_56 : f32 to vector<16x8xf32>
    %151 = arith.subf %150, %147 : vector<16x8xf32>
    %152 = arith.select %149, %151, %147 : vector<16x8xi1>, vector<16x8xf32>
    %cst_57 = arith.constant 1.000000e+00 : f32
    %153 = vector.broadcast %cst_57 : f32 to vector<16x8xf32>
    %154 = arith.addf %153, %152 : vector<16x8xf32>
    %155 = arith.mulf %118, %154 : vector<16x8xf32>
    %156 = arith.truncf %155 : vector<16x8xf32> to vector<16x8xbf16>
    %c2_i32_58 = arith.constant 2 : i32
    %157 = tpu.dynamic_rotate %156 by %c2_i32_58 dim 0 : vector<16x8xbf16>, i32 -> vector<16x8xbf16>
    %c0_i32_59 = arith.constant 0 : i32
    %158 = arith.sitofp %c0_i32_59 : i32 to bf16
    %159 = vector.shape_cast %25 : vector<16x1xi1> to vector<16x1xi1>
    %160 = vector.broadcast %159 : vector<16x1xi1> to vector<16x8xi1>
    %161 = vector.broadcast %158 : bf16 to vector<16x8xbf16>
    %162 = arith.select %160, %157, %161 : vector<16x8xi1>, vector<16x8xbf16>
    %c0_i32_60 = arith.constant 0 : i32
    %163 = arith.sitofp %c0_i32_60 : i32 to bf16
    %164 = vector.shape_cast %34 : vector<16x1xi1> to vector<16x1xi1>
    %165 = vector.broadcast %164 : vector<16x1xi1> to vector<16x8xi1>
    %166 = vector.broadcast %163 : bf16 to vector<16x8xbf16>
    %167 = arith.select %165, %156, %166 : vector<16x8xi1>, vector<16x8xbf16>
    %c14_i32_61 = arith.constant 14 : i32
    %168 = tpu.dynamic_rotate %156 by %c14_i32_61 dim 0 : vector<16x8xbf16>, i32 -> vector<16x8xbf16>
    %c0_i32_62 = arith.constant 0 : i32
    %169 = arith.sitofp %c0_i32_62 : i32 to bf16
    %170 = vector.shape_cast %43 : vector<16x1xi1> to vector<16x1xi1>
    %171 = vector.broadcast %170 : vector<16x1xi1> to vector<16x8xi1>
    %172 = vector.broadcast %169 : bf16 to vector<16x8xbf16>
    %173 = arith.select %171, %168, %172 : vector<16x8xi1>, vector<16x8xbf16>
    %c0_63 = arith.constant 0 : index
    %c0_64 = arith.constant 0 : index
    %c0_65 = arith.constant 0 : index
    %174 = vector.load %arg4[%c0_63, %c0_64, %c0_65] : memref<3x8x8xbf16, #tpu.memory_space<vmem>>, vector<1x8x8xbf16>
    %175 = vector.shape_cast %174 : vector<1x8x8xbf16> to vector<8x8xbf16>
    %cst_66 = arith.constant dense<0.000000e+00> : vector<16x8xf32>
    %176 = tpu.matmul %162, %175, %cst_66 {dimension_numbers = #tpu.dot_dimension_numbers<[1], [0], [0], [1], [0, 0, 1, 1], [], []>} : vector<16x8xbf16>, vector<8x8xbf16>, vector<16x8xf32> -> vector<16x8xf32>
    %c1_67 = arith.constant 1 : index
    %c0_68 = arith.constant 0 : index
    %c0_69 = arith.constant 0 : index
    %177 = vector.load %arg4[%c1_67, %c0_68, %c0_69] : memref<3x8x8xbf16, #tpu.memory_space<vmem>>, vector<1x8x8xbf16>
    %178 = vector.shape_cast %177 : vector<1x8x8xbf16> to vector<8x8xbf16>
    %cst_70 = arith.constant dense<0.000000e+00> : vector<16x8xf32>
    %179 = tpu.matmul %167, %178, %cst_70 {dimension_numbers = #tpu.dot_dimension_numbers<[1], [0], [0], [1], [0, 0, 1, 1], [], []>} : vector<16x8xbf16>, vector<8x8xbf16>, vector<16x8xf32> -> vector<16x8xf32>
    %180 = arith.addf %176, %179 : vector<16x8xf32>
    %c2_71 = arith.constant 2 : index
    %c0_72 = arith.constant 0 : index
    %c0_73 = arith.constant 0 : index
    %181 = vector.load %arg4[%c2_71, %c0_72, %c0_73] : memref<3x8x8xbf16, #tpu.memory_space<vmem>>, vector<1x8x8xbf16>
    %182 = vector.shape_cast %181 : vector<1x8x8xbf16> to vector<8x8xbf16>
    %cst_74 = arith.constant dense<0.000000e+00> : vector<16x8xf32>
    %183 = tpu.matmul %173, %182, %cst_74 {dimension_numbers = #tpu.dot_dimension_numbers<[1], [0], [0], [1], [0, 0, 1, 1], [], []>} : vector<16x8xbf16>, vector<8x8xbf16>, vector<16x8xf32> -> vector<16x8xf32>
    %184 = arith.addf %180, %183 : vector<16x8xf32>
    %c0_75 = arith.constant 0 : index
    %c0_76 = arith.constant 0 : index
    %185 = vector.load %arg5[%c0_75, %c0_76] : memref<1x8xf32, #tpu.memory_space<vmem>>, vector<1x8xf32>
    %186 = vector.broadcast %185 : vector<1x8xf32> to vector<16x8xf32>
    %187 = arith.addf %184, %186 : vector<16x8xf32>
    %c0_77 = arith.constant 0 : index
    %c0_78 = arith.constant 0 : index
    %c0_79 = arith.constant 0 : index
    %188 = vector.load %arg1[%c0_77, %c0_78, %c0_79] : memref<1x16x4xf32, #tpu.memory_space<vmem>>, vector<1x16x4xf32>
    %189 = vector.shape_cast %188 : vector<1x16x4xf32> to vector<16x4xf32>
    %190 = arith.truncf %189 : vector<16x4xf32> to vector<16x4xbf16>
    %c0_80 = arith.constant 0 : index
    %c0_81 = arith.constant 0 : index
    %191 = vector.load %arg6[%c0_80, %c0_81] : memref<4x8xbf16, #tpu.memory_space<vmem>>, vector<4x8xbf16>
    %cst_82 = arith.constant dense<0.000000e+00> : vector<16x8xf32>
    %192 = tpu.matmul %190, %191, %cst_82 {dimension_numbers = #tpu.dot_dimension_numbers<[1], [0], [0], [1], [0, 0, 1, 1], [], []>} : vector<16x4xbf16>, vector<4x8xbf16>, vector<16x8xf32> -> vector<16x8xf32>
    %c0_83 = arith.constant 0 : index
    %c0_84 = arith.constant 0 : index
    %193 = vector.load %arg7[%c0_83, %c0_84] : memref<1x8xf32, #tpu.memory_space<vmem>>, vector<1x8xf32>
    %194 = vector.broadcast %193 : vector<1x8xf32> to vector<16x8xf32>
    %195 = arith.addf %192, %194 : vector<16x8xf32>
    %196 = arith.addf %187, %195 : vector<16x8xf32>
    %197 = vector.shape_cast %196 : vector<16x8xf32> to vector<1x16x8xf32>
    %c0_85 = arith.constant 0 : index
    %c0_86 = arith.constant 0 : index
    %c0_87 = arith.constant 0 : index
    %198 = vector.load %arg8[%c0_85, %c0_86, %c0_87] : memref<1x16x8xf32, #tpu.memory_space<vmem>>, vector<1x16x8xf32>
    tpu.vector_store %arg8[%c0_85, %c0_86, %c0_87], %197 {strides = array<i32>} : memref<1x16x8xf32, #tpu.memory_space<vmem>>, vector<1x16x8xf32>,
    return
  }
  func.func @transform_0(%arg0: i32) -> (i32, i32, i32) {
    %c0_i32 = arith.constant 0 : i32
    %c0_i32_0 = arith.constant 0 : i32
    %c0_i32_1 = arith.constant 0 : i32
    return %arg0, %c0_i32, %c0_i32_0 : i32, i32, i32
  }
  func.func @transform_1(%arg0: i32) -> (i32, i32, i32) {
    %c0_i32 = arith.constant 0 : i32
    %c0_i32_0 = arith.constant 0 : i32
    %c0_i32_1 = arith.constant 0 : i32
    %c0_i32_2 = arith.constant 0 : i32
    return %c0_i32, %c0_i32_0, %c0_i32_1 : i32, i32, i32
  }
  func.func @transform_2(%arg0: i32) -> (i32, i32) {
    %c0_i32 = arith.constant 0 : i32
    %c0_i32_0 = arith.constant 0 : i32
    %c0_i32_1 = arith.constant 0 : i32
    return %c0_i32, %c0_i32_0 : i32, i32
  }
  func.func @transform_3(%arg0: i32) -> (i32, i32, i32) {
    %c0_i32 = arith.constant 0 : i32
    %c0_i32_0 = arith.constant 0 : i32
    %c0_i32_1 = arith.constant 0 : i32
    %c0_i32_2 = arith.constant 0 : i32
    return %c0_i32, %c0_i32_0, %c0_i32_1 : i32, i32, i32
  }
  func.func @transform_4(%arg0: i32) -> (i32, i32) {
    %c0_i32 = arith.constant 0 : i32
    %c0_i32_0 = arith.constant 0 : i32
    %c0_i32_1 = arith.constant 0 : i32
    return %c0_i32, %c0_i32_0 : i32, i32
  }
  func.func @transform_5(%arg0: i32) -> (i32, i32) {
    %c0_i32 = arith.constant 0 : i32
    %c0_i32_0 = arith.constant 0 : i32
    %c0_i32_1 = arith.constant 0 : i32
    return %c0_i32, %c0_i32_0 : i32, i32
  }
  func.func @transform_6(%arg0: i32) -> (i32, i32) {
    %c0_i32 = arith.constant 0 : i32
    %c0_i32_0 = arith.constant 0 : i32
    %c0_i32_1 = arith.constant 0 : i32
    return %c0_i32, %c0_i32_0 : i32, i32
  }
  func.func @transform_7(%arg0: i32) -> (i32, i32, i32) {
    %c0_i32 = arith.constant 0 : i32
    %c0_i32_0 = arith.constant 0 : i32
    %c0_i32_1 = arith.constant 0 : i32
    return %arg0, %c0_i32, %c0_i32_0 : i32, i32, i32
  }
}

module attributes {stable_mosaic.version = 11 : i64} {
  func.func @kernel(%arg0: i32, %arg1: memref<1x16x4xf32, #tpu.memory_space<vmem>>, %arg2: memref<3x4x8xbf16, #tpu.memory_space<vmem>>, %arg3: memref<1x8xf32, #tpu.memory_space<vmem>>, %arg4: memref<3x8x8xbf16, #tpu.memory_space<vmem>>, %arg5: memref<1x8xf32, #tpu.memory_space<vmem>>, %arg6: memref<4x8xbf16, #tpu.memory_space<vmem>>, %arg7: memref<1x8xf32, #tpu.memory_space<vmem>>, %arg8: memref<1x16x8xf32, #tpu.memory_space<vmem>>) attributes {dimension_semantics = [#tpu.dimension_semantics<parallel>], iteration_bounds = array<i64: 2>, scalar_prefetch = 0 : i64, scratch_operands = 0 : i64, tpu.core_type = #tpu.core_type<tc>, window_params = [{transform_indices = @transform_0, window_bounds = array<i64: 1, 16, 4>}, {pipeline_mode = #tpu.pipeline_mode<synchronous>, transform_indices = @transform_1, window_bounds = array<i64: 3, 4, 8>}, {pipeline_mode = #tpu.pipeline_mode<synchronous>, transform_indices = @transform_2, window_bounds = array<i64: 1, 8>}, {pipeline_mode = #tpu.pipeline_mode<synchronous>, transform_indices = @transform_3, window_bounds = array<i64: 3, 8, 8>}, {pipeline_mode = #tpu.pipeline_mode<synchronous>, transform_indices = @transform_4, window_bounds = array<i64: 1, 8>}, {pipeline_mode = #tpu.pipeline_mode<synchronous>, transform_indices = @transform_5, window_bounds = array<i64: 4, 8>}, {pipeline_mode = #tpu.pipeline_mode<synchronous>, transform_indices = @transform_6, window_bounds = array<i64: 1, 8>}, {transform_indices = @transform_7, window_bounds = array<i64: 1, 16, 8>}]} {
    %0 = tpu.iota {dimensions = array<i32: 0>} : vector<16x1xi32>
    %c16_i32 = arith.constant 16 : i32
    %c0_i32 = arith.constant 0 : i32
    %1 = arith.cmpi eq, %c16_i32, %c0_i32 : i32
    %c1_i32 = arith.constant 1 : i32
    %2 = arith.select %1, %c1_i32, %c16_i32 : i32
    %3 = vector.broadcast %2 : i32 to vector<16x1xi32>
    %4 = arith.remsi %0, %3 : vector<16x1xi32>
    %c0_i32_0 = arith.constant 0 : i32
    %5 = vector.broadcast %c0_i32_0 : i32 to vector<16x1xi32>
    %6 = arith.cmpi ne, %4, %5 : vector<16x1xi32>
    %c0_i32_1 = arith.constant 0 : i32
    %7 = vector.broadcast %c0_i32_1 : i32 to vector<16x1xi32>
    %8 = arith.cmpi slt, %4, %7 : vector<16x1xi32>
    %c0_i32_2 = arith.constant 0 : i32
    %9 = arith.cmpi slt, %2, %c0_i32_2 : i32
    %10 = vector.broadcast %9 : i1 to vector<16x1xi1>
    %11 = vector.broadcast %10 : vector<16x1xi1> to vector<16x1xi1>
    %12 = arith.xori %8, %11 : vector<16x1xi1>
    %13 = arith.andi %12, %6 : vector<16x1xi1>
    %14 = vector.broadcast %2 : i32 to vector<16x1xi32>
    %15 = arith.addi %4, %14 : vector<16x1xi32>
    %16 = arith.select %13, %15, %4 : vector<16x1xi1>, vector<16x1xi32>
    %c-2_i32 = arith.constant -2 : i32
    %17 = vector.broadcast %c-2_i32 : i32 to vector<16x1xi32>
    %18 = arith.addi %16, %17 : vector<16x1xi32>
    %c0_i32_3 = arith.constant 0 : i32
    %19 = vector.broadcast %c0_i32_3 : i32 to vector<16x1xi32>
    %20 = arith.cmpi sge, %18, %19 : vector<16x1xi32>
    %c-2_i32_4 = arith.constant -2 : i32
    %21 = vector.broadcast %c-2_i32_4 : i32 to vector<16x1xi32>
    %22 = arith.addi %16, %21 : vector<16x1xi32>
    %c16_i32_5 = arith.constant 16 : i32
    %23 = vector.broadcast %c16_i32_5 : i32 to vector<16x1xi32>
    %24 = arith.cmpi slt, %22, %23 : vector<16x1xi32>
    %25 = arith.andi %20, %24 : vector<16x1xi1>
    %c0_i32_6 = arith.constant 0 : i32
    %26 = vector.broadcast %c0_i32_6 : i32 to vector<16x1xi32>
    %27 = arith.addi %16, %26 : vector<16x1xi32>
    %c0_i32_7 = arith.constant 0 : i32
    %28 = vector.broadcast %c0_i32_7 : i32 to vector<16x1xi32>
    %29 = arith.cmpi sge, %27, %28 : vector<16x1xi32>
    %c0_i32_8 = arith.constant 0 : i32
    %30 = vector.broadcast %c0_i32_8 : i32 to vector<16x1xi32>
    %31 = arith.addi %16, %30 : vector<16x1xi32>
    %c16_i32_9 = arith.constant 16 : i32
    %32 = vector.broadcast %c16_i32_9 : i32 to vector<16x1xi32>
    %33 = arith.cmpi slt, %31, %32 : vector<16x1xi32>
    %34 = arith.andi %29, %33 : vector<16x1xi1>
    %c2_i32 = arith.constant 2 : i32
    %35 = vector.broadcast %c2_i32 : i32 to vector<16x1xi32>
    %36 = arith.addi %16, %35 : vector<16x1xi32>
    %c0_i32_10 = arith.constant 0 : i32
    %37 = vector.broadcast %c0_i32_10 : i32 to vector<16x1xi32>
    %38 = arith.cmpi sge, %36, %37 : vector<16x1xi32>
    %c2_i32_11 = arith.constant 2 : i32
    %39 = vector.broadcast %c2_i32_11 : i32 to vector<16x1xi32>
    %40 = arith.addi %16, %39 : vector<16x1xi32>
    %c16_i32_12 = arith.constant 16 : i32
    %41 = vector.broadcast %c16_i32_12 : i32 to vector<16x1xi32>
    %42 = arith.cmpi slt, %40, %41 : vector<16x1xi32>
    %43 = arith.andi %38, %42 : vector<16x1xi1>
    %c0 = arith.constant 0 : index
    %c0_13 = arith.constant 0 : index
    %c0_14 = arith.constant 0 : index
    %44 = vector.load %arg1[%c0, %c0_13, %c0_14] : memref<1x16x4xf32, #tpu.memory_space<vmem>>, vector<1x16x4xf32>
    %45 = vector.shape_cast %44 : vector<1x16x4xf32> to vector<16x4xf32>
    %cst = arith.constant 5.000000e-01 : f32
    %46 = vector.broadcast %cst : f32 to vector<16x4xf32>
    %47 = arith.mulf %46, %45 : vector<16x4xf32>
    %cst_15 = arith.constant 0.707106769 : f32
    %48 = vector.broadcast %cst_15 : f32 to vector<16x4xf32>
    %49 = arith.mulf %45, %48 : vector<16x4xf32>
    %50 = math.absf %49 : vector<16x4xf32>
    %cst_16 = arith.constant 0.327591091 : f32
    %51 = vector.broadcast %cst_16 : f32 to vector<16x4xf32>
    %52 = arith.mulf %51, %50 : vector<16x4xf32>
    %cst_17 = arith.constant 1.000000e+00 : f32
    %53 = vector.broadcast %cst_17 : f32 to vector<16x4xf32>
    %54 = arith.addf %53, %52 : vector<16x4xf32>
    %55 = tpu.reciprocal %54 {approx = true} : vector<16x4xf32> -> vector<16x4xf32>
    %cst_18 = arith.constant 1.06140542 : f32
    %56 = vector.broadcast %cst_18 : f32 to vector<16x4xf32>
    %57 = arith.mulf %56, %55 : vector<16x4xf32>
    %cst_19 = arith.constant -1.45315206 : f32
    %58 = vector.broadcast %cst_19 : f32 to vector<16x4xf32>
    %59 = arith.addf %57, %58 : vector<16x4xf32>
    %60 = arith.mulf %59, %55 : vector<16x4xf32>
    %cst_20 = arith.constant 1.42141378 : f32
    %61 = vector.broadcast %cst_20 : f32 to vector<16x4xf32>
    %62 = arith.addf %60, %61 : vector<16x4xf32>
    %63 = arith.mulf %62, %55 : vector<16x4xf32>
    %cst_21 = arith.constant -0.284496725 : f32
    %64 = vector.broadcast %cst_21 : f32 to vector<16x4xf32>
    %65 = arith.addf %63, %64 : vector<16x4xf32>
    %66 = arith.mulf %65, %55 : vector<16x4xf32>
    %cst_22 = arith.constant 0.254829586 : f32
    %67 = vector.broadcast %cst_22 : f32 to vector<16x4xf32>
    %68 = arith.addf %66, %67 : vector<16x4xf32>
    %69 = arith.mulf %68, %55 : vector<16x4xf32>
    %cst_23 = arith.constant 0.000000e+00 : f32
    %70 = vector.broadcast %cst_23 : f32 to vector<16x4xf32>
    %71 = arith.subf %70, %50 : vector<16x4xf32>
    %72 = arith.mulf %71, %50 : vector<16x4xf32>
    %73 = math.exp %72 : vector<16x4xf32>
    %74 = arith.mulf %69, %73 : vector<16x4xf32>
    %cst_24 = arith.constant 1.000000e+00 : f32
    %75 = vector.broadcast %cst_24 : f32 to vector<16x4xf32>
    %76 = arith.subf %75, %74 : vector<16x4xf32>
    %cst_25 = arith.constant 0.000000e+00 : f32
    %77 = vector.broadcast %cst_25 : f32 to vector<16x4xf32>
    %78 = arith.cmpf olt, %49, %77 : vector<16x4xf32>
    %cst_26 = arith.constant 0.000000e+00 : f32
    %79 = vector.broadcast %cst_26 : f32 to vector<16x4xf32>
    %80 = arith.subf %79, %76 : vector<16x4xf32>
    %81 = arith.select %78, %80, %76 : vector<16x4xi1>, vector<16x4xf32>
    %cst_27 = arith.constant 1.000000e+00 : f32
    %82 = vector.broadcast %cst_27 : f32 to vector<16x4xf32>
    %83 = arith.addf %82, %81 : vector<16x4xf32>
    %84 = arith.mulf %47, %83 : vector<16x4xf32>
    %85 = arith.truncf %84 : vector<16x4xf32> to vector<16x4xbf16>
    %c2_i32_28 = arith.constant 2 : i32
    %86 = tpu.dynamic_rotate %85 by %c2_i32_28 dim 0 : vector<16x4xbf16>, i32 -> vector<16x4xbf16>
    %c0_i32_29 = arith.constant 0 : i32
    %87 = arith.sitofp %c0_i32_29 : i32 to bf16
    %88 = vector.shape_cast %25 : vector<16x1xi1> to vector<16x1xi1>
    %89 = vector.broadcast %88 : vector<16x1xi1> to vector<16x4xi1>
    %90 = vector.broadcast %87 : bf16 to vector<16x4xbf16>
    %91 = arith.select %89, %86, %90 : vector<16x4xi1>, vector<16x4xbf16>
    %c0_i32_30 = arith.constant 0 : i32
    %92 = arith.sitofp %c0_i32_30 : i32 to bf16
    %93 = vector.shape_cast %34 : vector<16x1xi1> to vector<16x1xi1>
    %94 = vector.broadcast %93 : vector<16x1xi1> to vector<16x4xi1>
    %95 = vector.broadcast %92 : bf16 to vector<16x4xbf16>
    %96 = arith.select %94, %85, %95 : vector<16x4xi1>, vector<16x4xbf16>
    %c14_i32 = arith.constant 14 : i32
    %97 = tpu.dynamic_rotate %85 by %c14_i32 dim 0 : vector<16x4xbf16>, i32 -> vector<16x4xbf16>
    %c0_i32_31 = arith.constant 0 : i32
    %98 = arith.sitofp %c0_i32_31 : i32 to bf16
    %99 = vector.shape_cast %43 : vector<16x1xi1> to vector<16x1xi1>
    %100 = vector.broadcast %99 : vector<16x1xi1> to vector<16x4xi1>
    %101 = vector.broadcast %98 : bf16 to vector<16x4xbf16>
    %102 = arith.select %100, %97, %101 : vector<16x4xi1>, vector<16x4xbf16>
    %c0_32 = arith.constant 0 : index
    %c0_33 = arith.constant 0 : index
    %c0_34 = arith.constant 0 : index
    %103 = vector.load %arg2[%c0_32, %c0_33, %c0_34] : memref<3x4x8xbf16, #tpu.memory_space<vmem>>, vector<1x4x8xbf16>
    %104 = vector.shape_cast %103 : vector<1x4x8xbf16> to vector<4x8xbf16>
    %cst_35 = arith.constant dense<0.000000e+00> : vector<16x8xf32>
    %105 = tpu.matmul %91, %104, %cst_35 {dimension_numbers = #tpu.dot_dimension_numbers<[1], [0], [0], [1], [0, 0, 1, 1], [], []>} : vector<16x4xbf16>, vector<4x8xbf16>, vector<16x8xf32> -> vector<16x8xf32>
    %c1 = arith.constant 1 : index
    %c0_36 = arith.constant 0 : index
    %c0_37 = arith.constant 0 : index
    %106 = vector.load %arg2[%c1, %c0_36, %c0_37] : memref<3x4x8xbf16, #tpu.memory_space<vmem>>, vector<1x4x8xbf16>
    %107 = vector.shape_cast %106 : vector<1x4x8xbf16> to vector<4x8xbf16>
    %cst_38 = arith.constant dense<0.000000e+00> : vector<16x8xf32>
    %108 = tpu.matmul %96, %107, %cst_38 {dimension_numbers = #tpu.dot_dimension_numbers<[1], [0], [0], [1], [0, 0, 1, 1], [], []>} : vector<16x4xbf16>, vector<4x8xbf16>, vector<16x8xf32> -> vector<16x8xf32>
    %109 = arith.addf %105, %108 : vector<16x8xf32>
    %c2 = arith.constant 2 : index
    %c0_39 = arith.constant 0 : index
    %c0_40 = arith.constant 0 : index
    %110 = vector.load %arg2[%c2, %c0_39, %c0_40] : memref<3x4x8xbf16, #tpu.memory_space<vmem>>, vector<1x4x8xbf16>
    %111 = vector.shape_cast %110 : vector<1x4x8xbf16> to vector<4x8xbf16>
    %cst_41 = arith.constant dense<0.000000e+00> : vector<16x8xf32>
    %112 = tpu.matmul %102, %111, %cst_41 {dimension_numbers = #tpu.dot_dimension_numbers<[1], [0], [0], [1], [0, 0, 1, 1], [], []>} : vector<16x4xbf16>, vector<4x8xbf16>, vector<16x8xf32> -> vector<16x8xf32>
    %113 = arith.addf %109, %112 : vector<16x8xf32>
    %c0_42 = arith.constant 0 : index
    %c0_43 = arith.constant 0 : index
    %114 = vector.load %arg3[%c0_42, %c0_43] : memref<1x8xf32, #tpu.memory_space<vmem>>, vector<1x8xf32>
    %115 = vector.broadcast %114 : vector<1x8xf32> to vector<16x8xf32>
    %116 = arith.addf %113, %115 : vector<16x8xf32>
    %cst_44 = arith.constant 5.000000e-01 : f32
    %117 = vector.broadcast %cst_44 : f32 to vector<16x8xf32>
    %118 = arith.mulf %117, %116 : vector<16x8xf32>
    %cst_45 = arith.constant 0.707106769 : f32
    %119 = vector.broadcast %cst_45 : f32 to vector<16x8xf32>
    %120 = arith.mulf %116, %119 : vector<16x8xf32>
    %121 = math.absf %120 : vector<16x8xf32>
    %cst_46 = arith.constant 0.327591091 : f32
    %122 = vector.broadcast %cst_46 : f32 to vector<16x8xf32>
    %123 = arith.mulf %122, %121 : vector<16x8xf32>
    %cst_47 = arith.constant 1.000000e+00 : f32
    %124 = vector.broadcast %cst_47 : f32 to vector<16x8xf32>
    %125 = arith.addf %124, %123 : vector<16x8xf32>
    %126 = tpu.reciprocal %125 {approx = true} : vector<16x8xf32> -> vector<16x8xf32>
    %cst_48 = arith.constant 1.06140542 : f32
    %127 = vector.broadcast %cst_48 : f32 to vector<16x8xf32>
    %128 = arith.mulf %127, %126 : vector<16x8xf32>
    %cst_49 = arith.constant -1.45315206 : f32
    %129 = vector.broadcast %cst_49 : f32 to vector<16x8xf32>
    %130 = arith.addf %128, %129 : vector<16x8xf32>
    %131 = arith.mulf %130, %126 : vector<16x8xf32>
    %cst_50 = arith.constant 1.42141378 : f32
    %132 = vector.broadcast %cst_50 : f32 to vector<16x8xf32>
    %133 = arith.addf %131, %132 : vector<16x8xf32>
    %134 = arith.mulf %133, %126 : vector<16x8xf32>
    %cst_51 = arith.constant -0.284496725 : f32
    %135 = vector.broadcast %cst_51 : f32 to vector<16x8xf32>
    %136 = arith.addf %134, %135 : vector<16x8xf32>
    %137 = arith.mulf %136, %126 : vector<16x8xf32>
    %cst_52 = arith.constant 0.254829586 : f32
    %138 = vector.broadcast %cst_52 : f32 to vector<16x8xf32>
    %139 = arith.addf %137, %138 : vector<16x8xf32>
    %140 = arith.mulf %139, %126 : vector<16x8xf32>
    %cst_53 = arith.constant 0.000000e+00 : f32
    %141 = vector.broadcast %cst_53 : f32 to vector<16x8xf32>
    %142 = arith.subf %141, %121 : vector<16x8xf32>
    %143 = arith.mulf %142, %121 : vector<16x8xf32>
    %144 = math.exp %143 : vector<16x8xf32>
    %145 = arith.mulf %140, %144 : vector<16x8xf32>
    %cst_54 = arith.constant 1.000000e+00 : f32
    %146 = vector.broadcast %cst_54 : f32 to vector<16x8xf32>
    %147 = arith.subf %146, %145 : vector<16x8xf32>
    %cst_55 = arith.constant 0.000000e+00 : f32
    %148 = vector.broadcast %cst_55 : f32 to vector<16x8xf32>
    %149 = arith.cmpf olt, %120, %148 : vector<16x8xf32>
    %cst_56 = arith.constant 0.000000e+00 : f32
    %150 = vector.broadcast %cst_56 : f32 to vector<16x8xf32>
    %151 = arith.subf %150, %147 : vector<16x8xf32>
    %152 = arith.select %149, %151, %147 : vector<16x8xi1>, vector<16x8xf32>
    %cst_57 = arith.constant 1.000000e+00 : f32
    %153 = vector.broadcast %cst_57 : f32 to vector<16x8xf32>
    %154 = arith.addf %153, %152 : vector<16x8xf32>
    %155 = arith.mulf %118, %154 : vector<16x8xf32>
    %156 = arith.truncf %155 : vector<16x8xf32> to vector<16x8xbf16>
    %c2_i32_58 = arith.constant 2 : i32
    %157 = tpu.dynamic_rotate %156 by %c2_i32_58 dim 0 : vector<16x8xbf16>, i32 -> vector<16x8xbf16>
    %c0_i32_59 = arith.constant 0 : i32
    %158 = arith.sitofp %c0_i32_59 : i32 to bf16
    %159 = vector.shape_cast %25 : vector<16x1xi1> to vector<16x1xi1>
    %160 = vector.broadcast %159 : vector<16x1xi1> to vector<16x8xi1>
    %161 = vector.broadcast %158 : bf16 to vector<16x8xbf16>
    %162 = arith.select %160, %157, %161 : vector<16x8xi1>, vector<16x8xbf16>
    %c0_i32_60 = arith.constant 0 : i32
    %163 = arith.sitofp %c0_i32_60 : i32 to bf16
    %164 = vector.shape_cast %34 : vector<16x1xi1> to vector<16x1xi1>
    %165 = vector.broadcast %164 : vector<16x1xi1> to vector<16x8xi1>
    %166 = vector.broadcast %163 : bf16 to vector<16x8xbf16>
    %167 = arith.select %165, %156, %166 : vector<16x8xi1>, vector<16x8xbf16>
    %c14_i32_61 = arith.constant 14 : i32
    %168 = tpu.dynamic_rotate %156 by %c14_i32_61 dim 0 : vector<16x8xbf16>, i32 -> vector<16x8xbf16>
    %c0_i32_62 = arith.constant 0 : i32
    %169 = arith.sitofp %c0_i32_62 : i32 to bf16
    %170 = vector.shape_cast %43 : vector<16x1xi1> to vector<16x1xi1>
    %171 = vector.broadcast %170 : vector<16x1xi1> to vector<16x8xi1>
    %172 = vector.broadcast %169 : bf16 to vector<16x8xbf16>
    %173 = arith.select %171, %168, %172 : vector<16x8xi1>, vector<16x8xbf16>
    %c0_63 = arith.constant 0 : index
    %c0_64 = arith.constant 0 : index
    %c0_65 = arith.constant 0 : index
    %174 = vector.load %arg4[%c0_63, %c0_64, %c0_65] : memref<3x8x8xbf16, #tpu.memory_space<vmem>>, vector<1x8x8xbf16>
    %175 = vector.shape_cast %174 : vector<1x8x8xbf16> to vector<8x8xbf16>
    %cst_66 = arith.constant dense<0.000000e+00> : vector<16x8xf32>
    %176 = tpu.matmul %162, %175, %cst_66 {dimension_numbers = #tpu.dot_dimension_numbers<[1], [0], [0], [1], [0, 0, 1, 1], [], []>} : vector<16x8xbf16>, vector<8x8xbf16>, vector<16x8xf32> -> vector<16x8xf32>
    %c1_67 = arith.constant 1 : index
    %c0_68 = arith.constant 0 : index
    %c0_69 = arith.constant 0 : index
    %177 = vector.load %arg4[%c1_67, %c0_68, %c0_69] : memref<3x8x8xbf16, #tpu.memory_space<vmem>>, vector<1x8x8xbf16>
    %178 = vector.shape_cast %177 : vector<1x8x8xbf16> to vector<8x8xbf16>
    %cst_70 = arith.constant dense<0.000000e+00> : vector<16x8xf32>
    %179 = tpu.matmul %167, %178, %cst_70 {dimension_numbers = #tpu.dot_dimension_numbers<[1], [0], [0], [1], [0, 0, 1, 1], [], []>} : vector<16x8xbf16>, vector<8x8xbf16>, vector<16x8xf32> -> vector<16x8xf32>
    %180 = arith.addf %176, %179 : vector<16x8xf32>
    %c2_71 = arith.constant 2 : index
    %c0_72 = arith.constant 0 : index
    %c0_73 = arith.constant 0 : index
    %181 = vector.load %arg4[%c2_71, %c0_72, %c0_73] : memref<3x8x8xbf16, #tpu.memory_space<vmem>>, vector<1x8x8xbf16>
    %182 = vector.shape_cast %181 : vector<1x8x8xbf16> to vector<8x8xbf16>
    %cst_74 = arith.constant dense<0.000000e+00> : vector<16x8xf32>
    %183 = tpu.matmul %173, %182, %cst_74 {dimension_numbers = #tpu.dot_dimension_numbers<[1], [0], [0], [1], [0, 0, 1, 1], [], []>} : vector<16x8xbf16>, vector<8x8xbf16>, vector<16x8xf32> -> vector<16x8xf32>
    %184 = arith.addf %180, %183 : vector<16x8xf32>
    %c0_75 = arith.constant 0 : index
    %c0_76 = arith.constant 0 : index
    %185 = vector.load %arg5[%c0_75, %c0_76] : memref<1x8xf32, #tpu.memory_space<vmem>>, vector<1x8xf32>
    %186 = vector.broadcast %185 : vector<1x8xf32> to vector<16x8xf32>
    %187 = arith.addf %184, %186 : vector<16x8xf32>
    %c0_77 = arith.constant 0 : index
    %c0_78 = arith.constant 0 : index
    %c0_79 = arith.constant 0 : index
    %188 = vector.load %arg1[%c0_77, %c0_78, %c0_79] : memref<1x16x4xf32, #tpu.memory_space<vmem>>, vector<1x16x4xf32>
    %189 = vector.shape_cast %188 : vector<1x16x4xf32> to vector<16x4xf32>
    %190 = arith.truncf %189 : vector<16x4xf32> to vector<16x4xbf16>
    %c0_80 = arith.constant 0 : index
    %c0_81 = arith.constant 0 : index
    %191 = vector.load %arg6[%c0_80, %c0_81] : memref<4x8xbf16, #tpu.memory_space<vmem>>, vector<4x8xbf16>
    %cst_82 = arith.constant dense<0.000000e+00> : vector<16x8xf32>
    %192 = tpu.matmul %190, %191, %cst_82 {dimension_numbers = #tpu.dot_dimension_numbers<[1], [0], [0], [1], [0, 0, 1, 1], [], []>} : vector<16x4xbf16>, vector<4x8xbf16>, vector<16x8xf32> -> vector<16x8xf32>
    %c0_83 = arith.constant 0 : index
    %c0_84 = arith.constant 0 : index
    %193 = vector.load %arg7[%c0_83, %c0_84] : memref<1x8xf32, #tpu.memory_space<vmem>>, vector<1x8xf32>
    %194 = vector.broadcast %193 : vector<1x8xf32> to vector<16x8xf32>
    %195 = arith.addf %192, %194 : vector<16x8xf32>
    %196 = arith.addf %187, %195 : vector<16x8xf32>
    %197 = vector.shape_cast %196 : vector<16x8xf32> to vector<1x16x8xf32>
    %c0_85 = arith.constant 0 : index
    %c0_86 = arith.constant 0 : index
    %c0_87 = arith.constant 0 : index
    %198 = vector.load %arg8[%c0_85, %c0_86, %c0_87] : memref<1x16x8xf32, #tpu.memory_space<vmem>>, vector<1x16x8xf32>
    tpu.vector_store %arg8[%c0_85, %c0_86, %c0_87], %197 {strides = array<i32>} : memref<1x16x8xf32, #tpu.memory_space<vmem>>, vector<1x16x8xf32>,
    return
  }
  func.func @transform_0(%arg0: i32) -> (i32, i32, i32) {
    %c0_i32 = arith.constant 0 : i32
    %c0_i32_0 = arith.constant 0 : i32
    %c0_i32_1 = arith.constant 0 : i32
    return %arg0, %c0_i32, %c0_i32_0 : i32, i32, i32
  }
  func.func @transform_1(%arg0: i32) -> (i32, i32, i32) {
    %c0_i32 = arith.constant 0 : i32
    %c0_i32_0 = arith.constant 0 : i32
    %c0_i32_1 = arith.constant 0 : i32
    %c0_i32_2 = arith.constant 0 : i32
    return %c0_i32, %c0_i32_0, %c0_i32_1 : i32, i32, i32
  }
  func.func @transform_2(%arg0: i32) -> (i32, i32) {
    %c0_i32 = arith.constant 0 : i32
    %c0_i32_0 = arith.constant 0 : i32
    %c0_i32_1 = arith.constant 0 : i32
    return %c0_i32, %c0_i32_0 : i32, i32
  }
  func.func @transform_3(%arg0: i32) -> (i32, i32, i32) {
    %c0_i32 = arith.constant 0 : i32
    %c0_i32_0 = arith.constant 0 : i32
    %c0_i32_1 = arith.constant 0 : i32
    %c0_i32_2 = arith.constant 0 : i32
    return %c0_i32, %c0_i32_0, %c0_i32_1 : i32, i32, i32
  }
  func.func @transform_4(%arg0: i32) -> (i32, i32) {
    %c0_i32 = arith.constant 0 : i32
    %c0_i32_0 = arith.constant 0 : i32
    %c0_i32_1 = arith.constant 0 : i32
    return %c0_i32, %c0_i32_0 : i32, i32
  }
  func.func @transform_5(%arg0: i32) -> (i32, i32) {
    %c0_i32 = arith.constant 0 : i32
    %c0_i32_0 = arith.constant 0 : i32
    %c0_i32_1 = arith.constant 0 : i32
    return %c0_i32, %c0_i32_0 : i32, i32
  }
  func.func @transform_6(%arg0: i32) -> (i32, i32) {
    %c0_i32 = arith.constant 0 : i32
    %c0_i32_0 = arith.constant 0 : i32
    %c0_i32_1 = arith.constant 0 : i32
    return %c0_i32, %c0_i32_0 : i32, i32
  }
  func.func @transform_7(%arg0: i32) -> (i32, i32, i32) {
    %c0_i32 = arith.constant 0 : i32
    %c0_i32_0 = arith.constant 0 : i32
    %c0_i32_1 = arith.constant 0 : i32
    return %arg0, %c0_i32, %c0_i32_0 : i32, i32, i32
  }
}

module attributes {stable_mosaic.version = 11 : i64} {
  func.func @kernel(%arg0: i32, %arg1: memref<1x16x4xf32, #tpu.memory_space<vmem>>, %arg2: memref<3x4x8xbf16, #tpu.memory_space<vmem>>, %arg3: memref<1x8xf32, #tpu.memory_space<vmem>>, %arg4: memref<3x8x8xbf16, #tpu.memory_space<vmem>>, %arg5: memref<1x8xf32, #tpu.memory_space<vmem>>, %arg6: memref<4x8xbf16, #tpu.memory_space<vmem>>, %arg7: memref<1x8xf32, #tpu.memory_space<vmem>>, %arg8: memref<1x16x8xf32, #tpu.memory_space<vmem>>) attributes {dimension_semantics = [#tpu.dimension_semantics<parallel>], iteration_bounds = array<i64: 2>, scalar_prefetch = 0 : i64, scratch_operands = 0 : i64, tpu.core_type = #tpu.core_type<tc>, window_params = [{transform_indices = @transform_0, window_bounds = array<i64: 1, 16, 4>}, {pipeline_mode = #tpu.pipeline_mode<synchronous>, transform_indices = @transform_1, window_bounds = array<i64: 3, 4, 8>}, {pipeline_mode = #tpu.pipeline_mode<synchronous>, transform_indices = @transform_2, window_bounds = array<i64: 1, 8>}, {pipeline_mode = #tpu.pipeline_mode<synchronous>, transform_indices = @transform_3, window_bounds = array<i64: 3, 8, 8>}, {pipeline_mode = #tpu.pipeline_mode<synchronous>, transform_indices = @transform_4, window_bounds = array<i64: 1, 8>}, {pipeline_mode = #tpu.pipeline_mode<synchronous>, transform_indices = @transform_5, window_bounds = array<i64: 4, 8>}, {pipeline_mode = #tpu.pipeline_mode<synchronous>, transform_indices = @transform_6, window_bounds = array<i64: 1, 8>}, {transform_indices = @transform_7, window_bounds = array<i64: 1, 16, 8>}]} {
    %0 = tpu.iota {dimensions = array<i32: 0>} : vector<16x1xi32>
    %c16_i32 = arith.constant 16 : i32
    %c0_i32 = arith.constant 0 : i32
    %1 = arith.cmpi eq, %c16_i32, %c0_i32 : i32
    %c1_i32 = arith.constant 1 : i32
    %2 = arith.select %1, %c1_i32, %c16_i32 : i32
    %3 = vector.broadcast %2 : i32 to vector<16x1xi32>
    %4 = arith.remsi %0, %3 : vector<16x1xi32>
    %c0_i32_0 = arith.constant 0 : i32
    %5 = vector.broadcast %c0_i32_0 : i32 to vector<16x1xi32>
    %6 = arith.cmpi ne, %4, %5 : vector<16x1xi32>
    %c0_i32_1 = arith.constant 0 : i32
    %7 = vector.broadcast %c0_i32_1 : i32 to vector<16x1xi32>
    %8 = arith.cmpi slt, %4, %7 : vector<16x1xi32>
    %c0_i32_2 = arith.constant 0 : i32
    %9 = arith.cmpi slt, %2, %c0_i32_2 : i32
    %10 = vector.broadcast %9 : i1 to vector<16x1xi1>
    %11 = vector.broadcast %10 : vector<16x1xi1> to vector<16x1xi1>
    %12 = arith.xori %8, %11 : vector<16x1xi1>
    %13 = arith.andi %12, %6 : vector<16x1xi1>
    %14 = vector.broadcast %2 : i32 to vector<16x1xi32>
    %15 = arith.addi %4, %14 : vector<16x1xi32>
    %16 = arith.select %13, %15, %4 : vector<16x1xi1>, vector<16x1xi32>
    %c-2_i32 = arith.constant -2 : i32
    %17 = vector.broadcast %c-2_i32 : i32 to vector<16x1xi32>
    %18 = arith.addi %16, %17 : vector<16x1xi32>
    %c0_i32_3 = arith.constant 0 : i32
    %19 = vector.broadcast %c0_i32_3 : i32 to vector<16x1xi32>
    %20 = arith.cmpi sge, %18, %19 : vector<16x1xi32>
    %c-2_i32_4 = arith.constant -2 : i32
    %21 = vector.broadcast %c-2_i32_4 : i32 to vector<16x1xi32>
    %22 = arith.addi %16, %21 : vector<16x1xi32>
    %c16_i32_5 = arith.constant 16 : i32
    %23 = vector.broadcast %c16_i32_5 : i32 to vector<16x1xi32>
    %24 = arith.cmpi slt, %22, %23 : vector<16x1xi32>
    %25 = arith.andi %20, %24 : vector<16x1xi1>
    %c0_i32_6 = arith.constant 0 : i32
    %26 = vector.broadcast %c0_i32_6 : i32 to vector<16x1xi32>
    %27 = arith.addi %16, %26 : vector<16x1xi32>
    %c0_i32_7 = arith.constant 0 : i32
    %28 = vector.broadcast %c0_i32_7 : i32 to vector<16x1xi32>
    %29 = arith.cmpi sge, %27, %28 : vector<16x1xi32>
    %c0_i32_8 = arith.constant 0 : i32
    %30 = vector.broadcast %c0_i32_8 : i32 to vector<16x1xi32>
    %31 = arith.addi %16, %30 : vector<16x1xi32>
    %c16_i32_9 = arith.constant 16 : i32
    %32 = vector.broadcast %c16_i32_9 : i32 to vector<16x1xi32>
    %33 = arith.cmpi slt, %31, %32 : vector<16x1xi32>
    %34 = arith.andi %29, %33 : vector<16x1xi1>
    %c2_i32 = arith.constant 2 : i32
    %35 = vector.broadcast %c2_i32 : i32 to vector<16x1xi32>
    %36 = arith.addi %16, %35 : vector<16x1xi32>
    %c0_i32_10 = arith.constant 0 : i32
    %37 = vector.broadcast %c0_i32_10 : i32 to vector<16x1xi32>
    %38 = arith.cmpi sge, %36, %37 : vector<16x1xi32>
    %c2_i32_11 = arith.constant 2 : i32
    %39 = vector.broadcast %c2_i32_11 : i32 to vector<16x1xi32>
    %40 = arith.addi %16, %39 : vector<16x1xi32>
    %c16_i32_12 = arith.constant 16 : i32
    %41 = vector.broadcast %c16_i32_12 : i32 to vector<16x1xi32>
    %42 = arith.cmpi slt, %40, %41 : vector<16x1xi32>
    %43 = arith.andi %38, %42 : vector<16x1xi1>
    %c0 = arith.constant 0 : index
    %c0_13 = arith.constant 0 : index
    %c0_14 = arith.constant 0 : index
    %44 = vector.load %arg1[%c0, %c0_13, %c0_14] : memref<1x16x4xf32, #tpu.memory_space<vmem>>, vector<1x16x4xf32>
    %45 = vector.shape_cast %44 : vector<1x16x4xf32> to vector<16x4xf32>
    %cst = arith.constant 5.000000e-01 : f32
    %46 = vector.broadcast %cst : f32 to vector<16x4xf32>
    %47 = arith.mulf %46, %45 : vector<16x4xf32>
    %cst_15 = arith.constant 0.707106769 : f32
    %48 = vector.broadcast %cst_15 : f32 to vector<16x4xf32>
    %49 = arith.mulf %45, %48 : vector<16x4xf32>
    %50 = math.absf %49 : vector<16x4xf32>
    %cst_16 = arith.constant 0.327591091 : f32
    %51 = vector.broadcast %cst_16 : f32 to vector<16x4xf32>
    %52 = arith.mulf %51, %50 : vector<16x4xf32>
    %cst_17 = arith.constant 1.000000e+00 : f32
    %53 = vector.broadcast %cst_17 : f32 to vector<16x4xf32>
    %54 = arith.addf %53, %52 : vector<16x4xf32>
    %55 = tpu.reciprocal %54 {approx = true} : vector<16x4xf32> -> vector<16x4xf32>
    %cst_18 = arith.constant 1.06140542 : f32
    %56 = vector.broadcast %cst_18 : f32 to vector<16x4xf32>
    %57 = arith.mulf %56, %55 : vector<16x4xf32>
    %cst_19 = arith.constant -1.45315206 : f32
    %58 = vector.broadcast %cst_19 : f32 to vector<16x4xf32>
    %59 = arith.addf %57, %58 : vector<16x4xf32>
    %60 = arith.mulf %59, %55 : vector<16x4xf32>
    %cst_20 = arith.constant 1.42141378 : f32
    %61 = vector.broadcast %cst_20 : f32 to vector<16x4xf32>
    %62 = arith.addf %60, %61 : vector<16x4xf32>
    %63 = arith.mulf %62, %55 : vector<16x4xf32>
    %cst_21 = arith.constant -0.284496725 : f32
    %64 = vector.broadcast %cst_21 : f32 to vector<16x4xf32>
    %65 = arith.addf %63, %64 : vector<16x4xf32>
    %66 = arith.mulf %65, %55 : vector<16x4xf32>
    %cst_22 = arith.constant 0.254829586 : f32
    %67 = vector.broadcast %cst_22 : f32 to vector<16x4xf32>
    %68 = arith.addf %66, %67 : vector<16x4xf32>
    %69 = arith.mulf %68, %55 : vector<16x4xf32>
    %cst_23 = arith.constant 0.000000e+00 : f32
    %70 = vector.broadcast %cst_23 : f32 to vector<16x4xf32>
    %71 = arith.subf %70, %50 : vector<16x4xf32>
    %72 = arith.mulf %71, %50 : vector<16x4xf32>
    %73 = math.exp %72 : vector<16x4xf32>
    %74 = arith.mulf %69, %73 : vector<16x4xf32>
    %cst_24 = arith.constant 1.000000e+00 : f32
    %75 = vector.broadcast %cst_24 : f32 to vector<16x4xf32>
    %76 = arith.subf %75, %74 : vector<16x4xf32>
    %cst_25 = arith.constant 0.000000e+00 : f32
    %77 = vector.broadcast %cst_25 : f32 to vector<16x4xf32>
    %78 = arith.cmpf olt, %49, %77 : vector<16x4xf32>
    %cst_26 = arith.constant 0.000000e+00 : f32
    %79 = vector.broadcast %cst_26 : f32 to vector<16x4xf32>
    %80 = arith.subf %79, %76 : vector<16x4xf32>
    %81 = arith.select %78, %80, %76 : vector<16x4xi1>, vector<16x4xf32>
    %cst_27 = arith.constant 1.000000e+00 : f32
    %82 = vector.broadcast %cst_27 : f32 to vector<16x4xf32>
    %83 = arith.addf %82, %81 : vector<16x4xf32>
    %84 = arith.mulf %47, %83 : vector<16x4xf32>
    %c2_i32_28 = arith.constant 2 : i32
    %85 = tpu.dynamic_rotate %84 by %c2_i32_28 dim 0 : vector<16x4xf32>, i32 -> vector<16x4xf32>
    %86 = arith.truncf %85 : vector<16x4xf32> to vector<16x4xbf16>
    %c0_i32_29 = arith.constant 0 : i32
    %87 = arith.sitofp %c0_i32_29 : i32 to bf16
    %88 = vector.shape_cast %25 : vector<16x1xi1> to vector<16x1xi1>
    %89 = vector.broadcast %88 : vector<16x1xi1> to vector<16x4xi1>
    %90 = vector.broadcast %87 : bf16 to vector<16x4xbf16>
    %91 = arith.select %89, %86, %90 : vector<16x4xi1>, vector<16x4xbf16>
    %92 = arith.truncf %84 : vector<16x4xf32> to vector<16x4xbf16>
    %c0_i32_30 = arith.constant 0 : i32
    %93 = arith.sitofp %c0_i32_30 : i32 to bf16
    %94 = vector.shape_cast %34 : vector<16x1xi1> to vector<16x1xi1>
    %95 = vector.broadcast %94 : vector<16x1xi1> to vector<16x4xi1>
    %96 = vector.broadcast %93 : bf16 to vector<16x4xbf16>
    %97 = arith.select %95, %92, %96 : vector<16x4xi1>, vector<16x4xbf16>
    %c14_i32 = arith.constant 14 : i32
    %98 = tpu.dynamic_rotate %84 by %c14_i32 dim 0 : vector<16x4xf32>, i32 -> vector<16x4xf32>
    %99 = arith.truncf %98 : vector<16x4xf32> to vector<16x4xbf16>
    %c0_i32_31 = arith.constant 0 : i32
    %100 = arith.sitofp %c0_i32_31 : i32 to bf16
    %101 = vector.shape_cast %43 : vector<16x1xi1> to vector<16x1xi1>
    %102 = vector.broadcast %101 : vector<16x1xi1> to vector<16x4xi1>
    %103 = vector.broadcast %100 : bf16 to vector<16x4xbf16>
    %104 = arith.select %102, %99, %103 : vector<16x4xi1>, vector<16x4xbf16>
    %c0_32 = arith.constant 0 : index
    %c0_33 = arith.constant 0 : index
    %c0_34 = arith.constant 0 : index
    %105 = vector.load %arg2[%c0_32, %c0_33, %c0_34] : memref<3x4x8xbf16, #tpu.memory_space<vmem>>, vector<1x4x8xbf16>
    %106 = vector.shape_cast %105 : vector<1x4x8xbf16> to vector<4x8xbf16>
    %cst_35 = arith.constant dense<0.000000e+00> : vector<16x8xf32>
    %107 = tpu.matmul %91, %106, %cst_35 {dimension_numbers = #tpu.dot_dimension_numbers<[1], [0], [0], [1], [0, 0, 1, 1], [], []>} : vector<16x4xbf16>, vector<4x8xbf16>, vector<16x8xf32> -> vector<16x8xf32>
    %c1 = arith.constant 1 : index
    %c0_36 = arith.constant 0 : index
    %c0_37 = arith.constant 0 : index
    %108 = vector.load %arg2[%c1, %c0_36, %c0_37] : memref<3x4x8xbf16, #tpu.memory_space<vmem>>, vector<1x4x8xbf16>
    %109 = vector.shape_cast %108 : vector<1x4x8xbf16> to vector<4x8xbf16>
    %cst_38 = arith.constant dense<0.000000e+00> : vector<16x8xf32>
    %110 = tpu.matmul %97, %109, %cst_38 {dimension_numbers = #tpu.dot_dimension_numbers<[1], [0], [0], [1], [0, 0, 1, 1], [], []>} : vector<16x4xbf16>, vector<4x8xbf16>, vector<16x8xf32> -> vector<16x8xf32>
    %111 = arith.addf %107, %110 : vector<16x8xf32>
    %c2 = arith.constant 2 : index
    %c0_39 = arith.constant 0 : index
    %c0_40 = arith.constant 0 : index
    %112 = vector.load %arg2[%c2, %c0_39, %c0_40] : memref<3x4x8xbf16, #tpu.memory_space<vmem>>, vector<1x4x8xbf16>
    %113 = vector.shape_cast %112 : vector<1x4x8xbf16> to vector<4x8xbf16>
    %cst_41 = arith.constant dense<0.000000e+00> : vector<16x8xf32>
    %114 = tpu.matmul %104, %113, %cst_41 {dimension_numbers = #tpu.dot_dimension_numbers<[1], [0], [0], [1], [0, 0, 1, 1], [], []>} : vector<16x4xbf16>, vector<4x8xbf16>, vector<16x8xf32> -> vector<16x8xf32>
    %115 = arith.addf %111, %114 : vector<16x8xf32>
    %c0_42 = arith.constant 0 : index
    %c0_43 = arith.constant 0 : index
    %116 = vector.load %arg3[%c0_42, %c0_43] : memref<1x8xf32, #tpu.memory_space<vmem>>, vector<1x8xf32>
    %117 = vector.broadcast %116 : vector<1x8xf32> to vector<16x8xf32>
    %118 = arith.addf %115, %117 : vector<16x8xf32>
    %cst_44 = arith.constant 5.000000e-01 : f32
    %119 = vector.broadcast %cst_44 : f32 to vector<16x8xf32>
    %120 = arith.mulf %119, %118 : vector<16x8xf32>
    %cst_45 = arith.constant 0.707106769 : f32
    %121 = vector.broadcast %cst_45 : f32 to vector<16x8xf32>
    %122 = arith.mulf %118, %121 : vector<16x8xf32>
    %123 = math.absf %122 : vector<16x8xf32>
    %cst_46 = arith.constant 0.327591091 : f32
    %124 = vector.broadcast %cst_46 : f32 to vector<16x8xf32>
    %125 = arith.mulf %124, %123 : vector<16x8xf32>
    %cst_47 = arith.constant 1.000000e+00 : f32
    %126 = vector.broadcast %cst_47 : f32 to vector<16x8xf32>
    %127 = arith.addf %126, %125 : vector<16x8xf32>
    %128 = tpu.reciprocal %127 {approx = true} : vector<16x8xf32> -> vector<16x8xf32>
    %cst_48 = arith.constant 1.06140542 : f32
    %129 = vector.broadcast %cst_48 : f32 to vector<16x8xf32>
    %130 = arith.mulf %129, %128 : vector<16x8xf32>
    %cst_49 = arith.constant -1.45315206 : f32
    %131 = vector.broadcast %cst_49 : f32 to vector<16x8xf32>
    %132 = arith.addf %130, %131 : vector<16x8xf32>
    %133 = arith.mulf %132, %128 : vector<16x8xf32>
    %cst_50 = arith.constant 1.42141378 : f32
    %134 = vector.broadcast %cst_50 : f32 to vector<16x8xf32>
    %135 = arith.addf %133, %134 : vector<16x8xf32>
    %136 = arith.mulf %135, %128 : vector<16x8xf32>
    %cst_51 = arith.constant -0.284496725 : f32
    %137 = vector.broadcast %cst_51 : f32 to vector<16x8xf32>
    %138 = arith.addf %136, %137 : vector<16x8xf32>
    %139 = arith.mulf %138, %128 : vector<16x8xf32>
    %cst_52 = arith.constant 0.254829586 : f32
    %140 = vector.broadcast %cst_52 : f32 to vector<16x8xf32>
    %141 = arith.addf %139, %140 : vector<16x8xf32>
    %142 = arith.mulf %141, %128 : vector<16x8xf32>
    %cst_53 = arith.constant 0.000000e+00 : f32
    %143 = vector.broadcast %cst_53 : f32 to vector<16x8xf32>
    %144 = arith.subf %143, %123 : vector<16x8xf32>
    %145 = arith.mulf %144, %123 : vector<16x8xf32>
    %146 = math.exp %145 : vector<16x8xf32>
    %147 = arith.mulf %142, %146 : vector<16x8xf32>
    %cst_54 = arith.constant 1.000000e+00 : f32
    %148 = vector.broadcast %cst_54 : f32 to vector<16x8xf32>
    %149 = arith.subf %148, %147 : vector<16x8xf32>
    %cst_55 = arith.constant 0.000000e+00 : f32
    %150 = vector.broadcast %cst_55 : f32 to vector<16x8xf32>
    %151 = arith.cmpf olt, %122, %150 : vector<16x8xf32>
    %cst_56 = arith.constant 0.000000e+00 : f32
    %152 = vector.broadcast %cst_56 : f32 to vector<16x8xf32>
    %153 = arith.subf %152, %149 : vector<16x8xf32>
    %154 = arith.select %151, %153, %149 : vector<16x8xi1>, vector<16x8xf32>
    %cst_57 = arith.constant 1.000000e+00 : f32
    %155 = vector.broadcast %cst_57 : f32 to vector<16x8xf32>
    %156 = arith.addf %155, %154 : vector<16x8xf32>
    %157 = arith.mulf %120, %156 : vector<16x8xf32>
    %c2_i32_58 = arith.constant 2 : i32
    %158 = tpu.dynamic_rotate %157 by %c2_i32_58 dim 0 : vector<16x8xf32>, i32 -> vector<16x8xf32>
    %159 = arith.truncf %158 : vector<16x8xf32> to vector<16x8xbf16>
    %c0_i32_59 = arith.constant 0 : i32
    %160 = arith.sitofp %c0_i32_59 : i32 to bf16
    %161 = vector.shape_cast %25 : vector<16x1xi1> to vector<16x1xi1>
    %162 = vector.broadcast %161 : vector<16x1xi1> to vector<16x8xi1>
    %163 = vector.broadcast %160 : bf16 to vector<16x8xbf16>
    %164 = arith.select %162, %159, %163 : vector<16x8xi1>, vector<16x8xbf16>
    %165 = arith.truncf %157 : vector<16x8xf32> to vector<16x8xbf16>
    %c0_i32_60 = arith.constant 0 : i32
    %166 = arith.sitofp %c0_i32_60 : i32 to bf16
    %167 = vector.shape_cast %34 : vector<16x1xi1> to vector<16x1xi1>
    %168 = vector.broadcast %167 : vector<16x1xi1> to vector<16x8xi1>
    %169 = vector.broadcast %166 : bf16 to vector<16x8xbf16>
    %170 = arith.select %168, %165, %169 : vector<16x8xi1>, vector<16x8xbf16>
    %c14_i32_61 = arith.constant 14 : i32
    %171 = tpu.dynamic_rotate %157 by %c14_i32_61 dim 0 : vector<16x8xf32>, i32 -> vector<16x8xf32>
    %172 = arith.truncf %171 : vector<16x8xf32> to vector<16x8xbf16>
    %c0_i32_62 = arith.constant 0 : i32
    %173 = arith.sitofp %c0_i32_62 : i32 to bf16
    %174 = vector.shape_cast %43 : vector<16x1xi1> to vector<16x1xi1>
    %175 = vector.broadcast %174 : vector<16x1xi1> to vector<16x8xi1>
    %176 = vector.broadcast %173 : bf16 to vector<16x8xbf16>
    %177 = arith.select %175, %172, %176 : vector<16x8xi1>, vector<16x8xbf16>
    %c0_63 = arith.constant 0 : index
    %c0_64 = arith.constant 0 : index
    %c0_65 = arith.constant 0 : index
    %178 = vector.load %arg4[%c0_63, %c0_64, %c0_65] : memref<3x8x8xbf16, #tpu.memory_space<vmem>>, vector<1x8x8xbf16>
    %179 = vector.shape_cast %178 : vector<1x8x8xbf16> to vector<8x8xbf16>
    %cst_66 = arith.constant dense<0.000000e+00> : vector<16x8xf32>
    %180 = tpu.matmul %164, %179, %cst_66 {dimension_numbers = #tpu.dot_dimension_numbers<[1], [0], [0], [1], [0, 0, 1, 1], [], []>} : vector<16x8xbf16>, vector<8x8xbf16>, vector<16x8xf32> -> vector<16x8xf32>
    %c1_67 = arith.constant 1 : index
    %c0_68 = arith.constant 0 : index
    %c0_69 = arith.constant 0 : index
    %181 = vector.load %arg4[%c1_67, %c0_68, %c0_69] : memref<3x8x8xbf16, #tpu.memory_space<vmem>>, vector<1x8x8xbf16>
    %182 = vector.shape_cast %181 : vector<1x8x8xbf16> to vector<8x8xbf16>
    %cst_70 = arith.constant dense<0.000000e+00> : vector<16x8xf32>
    %183 = tpu.matmul %170, %182, %cst_70 {dimension_numbers = #tpu.dot_dimension_numbers<[1], [0], [0], [1], [0, 0, 1, 1], [], []>} : vector<16x8xbf16>, vector<8x8xbf16>, vector<16x8xf32> -> vector<16x8xf32>
    %184 = arith.addf %180, %183 : vector<16x8xf32>
    %c2_71 = arith.constant 2 : index
    %c0_72 = arith.constant 0 : index
    %c0_73 = arith.constant 0 : index
    %185 = vector.load %arg4[%c2_71, %c0_72, %c0_73] : memref<3x8x8xbf16, #tpu.memory_space<vmem>>, vector<1x8x8xbf16>
    %186 = vector.shape_cast %185 : vector<1x8x8xbf16> to vector<8x8xbf16>
    %cst_74 = arith.constant dense<0.000000e+00> : vector<16x8xf32>
    %187 = tpu.matmul %177, %186, %cst_74 {dimension_numbers = #tpu.dot_dimension_numbers<[1], [0], [0], [1], [0, 0, 1, 1], [], []>} : vector<16x8xbf16>, vector<8x8xbf16>, vector<16x8xf32> -> vector<16x8xf32>
    %188 = arith.addf %184, %187 : vector<16x8xf32>
    %c0_75 = arith.constant 0 : index
    %c0_76 = arith.constant 0 : index
    %189 = vector.load %arg5[%c0_75, %c0_76] : memref<1x8xf32, #tpu.memory_space<vmem>>, vector<1x8xf32>
    %190 = vector.broadcast %189 : vector<1x8xf32> to vector<16x8xf32>
    %191 = arith.addf %188, %190 : vector<16x8xf32>
    %c0_77 = arith.constant 0 : index
    %c0_78 = arith.constant 0 : index
    %c0_79 = arith.constant 0 : index
    %192 = vector.load %arg1[%c0_77, %c0_78, %c0_79] : memref<1x16x4xf32, #tpu.memory_space<vmem>>, vector<1x16x4xf32>
    %193 = vector.shape_cast %192 : vector<1x16x4xf32> to vector<16x4xf32>
    %194 = arith.truncf %193 : vector<16x4xf32> to vector<16x4xbf16>
    %c0_80 = arith.constant 0 : index
    %c0_81 = arith.constant 0 : index
    %195 = vector.load %arg6[%c0_80, %c0_81] : memref<4x8xbf16, #tpu.memory_space<vmem>>, vector<4x8xbf16>
    %cst_82 = arith.constant dense<0.000000e+00> : vector<16x8xf32>
    %196 = tpu.matmul %194, %195, %cst_82 {dimension_numbers = #tpu.dot_dimension_numbers<[1], [0], [0], [1], [0, 0, 1, 1], [], []>} : vector<16x4xbf16>, vector<4x8xbf16>, vector<16x8xf32> -> vector<16x8xf32>
    %c0_83 = arith.constant 0 : index
    %c0_84 = arith.constant 0 : index
    %197 = vector.load %arg7[%c0_83, %c0_84] : memref<1x8xf32, #tpu.memory_space<vmem>>, vector<1x8xf32>
    %198 = vector.broadcast %197 : vector<1x8xf32> to vector<16x8xf32>
    %199 = arith.addf %196, %198 : vector<16x8xf32>
    %200 = arith.addf %191, %199 : vector<16x8xf32>
    %201 = vector.shape_cast %200 : vector<16x8xf32> to vector<1x16x8xf32>
    %c0_85 = arith.constant 0 : index
    %c0_86 = arith.constant 0 : index
    %c0_87 = arith.constant 0 : index
    %202 = vector.load %arg8[%c0_85, %c0_86, %c0_87] : memref<1x16x8xf32, #tpu.memory_space<vmem>>, vector<1x16x8xf32>
    tpu.vector_store %arg8[%c0_85, %c0_86, %c0_87], %201 {strides = array<i32>} : memref<1x16x8xf32, #tpu.memory_space<vmem>>, vector<1x16x8xf32>,
    return
  }
  func.func @transform_0(%arg0: i32) -> (i32, i32, i32) {
    %c0_i32 = arith.constant 0 : i32
    %c0_i32_0 = arith.constant 0 : i32
    %c0_i32_1 = arith.constant 0 : i32
    return %arg0, %c0_i32, %c0_i32_0 : i32, i32, i32
  }
  func.func @transform_1(%arg0: i32) -> (i32, i32, i32) {
    %c0_i32 = arith.constant 0 : i32
    %c0_i32_0 = arith.constant 0 : i32
    %c0_i32_1 = arith.constant 0 : i32
    %c0_i32_2 = arith.constant 0 : i32
    return %c0_i32, %c0_i32_0, %c0_i32_1 : i32, i32, i32
  }
  func.func @transform_2(%arg0: i32) -> (i32, i32) {
    %c0_i32 = arith.constant 0 : i32
    %c0_i32_0 = arith.constant 0 : i32
    %c0_i32_1 = arith.constant 0 : i32
    return %c0_i32, %c0_i32_0 : i32, i32
  }
  func.func @transform_3(%arg0: i32) -> (i32, i32, i32) {
    %c0_i32 = arith.constant 0 : i32
    %c0_i32_0 = arith.constant 0 : i32
    %c0_i32_1 = arith.constant 0 : i32
    %c0_i32_2 = arith.constant 0 : i32
    return %c0_i32, %c0_i32_0, %c0_i32_1 : i32, i32, i32
  }
  func.func @transform_4(%arg0: i32) -> (i32, i32) {
    %c0_i32 = arith.constant 0 : i32
    %c0_i32_0 = arith.constant 0 : i32
    %c0_i32_1 = arith.constant 0 : i32
    return %c0_i32, %c0_i32_0 : i32, i32
  }
  func.func @transform_5(%arg0: i32) -> (i32, i32) {
    %c0_i32 = arith.constant 0 : i32
    %c0_i32_0 = arith.constant 0 : i32
    %c0_i32_1 = arith.constant 0 : i32
    return %c0_i32, %c0_i32_0 : i32, i32
  }
  func.func @transform_6(%arg0: i32) -> (i32, i32) {
    %c0_i32 = arith.constant 0 : i32
    %c0_i32_0 = arith.constant 0 : i32
    %c0_i32_1 = arith.constant 0 : i32
    return %c0_i32, %c0_i32_0 : i32, i32
  }
  func.func @transform_7(%arg0: i32) -> (i32, i32, i32) {
    %c0_i32 = arith.constant 0 : i32
    %c0_i32_0 = arith.constant 0 : i32
    %c0_i32_1 = arith.constant 0 : i32
    return %arg0, %c0_i32, %c0_i32_0 : i32, i32, i32
  }
}

module attributes {stable_mosaic.version = 11 : i64} {
  func.func @kernel(%arg0: i32, %arg1: memref<1x16x4xf32, #tpu.memory_space<vmem>>, %arg2: memref<3x4x8xbf16, #tpu.memory_space<vmem>>, %arg3: memref<1x8xf32, #tpu.memory_space<vmem>>, %arg4: memref<3x8x8xbf16, #tpu.memory_space<vmem>>, %arg5: memref<1x8xf32, #tpu.memory_space<vmem>>, %arg6: memref<4x8xbf16, #tpu.memory_space<vmem>>, %arg7: memref<1x8xf32, #tpu.memory_space<vmem>>, %arg8: memref<1x16x8xf32, #tpu.memory_space<vmem>>) attributes {dimension_semantics = [#tpu.dimension_semantics<parallel>], iteration_bounds = array<i64: 2>, scalar_prefetch = 0 : i64, scratch_operands = 0 : i64, tpu.core_type = #tpu.core_type<tc>, window_params = [{transform_indices = @transform_0, window_bounds = array<i64: 1, 16, 4>}, {pipeline_mode = #tpu.pipeline_mode<synchronous>, transform_indices = @transform_1, window_bounds = array<i64: 3, 4, 8>}, {pipeline_mode = #tpu.pipeline_mode<synchronous>, transform_indices = @transform_2, window_bounds = array<i64: 1, 8>}, {pipeline_mode = #tpu.pipeline_mode<synchronous>, transform_indices = @transform_3, window_bounds = array<i64: 3, 8, 8>}, {pipeline_mode = #tpu.pipeline_mode<synchronous>, transform_indices = @transform_4, window_bounds = array<i64: 1, 8>}, {pipeline_mode = #tpu.pipeline_mode<synchronous>, transform_indices = @transform_5, window_bounds = array<i64: 4, 8>}, {pipeline_mode = #tpu.pipeline_mode<synchronous>, transform_indices = @transform_6, window_bounds = array<i64: 1, 8>}, {transform_indices = @transform_7, window_bounds = array<i64: 1, 16, 8>}]} {
    %0 = tpu.iota {dimensions = array<i32: 0>} : vector<16x1xi32>
    %c16_i32 = arith.constant 16 : i32
    %c0_i32 = arith.constant 0 : i32
    %1 = arith.cmpi eq, %c16_i32, %c0_i32 : i32
    %c1_i32 = arith.constant 1 : i32
    %2 = arith.select %1, %c1_i32, %c16_i32 : i32
    %3 = vector.broadcast %2 : i32 to vector<16x1xi32>
    %4 = arith.remsi %0, %3 : vector<16x1xi32>
    %c0_i32_0 = arith.constant 0 : i32
    %5 = vector.broadcast %c0_i32_0 : i32 to vector<16x1xi32>
    %6 = arith.cmpi ne, %4, %5 : vector<16x1xi32>
    %c0_i32_1 = arith.constant 0 : i32
    %7 = vector.broadcast %c0_i32_1 : i32 to vector<16x1xi32>
    %8 = arith.cmpi slt, %4, %7 : vector<16x1xi32>
    %c0_i32_2 = arith.constant 0 : i32
    %9 = arith.cmpi slt, %2, %c0_i32_2 : i32
    %10 = vector.broadcast %9 : i1 to vector<16x1xi1>
    %11 = vector.broadcast %10 : vector<16x1xi1> to vector<16x1xi1>
    %12 = arith.xori %8, %11 : vector<16x1xi1>
    %13 = arith.andi %12, %6 : vector<16x1xi1>
    %14 = vector.broadcast %2 : i32 to vector<16x1xi32>
    %15 = arith.addi %4, %14 : vector<16x1xi32>
    %16 = arith.select %13, %15, %4 : vector<16x1xi1>, vector<16x1xi32>
    %c-2_i32 = arith.constant -2 : i32
    %17 = vector.broadcast %c-2_i32 : i32 to vector<16x1xi32>
    %18 = arith.addi %16, %17 : vector<16x1xi32>
    %c0_i32_3 = arith.constant 0 : i32
    %19 = vector.broadcast %c0_i32_3 : i32 to vector<16x1xi32>
    %20 = arith.cmpi sge, %18, %19 : vector<16x1xi32>
    %c-2_i32_4 = arith.constant -2 : i32
    %21 = vector.broadcast %c-2_i32_4 : i32 to vector<16x1xi32>
    %22 = arith.addi %16, %21 : vector<16x1xi32>
    %c16_i32_5 = arith.constant 16 : i32
    %23 = vector.broadcast %c16_i32_5 : i32 to vector<16x1xi32>
    %24 = arith.cmpi slt, %22, %23 : vector<16x1xi32>
    %25 = arith.andi %20, %24 : vector<16x1xi1>
    %c0_i32_6 = arith.constant 0 : i32
    %26 = vector.broadcast %c0_i32_6 : i32 to vector<16x1xi32>
    %27 = arith.addi %16, %26 : vector<16x1xi32>
    %c0_i32_7 = arith.constant 0 : i32
    %28 = vector.broadcast %c0_i32_7 : i32 to vector<16x1xi32>
    %29 = arith.cmpi sge, %27, %28 : vector<16x1xi32>
    %c0_i32_8 = arith.constant 0 : i32
    %30 = vector.broadcast %c0_i32_8 : i32 to vector<16x1xi32>
    %31 = arith.addi %16, %30 : vector<16x1xi32>
    %c16_i32_9 = arith.constant 16 : i32
    %32 = vector.broadcast %c16_i32_9 : i32 to vector<16x1xi32>
    %33 = arith.cmpi slt, %31, %32 : vector<16x1xi32>
    %34 = arith.andi %29, %33 : vector<16x1xi1>
    %c2_i32 = arith.constant 2 : i32
    %35 = vector.broadcast %c2_i32 : i32 to vector<16x1xi32>
    %36 = arith.addi %16, %35 : vector<16x1xi32>
    %c0_i32_10 = arith.constant 0 : i32
    %37 = vector.broadcast %c0_i32_10 : i32 to vector<16x1xi32>
    %38 = arith.cmpi sge, %36, %37 : vector<16x1xi32>
    %c2_i32_11 = arith.constant 2 : i32
    %39 = vector.broadcast %c2_i32_11 : i32 to vector<16x1xi32>
    %40 = arith.addi %16, %39 : vector<16x1xi32>
    %c16_i32_12 = arith.constant 16 : i32
    %41 = vector.broadcast %c16_i32_12 : i32 to vector<16x1xi32>
    %42 = arith.cmpi slt, %40, %41 : vector<16x1xi32>
    %43 = arith.andi %38, %42 : vector<16x1xi1>
    %c0 = arith.constant 0 : index
    %c0_13 = arith.constant 0 : index
    %c0_14 = arith.constant 0 : index
    %44 = vector.load %arg1[%c0, %c0_13, %c0_14] : memref<1x16x4xf32, #tpu.memory_space<vmem>>, vector<1x16x4xf32>
    %45 = vector.shape_cast %44 : vector<1x16x4xf32> to vector<16x4xf32>
    %cst = arith.constant 5.000000e-01 : f32
    %46 = vector.broadcast %cst : f32 to vector<16x4xf32>
    %47 = arith.mulf %46, %45 : vector<16x4xf32>
    %cst_15 = arith.constant 0.707106769 : f32
    %48 = vector.broadcast %cst_15 : f32 to vector<16x4xf32>
    %49 = arith.mulf %45, %48 : vector<16x4xf32>
    %50 = math.absf %49 : vector<16x4xf32>
    %cst_16 = arith.constant 0.327591091 : f32
    %51 = vector.broadcast %cst_16 : f32 to vector<16x4xf32>
    %52 = arith.mulf %51, %50 : vector<16x4xf32>
    %cst_17 = arith.constant 1.000000e+00 : f32
    %53 = vector.broadcast %cst_17 : f32 to vector<16x4xf32>
    %54 = arith.addf %53, %52 : vector<16x4xf32>
    %55 = tpu.reciprocal %54 {approx = true} : vector<16x4xf32> -> vector<16x4xf32>
    %cst_18 = arith.constant 1.06140542 : f32
    %56 = vector.broadcast %cst_18 : f32 to vector<16x4xf32>
    %57 = arith.mulf %56, %55 : vector<16x4xf32>
    %cst_19 = arith.constant -1.45315206 : f32
    %58 = vector.broadcast %cst_19 : f32 to vector<16x4xf32>
    %59 = arith.addf %57, %58 : vector<16x4xf32>
    %60 = arith.mulf %59, %55 : vector<16x4xf32>
    %cst_20 = arith.constant 1.42141378 : f32
    %61 = vector.broadcast %cst_20 : f32 to vector<16x4xf32>
    %62 = arith.addf %60, %61 : vector<16x4xf32>
    %63 = arith.mulf %62, %55 : vector<16x4xf32>
    %cst_21 = arith.constant -0.284496725 : f32
    %64 = vector.broadcast %cst_21 : f32 to vector<16x4xf32>
    %65 = arith.addf %63, %64 : vector<16x4xf32>
    %66 = arith.mulf %65, %55 : vector<16x4xf32>
    %cst_22 = arith.constant 0.254829586 : f32
    %67 = vector.broadcast %cst_22 : f32 to vector<16x4xf32>
    %68 = arith.addf %66, %67 : vector<16x4xf32>
    %69 = arith.mulf %68, %55 : vector<16x4xf32>
    %cst_23 = arith.constant 0.000000e+00 : f32
    %70 = vector.broadcast %cst_23 : f32 to vector<16x4xf32>
    %71 = arith.subf %70, %50 : vector<16x4xf32>
    %72 = arith.mulf %71, %50 : vector<16x4xf32>
    %73 = math.exp %72 : vector<16x4xf32>
    %74 = arith.mulf %69, %73 : vector<16x4xf32>
    %cst_24 = arith.constant 1.000000e+00 : f32
    %75 = vector.broadcast %cst_24 : f32 to vector<16x4xf32>
    %76 = arith.subf %75, %74 : vector<16x4xf32>
    %cst_25 = arith.constant 0.000000e+00 : f32
    %77 = vector.broadcast %cst_25 : f32 to vector<16x4xf32>
    %78 = arith.cmpf olt, %49, %77 : vector<16x4xf32>
    %cst_26 = arith.constant 0.000000e+00 : f32
    %79 = vector.broadcast %cst_26 : f32 to vector<16x4xf32>
    %80 = arith.subf %79, %76 : vector<16x4xf32>
    %81 = arith.select %78, %80, %76 : vector<16x4xi1>, vector<16x4xf32>
    %cst_27 = arith.constant 1.000000e+00 : f32
    %82 = vector.broadcast %cst_27 : f32 to vector<16x4xf32>
    %83 = arith.addf %82, %81 : vector<16x4xf32>
    %84 = arith.mulf %47, %83 : vector<16x4xf32>
    %c2_i32_28 = arith.constant 2 : i32
    %85 = tpu.dynamic_rotate %84 by %c2_i32_28 dim 0 : vector<16x4xf32>, i32 -> vector<16x4xf32>
    %86 = arith.truncf %85 : vector<16x4xf32> to vector<16x4xbf16>
    %c0_i32_29 = arith.constant 0 : i32
    %87 = arith.sitofp %c0_i32_29 : i32 to bf16
    %88 = vector.shape_cast %25 : vector<16x1xi1> to vector<16x1xi1>
    %89 = vector.broadcast %88 : vector<16x1xi1> to vector<16x4xi1>
    %90 = vector.broadcast %87 : bf16 to vector<16x4xbf16>
    %91 = arith.select %89, %86, %90 : vector<16x4xi1>, vector<16x4xbf16>
    %92 = arith.truncf %84 : vector<16x4xf32> to vector<16x4xbf16>
    %c0_i32_30 = arith.constant 0 : i32
    %93 = arith.sitofp %c0_i32_30 : i32 to bf16
    %94 = vector.shape_cast %34 : vector<16x1xi1> to vector<16x1xi1>
    %95 = vector.broadcast %94 : vector<16x1xi1> to vector<16x4xi1>
    %96 = vector.broadcast %93 : bf16 to vector<16x4xbf16>
    %97 = arith.select %95, %92, %96 : vector<16x4xi1>, vector<16x4xbf16>
    %c14_i32 = arith.constant 14 : i32
    %98 = tpu.dynamic_rotate %84 by %c14_i32 dim 0 : vector<16x4xf32>, i32 -> vector<16x4xf32>
    %99 = arith.truncf %98 : vector<16x4xf32> to vector<16x4xbf16>
    %c0_i32_31 = arith.constant 0 : i32
    %100 = arith.sitofp %c0_i32_31 : i32 to bf16
    %101 = vector.shape_cast %43 : vector<16x1xi1> to vector<16x1xi1>
    %102 = vector.broadcast %101 : vector<16x1xi1> to vector<16x4xi1>
    %103 = vector.broadcast %100 : bf16 to vector<16x4xbf16>
    %104 = arith.select %102, %99, %103 : vector<16x4xi1>, vector<16x4xbf16>
    %c0_32 = arith.constant 0 : index
    %c0_33 = arith.constant 0 : index
    %c0_34 = arith.constant 0 : index
    %105 = vector.load %arg2[%c0_32, %c0_33, %c0_34] : memref<3x4x8xbf16, #tpu.memory_space<vmem>>, vector<1x4x8xbf16>
    %106 = vector.shape_cast %105 : vector<1x4x8xbf16> to vector<4x8xbf16>
    %cst_35 = arith.constant dense<0.000000e+00> : vector<16x8xf32>
    %107 = tpu.matmul %91, %106, %cst_35 {dimension_numbers = #tpu.dot_dimension_numbers<[1], [0], [0], [1], [0, 0, 1, 1], [], []>} : vector<16x4xbf16>, vector<4x8xbf16>, vector<16x8xf32> -> vector<16x8xf32>
    %c1 = arith.constant 1 : index
    %c0_36 = arith.constant 0 : index
    %c0_37 = arith.constant 0 : index
    %108 = vector.load %arg2[%c1, %c0_36, %c0_37] : memref<3x4x8xbf16, #tpu.memory_space<vmem>>, vector<1x4x8xbf16>
    %109 = vector.shape_cast %108 : vector<1x4x8xbf16> to vector<4x8xbf16>
    %cst_38 = arith.constant dense<0.000000e+00> : vector<16x8xf32>
    %110 = tpu.matmul %97, %109, %cst_38 {dimension_numbers = #tpu.dot_dimension_numbers<[1], [0], [0], [1], [0, 0, 1, 1], [], []>} : vector<16x4xbf16>, vector<4x8xbf16>, vector<16x8xf32> -> vector<16x8xf32>
    %111 = arith.addf %107, %110 : vector<16x8xf32>
    %c2 = arith.constant 2 : index
    %c0_39 = arith.constant 0 : index
    %c0_40 = arith.constant 0 : index
    %112 = vector.load %arg2[%c2, %c0_39, %c0_40] : memref<3x4x8xbf16, #tpu.memory_space<vmem>>, vector<1x4x8xbf16>
    %113 = vector.shape_cast %112 : vector<1x4x8xbf16> to vector<4x8xbf16>
    %cst_41 = arith.constant dense<0.000000e+00> : vector<16x8xf32>
    %114 = tpu.matmul %104, %113, %cst_41 {dimension_numbers = #tpu.dot_dimension_numbers<[1], [0], [0], [1], [0, 0, 1, 1], [], []>} : vector<16x4xbf16>, vector<4x8xbf16>, vector<16x8xf32> -> vector<16x8xf32>
    %115 = arith.addf %111, %114 : vector<16x8xf32>
    %c0_42 = arith.constant 0 : index
    %c0_43 = arith.constant 0 : index
    %116 = vector.load %arg3[%c0_42, %c0_43] : memref<1x8xf32, #tpu.memory_space<vmem>>, vector<1x8xf32>
    %117 = vector.broadcast %116 : vector<1x8xf32> to vector<16x8xf32>
    %118 = arith.addf %115, %117 : vector<16x8xf32>
    %cst_44 = arith.constant 5.000000e-01 : f32
    %119 = vector.broadcast %cst_44 : f32 to vector<16x8xf32>
    %120 = arith.mulf %119, %118 : vector<16x8xf32>
    %cst_45 = arith.constant 0.707106769 : f32
    %121 = vector.broadcast %cst_45 : f32 to vector<16x8xf32>
    %122 = arith.mulf %118, %121 : vector<16x8xf32>
    %123 = math.absf %122 : vector<16x8xf32>
    %cst_46 = arith.constant 0.327591091 : f32
    %124 = vector.broadcast %cst_46 : f32 to vector<16x8xf32>
    %125 = arith.mulf %124, %123 : vector<16x8xf32>
    %cst_47 = arith.constant 1.000000e+00 : f32
    %126 = vector.broadcast %cst_47 : f32 to vector<16x8xf32>
    %127 = arith.addf %126, %125 : vector<16x8xf32>
    %128 = tpu.reciprocal %127 {approx = true} : vector<16x8xf32> -> vector<16x8xf32>
    %cst_48 = arith.constant 1.06140542 : f32
    %129 = vector.broadcast %cst_48 : f32 to vector<16x8xf32>
    %130 = arith.mulf %129, %128 : vector<16x8xf32>
    %cst_49 = arith.constant -1.45315206 : f32
    %131 = vector.broadcast %cst_49 : f32 to vector<16x8xf32>
    %132 = arith.addf %130, %131 : vector<16x8xf32>
    %133 = arith.mulf %132, %128 : vector<16x8xf32>
    %cst_50 = arith.constant 1.42141378 : f32
    %134 = vector.broadcast %cst_50 : f32 to vector<16x8xf32>
    %135 = arith.addf %133, %134 : vector<16x8xf32>
    %136 = arith.mulf %135, %128 : vector<16x8xf32>
    %cst_51 = arith.constant -0.284496725 : f32
    %137 = vector.broadcast %cst_51 : f32 to vector<16x8xf32>
    %138 = arith.addf %136, %137 : vector<16x8xf32>
    %139 = arith.mulf %138, %128 : vector<16x8xf32>
    %cst_52 = arith.constant 0.254829586 : f32
    %140 = vector.broadcast %cst_52 : f32 to vector<16x8xf32>
    %141 = arith.addf %139, %140 : vector<16x8xf32>
    %142 = arith.mulf %141, %128 : vector<16x8xf32>
    %cst_53 = arith.constant 0.000000e+00 : f32
    %143 = vector.broadcast %cst_53 : f32 to vector<16x8xf32>
    %144 = arith.subf %143, %123 : vector<16x8xf32>
    %145 = arith.mulf %144, %123 : vector<16x8xf32>
    %146 = math.exp %145 : vector<16x8xf32>
    %147 = arith.mulf %142, %146 : vector<16x8xf32>
    %cst_54 = arith.constant 1.000000e+00 : f32
    %148 = vector.broadcast %cst_54 : f32 to vector<16x8xf32>
    %149 = arith.subf %148, %147 : vector<16x8xf32>
    %cst_55 = arith.constant 0.000000e+00 : f32
    %150 = vector.broadcast %cst_55 : f32 to vector<16x8xf32>
    %151 = arith.cmpf olt, %122, %150 : vector<16x8xf32>
    %cst_56 = arith.constant 0.000000e+00 : f32
    %152 = vector.broadcast %cst_56 : f32 to vector<16x8xf32>
    %153 = arith.subf %152, %149 : vector<16x8xf32>
    %154 = arith.select %151, %153, %149 : vector<16x8xi1>, vector<16x8xf32>
    %cst_57 = arith.constant 1.000000e+00 : f32
    %155 = vector.broadcast %cst_57 : f32 to vector<16x8xf32>
    %156 = arith.addf %155, %154 : vector<16x8xf32>
    %157 = arith.mulf %120, %156 : vector<16x8xf32>
    %c2_i32_58 = arith.constant 2 : i32
    %158 = tpu.dynamic_rotate %157 by %c2_i32_58 dim 0 : vector<16x8xf32>, i32 -> vector<16x8xf32>
    %159 = arith.truncf %158 : vector<16x8xf32> to vector<16x8xbf16>
    %c0_i32_59 = arith.constant 0 : i32
    %160 = arith.sitofp %c0_i32_59 : i32 to bf16
    %161 = vector.shape_cast %25 : vector<16x1xi1> to vector<16x1xi1>
    %162 = vector.broadcast %161 : vector<16x1xi1> to vector<16x8xi1>
    %163 = vector.broadcast %160 : bf16 to vector<16x8xbf16>
    %164 = arith.select %162, %159, %163 : vector<16x8xi1>, vector<16x8xbf16>
    %165 = arith.truncf %157 : vector<16x8xf32> to vector<16x8xbf16>
    %c0_i32_60 = arith.constant 0 : i32
    %166 = arith.sitofp %c0_i32_60 : i32 to bf16
    %167 = vector.shape_cast %34 : vector<16x1xi1> to vector<16x1xi1>
    %168 = vector.broadcast %167 : vector<16x1xi1> to vector<16x8xi1>
    %169 = vector.broadcast %166 : bf16 to vector<16x8xbf16>
    %170 = arith.select %168, %165, %169 : vector<16x8xi1>, vector<16x8xbf16>
    %c14_i32_61 = arith.constant 14 : i32
    %171 = tpu.dynamic_rotate %157 by %c14_i32_61 dim 0 : vector<16x8xf32>, i32 -> vector<16x8xf32>
    %172 = arith.truncf %171 : vector<16x8xf32> to vector<16x8xbf16>
    %c0_i32_62 = arith.constant 0 : i32
    %173 = arith.sitofp %c0_i32_62 : i32 to bf16
    %174 = vector.shape_cast %43 : vector<16x1xi1> to vector<16x1xi1>
    %175 = vector.broadcast %174 : vector<16x1xi1> to vector<16x8xi1>
    %176 = vector.broadcast %173 : bf16 to vector<16x8xbf16>
    %177 = arith.select %175, %172, %176 : vector<16x8xi1>, vector<16x8xbf16>
    %c0_63 = arith.constant 0 : index
    %c0_64 = arith.constant 0 : index
    %c0_65 = arith.constant 0 : index
    %178 = vector.load %arg4[%c0_63, %c0_64, %c0_65] : memref<3x8x8xbf16, #tpu.memory_space<vmem>>, vector<1x8x8xbf16>
    %179 = vector.shape_cast %178 : vector<1x8x8xbf16> to vector<8x8xbf16>
    %cst_66 = arith.constant dense<0.000000e+00> : vector<16x8xf32>
    %180 = tpu.matmul %164, %179, %cst_66 {dimension_numbers = #tpu.dot_dimension_numbers<[1], [0], [0], [1], [0, 0, 1, 1], [], []>} : vector<16x8xbf16>, vector<8x8xbf16>, vector<16x8xf32> -> vector<16x8xf32>
    %c1_67 = arith.constant 1 : index
    %c0_68 = arith.constant 0 : index
    %c0_69 = arith.constant 0 : index
    %181 = vector.load %arg4[%c1_67, %c0_68, %c0_69] : memref<3x8x8xbf16, #tpu.memory_space<vmem>>, vector<1x8x8xbf16>
    %182 = vector.shape_cast %181 : vector<1x8x8xbf16> to vector<8x8xbf16>
    %cst_70 = arith.constant dense<0.000000e+00> : vector<16x8xf32>
    %183 = tpu.matmul %170, %182, %cst_70 {dimension_numbers = #tpu.dot_dimension_numbers<[1], [0], [0], [1], [0, 0, 1, 1], [], []>} : vector<16x8xbf16>, vector<8x8xbf16>, vector<16x8xf32> -> vector<16x8xf32>
    %184 = arith.addf %180, %183 : vector<16x8xf32>
    %c2_71 = arith.constant 2 : index
    %c0_72 = arith.constant 0 : index
    %c0_73 = arith.constant 0 : index
    %185 = vector.load %arg4[%c2_71, %c0_72, %c0_73] : memref<3x8x8xbf16, #tpu.memory_space<vmem>>, vector<1x8x8xbf16>
    %186 = vector.shape_cast %185 : vector<1x8x8xbf16> to vector<8x8xbf16>
    %cst_74 = arith.constant dense<0.000000e+00> : vector<16x8xf32>
    %187 = tpu.matmul %177, %186, %cst_74 {dimension_numbers = #tpu.dot_dimension_numbers<[1], [0], [0], [1], [0, 0, 1, 1], [], []>} : vector<16x8xbf16>, vector<8x8xbf16>, vector<16x8xf32> -> vector<16x8xf32>
    %188 = arith.addf %184, %187 : vector<16x8xf32>
    %c0_75 = arith.constant 0 : index
    %c0_76 = arith.constant 0 : index
    %189 = vector.load %arg5[%c0_75, %c0_76] : memref<1x8xf32, #tpu.memory_space<vmem>>, vector<1x8xf32>
    %190 = vector.broadcast %189 : vector<1x8xf32> to vector<16x8xf32>
    %191 = arith.addf %188, %190 : vector<16x8xf32>
    %c0_77 = arith.constant 0 : index
    %c0_78 = arith.constant 0 : index
    %c0_79 = arith.constant 0 : index
    %192 = vector.load %arg1[%c0_77, %c0_78, %c0_79] : memref<1x16x4xf32, #tpu.memory_space<vmem>>, vector<1x16x4xf32>
    %193 = vector.shape_cast %192 : vector<1x16x4xf32> to vector<16x4xf32>
    %194 = arith.truncf %193 : vector<16x4xf32> to vector<16x4xbf16>
    %c0_80 = arith.constant 0 : index
    %c0_81 = arith.constant 0 : index
    %195 = vector.load %arg6[%c0_80, %c0_81] : memref<4x8xbf16, #tpu.memory_space<vmem>>, vector<4x8xbf16>
    %cst_82 = arith.constant dense<0.000000e+00> : vector<16x8xf32>
    %196 = tpu.matmul %194, %195, %cst_82 {dimension_numbers = #tpu.dot_dimension_numbers<[1], [0], [0], [1], [0, 0, 1, 1], [], []>} : vector<16x4xbf16>, vector<4x8xbf16>, vector<16x8xf32> -> vector<16x8xf32>
    %c0_83 = arith.constant 0 : index
    %c0_84 = arith.constant 0 : index
    %197 = vector.load %arg7[%c0_83, %c0_84] : memref<1x8xf32, #tpu.memory_space<vmem>>, vector<1x8xf32>
    %198 = vector.broadcast %197 : vector<1x8xf32> to vector<16x8xf32>
    %199 = arith.addf %196, %198 : vector<16x8xf32>
    %200 = arith.addf %191, %199 : vector<16x8xf32>
    %201 = vector.shape_cast %200 : vector<16x8xf32> to vector<1x16x8xf32>
    %c0_85 = arith.constant 0 : index
    %c0_86 = arith.constant 0 : index
    %c0_87 = arith.constant 0 : index
    %202 = vector.load %arg8[%c0_85, %c0_86, %c0_87] : memref<1x16x8xf32, #tpu.memory_space<vmem>>, vector<1x16x8xf32>
    tpu.vector_store %arg8[%c0_85, %c0_86, %c0_87], %201 {strides = array<i32>} : memref<1x16x8xf32, #tpu.memory_space<vmem>>, vector<1x16x8xf32>,
    return
  }
  func.func @transform_0(%arg0: i32) -> (i32, i32, i32) {
    %c0_i32 = arith.constant 0 : i32
    %c0_i32_0 = arith.constant 0 : i32
    %c0_i32_1 = arith.constant 0 : i32
    return %arg0, %c0_i32, %c0_i32_0 : i32, i32, i32
  }
  func.func @transform_1(%arg0: i32) -> (i32, i32, i32) {
    %c0_i32 = arith.constant 0 : i32
    %c0_i32_0 = arith.constant 0 : i32
    %c0_i32_1 = arith.constant 0 : i32
    %c0_i32_2 = arith.constant 0 : i32
    return %c0_i32, %c0_i32_0, %c0_i32_1 : i32, i32, i32
  }
  func.func @transform_2(%arg0: i32) -> (i32, i32) {
    %c0_i32 = arith.constant 0 : i32
    %c0_i32_0 = arith.constant 0 : i32
    %c0_i32_1 = arith.constant 0 : i32
    return %c0_i32, %c0_i32_0 : i32, i32
  }
  func.func @transform_3(%arg0: i32) -> (i32, i32, i32) {
    %c0_i32 = arith.constant 0 : i32
    %c0_i32_0 = arith.constant 0 : i32
    %c0_i32_1 = arith.constant 0 : i32
    %c0_i32_2 = arith.constant 0 : i32
    return %c0_i32, %c0_i32_0, %c0_i32_1 : i32, i32, i32
  }
  func.func @transform_4(%arg0: i32) -> (i32, i32) {
    %c0_i32 = arith.constant 0 : i32
    %c0_i32_0 = arith.constant 0 : i32
    %c0_i32_1 = arith.constant 0 : i32
    return %c0_i32, %c0_i32_0 : i32, i32
  }
  func.func @transform_5(%arg0: i32) -> (i32, i32) {
    %c0_i32 = arith.constant 0 : i32
    %c0_i32_0 = arith.constant 0 : i32
    %c0_i32_1 = arith.constant 0 : i32
    return %c0_i32, %c0_i32_0 : i32, i32
  }
  func.func @transform_6(%arg0: i32) -> (i32, i32) {
    %c0_i32 = arith.constant 0 : i32
    %c0_i32_0 = arith.constant 0 : i32
    %c0_i32_1 = arith.constant 0 : i32
    return %c0_i32, %c0_i32_0 : i32, i32
  }
  func.func @transform_7(%arg0: i32) -> (i32, i32, i32) {
    %c0_i32 = arith.constant 0 : i32
    %c0_i32_0 = arith.constant 0 : i32
    %c0_i32_1 = arith.constant 0 : i32
    return %arg0, %c0_i32, %c0_i32_0 : i32, i32, i32
  }
}

</mosaic_0001>

<llo_original>
// kernel: tpu_custom_call.1
$region0: #{tpu_custom_call.1}
  #allocation0 [shape = 'u32[]', space=smem, size = 0x4, offset = 0x4, fixed_abs, tag = 'smem constant byte address 0x4 - core index']
  #allocation1 [shape = 'u32[144,128]{1,0:T(1,128)}', space=vmem, size = 0x12000, scoped, tag = 'internal scratch']
  %s0 = inlined_call_operand.vmem [shape: f32[2,16,4], index: 0, kind: input, shape index: {}]
  %s1 = inlined_call_operand.vmem [shape: bf16[12,8], index: 1, kind: input, shape index: {}]
  %s2 = inlined_call_operand.vmem [shape: f32[1,8], index: 2, kind: input, shape index: {}]
  %s3 = inlined_call_operand.vmem [shape: bf16[24,8], index: 3, kind: input, shape index: {}]
  %s4 = inlined_call_operand.vmem [shape: f32[1,8], index: 4, kind: input, shape index: {}]
  %s5 = inlined_call_operand.vmem [shape: bf16[4,8], index: 5, kind: input, shape index: {}]
  %s6 = inlined_call_operand.vmem [shape: f32[1,8], index: 6, kind: input, shape index: {}]
  %s7 = inlined_call_operand.vmem [shape: f32[2,16,8], index: 7, kind: output, shape index: {}]
  %s8 = sld [smem:[#allocation0]]
  $region61: #{tpu_custom_call.1} parent=0
    _
  %s10 = ssub.s32 1, %s8
  %s11 = scalar_select 0, %s10, %s8
  loop: start=0, step=1, limit=4
  $region2: #{tpu_custom_call.1} parent=0 // loop_pre_header
    _
  $region3: #{tpu_custom_call.1} parent=0 // loop_header
    %s13 = sphi 0, %s17
    %p14 = scmp.ge.s32.totalorder %s13, 4
    %s23 = sphi 0, %s25
    %s26 = sphi 0, %s23
    %s27 = sphi 0, %s26
    %s43 = sphi 0, %s27
    %s47 = sphi 0, %s47
    %s49 = sphi 0, %s47
    %s50 = sphi 0, %s49
    %s64 = sphi 0, %s50
    %s68 = sphi 0, %s68
    %s70 = sphi 0, %s68
    %s71 = sphi 0, %s70
    %s85 = sphi 0, %s71
    %s89 = sphi 0, %s89
    %s91 = sphi 0, %s89
    %s92 = sphi 0, %s91
    %s106 = sphi 0, %s92
    %s110 = sphi 0, %s110
    %s112 = sphi 0, %s110
    %s113 = sphi 0, %s112
    %s127 = sphi 0, %s113
    %s131 = sphi 0, %s131
    %s133 = sphi 0, %s131
    %s134 = sphi 0, %s133
    %s148 = sphi 0, %s134
    %s152 = sphi 0, %s152
    %s154 = sphi 0, %s152
    %s155 = sphi 0, %s154
    %s169 = sphi 0, %s155
    %s175 = sphi 0, %s177
    %s178 = sphi 0, %s175
    %s179 = sphi 0, %s178
    %s195 = sphi 0, %s179
  $region4: #{tpu_custom_call.1} parent=0 // loop_header_branch
    %16 = sbr.rel (%p14) target = $region8
  $region5: #{tpu_custom_call.1} parent=0 // loop_body
    %s18 = ssub.s32 %s13, 1
    %s19 = ssub.s32 %s13, 2
    %s20 = sadd.s32 %s13, 1
    %s21 = ssub.s32 %s13, %s20
    %p22 = scmp.eq.s32.totalorder %s21, 0
    %s24 = sadd.s32 %s23, 1
    %s25 = scalar_select %p22, %s23, %s24
    %p28 = pneg %p22
    %p29 = scmp.eq.s32.totalorder %s13, 1
    %p30 = por %p28, %p29
    %p31 = scmp.ne.s32.totalorder %s23, %s26
    %p32 = scmp.eq.s32.totalorder %s13, 0
    %p33 = por %p31, %p32
    %p34 = scmp.ne.s32.totalorder %s23, %s26
    %p35 = scmp.eq.s32.totalorder %s18, 1
    %p36 = por %p34, %p35
    %p37 = scmp.ne.s32.totalorder %s26, %s27
    %p38 = scmp.eq.s32.totalorder %s18, 0
    %p39 = por %p37, %p38
    %p40 = scmp.ne.s32.totalorder %s26, %s27
    %p41 = scmp.eq.s32.totalorder %s19, 1
    %p42 = por %p40, %p41
    %p44 = scmp.ne.s32.totalorder %s27, %s43
    %p45 = scmp.eq.s32.totalorder %s19, 0
    %p46 = por %p44, %p45
    %s48 = sadd.s32 %s47, 1
    %p51 = scmp.eq.s32.totalorder %s13, 1
    %p52 = scmp.ne.s32.totalorder %s47, %s49
    %p53 = scmp.eq.s32.totalorder %s13, 0
    %p54 = por %p52, %p53
    %p55 = scmp.ne.s32.totalorder %s47, %s49
    %p56 = scmp.eq.s32.totalorder %s18, 1
    %p57 = por %p55, %p56
    %p58 = scmp.ne.s32.totalorder %s49, %s50
    %p59 = scmp.eq.s32.totalorder %s18, 0
    %p60 = por %p58, %p59
    %p61 = scmp.ne.s32.totalorder %s49, %s50
    %p62 = scmp.eq.s32.totalorder %s19, 1
    %p63 = por %p61, %p62
    %p65 = scmp.ne.s32.totalorder %s50, %s64
    %p66 = scmp.eq.s32.totalorder %s19, 0
    %p67 = por %p65, %p66
    %s69 = sadd.s32 %s68, 1
    %p72 = scmp.eq.s32.totalorder %s13, 1
    %p73 = scmp.ne.s32.totalorder %s68, %s70
    %p74 = scmp.eq.s32.totalorder %s13, 0
    %p75 = por %p73, %p74
    %p76 = scmp.ne.s32.totalorder %s68, %s70
    %p77 = scmp.eq.s32.totalorder %s18, 1
    %p78 = por %p76, %p77
    %p79 = scmp.ne.s32.totalorder %s70, %s71
    %p80 = scmp.eq.s32.totalorder %s18, 0
    %p81 = por %p79, %p80
    %p82 = scmp.ne.s32.totalorder %s70, %s71
    %p83 = scmp.eq.s32.totalorder %s19, 1
    %p84 = por %p82, %p83
    %p86 = scmp.ne.s32.totalorder %s71, %s85
    %p87 = scmp.eq.s32.totalorder %s19, 0
    %p88 = por %p86, %p87
    %s90 = sadd.s32 %s89, 1
    %p93 = scmp.eq.s32.totalorder %s13, 1
    %p94 = scmp.ne.s32.totalorder %s89, %s91
    %p95 = scmp.eq.s32.totalorder %s13, 0
    %p96 = por %p94, %p95
    %p97 = scmp.ne.s32.totalorder %s89, %s91
    %p98 = scmp.eq.s32.totalorder %s18, 1
    %p99 = por %p97, %p98
    %p100 = scmp.ne.s32.totalorder %s91, %s92
    %p101 = scmp.eq.s32.totalorder %s18, 0
    %p102 = por %p100, %p101
    %p103 = scmp.ne.s32.totalorder %s91, %s92
    %p104 = scmp.eq.s32.totalorder %s19, 1
    %p105 = por %p103, %p104
    %p107 = scmp.ne.s32.totalorder %s92, %s106
    %p108 = scmp.eq.s32.totalorder %s19, 0
    %p109 = por %p107, %p108
    %s111 = sadd.s32 %s110, 1
    %p114 = scmp.eq.s32.totalorder %s13, 1
    %p115 = scmp.ne.s32.totalorder %s110, %s112
    %p116 = scmp.eq.s32.totalorder %s13, 0
    %p117 = por %p115, %p116
    %p118 = scmp.ne.s32.totalorder %s110, %s112
    %p119 = scmp.eq.s32.totalorder %s18, 1
    %p120 = por %p118, %p119
    %p121 = scmp.ne.s32.totalorder %s112, %s113
    %p122 = scmp.eq.s32.totalorder %s18, 0
    %p123 = por %p121, %p122
    %p124 = scmp.ne.s32.totalorder %s112, %s113
    %p125 = scmp.eq.s32.totalorder %s19, 1
    %p126 = por %p124, %p125
    %p128 = scmp.ne.s32.totalorder %s113, %s127
    %p129 = scmp.eq.s32.totalorder %s19, 0
    %p130 = por %p128, %p129
    %s132 = sadd.s32 %s131, 1
    %p135 = scmp.eq.s32.totalorder %s13, 1
    %p136 = scmp.ne.s32.totalorder %s131, %s133
    %p137 = scmp.eq.s32.totalorder %s13, 0
    %p138 = por %p136, %p137
    %p139 = scmp.ne.s32.totalorder %s131, %s133
    %p140 = scmp.eq.s32.totalorder %s18, 1
    %p141 = por %p139, %p140
    %p142 = scmp.ne.s32.totalorder %s133, %s134
    %p143 = scmp.eq.s32.totalorder %s18, 0
    %p144 = por %p142, %p143
    %p145 = scmp.ne.s32.totalorder %s133, %s134
    %p146 = scmp.eq.s32.totalorder %s19, 1
    %p147 = por %p145, %p146
    %p149 = scmp.ne.s32.totalorder %s134, %s148
    %p150 = scmp.eq.s32.totalorder %s19, 0
    %p151 = por %p149, %p150
    %s153 = sadd.s32 %s152, 1
    %p156 = scmp.eq.s32.totalorder %s13, 1
    %p157 = scmp.ne.s32.totalorder %s152, %s154
    %p158 = scmp.eq.s32.totalorder %s13, 0
    %p159 = por %p157, %p158
    %p160 = scmp.ne.s32.totalorder %s152, %s154
    %p161 = scmp.eq.s32.totalorder %s18, 1
    %p162 = por %p160, %p161
    %p163 = scmp.ne.s32.totalorder %s154, %s155
    %p164 = scmp.eq.s32.totalorder %s18, 0
    %p165 = por %p163, %p164
    %p166 = scmp.ne.s32.totalorder %s154, %s155
    %p167 = scmp.eq.s32.totalorder %s19, 1
    %p168 = por %p166, %p167
    %p170 = scmp.ne.s32.totalorder %s155, %s169
    %p171 = scmp.eq.s32.totalorder %s19, 0
    %p172 = por %p170, %p171
    %s173 = ssub.s32 %s13, %s20
    %p174 = scmp.eq.s32.totalorder %s173, 0
    %s176 = sadd.s32 %s175, 1
    %s177 = scalar_select %p174, %s175, %s176
    %p180 = pneg %p174
    %p181 = scmp.eq.s32.totalorder %s13, 1
    %p182 = por %p180, %p181
    %p183 = scmp.ne.s32.totalorder %s175, %s178
    %p184 = scmp.eq.s32.totalorder %s13, 0
    %p185 = por %p183, %p184
    %p186 = scmp.ne.s32.totalorder %s175, %s178
    %p187 = scmp.eq.s32.totalorder %s18, 1
    %p188 = por %p186, %p187
    %p189 = scmp.ne.s32.totalorder %s178, %s179
    %p190 = scmp.eq.s32.totalorder %s18, 0
    %p191 = por %p189, %p190
    %p192 = scmp.ne.s32.totalorder %s178, %s179
    %p193 = scmp.eq.s32.totalorder %s19, 1
    %p194 = por %p192, %p193
    %p196 = scmp.ne.s32.totalorder %s179, %s195
    %p197 = scmp.eq.s32.totalorder %s19, 0
    %p198 = por %p196, %p197
    %p199 = scmp.le.s32.totalorder 1, %s13
    %p200 = scmp.lt.s32.totalorder %s13, 3
    %p201 = pnand %p199, %p200
    %p202 = pneg %p201
    // Predicated region
    $region9: #{tpu_custom_call.1} parent=5 // pred_check
      _
    $region10: #{tpu_custom_call.1} parent=5 // pred_check_branch
      %204 = sbr.rel (%p201) target = $region12
    $region11: #{tpu_custom_call.1} parent=5 // pred_region
      %s205 = ssub.s32 %s13, 1
      // Predicated region
      $region13: #{tpu_custom_call.1} parent=11 // pred_check
        %p206 = pneg %p60
      $region14: #{tpu_custom_call.1} parent=11 // pred_check_branch
        %208 = sbr.rel (%p206) target = $region16
      $region15: #{tpu_custom_call.1} parent=11 // pred_region
        _
      $region16: #{tpu_custom_call.1} parent=11 // pred_fallthru
        _
      // Predicated region
      $region17: #{tpu_custom_call.1} parent=11 // pred_check
        %p209 = pneg %p81
      $region18: #{tpu_custom_call.1} parent=11 // pred_check_branch
        %211 = sbr.rel (%p209) target = $region20
      $region19: #{tpu_custom_call.1} parent=11 // pred_region
        _
      $region20: #{tpu_custom_call.1} parent=11 // pred_fallthru
        _
      // Predicated region
      $region21: #{tpu_custom_call.1} parent=11 // pred_check
        %p212 = pneg %p102
      $region22: #{tpu_custom_call.1} parent=11 // pred_check_branch
        %214 = sbr.rel (%p212) target = $region24
      $region23: #{tpu_custom_call.1} parent=11 // pred_region
        _
      $region24: #{tpu_custom_call.1} parent=11 // pred_fallthru
        _
      // Predicated region
      $region25: #{tpu_custom_call.1} parent=11 // pred_check
        %p215 = pneg %p123
      $region26: #{tpu_custom_call.1} parent=11 // pred_check_branch
        %217 = sbr.rel (%p215) target = $region28
      $region27: #{tpu_custom_call.1} parent=11 // pred_region
        _
      $region28: #{tpu_custom_call.1} parent=11 // pred_fallthru
        _
      // Predicated region
      $region29: #{tpu_custom_call.1} parent=11 // pred_check
        %p218 = pneg %p144
      $region30: #{tpu_custom_call.1} parent=11 // pred_check_branch
        %220 = sbr.rel (%p218) target = $region32
      $region31: #{tpu_custom_call.1} parent=11 // pred_region
        _
      $region32: #{tpu_custom_call.1} parent=11 // pred_fallthru
        _
      // Predicated region
      $region33: #{tpu_custom_call.1} parent=11 // pred_check
        %p221 = pneg %p165
      $region34: #{tpu_custom_call.1} parent=11 // pred_check_branch
        %223 = sbr.rel (%p221) target = $region36
      $region35: #{tpu_custom_call.1} parent=11 // pred_region
        _
      $region36: #{tpu_custom_call.1} parent=11 // pred_fallthru
        _
    $region12: #{tpu_custom_call.1} parent=5 // pred_fallthru
      _
    %p224 = scmp.lt.s32.totalorder %s13, 2
    // Predicated region
    $region37: #{tpu_custom_call.1} parent=5 // pred_check
      %p225 = pneg %p224
    $region38: #{tpu_custom_call.1} parent=5 // pred_check_branch
      %227 = sbr.rel (%p225) target = $region40
    $region39: #{tpu_custom_call.1} parent=5 // pred_region
      // Predicated region
      $region41: #{tpu_custom_call.1} parent=39 // pred_check
        %p228 = pneg %p33
      $region42: #{tpu_custom_call.1} parent=39 // pred_check_branch
        %230 = sbr.rel (%p228) target = $region44
      $region43: #{tpu_custom_call.1} parent=39 // pred_region
        %p231 = scmp.lt.s32.totalorder %s13, 1
        %s232 = scalar_select %p231, %s13, 1
        %s233 = smul.addr %s232, 2
        %s234 = smul.addr %s233, 8
        %s235 = scalar_lea.vmem %s0, %s234
      $region44: #{tpu_custom_call.1} parent=39 // pred_fallthru
        _
    $region40: #{tpu_custom_call.1} parent=5 // pred_fallthru
      _
    %p236 = scmp.le.s32.totalorder 1, %s13
    %p237 = scmp.lt.s32.totalorder %s13, 3
    %p238 = pnand %p236, %p237
    %p239 = pneg %p238
    // Predicated region
    $region45: #{tpu_custom_call.1} parent=5 // pred_check
      _
    $region46: #{tpu_custom_call.1} parent=5 // pred_check_branch
      %241 = sbr.rel (%p238) target = $region48
    $region47: #{tpu_custom_call.1} parent=5 // pred_region
      %s242 = ssub.s32 %s13, 1
      %p243 = scmp.lt.s32.totalorder %s18, 1
      %s244 = scalar_select %p243, %s18, 1
      %s245 = smul.addr %s244, 2
      %s246 = smul.addr %s245, 8
      %s247 = scalar_lea.vmem %s0, %s246
      %p248 = pneg %p39
      %p249 = pneg %p36
      %p250 = pneg %p60
      %p251 = pneg %p57
      %p252 = pneg %p81
      %p253 = pneg %p78
      %p254 = pneg %p102
      %p255 = pneg %p99
      %p256 = pneg %p123
      %p257 = pneg %p120
      %p258 = pneg %p144
      %p259 = pneg %p141
      %p260 = pneg %p165
      %p261 = pneg %p162
      %p262 = pneg %p191
      %p263 = pneg %p188
      %p264 = scmp.lt.s32.totalorder %s18, 1
      %s265 = scalar_select %p264, %s18, 1
      %s266 = smul.addr %s265, 2
      %s267 = smul.addr %s266, 8
      %s268 = scalar_lea.vmem %s7, %s267
      %p269 = scmp.lt.s32.totalorder %s18, 1
      %s270 = scalar_select %p269, %s18, 1
      %s271 = smul.addr %s270, 2
      %s272 = smul.addr %s271, 8
      %s273 = scalar_lea.vmem %s0, %s272
      %p274 = scmp.lt.s32.totalorder %s18, 1
      %s275 = scalar_select %p274, %s18, 1
      %s276 = smul.addr %s275, 2
      %s277 = smul.addr %s276, 8
      %s278 = scalar_lea.vmem %s7, %s277
      %v282 = vlaneseq
      %v283 = vshrl.u32 %v282, 7
      %v284 = vadd.s32 %v283, 8
      %vm285 = vcmp.lt.s32.totalorder %v283, 0
      %v286 = vsub.s32 0, %v283
      %v287 = vsel %vm285, %v286, %v283
      %v288 = vshrl.u32 %v287, 4
      %v289 = vand.u32 %v287, 15
      %v290 = vsub.s32 0, %v289
      %v291 = vsel %vm285, %v290, %v289
      %vm292 = vcmp.lt.s32.totalorder %v284, 0
      %v293 = vsub.s32 0, %v284
      %v294 = vsel %vm292, %v293, %v284
      %v295 = vshrl.u32 %v294, 4
      %v296 = vand.u32 %v294, 15
      %v297 = vsub.s32 0, %v296
      %v298 = vsel %vm292, %v297, %v296
      %vm299 = vcmp.ne.s32.totalorder %v291, 0
      %vm300 = vcmp.ne.s32.totalorder %v298, 0
      %vm301 = vcmp.lt.s32.totalorder %v291, 0
      %vm302 = vcmp.lt.s32.totalorder %v298, 0
      %vm303 = vmand %vm301, %vm299
      %vm304 = vmand %vm302, %vm300
      %v305 = vadd.s32 %v291, 16
      %v306 = vadd.s32 %v298, 16
      %v307 = vsel %vm303, %v305, %v291
      %v308 = vsel %vm304, %v306, %v298
      %v309 = vadd.s32 %v307, 4294967294
      %v310 = vadd.s32 %v308, 4294967294
      %vm311 = vcmp.ge.s32.totalorder %v309, 0
      %vm312 = vcmp.ge.s32.totalorder %v310, 0
      %vm313 = vcmp.lt.s32.totalorder %v309, 16
      %vm314 = vcmp.lt.s32.totalorder %v310, 16
      %vm315 = vmand %vm311, %vm313
      %vm316 = vmand %vm312, %vm314
      %vm317 = vcmp.ge.s32.totalorder %v307, 0
      %vm318 = vcmp.ge.s32.totalorder %v308, 0
      %vm319 = vcmp.lt.s32.totalorder %v307, 16
      %vm320 = vcmp.lt.s32.totalorder %v308, 16
      %vm321 = vmand %vm317, %vm319
      %vm322 = vmand %vm318, %vm320
      %v323 = vadd.s32 %v307, 2
      %v324 = vadd.s32 %v308, 2
      %vm325 = vcmp.ge.s32.totalorder %v323, 0
      %vm326 = vcmp.ge.s32.totalorder %v324, 0
      %vm327 = vcmp.lt.s32.totalorder %v323, 16
      %vm328 = vcmp.lt.s32.totalorder %v324, 16
      %vm329 = vmand %vm325, %vm327
      %vm330 = vmand %vm326, %vm328
      %v331 = vld [vmem:[%s273] sm:$0xff]
      %v332 = vld [vmem:[%s273 + $0x8] sm:$0xff]
      %v333 = vmul.f32 %v331, 0.5
      %v334 = vmul.f32 %v332, 0.5
      %v335 = vmul.f32 %v331, 0.70710677
      %v336 = vmul.f32 %v332, 0.70710677
      %v337 = vand.u32 2147483647, %v335
      %v338 = vand.u32 2147483647, %v336
      %v339 = vmul.f32 %v337, 0.3275911
      %v340 = vmul.f32 %v338, 0.3275911
      %v341 = vadd.f32 %v339, 1.0
      %v342 = vadd.f32 %v340, 1.0
      %v343 = vrcp.pop %v341
      %v344 = vrcp.pop %v342
      %v345 = vmul.f32 %v343, 1.0614054
      %v346 = vmul.f32 %v344, 1.0614054
      %v347 = vadd.f32 %v345, -1.4531521
      %v348 = vadd.f32 %v346, -1.4531521
      %v349 = vmul.f32 %v347, %v343
      %v350 = vmul.f32 %v348, %v344
      %v351 = vadd.f32 %v349, 1.4214138
      %v352 = vadd.f32 %v350, 1.4214138
      %v353 = vmul.f32 %v351, %v343
      %v354 = vmul.f32 %v352, %v344
      %v355 = vadd.f32 %v353, -0.28449672
      %v356 = vadd.f32 %v354, -0.28449672
      %v357 = vmul.f32 %v355, %v343
      %v358 = vmul.f32 %v356, %v344
      %v359 = vadd.f32 %v357, 0.2548296
      %v360 = vadd.f32 %v358, 0.2548296
      %v361 = vmul.f32 %v359, %v343
      %v362 = vmul.f32 %v360, %v344
      %v363 = vsub.f32 0.0, %v337
      %v364 = vsub.f32 0.0, %v338
      %v365 = vmul.f32 %v363, %v337
      %v366 = vmul.f32 %v364, %v338
      %v367 = vmul.f32 %v365, 1.442695
      %v368 = vpow.pop %v367
      %v369 = vmul.f32 %v366, 1.442695
      %v370 = vpow.pop %v369
      %v371 = vmul.f32 %v361, %v368
      %v372 = vmul.f32 %v362, %v370
      %v373 = vsub.f32 1.0, %v371
      %v374 = vsub.f32 1.0, %v372
      %vm375 = vcmp.lt.f32.partialorder %v335, 0.0
      %vm376 = vcmp.lt.f32.partialorder %v336, 0.0
      %v377 = vsub.f32 0.0, %v373
      %v378 = vsub.f32 0.0, %v374
      %v379 = vsel %vm375, %v377, %v373
      %v380 = vsel %vm376, %v378, %v374
      %v381 = vadd.f32 %v379, 1.0
      %v382 = vadd.f32 %v380, 1.0
      %v383 = vmul.f32 %v333, %v381
      %v384 = vmul.f32 %v334, %v382
      %v385 = vrot.slane %v383, 6
      %v386 = vrot.slane %v384, 6
      %vm387 = vcmp.lt.s32.totalorder %v283, 2
      %v388 = vsel %vm387, %v385, %v386
      %v389 = vsel %vm387, %v386, %v385
      %v390 = vpack.c.bf16 %v388, %v389
      %v391 = vsel %vm315, 1, 0
      %v392 = vsel %vm316, 1, 0
      %vm393 = vcmp.eq.s32.totalorder %v391, 1
      %vm394 = vcmp.eq.s32.totalorder %v392, 1
      %vm395 = vmpackc.low %vm393, %vm393
      %vm396 = vmpackc.low %vm394, %vm394
      %v397 = vsel %vm395, 65537, 0
      %v398 = vsel %vm396, 65537, 0
      %v399 = vunpack.c.l.b16 %v397
      %v400 = vunpack.c.l.b16 %v398
      %v401 = vpack.c.b16 %v400, %v399
      %vm402 = vcmp.ne.s16.totalorder %v401, 0
      %v403 = vsel %vm402, %v390, 0
      %v404 = vpack.c.bf16 %v384, %v383
      %v405 = vsel %vm321, 1, 0
      %v406 = vsel %vm322, 1, 0
      %vm407 = vcmp.eq.s32.totalorder %v405, 1
      %vm408 = vcmp.eq.s32.totalorder %v406, 1
      %vm409 = vmpackc.low %vm407, %vm407
      %vm410 = vmpackc.low %vm408, %vm408
      %v411 = vsel %vm409, 65537, 0
      %v412 = vsel %vm410, 65537, 0
      %v413 = vunpack.c.l.b16 %v411
      %v414 = vunpack.c.l.b16 %v412
      %v415 = vpack.c.b16 %v414, %v413
      %vm416 = vcmp.ne.s16.totalorder %v415, 0
      %v417 = vsel %vm416, %v404, 0
      %v418 = vrot.slane %v383, 2
      %v419 = vrot.slane %v384, 2
      %vm420 = vcmp.lt.s32.totalorder %v283, 6
      %v421 = vsel %vm420, %v418, %v419
      %v422 = vsel %vm420, %v419, %v418
      %v423 = vpack.c.bf16 %v422, %v421
      %v424 = vsel %vm329, 1, 0
      %v425 = vsel %vm330, 1, 0
      %vm426 = vcmp.eq.s32.totalorder %v424, 1
      %vm427 = vcmp.eq.s32.totalorder %v425, 1
      %vm428 = vmpackc.low %vm426, %vm426
      %vm429 = vmpackc.low %vm427, %vm427
      %v430 = vsel %vm428, 65537, 0
      %v431 = vsel %vm429, 65537, 0
      %v432 = vunpack.c.l.b16 %v430
      %v433 = vunpack.c.l.b16 %v431
      %v434 = vpack.c.b16 %v433, %v432
      %vm435 = vcmp.ne.s16.totalorder %v434, 0
      %v436 = vsel %vm435, %v423, 0
      %438 = vrot.lane.b32.xlu0 %v417, 4
      %v439 = vpop.permute.xlu0 %438
      %441 = vrot.lane.b32.xlu0 %v436, 8
      %v442 = vpop.permute.xlu0 %441
      %vm443 = vcmask 31744
      %v446 = vsel %vm443, %v403, %v439
      %vm447 = vcmask 64512
      %v449 = vsel %vm447, %v446, %v442
      %v450 = vld [vmem:[%s1] sm:$0xf]
      %v451 = vld [vmem:[%s1 + $0x4] sm:$0x3]
      %v452 = vld [vmem:[%s2] sm:$0x1]
      %v454 = vlaneseq
      %v455 = vshrl.u32 %v454, 7
      %v456 = vsub.s32 0, %v455
      %v457 = vrot.slane %v452, %v456
      %v461 = vunpack.c.l.b16 %v450
      %v462 = vunpack.c.l.b16 %v451
      %v463 = vpack.c.b16 %v462, %v461
      %vm464 = vcmask 97280
      %v465 = vsel %vm464, %v449, 0
      %vm467 = vcmask 1045504
      %v469 = vsel %vm467, %v463, 0
      %471 = vmatprep.subr.bf16.mxu0 0
      %472 = vmatpush1.bf16.msra.mxu0 %v469
      %473 = vmatprep.subr.bf16.mxu0 0
      %474 = vmatpush1.bf16.msra.mxu0 0
      %475 = vmatprep.subr.bf16.mxu0 0
      %476 = vmatpush1.bf16.msra.mxu0 0
      %477 = vmatprep.subr.bf16.mxu0 0
      %478 = vmatpush1.bf16.msra.mxu0 0
      %479 = vmatprep.subr.bf16.mxu0 0
      %480 = vmatpush1.bf16.msra.mxu0 0
      %481 = vmatprep.subr.bf16.mxu0 0
      %482 = vmatpush1.bf16.msra.mxu0 0
      %483 = vmatprep.subr.bf16.mxu0 0
      %484 = vmatpush1.bf16.msra.mxu0 0
      %485 = vmatprep.subr.bf16.mxu0 0
      %486 = vmatpush1.bf16.msra.mxu0 0
      %487 = vmatprep.subr.bf16.mxu0 0
      %488 = vmatpush1.bf16.msra.mxu0 0
      %489 = vmatprep.subr.bf16.mxu0 0
      %490 = vmatpush1.bf16.msra.mxu0 0
      %491 = vmatprep.subr.bf16.mxu0 0
      %492 = vmatpush1.bf16.msra.mxu0 0
      %493 = vmatprep.subr.bf16.mxu0 0
      %494 = vmatpush1.bf16.msra.mxu0 0
      %495 = vmatprep.subr.bf16.mxu0 0
      %496 = vmatpush1.bf16.msra.mxu0 0
      %497 = vmatprep.subr.bf16.mxu0 0
      %498 = vmatpush1.bf16.msra.mxu0 0
      %499 = vmatprep.subr.bf16.mxu0 0
      %500 = vmatpush1.bf16.msra.mxu0 0
      %501 = vmatprep.subr.bf16.mxu0 0
      %502 = vmatpush1.bf16.msra.mxu0 0
      %503 = vmatprep.mubr.bf16.mxu0 0
      %504 = vmatmul.mubr.bf16.gmra.mrb[0].mxu0 %v465
      %v505 = vpop.f32.mrb[0].mxu0
      %v506 = vadd.f32 %v457, %v505
      %v507 = vpop.f32.mrb[0].mxu0
      %v508 = vpop.f32.mrb[0].mxu0
      %v509 = vadd.f32 %v457, %v508
      %v510 = vpop.f32.mrb[0].mxu0
      %511 = vdwg.mxu0
      %v512 = vmul.f32 %v506, 0.5
      %v513 = vmul.f32 %v509, 0.5
      %v514 = vmul.f32 %v506, 0.70710677
      %v515 = vmul.f32 %v509, 0.70710677
      %v516 = vand.u32 2147483647, %v514
      %v517 = vand.u32 2147483647, %v515
      %v518 = vmul.f32 %v516, 0.3275911
      %v519 = vmul.f32 %v517, 0.3275911
      %v520 = vadd.f32 %v518, 1.0
      %v521 = vadd.f32 %v519, 1.0
      %v522 = vrcp.pop %v520
      %v523 = vrcp.pop %v521
      %v524 = vmul.f32 %v522, 1.0614054
      %v525 = vmul.f32 %v523, 1.0614054
      %v526 = vadd.f32 %v524, -1.4531521
      %v527 = vadd.f32 %v525, -1.4531521
      %v528 = vmul.f32 %v526, %v522
      %v529 = vmul.f32 %v527, %v523
      %v530 = vadd.f32 %v528, 1.4214138
      %v531 = vadd.f32 %v529, 1.4214138
      %v532 = vmul.f32 %v530, %v522
      %v533 = vmul.f32 %v531, %v523
      %v534 = vadd.f32 %v532, -0.28449672
      %v535 = vadd.f32 %v533, -0.28449672
      %v536 = vmul.f32 %v534, %v522
      %v537 = vmul.f32 %v535, %v523
      %v538 = vadd.f32 %v536, 0.2548296
      %v539 = vadd.f32 %v537, 0.2548296
      %v540 = vmul.f32 %v538, %v522
      %v541 = vmul.f32 %v539, %v523
      %v542 = vsub.f32 0.0, %v516
      %v543 = vsub.f32 0.0, %v517
      %v544 = vmul.f32 %v542, %v516
      %v545 = vmul.f32 %v543, %v517
      %v546 = vmul.f32 %v544, 1.442695
      %v547 = vpow.pop %v546
      %v548 = vmul.f32 %v545, 1.442695
      %v549 = vpow.pop %v548
      %v550 = vmul.f32 %v540, %v547
      %v551 = vmul.f32 %v541, %v549
      %v552 = vsub.f32 1.0, %v550
      %v553 = vsub.f32 1.0, %v551
      %vm554 = vcmp.lt.f32.partialorder %v514, 0.0
      %vm555 = vcmp.lt.f32.partialorder %v515, 0.0
      %v556 = vsub.f32 0.0, %v552
      %v557 = vsub.f32 0.0, %v553
      %v558 = vsel %vm554, %v556, %v552
      %v559 = vsel %vm555, %v557, %v553
      %v560 = vadd.f32 %v558, 1.0
      %v561 = vadd.f32 %v559, 1.0
      %v562 = vmul.f32 %v512, %v560
      %v563 = vmul.f32 %v513, %v561
      %v564 = vrot.slane %v562, 6
      %v565 = vrot.slane %v563, 6
      %v566 = vsel %vm387, %v564, %v565
      %v567 = vsel %vm387, %v565, %v564
      %v568 = vpack.c.bf16 %v566, %v567
      %v569 = vsel %vm402, %v568, 0
      %v570 = vpack.c.bf16 %v563, %v562
      %v571 = vsel %vm416, %v570, 0
      %v572 = vrot.slane %v562, 2
      %v573 = vrot.slane %v563, 2
      %v574 = vsel %vm420, %v572, %v573
      %v575 = vsel %vm420, %v573, %v572
      %v576 = vpack.c.bf16 %v575, %v574
      %v577 = vsel %vm435, %v576, 0
      %579 = vrot.lane.b32.xlu0 %v571, 8
      %v580 = vpop.permute.xlu0 %579
      %582 = vrot.lane.b32.xlu0 %v577, 16
      %v583 = vpop.permute.xlu0 %582
      %v586 = vsel %vm447, %v569, %v580
      %vm587 = vcmask 130048
      %v589 = vsel %vm587, %v586, %v583
      %v590 = vld [vmem:[%s3] sm:$0xf]
      %v591 = vld [vmem:[%s3 + $0x4] sm:$0xf]
      %v592 = vld [vmem:[%s3 + $0x8] sm:$0xf]
      %v593 = vld [vmem:[%s4] sm:$0x1]
      %v595 = vlaneseq
      %v596 = vshrl.u32 %v595, 7
      %v597 = vsub.s32 0, %v596
      %v598 = vrot.slane %v593, %v597
      %v603 = vunpack.c.l.b16 %v590
      %v604 = vunpack.c.l.b16 %v591
      %v605 = vunpack.c.l.b16 %v592
      %v606 = vpack.c.b16 %v604, %v603
      %v607 = vpack.c.b16 %v605, %v605
      %vm609 = vcmask 195584
      %v610 = vsel %vm609, %v589, 0
      %vm612 = vcmask 1043456
      %v614 = vsel %vm612, %v607, 0
      %616 = vmatprep.subr.bf16.mxu0 0
      %617 = vmatpush1.bf16.msra.mxu0 %v606
      %618 = vmatprep.subr.bf16.mxu0 0
      %619 = vmatpush1.bf16.msra.mxu0 %v614
      %620 = vmatprep.subr.bf16.mxu0 0
      %621 = vmatpush1.bf16.msra.mxu0 0
      %622 = vmatprep.subr.bf16.mxu0 0
      %623 = vmatpush1.bf16.msra.mxu0 0
      %624 = vmatprep.subr.bf16.mxu0 0
      %625 = vmatpush1.bf16.msra.mxu0 0
      %626 = vmatprep.subr.bf16.mxu0 0
      %627 = vmatpush1.bf16.msra.mxu0 0
      %628 = vmatprep.subr.bf16.mxu0 0
      %629 = vmatpush1.bf16.msra.mxu0 0
      %630 = vmatprep.subr.bf16.mxu0 0
      %631 = vmatpush1.bf16.msra.mxu0 0
      %632 = vmatprep.subr.bf16.mxu0 0
      %633 = vmatpush1.bf16.msra.mxu0 0
      %634 = vmatprep.subr.bf16.mxu0 0
      %635 = vmatpush1.bf16.msra.mxu0 0
      %636 = vmatprep.subr.bf16.mxu0 0
      %637 = vmatpush1.bf16.msra.mxu0 0
      %638 = vmatprep.subr.bf16.mxu0 0
      %639 = vmatpush1.bf16.msra.mxu0 0
      %640 = vmatprep.subr.bf16.mxu0 0
      %641 = vmatpush1.bf16.msra.mxu0 0
      %642 = vmatprep.subr.bf16.mxu0 0
      %643 = vmatpush1.bf16.msra.mxu0 0
      %644 = vmatprep.subr.bf16.mxu0 0
      %645 = vmatpush1.bf16.msra.mxu0 0
      %646 = vmatprep.subr.bf16.mxu0 0
      %647 = vmatpush1.bf16.msra.mxu0 0
      %648 = vmatprep.mubr.bf16.mxu0 0
      %649 = vmatmul.mubr.bf16.gmra.mrb[0].mxu0 %v610
      %v650 = vpop.f32.mrb[0].mxu0
      %v651 = vadd.f32 %v598, %v650
      %v652 = vpop.f32.mrb[0].mxu0
      %v653 = vpop.f32.mrb[0].mxu0
      %v654 = vadd.f32 %v598, %v653
      %v655 = vpop.f32.mrb[0].mxu0
      %656 = vdwg.mxu0
      %v657 = vpack.c.bf16 %v332, %v331
      %v658 = vld [vmem:[%s5] sm:$0x3]
      %v659 = vld [vmem:[%s6] sm:$0x1]
      %v661 = vlaneseq
      %v662 = vshrl.u32 %v661, 7
      %v663 = vsub.s32 0, %v662
      %v664 = vrot.slane %v659, %v663
      %v667 = vsel %vm443, %v657, 0
      %vm669 = vcmask 1041408
      %v671 = vsel %vm669, %v658, 0
      %673 = vmatprep.subr.bf16.mxu0 0
      %674 = vmatpush1.bf16.msra.mxu0 %v671
      %675 = vmatprep.subr.bf16.mxu0 0
      %676 = vmatpush1.bf16.msra.mxu0 0
      %677 = vmatprep.subr.bf16.mxu0 0
      %678 = vmatpush1.bf16.msra.mxu0 0
      %679 = vmatprep.subr.bf16.mxu0 0
      %680 = vmatpush1.bf16.msra.mxu0 0
      %681 = vmatprep.subr.bf16.mxu0 0
      %682 = vmatpush1.bf16.msra.mxu0 0
      %683 = vmatprep.subr.bf16.mxu0 0
      %684 = vmatpush1.bf16.msra.mxu0 0
      %685 = vmatprep.subr.bf16.mxu0 0
      %686 = vmatpush1.bf16.msra.mxu0 0
      %687 = vmatprep.subr.bf16.mxu0 0
      %688 = vmatpush1.bf16.msra.mxu0 0
      %689 = vmatprep.subr.bf16.mxu0 0
      %690 = vmatpush1.bf16.msra.mxu0 0
      %691 = vmatprep.subr.bf16.mxu0 0
      %692 = vmatpush1.bf16.msra.mxu0 0
      %693 = vmatprep.subr.bf16.mxu0 0
      %694 = vmatpush1.bf16.msra.mxu0 0
      %695 = vmatprep.subr.bf16.mxu0 0
      %696 = vmatpush1.bf16.msra.mxu0 0
      %697 = vmatprep.subr.bf16.mxu0 0
      %698 = vmatpush1.bf16.msra.mxu0 0
      %699 = vmatprep.subr.bf16.mxu0 0
      %700 = vmatpush1.bf16.msra.mxu0 0
      %701 = vmatprep.subr.bf16.mxu0 0
      %702 = vmatpush1.bf16.msra.mxu0 0
      %703 = vmatprep.subr.bf16.mxu0 0
      %704 = vmatpush1.bf16.msra.mxu0 0
      %705 = vmatprep.mubr.bf16.mxu0 0
      %706 = vmatmul.mubr.bf16.gmra.mrb[0].mxu0 %v667
      %v707 = vpop.f32.mrb[0].mxu0
      %v708 = vadd.f32 %v664, %v707
      %v709 = vpop.f32.mrb[0].mxu0
      %v710 = vpop.f32.mrb[0].mxu0
      %v711 = vadd.f32 %v664, %v710
      %v712 = vpop.f32.mrb[0].mxu0
      %713 = vdwg.mxu0
      %v714 = vadd.f32 %v651, %v708
      %v715 = vadd.f32 %v654, %v711
      %716 = vst.msk [vmem:[%s278] sm:$0xff] %vm447, %v714
      %717 = vst.msk [vmem:[%s278 + $0x8] sm:$0xff] %vm447, %v715
      %p718 = scmp.lt.s32.totalorder %s18, 1
      %s719 = scalar_select %p718, %s18, 1
      %s720 = smul.addr %s719, 2
      %s721 = smul.addr %s720, 8
      %s722 = scalar_lea.vmem %s7, %s721
      // Predicated region
      $region49: #{tpu_custom_call.1} parent=47 // pred_check
        %p723 = pneg %p188
      $region50: #{tpu_custom_call.1} parent=47 // pred_check_branch
        %725 = sbr.rel (%p723) target = $region52
      $region51: #{tpu_custom_call.1} parent=47 // pred_region
        _
      $region52: #{tpu_custom_call.1} parent=47 // pred_fallthru
        _
    $region48: #{tpu_custom_call.1} parent=5 // pred_fallthru
      _
    %p726 = scmp.le.s32.totalorder 2, %s13
    // Predicated region
    $region53: #{tpu_custom_call.1} parent=5 // pred_check
      %p727 = pneg %p726
    $region54: #{tpu_custom_call.1} parent=5 // pred_check_branch
      %729 = sbr.rel (%p727) target = $region56
    $region55: #{tpu_custom_call.1} parent=5 // pred_region
      %s730 = ssub.s32 %s13, 2
      // Predicated region
      $region57: #{tpu_custom_call.1} parent=55 // pred_check
        %p731 = pneg %p194
      $region58: #{tpu_custom_call.1} parent=55 // pred_check_branch
        %733 = sbr.rel (%p731) target = $region60
      $region59: #{tpu_custom_call.1} parent=55 // pred_region
        %p734 = scmp.lt.s32.totalorder %s19, 1
        %s735 = scalar_select %p734, %s19, 1
        %s736 = smul.addr %s735, 2
        %s737 = smul.addr %s736, 8
        %s738 = scalar_lea.vmem %s7, %s737
      $region60: #{tpu_custom_call.1} parent=55 // pred_fallthru
        _
    $region56: #{tpu_custom_call.1} parent=5 // pred_fallthru
      _
  $region6: #{tpu_custom_call.1} parent=0 // loop_footer
    %s17 = sadd.s32 1, %s13
  $region7: #{tpu_custom_call.1} parent=0 // loop_footer_branch
    %12 = sbr.rel target = $region3
  $region8: #{tpu_custom_call.1} parent=0 // loop_exit
    _

// kernel: tpu_custom_call.1
$region0: #{tpu_custom_call.1}
  #allocation0 [shape = 'u32[]', space=smem, size = 0x4, offset = 0x4, fixed_abs, tag = 'smem constant byte address 0x4 - core index']
  #allocation1 [shape = 'u32[144,128]{1,0:T(1,128)}', space=vmem, size = 0x12000, scoped, tag = 'internal scratch']
  %s0 = inlined_call_operand.vmem [shape: f32[2,16,4], index: 0, kind: input, shape index: {}]
  %s1 = inlined_call_operand.vmem [shape: bf16[12,8], index: 1, kind: input, shape index: {}]
  %s2 = inlined_call_operand.vmem [shape: f32[1,8], index: 2, kind: input, shape index: {}]
  %s3 = inlined_call_operand.vmem [shape: bf16[24,8], index: 3, kind: input, shape index: {}]
  %s4 = inlined_call_operand.vmem [shape: f32[1,8], index: 4, kind: input, shape index: {}]
  %s5 = inlined_call_operand.vmem [shape: bf16[4,8], index: 5, kind: input, shape index: {}]
  %s6 = inlined_call_operand.vmem [shape: f32[1,8], index: 6, kind: input, shape index: {}]
  %s7 = inlined_call_operand.vmem [shape: f32[2,16,8], index: 7, kind: output, shape index: {}]
  %s8 = sld [smem:[#allocation0]]
  $region61: #{tpu_custom_call.1} parent=0
    _
  %s10 = ssub.s32 1, %s8
  %s11 = scalar_select 0, %s10, %s8
  loop: start=0, step=1, limit=4
  $region2: #{tpu_custom_call.1} parent=0 // loop_pre_header
    _
  $region3: #{tpu_custom_call.1} parent=0 // loop_header
    %s13 = sphi 0, %s17
    %p14 = scmp.ge.s32.totalorder %s13, 4
    %s23 = sphi 0, %s25
    %s26 = sphi 0, %s23
    %s27 = sphi 0, %s26
    %s43 = sphi 0, %s27
    %s47 = sphi 0, %s47
    %s49 = sphi 0, %s47
    %s50 = sphi 0, %s49
    %s64 = sphi 0, %s50
    %s68 = sphi 0, %s68
    %s70 = sphi 0, %s68
    %s71 = sphi 0, %s70
    %s85 = sphi 0, %s71
    %s89 = sphi 0, %s89
    %s91 = sphi 0, %s89
    %s92 = sphi 0, %s91
    %s106 = sphi 0, %s92
    %s110 = sphi 0, %s110
    %s112 = sphi 0, %s110
    %s113 = sphi 0, %s112
    %s127 = sphi 0, %s113
    %s131 = sphi 0, %s131
    %s133 = sphi 0, %s131
    %s134 = sphi 0, %s133
    %s148 = sphi 0, %s134
    %s152 = sphi 0, %s152
    %s154 = sphi 0, %s152
    %s155 = sphi 0, %s154
    %s169 = sphi 0, %s155
    %s175 = sphi 0, %s177
    %s178 = sphi 0, %s175
    %s179 = sphi 0, %s178
    %s195 = sphi 0, %s179
  $region4: #{tpu_custom_call.1} parent=0 // loop_header_branch
    %16 = sbr.rel (%p14) target = $region8
  $region5: #{tpu_custom_call.1} parent=0 // loop_body
    %s18 = ssub.s32 %s13, 1
    %s19 = ssub.s32 %s13, 2
    %s20 = sadd.s32 %s13, 1
    %s21 = ssub.s32 %s13, %s20
    %p22 = scmp.eq.s32.totalorder %s21, 0
    %s24 = sadd.s32 %s23, 1
    %s25 = scalar_select %p22, %s23, %s24
    %p28 = pneg %p22
    %p29 = scmp.eq.s32.totalorder %s13, 1
    %p30 = por %p28, %p29
    %p31 = scmp.ne.s32.totalorder %s23, %s26
    %p32 = scmp.eq.s32.totalorder %s13, 0
    %p33 = por %p31, %p32
    %p34 = scmp.ne.s32.totalorder %s23, %s26
    %p35 = scmp.eq.s32.totalorder %s18, 1
    %p36 = por %p34, %p35
    %p37 = scmp.ne.s32.totalorder %s26, %s27
    %p38 = scmp.eq.s32.totalorder %s18, 0
    %p39 = por %p37, %p38
    %p40 = scmp.ne.s32.totalorder %s26, %s27
    %p41 = scmp.eq.s32.totalorder %s19, 1
    %p42 = por %p40, %p41
    %p44 = scmp.ne.s32.totalorder %s27, %s43
    %p45 = scmp.eq.s32.totalorder %s19, 0
    %p46 = por %p44, %p45
    %s48 = sadd.s32 %s47, 1
    %p51 = scmp.eq.s32.totalorder %s13, 1
    %p52 = scmp.ne.s32.totalorder %s47, %s49
    %p53 = scmp.eq.s32.totalorder %s13, 0
    %p54 = por %p52, %p53
    %p55 = scmp.ne.s32.totalorder %s47, %s49
    %p56 = scmp.eq.s32.totalorder %s18, 1
    %p57 = por %p55, %p56
    %p58 = scmp.ne.s32.totalorder %s49, %s50
    %p59 = scmp.eq.s32.totalorder %s18, 0
    %p60 = por %p58, %p59
    %p61 = scmp.ne.s32.totalorder %s49, %s50
    %p62 = scmp.eq.s32.totalorder %s19, 1
    %p63 = por %p61, %p62
    %p65 = scmp.ne.s32.totalorder %s50, %s64
    %p66 = scmp.eq.s32.totalorder %s19, 0
    %p67 = por %p65, %p66
    %s69 = sadd.s32 %s68, 1
    %p72 = scmp.eq.s32.totalorder %s13, 1
    %p73 = scmp.ne.s32.totalorder %s68, %s70
    %p74 = scmp.eq.s32.totalorder %s13, 0
    %p75 = por %p73, %p74
    %p76 = scmp.ne.s32.totalorder %s68, %s70
    %p77 = scmp.eq.s32.totalorder %s18, 1
    %p78 = por %p76, %p77
    %p79 = scmp.ne.s32.totalorder %s70, %s71
    %p80 = scmp.eq.s32.totalorder %s18, 0
    %p81 = por %p79, %p80
    %p82 = scmp.ne.s32.totalorder %s70, %s71
    %p83 = scmp.eq.s32.totalorder %s19, 1
    %p84 = por %p82, %p83
    %p86 = scmp.ne.s32.totalorder %s71, %s85
    %p87 = scmp.eq.s32.totalorder %s19, 0
    %p88 = por %p86, %p87
    %s90 = sadd.s32 %s89, 1
    %p93 = scmp.eq.s32.totalorder %s13, 1
    %p94 = scmp.ne.s32.totalorder %s89, %s91
    %p95 = scmp.eq.s32.totalorder %s13, 0
    %p96 = por %p94, %p95
    %p97 = scmp.ne.s32.totalorder %s89, %s91
    %p98 = scmp.eq.s32.totalorder %s18, 1
    %p99 = por %p97, %p98
    %p100 = scmp.ne.s32.totalorder %s91, %s92
    %p101 = scmp.eq.s32.totalorder %s18, 0
    %p102 = por %p100, %p101
    %p103 = scmp.ne.s32.totalorder %s91, %s92
    %p104 = scmp.eq.s32.totalorder %s19, 1
    %p105 = por %p103, %p104
    %p107 = scmp.ne.s32.totalorder %s92, %s106
    %p108 = scmp.eq.s32.totalorder %s19, 0
    %p109 = por %p107, %p108
    %s111 = sadd.s32 %s110, 1
    %p114 = scmp.eq.s32.totalorder %s13, 1
    %p115 = scmp.ne.s32.totalorder %s110, %s112
    %p116 = scmp.eq.s32.totalorder %s13, 0
    %p117 = por %p115, %p116
    %p118 = scmp.ne.s32.totalorder %s110, %s112
    %p119 = scmp.eq.s32.totalorder %s18, 1
    %p120 = por %p118, %p119
    %p121 = scmp.ne.s32.totalorder %s112, %s113
    %p122 = scmp.eq.s32.totalorder %s18, 0
    %p123 = por %p121, %p122
    %p124 = scmp.ne.s32.totalorder %s112, %s113
    %p125 = scmp.eq.s32.totalorder %s19, 1
    %p126 = por %p124, %p125
    %p128 = scmp.ne.s32.totalorder %s113, %s127
    %p129 = scmp.eq.s32.totalorder %s19, 0
    %p130 = por %p128, %p129
    %s132 = sadd.s32 %s131, 1
    %p135 = scmp.eq.s32.totalorder %s13, 1
    %p136 = scmp.ne.s32.totalorder %s131, %s133
    %p137 = scmp.eq.s32.totalorder %s13, 0
    %p138 = por %p136, %p137
    %p139 = scmp.ne.s32.totalorder %s131, %s133
    %p140 = scmp.eq.s32.totalorder %s18, 1
    %p141 = por %p139, %p140
    %p142 = scmp.ne.s32.totalorder %s133, %s134
    %p143 = scmp.eq.s32.totalorder %s18, 0
    %p144 = por %p142, %p143
    %p145 = scmp.ne.s32.totalorder %s133, %s134
    %p146 = scmp.eq.s32.totalorder %s19, 1
    %p147 = por %p145, %p146
    %p149 = scmp.ne.s32.totalorder %s134, %s148
    %p150 = scmp.eq.s32.totalorder %s19, 0
    %p151 = por %p149, %p150
    %s153 = sadd.s32 %s152, 1
    %p156 = scmp.eq.s32.totalorder %s13, 1
    %p157 = scmp.ne.s32.totalorder %s152, %s154
    %p158 = scmp.eq.s32.totalorder %s13, 0
    %p159 = por %p157, %p158
    %p160 = scmp.ne.s32.totalorder %s152, %s154
    %p161 = scmp.eq.s32.totalorder %s18, 1
    %p162 = por %p160, %p161
    %p163 = scmp.ne.s32.totalorder %s154, %s155
    %p164 = scmp.eq.s32.totalorder %s18, 0
    %p165 = por %p163, %p164
    %p166 = scmp.ne.s32.totalorder %s154, %s155
    %p167 = scmp.eq.s32.totalorder %s19, 1
    %p168 = por %p166, %p167
    %p170 = scmp.ne.s32.totalorder %s155, %s169
    %p171 = scmp.eq.s32.totalorder %s19, 0
    %p172 = por %p170, %p171
    %s173 = ssub.s32 %s13, %s20
    %p174 = scmp.eq.s32.totalorder %s173, 0
    %s176 = sadd.s32 %s175, 1
    %s177 = scalar_select %p174, %s175, %s176
    %p180 = pneg %p174
    %p181 = scmp.eq.s32.totalorder %s13, 1
    %p182 = por %p180, %p181
    %p183 = scmp.ne.s32.totalorder %s175, %s178
    %p184 = scmp.eq.s32.totalorder %s13, 0
    %p185 = por %p183, %p184
    %p186 = scmp.ne.s32.totalorder %s175, %s178
    %p187 = scmp.eq.s32.totalorder %s18, 1
    %p188 = por %p186, %p187
    %p189 = scmp.ne.s32.totalorder %s178, %s179
    %p190 = scmp.eq.s32.totalorder %s18, 0
    %p191 = por %p189, %p190
    %p192 = scmp.ne.s32.totalorder %s178, %s179
    %p193 = scmp.eq.s32.totalorder %s19, 1
    %p194 = por %p192, %p193
    %p196 = scmp.ne.s32.totalorder %s179, %s195
    %p197 = scmp.eq.s32.totalorder %s19, 0
    %p198 = por %p196, %p197
    %p199 = scmp.le.s32.totalorder 1, %s13
    %p200 = scmp.lt.s32.totalorder %s13, 3
    %p201 = pnand %p199, %p200
    %p202 = pneg %p201
    // Predicated region
    $region9: #{tpu_custom_call.1} parent=5 // pred_check
      _
    $region10: #{tpu_custom_call.1} parent=5 // pred_check_branch
      %204 = sbr.rel (%p201) target = $region12
    $region11: #{tpu_custom_call.1} parent=5 // pred_region
      %s205 = ssub.s32 %s13, 1
      // Predicated region
      $region13: #{tpu_custom_call.1} parent=11 // pred_check
        %p206 = pneg %p60
      $region14: #{tpu_custom_call.1} parent=11 // pred_check_branch
        %208 = sbr.rel (%p206) target = $region16
      $region15: #{tpu_custom_call.1} parent=11 // pred_region
        _
      $region16: #{tpu_custom_call.1} parent=11 // pred_fallthru
        _
      // Predicated region
      $region17: #{tpu_custom_call.1} parent=11 // pred_check
        %p209 = pneg %p81
      $region18: #{tpu_custom_call.1} parent=11 // pred_check_branch
        %211 = sbr.rel (%p209) target = $region20
      $region19: #{tpu_custom_call.1} parent=11 // pred_region
        _
      $region20: #{tpu_custom_call.1} parent=11 // pred_fallthru
        _
      // Predicated region
      $region21: #{tpu_custom_call.1} parent=11 // pred_check
        %p212 = pneg %p102
      $region22: #{tpu_custom_call.1} parent=11 // pred_check_branch
        %214 = sbr.rel (%p212) target = $region24
      $region23: #{tpu_custom_call.1} parent=11 // pred_region
        _
      $region24: #{tpu_custom_call.1} parent=11 // pred_fallthru
        _
      // Predicated region
      $region25: #{tpu_custom_call.1} parent=11 // pred_check
        %p215 = pneg %p123
      $region26: #{tpu_custom_call.1} parent=11 // pred_check_branch
        %217 = sbr.rel (%p215) target = $region28
      $region27: #{tpu_custom_call.1} parent=11 // pred_region
        _
      $region28: #{tpu_custom_call.1} parent=11 // pred_fallthru
        _
      // Predicated region
      $region29: #{tpu_custom_call.1} parent=11 // pred_check
        %p218 = pneg %p144
      $region30: #{tpu_custom_call.1} parent=11 // pred_check_branch
        %220 = sbr.rel (%p218) target = $region32
      $region31: #{tpu_custom_call.1} parent=11 // pred_region
        _
      $region32: #{tpu_custom_call.1} parent=11 // pred_fallthru
        _
      // Predicated region
      $region33: #{tpu_custom_call.1} parent=11 // pred_check
        %p221 = pneg %p165
      $region34: #{tpu_custom_call.1} parent=11 // pred_check_branch
        %223 = sbr.rel (%p221) target = $region36
      $region35: #{tpu_custom_call.1} parent=11 // pred_region
        _
      $region36: #{tpu_custom_call.1} parent=11 // pred_fallthru
        _
    $region12: #{tpu_custom_call.1} parent=5 // pred_fallthru
      _
    %p224 = scmp.lt.s32.totalorder %s13, 2
    // Predicated region
    $region37: #{tpu_custom_call.1} parent=5 // pred_check
      %p225 = pneg %p224
    $region38: #{tpu_custom_call.1} parent=5 // pred_check_branch
      %227 = sbr.rel (%p225) target = $region40
    $region39: #{tpu_custom_call.1} parent=5 // pred_region
      // Predicated region
      $region41: #{tpu_custom_call.1} parent=39 // pred_check
        %p228 = pneg %p33
      $region42: #{tpu_custom_call.1} parent=39 // pred_check_branch
        %230 = sbr.rel (%p228) target = $region44
      $region43: #{tpu_custom_call.1} parent=39 // pred_region
        %p231 = scmp.lt.s32.totalorder %s13, 1
        %s232 = scalar_select %p231, %s13, 1
        %s233 = smul.addr %s232, 2
        %s234 = smul.addr %s233, 8
        %s235 = scalar_lea.vmem %s0, %s234
      $region44: #{tpu_custom_call.1} parent=39 // pred_fallthru
        _
    $region40: #{tpu_custom_call.1} parent=5 // pred_fallthru
      _
    %p236 = scmp.le.s32.totalorder 1, %s13
    %p237 = scmp.lt.s32.totalorder %s13, 3
    %p238 = pnand %p236, %p237
    %p239 = pneg %p238
    // Predicated region
    $region45: #{tpu_custom_call.1} parent=5 // pred_check
      _
    $region46: #{tpu_custom_call.1} parent=5 // pred_check_branch
      %241 = sbr.rel (%p238) target = $region48
    $region47: #{tpu_custom_call.1} parent=5 // pred_region
      %s242 = ssub.s32 %s13, 1
      %p243 = scmp.lt.s32.totalorder %s18, 1
      %s244 = scalar_select %p243, %s18, 1
      %s245 = smul.addr %s244, 2
      %s246 = smul.addr %s245, 8
      %s247 = scalar_lea.vmem %s0, %s246
      %p248 = pneg %p39
      %p249 = pneg %p36
      %p250 = pneg %p60
      %p251 = pneg %p57
      %p252 = pneg %p81
      %p253 = pneg %p78
      %p254 = pneg %p102
      %p255 = pneg %p99
      %p256 = pneg %p123
      %p257 = pneg %p120
      %p258 = pneg %p144
      %p259 = pneg %p141
      %p260 = pneg %p165
      %p261 = pneg %p162
      %p262 = pneg %p191
      %p263 = pneg %p188
      %p264 = scmp.lt.s32.totalorder %s18, 1
      %s265 = scalar_select %p264, %s18, 1
      %s266 = smul.addr %s265, 2
      %s267 = smul.addr %s266, 8
      %s268 = scalar_lea.vmem %s7, %s267
      %p269 = scmp.lt.s32.totalorder %s18, 1
      %s270 = scalar_select %p269, %s18, 1
      %s271 = smul.addr %s270, 2
      %s272 = smul.addr %s271, 8
      %s273 = scalar_lea.vmem %s0, %s272
      %p274 = scmp.lt.s32.totalorder %s18, 1
      %s275 = scalar_select %p274, %s18, 1
      %s276 = smul.addr %s275, 2
      %s277 = smul.addr %s276, 8
      %s278 = scalar_lea.vmem %s7, %s277
      %v282 = vlaneseq
      %v283 = vshrl.u32 %v282, 7
      %v284 = vadd.s32 %v283, 8
      %vm285 = vcmp.lt.s32.totalorder %v283, 0
      %v286 = vsub.s32 0, %v283
      %v287 = vsel %vm285, %v286, %v283
      %v288 = vshrl.u32 %v287, 4
      %v289 = vand.u32 %v287, 15
      %v290 = vsub.s32 0, %v289
      %v291 = vsel %vm285, %v290, %v289
      %vm292 = vcmp.lt.s32.totalorder %v284, 0
      %v293 = vsub.s32 0, %v284
      %v294 = vsel %vm292, %v293, %v284
      %v295 = vshrl.u32 %v294, 4
      %v296 = vand.u32 %v294, 15
      %v297 = vsub.s32 0, %v296
      %v298 = vsel %vm292, %v297, %v296
      %vm299 = vcmp.ne.s32.totalorder %v291, 0
      %vm300 = vcmp.ne.s32.totalorder %v298, 0
      %vm301 = vcmp.lt.s32.totalorder %v291, 0
      %vm302 = vcmp.lt.s32.totalorder %v298, 0
      %vm303 = vmand %vm301, %vm299
      %vm304 = vmand %vm302, %vm300
      %v305 = vadd.s32 %v291, 16
      %v306 = vadd.s32 %v298, 16
      %v307 = vsel %vm303, %v305, %v291
      %v308 = vsel %vm304, %v306, %v298
      %v309 = vadd.s32 %v307, 4294967294
      %v310 = vadd.s32 %v308, 4294967294
      %vm311 = vcmp.ge.s32.totalorder %v309, 0
      %vm312 = vcmp.ge.s32.totalorder %v310, 0
      %vm313 = vcmp.lt.s32.totalorder %v309, 16
      %vm314 = vcmp.lt.s32.totalorder %v310, 16
      %vm315 = vmand %vm311, %vm313
      %vm316 = vmand %vm312, %vm314
      %vm317 = vcmp.ge.s32.totalorder %v307, 0
      %vm318 = vcmp.ge.s32.totalorder %v308, 0
      %vm319 = vcmp.lt.s32.totalorder %v307, 16
      %vm320 = vcmp.lt.s32.totalorder %v308, 16
      %vm321 = vmand %vm317, %vm319
      %vm322 = vmand %vm318, %vm320
      %v323 = vadd.s32 %v307, 2
      %v324 = vadd.s32 %v308, 2
      %vm325 = vcmp.ge.s32.totalorder %v323, 0
      %vm326 = vcmp.ge.s32.totalorder %v324, 0
      %vm327 = vcmp.lt.s32.totalorder %v323, 16
      %vm328 = vcmp.lt.s32.totalorder %v324, 16
      %vm329 = vmand %vm325, %vm327
      %vm330 = vmand %vm326, %vm328
      %v331 = vld [vmem:[%s273] sm:$0xff]
      %v332 = vld [vmem:[%s273 + $0x8] sm:$0xff]
      %v333 = vmul.f32 %v331, 0.5
      %v334 = vmul.f32 %v332, 0.5
      %v335 = vmul.f32 %v331, 0.70710677
      %v336 = vmul.f32 %v332, 0.70710677
      %v337 = vand.u32 2147483647, %v335
      %v338 = vand.u32 2147483647, %v336
      %v339 = vmul.f32 %v337, 0.3275911
      %v340 = vmul.f32 %v338, 0.3275911
      %v341 = vadd.f32 %v339, 1.0
      %v342 = vadd.f32 %v340, 1.0
      %v343 = vrcp.pop %v341
      %v344 = vrcp.pop %v342
      %v345 = vmul.f32 %v343, 1.0614054
      %v346 = vmul.f32 %v344, 1.0614054
      %v347 = vadd.f32 %v345, -1.4531521
      %v348 = vadd.f32 %v346, -1.4531521
      %v349 = vmul.f32 %v347, %v343
      %v350 = vmul.f32 %v348, %v344
      %v351 = vadd.f32 %v349, 1.4214138
      %v352 = vadd.f32 %v350, 1.4214138
      %v353 = vmul.f32 %v351, %v343
      %v354 = vmul.f32 %v352, %v344
      %v355 = vadd.f32 %v353, -0.28449672
      %v356 = vadd.f32 %v354, -0.28449672
      %v357 = vmul.f32 %v355, %v343
      %v358 = vmul.f32 %v356, %v344
      %v359 = vadd.f32 %v357, 0.2548296
      %v360 = vadd.f32 %v358, 0.2548296
      %v361 = vmul.f32 %v359, %v343
      %v362 = vmul.f32 %v360, %v344
      %v363 = vsub.f32 0.0, %v337
      %v364 = vsub.f32 0.0, %v338
      %v365 = vmul.f32 %v363, %v337
      %v366 = vmul.f32 %v364, %v338
      %v367 = vmul.f32 %v365, 1.442695
      %v368 = vpow.pop %v367
      %v369 = vmul.f32 %v366, 1.442695
      %v370 = vpow.pop %v369
      %v371 = vmul.f32 %v361, %v368
      %v372 = vmul.f32 %v362, %v370
      %v373 = vsub.f32 1.0, %v371
      %v374 = vsub.f32 1.0, %v372
      %vm375 = vcmp.lt.f32.partialorder %v335, 0.0
      %vm376 = vcmp.lt.f32.partialorder %v336, 0.0
      %v377 = vsub.f32 0.0, %v373
      %v378 = vsub.f32 0.0, %v374
      %v379 = vsel %vm375, %v377, %v373
      %v380 = vsel %vm376, %v378, %v374
      %v381 = vadd.f32 %v379, 1.0
      %v382 = vadd.f32 %v380, 1.0
      %v383 = vmul.f32 %v333, %v381
      %v384 = vmul.f32 %v334, %v382
      %v385 = vrot.slane %v383, 6
      %v386 = vrot.slane %v384, 6
      %vm387 = vcmp.lt.s32.totalorder %v283, 2
      %v388 = vsel %vm387, %v385, %v386
      %v389 = vsel %vm387, %v386, %v385
      %v390 = vpack.c.bf16 %v388, %v389
      %v391 = vsel %vm315, 1, 0
      %v392 = vsel %vm316, 1, 0
      %vm393 = vcmp.eq.s32.totalorder %v391, 1
      %vm394 = vcmp.eq.s32.totalorder %v392, 1
      %vm395 = vmpackc.low %vm393, %vm393
      %vm396 = vmpackc.low %vm394, %vm394
      %v397 = vsel %vm395, 65537, 0
      %v398 = vsel %vm396, 65537, 0
      %v399 = vunpack.c.l.b16 %v397
      %v400 = vunpack.c.l.b16 %v398
      %v401 = vpack.c.b16 %v400, %v399
      %vm402 = vcmp.ne.s16.totalorder %v401, 0
      %v403 = vsel %vm402, %v390, 0
      %v404 = vpack.c.bf16 %v384, %v383
      %v405 = vsel %vm321, 1, 0
      %v406 = vsel %vm322, 1, 0
      %vm407 = vcmp.eq.s32.totalorder %v405, 1
      %vm408 = vcmp.eq.s32.totalorder %v406, 1
      %vm409 = vmpackc.low %vm407, %vm407
      %vm410 = vmpackc.low %vm408, %vm408
      %v411 = vsel %vm409, 65537, 0
      %v412 = vsel %vm410, 65537, 0
      %v413 = vunpack.c.l.b16 %v411
      %v414 = vunpack.c.l.b16 %v412
      %v415 = vpack.c.b16 %v414, %v413
      %vm416 = vcmp.ne.s16.totalorder %v415, 0
      %v417 = vsel %vm416, %v404, 0
      %v418 = vrot.slane %v383, 2
      %v419 = vrot.slane %v384, 2
      %vm420 = vcmp.lt.s32.totalorder %v283, 6
      %v421 = vsel %vm420, %v418, %v419
      %v422 = vsel %vm420, %v419, %v418
      %v423 = vpack.c.bf16 %v422, %v421
      %v424 = vsel %vm329, 1, 0
      %v425 = vsel %vm330, 1, 0
      %vm426 = vcmp.eq.s32.totalorder %v424, 1
      %vm427 = vcmp.eq.s32.totalorder %v425, 1
      %vm428 = vmpackc.low %vm426, %vm426
      %vm429 = vmpackc.low %vm427, %vm427
      %v430 = vsel %vm428, 65537, 0
      %v431 = vsel %vm429, 65537, 0
      %v432 = vunpack.c.l.b16 %v430
      %v433 = vunpack.c.l.b16 %v431
      %v434 = vpack.c.b16 %v433, %v432
      %vm435 = vcmp.ne.s16.totalorder %v434, 0
      %v436 = vsel %vm435, %v423, 0
      %438 = vrot.lane.b32.xlu0 %v417, 4
      %v439 = vpop.permute.xlu0 %438
      %441 = vrot.lane.b32.xlu0 %v436, 8
      %v442 = vpop.permute.xlu0 %441
      %vm443 = vcmask 31744
      %v446 = vsel %vm443, %v403, %v439
      %vm447 = vcmask 64512
      %v449 = vsel %vm447, %v446, %v442
      %v450 = vld [vmem:[%s1] sm:$0xf]
      %v451 = vld [vmem:[%s1 + $0x4] sm:$0x3]
      %v452 = vld [vmem:[%s2] sm:$0x1]
      %v454 = vlaneseq
      %v455 = vshrl.u32 %v454, 7
      %v456 = vsub.s32 0, %v455
      %v457 = vrot.slane %v452, %v456
      %v461 = vunpack.c.l.b16 %v450
      %v462 = vunpack.c.l.b16 %v451
      %v463 = vpack.c.b16 %v462, %v461
      %vm464 = vcmask 97280
      %v465 = vsel %vm464, %v449, 0
      %vm467 = vcmask 1045504
      %v469 = vsel %vm467, %v463, 0
      %471 = vmatprep.subr.bf16.mxu0 0
      %472 = vmatpush1.bf16.msra.mxu0 %v469
      %473 = vmatprep.subr.bf16.mxu0 0
      %474 = vmatpush1.bf16.msra.mxu0 0
      %475 = vmatprep.subr.bf16.mxu0 0
      %476 = vmatpush1.bf16.msra.mxu0 0
      %477 = vmatprep.subr.bf16.mxu0 0
      %478 = vmatpush1.bf16.msra.mxu0 0
      %479 = vmatprep.subr.bf16.mxu0 0
      %480 = vmatpush1.bf16.msra.mxu0 0
      %481 = vmatprep.subr.bf16.mxu0 0
      %482 = vmatpush1.bf16.msra.mxu0 0
      %483 = vmatprep.subr.bf16.mxu0 0
      %484 = vmatpush1.bf16.msra.mxu0 0
      %485 = vmatprep.subr.bf16.mxu0 0
      %486 = vmatpush1.bf16.msra.mxu0 0
      %487 = vmatprep.subr.bf16.mxu0 0
      %488 = vmatpush1.bf16.msra.mxu0 0
      %489 = vmatprep.subr.bf16.mxu0 0
      %490 = vmatpush1.bf16.msra.mxu0 0
      %491 = vmatprep.subr.bf16.mxu0 0
      %492 = vmatpush1.bf16.msra.mxu0 0
      %493 = vmatprep.subr.bf16.mxu0 0
      %494 = vmatpush1.bf16.msra.mxu0 0
      %495 = vmatprep.subr.bf16.mxu0 0
      %496 = vmatpush1.bf16.msra.mxu0 0
      %497 = vmatprep.subr.bf16.mxu0 0
      %498 = vmatpush1.bf16.msra.mxu0 0
      %499 = vmatprep.subr.bf16.mxu0 0
      %500 = vmatpush1.bf16.msra.mxu0 0
      %501 = vmatprep.subr.bf16.mxu0 0
      %502 = vmatpush1.bf16.msra.mxu0 0
      %503 = vmatprep.mubr.bf16.mxu0 0
      %504 = vmatmul.mubr.bf16.gmra.mrb[0].mxu0 %v465
      %v505 = vpop.f32.mrb[0].mxu0
      %v506 = vadd.f32 %v457, %v505
      %v507 = vpop.f32.mrb[0].mxu0
      %v508 = vpop.f32.mrb[0].mxu0
      %v509 = vadd.f32 %v457, %v508
      %v510 = vpop.f32.mrb[0].mxu0
      %511 = vdwg.mxu0
      %v512 = vmul.f32 %v506, 0.5
      %v513 = vmul.f32 %v509, 0.5
      %v514 = vmul.f32 %v506, 0.70710677
      %v515 = vmul.f32 %v509, 0.70710677
      %v516 = vand.u32 2147483647, %v514
      %v517 = vand.u32 2147483647, %v515
      %v518 = vmul.f32 %v516, 0.3275911
      %v519 = vmul.f32 %v517, 0.3275911
      %v520 = vadd.f32 %v518, 1.0
      %v521 = vadd.f32 %v519, 1.0
      %v522 = vrcp.pop %v520
      %v523 = vrcp.pop %v521
      %v524 = vmul.f32 %v522, 1.0614054
      %v525 = vmul.f32 %v523, 1.0614054
      %v526 = vadd.f32 %v524, -1.4531521
      %v527 = vadd.f32 %v525, -1.4531521
      %v528 = vmul.f32 %v526, %v522
      %v529 = vmul.f32 %v527, %v523
      %v530 = vadd.f32 %v528, 1.4214138
      %v531 = vadd.f32 %v529, 1.4214138
      %v532 = vmul.f32 %v530, %v522
      %v533 = vmul.f32 %v531, %v523
      %v534 = vadd.f32 %v532, -0.28449672
      %v535 = vadd.f32 %v533, -0.28449672
      %v536 = vmul.f32 %v534, %v522
      %v537 = vmul.f32 %v535, %v523
      %v538 = vadd.f32 %v536, 0.2548296
      %v539 = vadd.f32 %v537, 0.2548296
      %v540 = vmul.f32 %v538, %v522
      %v541 = vmul.f32 %v539, %v523
      %v542 = vsub.f32 0.0, %v516
      %v543 = vsub.f32 0.0, %v517
      %v544 = vmul.f32 %v542, %v516
      %v545 = vmul.f32 %v543, %v517
      %v546 = vmul.f32 %v544, 1.442695
      %v547 = vpow.pop %v546
      %v548 = vmul.f32 %v545, 1.442695
      %v549 = vpow.pop %v548
      %v550 = vmul.f32 %v540, %v547
      %v551 = vmul.f32 %v541, %v549
      %v552 = vsub.f32 1.0, %v550
      %v553 = vsub.f32 1.0, %v551
      %vm554 = vcmp.lt.f32.partialorder %v514, 0.0
      %vm555 = vcmp.lt.f32.partialorder %v515, 0.0
      %v556 = vsub.f32 0.0, %v552
      %v557 = vsub.f32 0.0, %v553
      %v558 = vsel %vm554, %v556, %v552
      %v559 = vsel %vm555, %v557, %v553
      %v560 = vadd.f32 %v558, 1.0
      %v561 = vadd.f32 %v559, 1.0
      %v562 = vmul.f32 %v512, %v560
      %v563 = vmul.f32 %v513, %v561
      %v564 = vrot.slane %v562, 6
      %v565 = vrot.slane %v563, 6
      %v566 = vsel %vm387, %v564, %v565
      %v567 = vsel %vm387, %v565, %v564
      %v568 = vpack.c.bf16 %v566, %v567
      %v569 = vsel %vm402, %v568, 0
      %v570 = vpack.c.bf16 %v563, %v562
      %v571 = vsel %vm416, %v570, 0
      %v572 = vrot.slane %v562, 2
      %v573 = vrot.slane %v563, 2
      %v574 = vsel %vm420, %v572, %v573
      %v575 = vsel %vm420, %v573, %v572
      %v576 = vpack.c.bf16 %v575, %v574
      %v577 = vsel %vm435, %v576, 0
      %579 = vrot.lane.b32.xlu0 %v571, 8
      %v580 = vpop.permute.xlu0 %579
      %582 = vrot.lane.b32.xlu0 %v577, 16
      %v583 = vpop.permute.xlu0 %582
      %v586 = vsel %vm447, %v569, %v580
      %vm587 = vcmask 130048
      %v589 = vsel %vm587, %v586, %v583
      %v590 = vld [vmem:[%s3] sm:$0xf]
      %v591 = vld [vmem:[%s3 + $0x4] sm:$0xf]
      %v592 = vld [vmem:[%s3 + $0x8] sm:$0xf]
      %v593 = vld [vmem:[%s4] sm:$0x1]
      %v595 = vlaneseq
      %v596 = vshrl.u32 %v595, 7
      %v597 = vsub.s32 0, %v596
      %v598 = vrot.slane %v593, %v597
      %v603 = vunpack.c.l.b16 %v590
      %v604 = vunpack.c.l.b16 %v591
      %v605 = vunpack.c.l.b16 %v592
      %v606 = vpack.c.b16 %v604, %v603
      %v607 = vpack.c.b16 %v605, %v605
      %vm609 = vcmask 195584
      %v610 = vsel %vm609, %v589, 0
      %vm612 = vcmask 1043456
      %v614 = vsel %vm612, %v607, 0
      %616 = vmatprep.subr.bf16.mxu0 0
      %617 = vmatpush1.bf16.msra.mxu0 %v606
      %618 = vmatprep.subr.bf16.mxu0 0
      %619 = vmatpush1.bf16.msra.mxu0 %v614
      %620 = vmatprep.subr.bf16.mxu0 0
      %621 = vmatpush1.bf16.msra.mxu0 0
      %622 = vmatprep.subr.bf16.mxu0 0
      %623 = vmatpush1.bf16.msra.mxu0 0
      %624 = vmatprep.subr.bf16.mxu0 0
      %625 = vmatpush1.bf16.msra.mxu0 0
      %626 = vmatprep.subr.bf16.mxu0 0
      %627 = vmatpush1.bf16.msra.mxu0 0
      %628 = vmatprep.subr.bf16.mxu0 0
      %629 = vmatpush1.bf16.msra.mxu0 0
      %630 = vmatprep.subr.bf16.mxu0 0
      %631 = vmatpush1.bf16.msra.mxu0 0
      %632 = vmatprep.subr.bf16.mxu0 0
      %633 = vmatpush1.bf16.msra.mxu0 0
      %634 = vmatprep.subr.bf16.mxu0 0
      %635 = vmatpush1.bf16.msra.mxu0 0
      %636 = vmatprep.subr.bf16.mxu0 0
      %637 = vmatpush1.bf16.msra.mxu0 0
      %638 = vmatprep.subr.bf16.mxu0 0
      %639 = vmatpush1.bf16.msra.mxu0 0
      %640 = vmatprep.subr.bf16.mxu0 0
      %641 = vmatpush1.bf16.msra.mxu0 0
      %642 = vmatprep.subr.bf16.mxu0 0
      %643 = vmatpush1.bf16.msra.mxu0 0
      %644 = vmatprep.subr.bf16.mxu0 0
      %645 = vmatpush1.bf16.msra.mxu0 0
      %646 = vmatprep.subr.bf16.mxu0 0
      %647 = vmatpush1.bf16.msra.mxu0 0
      %648 = vmatprep.mubr.bf16.mxu0 0
      %649 = vmatmul.mubr.bf16.gmra.mrb[0].mxu0 %v610
      %v650 = vpop.f32.mrb[0].mxu0
      %v651 = vadd.f32 %v598, %v650
      %v652 = vpop.f32.mrb[0].mxu0
      %v653 = vpop.f32.mrb[0].mxu0
      %v654 = vadd.f32 %v598, %v653
      %v655 = vpop.f32.mrb[0].mxu0
      %656 = vdwg.mxu0
      %v657 = vpack.c.bf16 %v332, %v331
      %v658 = vld [vmem:[%s5] sm:$0x3]
      %v659 = vld [vmem:[%s6] sm:$0x1]
      %v661 = vlaneseq
      %v662 = vshrl.u32 %v661, 7
      %v663 = vsub.s32 0, %v662
      %v664 = vrot.slane %v659, %v663
      %v667 = vsel %vm443, %v657, 0
      %vm669 = vcmask 1041408
      %v671 = vsel %vm669, %v658, 0
      %673 = vmatprep.subr.bf16.mxu0 0
      %674 = vmatpush1.bf16.msra.mxu0 %v671
      %675 = vmatprep.subr.bf16.mxu0 0
      %676 = vmatpush1.bf16.msra.mxu0 0
      %677 = vmatprep.subr.bf16.mxu0 0
      %678 = vmatpush1.bf16.msra.mxu0 0
      %679 = vmatprep.subr.bf16.mxu0 0
      %680 = vmatpush1.bf16.msra.mxu0 0
      %681 = vmatprep.subr.bf16.mxu0 0
      %682 = vmatpush1.bf16.msra.mxu0 0
      %683 = vmatprep.subr.bf16.mxu0 0
      %684 = vmatpush1.bf16.msra.mxu0 0
      %685 = vmatprep.subr.bf16.mxu0 0
      %686 = vmatpush1.bf16.msra.mxu0 0
      %687 = vmatprep.subr.bf16.mxu0 0
      %688 = vmatpush1.bf16.msra.mxu0 0
      %689 = vmatprep.subr.bf16.mxu0 0
      %690 = vmatpush1.bf16.msra.mxu0 0
      %691 = vmatprep.subr.bf16.mxu0 0
      %692 = vmatpush1.bf16.msra.mxu0 0
      %693 = vmatprep.subr.bf16.mxu0 0
      %694 = vmatpush1.bf16.msra.mxu0 0
      %695 = vmatprep.subr.bf16.mxu0 0
      %696 = vmatpush1.bf16.msra.mxu0 0
      %697 = vmatprep.subr.bf16.mxu0 0
      %698 = vmatpush1.bf16.msra.mxu0 0
      %699 = vmatprep.subr.bf16.mxu0 0
      %700 = vmatpush1.bf16.msra.mxu0 0
      %701 = vmatprep.subr.bf16.mxu0 0
      %702 = vmatpush1.bf16.msra.mxu0 0
      %703 = vmatprep.subr.bf16.mxu0 0
      %704 = vmatpush1.bf16.msra.mxu0 0
      %705 = vmatprep.mubr.bf16.mxu0 0
      %706 = vmatmul.mubr.bf16.gmra.mrb[0].mxu0 %v667
      %v707 = vpop.f32.mrb[0].mxu0
      %v708 = vadd.f32 %v664, %v707
      %v709 = vpop.f32.mrb[0].mxu0
      %v710 = vpop.f32.mrb[0].mxu0
      %v711 = vadd.f32 %v664, %v710
      %v712 = vpop.f32.mrb[0].mxu0
      %713 = vdwg.mxu0
      %v714 = vadd.f32 %v651, %v708
      %v715 = vadd.f32 %v654, %v711
      %716 = vst.msk [vmem:[%s278] sm:$0xff] %vm447, %v714
      %717 = vst.msk [vmem:[%s278 + $0x8] sm:$0xff] %vm447, %v715
      %p718 = scmp.lt.s32.totalorder %s18, 1
      %s719 = scalar_select %p718, %s18, 1
      %s720 = smul.addr %s719, 2
      %s721 = smul.addr %s720, 8
      %s722 = scalar_lea.vmem %s7, %s721
      // Predicated region
      $region49: #{tpu_custom_call.1} parent=47 // pred_check
        %p723 = pneg %p188
      $region50: #{tpu_custom_call.1} parent=47 // pred_check_branch
        %725 = sbr.rel (%p723) target = $region52
      $region51: #{tpu_custom_call.1} parent=47 // pred_region
        _
      $region52: #{tpu_custom_call.1} parent=47 // pred_fallthru
        _
    $region48: #{tpu_custom_call.1} parent=5 // pred_fallthru
      _
    %p726 = scmp.le.s32.totalorder 2, %s13
    // Predicated region
    $region53: #{tpu_custom_call.1} parent=5 // pred_check
      %p727 = pneg %p726
    $region54: #{tpu_custom_call.1} parent=5 // pred_check_branch
      %729 = sbr.rel (%p727) target = $region56
    $region55: #{tpu_custom_call.1} parent=5 // pred_region
      %s730 = ssub.s32 %s13, 2
      // Predicated region
      $region57: #{tpu_custom_call.1} parent=55 // pred_check
        %p731 = pneg %p194
      $region58: #{tpu_custom_call.1} parent=55 // pred_check_branch
        %733 = sbr.rel (%p731) target = $region60
      $region59: #{tpu_custom_call.1} parent=55 // pred_region
        %p734 = scmp.lt.s32.totalorder %s19, 1
        %s735 = scalar_select %p734, %s19, 1
        %s736 = smul.addr %s735, 2
        %s737 = smul.addr %s736, 8
        %s738 = scalar_lea.vmem %s7, %s737
      $region60: #{tpu_custom_call.1} parent=55 // pred_fallthru
        _
    $region56: #{tpu_custom_call.1} parent=5 // pred_fallthru
      _
  $region6: #{tpu_custom_call.1} parent=0 // loop_footer
    %s17 = sadd.s32 1, %s13
  $region7: #{tpu_custom_call.1} parent=0 // loop_footer_branch
    %12 = sbr.rel target = $region3
  $region8: #{tpu_custom_call.1} parent=0 // loop_exit
    _

// kernel: tpu_custom_call.1
$region0: #{tpu_custom_call.1}
  #allocation0 [shape = 'u32[]', space=smem, size = 0x4, offset = 0x4, fixed_abs, tag = 'smem constant byte address 0x4 - core index']
  #allocation1 [shape = 'u32[144,128]{1,0:T(1,128)}', space=vmem, size = 0x12000, scoped, tag = 'internal scratch']
  %s0 = inlined_call_operand.vmem [shape: f32[2,16,4], index: 0, kind: input, shape index: {}]
  %s1 = inlined_call_operand.vmem [shape: bf16[3,4,8], index: 1, kind: input, shape index: {}]
  %s2 = inlined_call_operand.vmem [shape: f32[1,8], index: 2, kind: input, shape index: {}]
  %s3 = inlined_call_operand.vmem [shape: bf16[3,8,8], index: 3, kind: input, shape index: {}]
  %s4 = inlined_call_operand.vmem [shape: f32[1,8], index: 4, kind: input, shape index: {}]
  %s5 = inlined_call_operand.vmem [shape: bf16[4,8], index: 5, kind: input, shape index: {}]
  %s6 = inlined_call_operand.vmem [shape: f32[1,8], index: 6, kind: input, shape index: {}]
  %s7 = inlined_call_operand.vmem [shape: f32[2,16,8], index: 7, kind: output, shape index: {}]
  %s8 = sld [smem:[#allocation0]]
  $region61: #{tpu_custom_call.1} parent=0
    _
  %s10 = ssub.s32 1, %s8
  %s11 = scalar_select 0, %s10, %s8
  loop: start=0, step=1, limit=4
  $region2: #{tpu_custom_call.1} parent=0 // loop_pre_header
    _
  $region3: #{tpu_custom_call.1} parent=0 // loop_header
    %s13 = sphi 0, %s17
    %p14 = scmp.ge.s32.totalorder %s13, 4
    %s23 = sphi 0, %s25
    %s26 = sphi 0, %s23
    %s27 = sphi 0, %s26
    %s43 = sphi 0, %s27
    %s47 = sphi 0, %s47
    %s49 = sphi 0, %s47
    %s50 = sphi 0, %s49
    %s64 = sphi 0, %s50
    %s68 = sphi 0, %s68
    %s70 = sphi 0, %s68
    %s71 = sphi 0, %s70
    %s85 = sphi 0, %s71
    %s89 = sphi 0, %s89
    %s91 = sphi 0, %s89
    %s92 = sphi 0, %s91
    %s106 = sphi 0, %s92
    %s110 = sphi 0, %s110
    %s112 = sphi 0, %s110
    %s113 = sphi 0, %s112
    %s127 = sphi 0, %s113
    %s131 = sphi 0, %s131
    %s133 = sphi 0, %s131
    %s134 = sphi 0, %s133
    %s148 = sphi 0, %s134
    %s152 = sphi 0, %s152
    %s154 = sphi 0, %s152
    %s155 = sphi 0, %s154
    %s169 = sphi 0, %s155
    %s175 = sphi 0, %s177
    %s178 = sphi 0, %s175
    %s179 = sphi 0, %s178
    %s195 = sphi 0, %s179
  $region4: #{tpu_custom_call.1} parent=0 // loop_header_branch
    %16 = sbr.rel (%p14) target = $region8
  $region5: #{tpu_custom_call.1} parent=0 // loop_body
    %s18 = ssub.s32 %s13, 1
    %s19 = ssub.s32 %s13, 2
    %s20 = sadd.s32 %s13, 1
    %s21 = ssub.s32 %s13, %s20
    %p22 = scmp.eq.s32.totalorder %s21, 0
    %s24 = sadd.s32 %s23, 1
    %s25 = scalar_select %p22, %s23, %s24
    %p28 = pneg %p22
    %p29 = scmp.eq.s32.totalorder %s13, 1
    %p30 = por %p28, %p29
    %p31 = scmp.ne.s32.totalorder %s23, %s26
    %p32 = scmp.eq.s32.totalorder %s13, 0
    %p33 = por %p31, %p32
    %p34 = scmp.ne.s32.totalorder %s23, %s26
    %p35 = scmp.eq.s32.totalorder %s18, 1
    %p36 = por %p34, %p35
    %p37 = scmp.ne.s32.totalorder %s26, %s27
    %p38 = scmp.eq.s32.totalorder %s18, 0
    %p39 = por %p37, %p38
    %p40 = scmp.ne.s32.totalorder %s26, %s27
    %p41 = scmp.eq.s32.totalorder %s19, 1
    %p42 = por %p40, %p41
    %p44 = scmp.ne.s32.totalorder %s27, %s43
    %p45 = scmp.eq.s32.totalorder %s19, 0
    %p46 = por %p44, %p45
    %s48 = sadd.s32 %s47, 1
    %p51 = scmp.eq.s32.totalorder %s13, 1
    %p52 = scmp.ne.s32.totalorder %s47, %s49
    %p53 = scmp.eq.s32.totalorder %s13, 0
    %p54 = por %p52, %p53
    %p55 = scmp.ne.s32.totalorder %s47, %s49
    %p56 = scmp.eq.s32.totalorder %s18, 1
    %p57 = por %p55, %p56
    %p58 = scmp.ne.s32.totalorder %s49, %s50
    %p59 = scmp.eq.s32.totalorder %s18, 0
    %p60 = por %p58, %p59
    %p61 = scmp.ne.s32.totalorder %s49, %s50
    %p62 = scmp.eq.s32.totalorder %s19, 1
    %p63 = por %p61, %p62
    %p65 = scmp.ne.s32.totalorder %s50, %s64
    %p66 = scmp.eq.s32.totalorder %s19, 0
    %p67 = por %p65, %p66
    %s69 = sadd.s32 %s68, 1
    %p72 = scmp.eq.s32.totalorder %s13, 1
    %p73 = scmp.ne.s32.totalorder %s68, %s70
    %p74 = scmp.eq.s32.totalorder %s13, 0
    %p75 = por %p73, %p74
    %p76 = scmp.ne.s32.totalorder %s68, %s70
    %p77 = scmp.eq.s32.totalorder %s18, 1
    %p78 = por %p76, %p77
    %p79 = scmp.ne.s32.totalorder %s70, %s71
    %p80 = scmp.eq.s32.totalorder %s18, 0
    %p81 = por %p79, %p80
    %p82 = scmp.ne.s32.totalorder %s70, %s71
    %p83 = scmp.eq.s32.totalorder %s19, 1
    %p84 = por %p82, %p83
    %p86 = scmp.ne.s32.totalorder %s71, %s85
    %p87 = scmp.eq.s32.totalorder %s19, 0
    %p88 = por %p86, %p87
    %s90 = sadd.s32 %s89, 1
    %p93 = scmp.eq.s32.totalorder %s13, 1
    %p94 = scmp.ne.s32.totalorder %s89, %s91
    %p95 = scmp.eq.s32.totalorder %s13, 0
    %p96 = por %p94, %p95
    %p97 = scmp.ne.s32.totalorder %s89, %s91
    %p98 = scmp.eq.s32.totalorder %s18, 1
    %p99 = por %p97, %p98
    %p100 = scmp.ne.s32.totalorder %s91, %s92
    %p101 = scmp.eq.s32.totalorder %s18, 0
    %p102 = por %p100, %p101
    %p103 = scmp.ne.s32.totalorder %s91, %s92
    %p104 = scmp.eq.s32.totalorder %s19, 1
    %p105 = por %p103, %p104
    %p107 = scmp.ne.s32.totalorder %s92, %s106
    %p108 = scmp.eq.s32.totalorder %s19, 0
    %p109 = por %p107, %p108
    %s111 = sadd.s32 %s110, 1
    %p114 = scmp.eq.s32.totalorder %s13, 1
    %p115 = scmp.ne.s32.totalorder %s110, %s112
    %p116 = scmp.eq.s32.totalorder %s13, 0
    %p117 = por %p115, %p116
    %p118 = scmp.ne.s32.totalorder %s110, %s112
    %p119 = scmp.eq.s32.totalorder %s18, 1
    %p120 = por %p118, %p119
    %p121 = scmp.ne.s32.totalorder %s112, %s113
    %p122 = scmp.eq.s32.totalorder %s18, 0
    %p123 = por %p121, %p122
    %p124 = scmp.ne.s32.totalorder %s112, %s113
    %p125 = scmp.eq.s32.totalorder %s19, 1
    %p126 = por %p124, %p125
    %p128 = scmp.ne.s32.totalorder %s113, %s127
    %p129 = scmp.eq.s32.totalorder %s19, 0
    %p130 = por %p128, %p129
    %s132 = sadd.s32 %s131, 1
    %p135 = scmp.eq.s32.totalorder %s13, 1
    %p136 = scmp.ne.s32.totalorder %s131, %s133
    %p137 = scmp.eq.s32.totalorder %s13, 0
    %p138 = por %p136, %p137
    %p139 = scmp.ne.s32.totalorder %s131, %s133
    %p140 = scmp.eq.s32.totalorder %s18, 1
    %p141 = por %p139, %p140
    %p142 = scmp.ne.s32.totalorder %s133, %s134
    %p143 = scmp.eq.s32.totalorder %s18, 0
    %p144 = por %p142, %p143
    %p145 = scmp.ne.s32.totalorder %s133, %s134
    %p146 = scmp.eq.s32.totalorder %s19, 1
    %p147 = por %p145, %p146
    %p149 = scmp.ne.s32.totalorder %s134, %s148
    %p150 = scmp.eq.s32.totalorder %s19, 0
    %p151 = por %p149, %p150
    %s153 = sadd.s32 %s152, 1
    %p156 = scmp.eq.s32.totalorder %s13, 1
    %p157 = scmp.ne.s32.totalorder %s152, %s154
    %p158 = scmp.eq.s32.totalorder %s13, 0
    %p159 = por %p157, %p158
    %p160 = scmp.ne.s32.totalorder %s152, %s154
    %p161 = scmp.eq.s32.totalorder %s18, 1
    %p162 = por %p160, %p161
    %p163 = scmp.ne.s32.totalorder %s154, %s155
    %p164 = scmp.eq.s32.totalorder %s18, 0
    %p165 = por %p163, %p164
    %p166 = scmp.ne.s32.totalorder %s154, %s155
    %p167 = scmp.eq.s32.totalorder %s19, 1
    %p168 = por %p166, %p167
    %p170 = scmp.ne.s32.totalorder %s155, %s169
    %p171 = scmp.eq.s32.totalorder %s19, 0
    %p172 = por %p170, %p171
    %s173 = ssub.s32 %s13, %s20
    %p174 = scmp.eq.s32.totalorder %s173, 0
    %s176 = sadd.s32 %s175, 1
    %s177 = scalar_select %p174, %s175, %s176
    %p180 = pneg %p174
    %p181 = scmp.eq.s32.totalorder %s13, 1
    %p182 = por %p180, %p181
    %p183 = scmp.ne.s32.totalorder %s175, %s178
    %p184 = scmp.eq.s32.totalorder %s13, 0
    %p185 = por %p183, %p184
    %p186 = scmp.ne.s32.totalorder %s175, %s178
    %p187 = scmp.eq.s32.totalorder %s18, 1
    %p188 = por %p186, %p187
    %p189 = scmp.ne.s32.totalorder %s178, %s179
    %p190 = scmp.eq.s32.totalorder %s18, 0
    %p191 = por %p189, %p190
    %p192 = scmp.ne.s32.totalorder %s178, %s179
    %p193 = scmp.eq.s32.totalorder %s19, 1
    %p194 = por %p192, %p193
    %p196 = scmp.ne.s32.totalorder %s179, %s195
    %p197 = scmp.eq.s32.totalorder %s19, 0
    %p198 = por %p196, %p197
    %p199 = scmp.le.s32.totalorder 1, %s13
    %p200 = scmp.lt.s32.totalorder %s13, 3
    %p201 = pnand %p199, %p200
    %p202 = pneg %p201
    // Predicated region
    $region9: #{tpu_custom_call.1} parent=5 // pred_check
      _
    $region10: #{tpu_custom_call.1} parent=5 // pred_check_branch
      %204 = sbr.rel (%p201) target = $region12
    $region11: #{tpu_custom_call.1} parent=5 // pred_region
      %s205 = ssub.s32 %s13, 1
      // Predicated region
      $region13: #{tpu_custom_call.1} parent=11 // pred_check
        %p206 = pneg %p60
      $region14: #{tpu_custom_call.1} parent=11 // pred_check_branch
        %208 = sbr.rel (%p206) target = $region16
      $region15: #{tpu_custom_call.1} parent=11 // pred_region
        _
      $region16: #{tpu_custom_call.1} parent=11 // pred_fallthru
        _
      // Predicated region
      $region17: #{tpu_custom_call.1} parent=11 // pred_check
        %p209 = pneg %p81
      $region18: #{tpu_custom_call.1} parent=11 // pred_check_branch
        %211 = sbr.rel (%p209) target = $region20
      $region19: #{tpu_custom_call.1} parent=11 // pred_region
        _
      $region20: #{tpu_custom_call.1} parent=11 // pred_fallthru
        _
      // Predicated region
      $region21: #{tpu_custom_call.1} parent=11 // pred_check
        %p212 = pneg %p102
      $region22: #{tpu_custom_call.1} parent=11 // pred_check_branch
        %214 = sbr.rel (%p212) target = $region24
      $region23: #{tpu_custom_call.1} parent=11 // pred_region
        _
      $region24: #{tpu_custom_call.1} parent=11 // pred_fallthru
        _
      // Predicated region
      $region25: #{tpu_custom_call.1} parent=11 // pred_check
        %p215 = pneg %p123
      $region26: #{tpu_custom_call.1} parent=11 // pred_check_branch
        %217 = sbr.rel (%p215) target = $region28
      $region27: #{tpu_custom_call.1} parent=11 // pred_region
        _
      $region28: #{tpu_custom_call.1} parent=11 // pred_fallthru
        _
      // Predicated region
      $region29: #{tpu_custom_call.1} parent=11 // pred_check
        %p218 = pneg %p144
      $region30: #{tpu_custom_call.1} parent=11 // pred_check_branch
        %220 = sbr.rel (%p218) target = $region32
      $region31: #{tpu_custom_call.1} parent=11 // pred_region
        _
      $region32: #{tpu_custom_call.1} parent=11 // pred_fallthru
        _
      // Predicated region
      $region33: #{tpu_custom_call.1} parent=11 // pred_check
        %p221 = pneg %p165
      $region34: #{tpu_custom_call.1} parent=11 // pred_check_branch
        %223 = sbr.rel (%p221) target = $region36
      $region35: #{tpu_custom_call.1} parent=11 // pred_region
        _
      $region36: #{tpu_custom_call.1} parent=11 // pred_fallthru
        _
    $region12: #{tpu_custom_call.1} parent=5 // pred_fallthru
      _
    %p224 = scmp.lt.s32.totalorder %s13, 2
    // Predicated region
    $region37: #{tpu_custom_call.1} parent=5 // pred_check
      %p225 = pneg %p224
    $region38: #{tpu_custom_call.1} parent=5 // pred_check_branch
      %227 = sbr.rel (%p225) target = $region40
    $region39: #{tpu_custom_call.1} parent=5 // pred_region
      // Predicated region
      $region41: #{tpu_custom_call.1} parent=39 // pred_check
        %p228 = pneg %p33
      $region42: #{tpu_custom_call.1} parent=39 // pred_check_branch
        %230 = sbr.rel (%p228) target = $region44
      $region43: #{tpu_custom_call.1} parent=39 // pred_region
        %p231 = scmp.lt.s32.totalorder %s13, 1
        %s232 = scalar_select %p231, %s13, 1
        %s233 = smul.addr %s232, 2
        %s234 = smul.addr %s233, 8
        %s235 = scalar_lea.vmem %s0, %s234
      $region44: #{tpu_custom_call.1} parent=39 // pred_fallthru
        _
    $region40: #{tpu_custom_call.1} parent=5 // pred_fallthru
      _
    %p236 = scmp.le.s32.totalorder 1, %s13
    %p237 = scmp.lt.s32.totalorder %s13, 3
    %p238 = pnand %p236, %p237
    %p239 = pneg %p238
    // Predicated region
    $region45: #{tpu_custom_call.1} parent=5 // pred_check
      _
    $region46: #{tpu_custom_call.1} parent=5 // pred_check_branch
      %241 = sbr.rel (%p238) target = $region48
    $region47: #{tpu_custom_call.1} parent=5 // pred_region
      %s242 = ssub.s32 %s13, 1
      %p243 = scmp.lt.s32.totalorder %s18, 1
      %s244 = scalar_select %p243, %s18, 1
      %s245 = smul.addr %s244, 2
      %s246 = smul.addr %s245, 8
      %s247 = scalar_lea.vmem %s0, %s246
      %p248 = pneg %p39
      %p249 = pneg %p36
      %p250 = pneg %p60
      %p251 = pneg %p57
      %p252 = pneg %p81
      %p253 = pneg %p78
      %p254 = pneg %p102
      %p255 = pneg %p99
      %p256 = pneg %p123
      %p257 = pneg %p120
      %p258 = pneg %p144
      %p259 = pneg %p141
      %p260 = pneg %p165
      %p261 = pneg %p162
      %p262 = pneg %p191
      %p263 = pneg %p188
      %p264 = scmp.lt.s32.totalorder %s18, 1
      %s265 = scalar_select %p264, %s18, 1
      %s266 = smul.addr %s265, 2
      %s267 = smul.addr %s266, 8
      %s268 = scalar_lea.vmem %s7, %s267
      %p269 = scmp.lt.s32.totalorder %s18, 1
      %s270 = scalar_select %p269, %s18, 1
      %s271 = smul.addr %s270, 2
      %s272 = smul.addr %s271, 8
      %s273 = scalar_lea.vmem %s0, %s272
      %p274 = scmp.lt.s32.totalorder %s18, 1
      %s275 = scalar_select %p274, %s18, 1
      %s276 = smul.addr %s275, 2
      %s277 = smul.addr %s276, 8
      %s278 = scalar_lea.vmem %s7, %s277
      %v282 = vlaneseq
      %v283 = vshrl.u32 %v282, 7
      %v284 = vadd.s32 %v283, 8
      %vm285 = vcmp.lt.s32.totalorder %v283, 0
      %v286 = vsub.s32 0, %v283
      %v287 = vsel %vm285, %v286, %v283
      %v288 = vshrl.u32 %v287, 4
      %v289 = vand.u32 %v287, 15
      %v290 = vsub.s32 0, %v289
      %v291 = vsel %vm285, %v290, %v289
      %vm292 = vcmp.lt.s32.totalorder %v284, 0
      %v293 = vsub.s32 0, %v284
      %v294 = vsel %vm292, %v293, %v284
      %v295 = vshrl.u32 %v294, 4
      %v296 = vand.u32 %v294, 15
      %v297 = vsub.s32 0, %v296
      %v298 = vsel %vm292, %v297, %v296
      %vm299 = vcmp.ne.s32.totalorder %v291, 0
      %vm300 = vcmp.ne.s32.totalorder %v298, 0
      %vm301 = vcmp.lt.s32.totalorder %v291, 0
      %vm302 = vcmp.lt.s32.totalorder %v298, 0
      %vm303 = vmand %vm301, %vm299
      %vm304 = vmand %vm302, %vm300
      %v305 = vadd.s32 %v291, 16
      %v306 = vadd.s32 %v298, 16
      %v307 = vsel %vm303, %v305, %v291
      %v308 = vsel %vm304, %v306, %v298
      %v309 = vadd.s32 %v307, 4294967294
      %v310 = vadd.s32 %v308, 4294967294
      %vm311 = vcmp.ge.s32.totalorder %v309, 0
      %vm312 = vcmp.ge.s32.totalorder %v310, 0
      %vm313 = vcmp.lt.s32.totalorder %v309, 16
      %vm314 = vcmp.lt.s32.totalorder %v310, 16
      %vm315 = vmand %vm311, %vm313
      %vm316 = vmand %vm312, %vm314
      %vm317 = vcmp.ge.s32.totalorder %v307, 0
      %vm318 = vcmp.ge.s32.totalorder %v308, 0
      %vm319 = vcmp.lt.s32.totalorder %v307, 16
      %vm320 = vcmp.lt.s32.totalorder %v308, 16
      %vm321 = vmand %vm317, %vm319
      %vm322 = vmand %vm318, %vm320
      %v323 = vadd.s32 %v307, 2
      %v324 = vadd.s32 %v308, 2
      %vm325 = vcmp.ge.s32.totalorder %v323, 0
      %vm326 = vcmp.ge.s32.totalorder %v324, 0
      %vm327 = vcmp.lt.s32.totalorder %v323, 16
      %vm328 = vcmp.lt.s32.totalorder %v324, 16
      %vm329 = vmand %vm325, %vm327
      %vm330 = vmand %vm326, %vm328
      %v331 = vld [vmem:[%s273] sm:$0xff]
      %v332 = vld [vmem:[%s273 + $0x8] sm:$0xff]
      %v333 = vmul.f32 %v331, 0.5
      %v334 = vmul.f32 %v332, 0.5
      %v335 = vmul.f32 %v331, 0.70710677
      %v336 = vmul.f32 %v332, 0.70710677
      %v337 = vand.u32 2147483647, %v335
      %v338 = vand.u32 2147483647, %v336
      %v339 = vmul.f32 %v337, 0.3275911
      %v340 = vmul.f32 %v338, 0.3275911
      %v341 = vadd.f32 %v339, 1.0
      %v342 = vadd.f32 %v340, 1.0
      %v343 = vrcp.pop %v341
      %v344 = vrcp.pop %v342
      %v345 = vmul.f32 %v343, 1.0614054
      %v346 = vmul.f32 %v344, 1.0614054
      %v347 = vadd.f32 %v345, -1.4531521
      %v348 = vadd.f32 %v346, -1.4531521
      %v349 = vmul.f32 %v347, %v343
      %v350 = vmul.f32 %v348, %v344
      %v351 = vadd.f32 %v349, 1.4214138
      %v352 = vadd.f32 %v350, 1.4214138
      %v353 = vmul.f32 %v351, %v343
      %v354 = vmul.f32 %v352, %v344
      %v355 = vadd.f32 %v353, -0.28449672
      %v356 = vadd.f32 %v354, -0.28449672
      %v357 = vmul.f32 %v355, %v343
      %v358 = vmul.f32 %v356, %v344
      %v359 = vadd.f32 %v357, 0.2548296
      %v360 = vadd.f32 %v358, 0.2548296
      %v361 = vmul.f32 %v359, %v343
      %v362 = vmul.f32 %v360, %v344
      %v363 = vsub.f32 0.0, %v337
      %v364 = vsub.f32 0.0, %v338
      %v365 = vmul.f32 %v363, %v337
      %v366 = vmul.f32 %v364, %v338
      %v367 = vmul.f32 %v365, 1.442695
      %v368 = vpow.pop %v367
      %v369 = vmul.f32 %v366, 1.442695
      %v370 = vpow.pop %v369
      %v371 = vmul.f32 %v361, %v368
      %v372 = vmul.f32 %v362, %v370
      %v373 = vsub.f32 1.0, %v371
      %v374 = vsub.f32 1.0, %v372
      %vm375 = vcmp.lt.f32.partialorder %v335, 0.0
      %vm376 = vcmp.lt.f32.partialorder %v336, 0.0
      %v377 = vsub.f32 0.0, %v373
      %v378 = vsub.f32 0.0, %v374
      %v379 = vsel %vm375, %v377, %v373
      %v380 = vsel %vm376, %v378, %v374
      %v381 = vadd.f32 %v379, 1.0
      %v382 = vadd.f32 %v380, 1.0
      %v383 = vmul.f32 %v333, %v381
      %v384 = vmul.f32 %v334, %v382
      %v385 = vrot.slane %v383, 6
      %v386 = vrot.slane %v384, 6
      %vm387 = vcmp.lt.s32.totalorder %v283, 2
      %v388 = vsel %vm387, %v385, %v386
      %v389 = vsel %vm387, %v386, %v385
      %v390 = vpack.c.bf16 %v388, %v389
      %v391 = vsel %vm315, 1, 0
      %v392 = vsel %vm316, 1, 0
      %vm393 = vcmp.eq.s32.totalorder %v391, 1
      %vm394 = vcmp.eq.s32.totalorder %v392, 1
      %vm395 = vmpackc.low %vm393, %vm393
      %vm396 = vmpackc.low %vm394, %vm394
      %v397 = vsel %vm395, 65537, 0
      %v398 = vsel %vm396, 65537, 0
      %v399 = vunpack.c.l.b16 %v397
      %v400 = vunpack.c.l.b16 %v398
      %v401 = vpack.c.b16 %v400, %v399
      %vm402 = vcmp.ne.s16.totalorder %v401, 0
      %v403 = vsel %vm402, %v390, 0
      %v404 = vpack.c.bf16 %v384, %v383
      %v405 = vsel %vm321, 1, 0
      %v406 = vsel %vm322, 1, 0
      %vm407 = vcmp.eq.s32.totalorder %v405, 1
      %vm408 = vcmp.eq.s32.totalorder %v406, 1
      %vm409 = vmpackc.low %vm407, %vm407
      %vm410 = vmpackc.low %vm408, %vm408
      %v411 = vsel %vm409, 65537, 0
      %v412 = vsel %vm410, 65537, 0
      %v413 = vunpack.c.l.b16 %v411
      %v414 = vunpack.c.l.b16 %v412
      %v415 = vpack.c.b16 %v414, %v413
      %vm416 = vcmp.ne.s16.totalorder %v415, 0
      %v417 = vsel %vm416, %v404, 0
      %v418 = vrot.slane %v383, 2
      %v419 = vrot.slane %v384, 2
      %vm420 = vcmp.lt.s32.totalorder %v283, 6
      %v421 = vsel %vm420, %v418, %v419
      %v422 = vsel %vm420, %v419, %v418
      %v423 = vpack.c.bf16 %v422, %v421
      %v424 = vsel %vm329, 1, 0
      %v425 = vsel %vm330, 1, 0
      %vm426 = vcmp.eq.s32.totalorder %v424, 1
      %vm427 = vcmp.eq.s32.totalorder %v425, 1
      %vm428 = vmpackc.low %vm426, %vm426
      %vm429 = vmpackc.low %vm427, %vm427
      %v430 = vsel %vm428, 65537, 0
      %v431 = vsel %vm429, 65537, 0
      %v432 = vunpack.c.l.b16 %v430
      %v433 = vunpack.c.l.b16 %v431
      %v434 = vpack.c.b16 %v433, %v432
      %vm435 = vcmp.ne.s16.totalorder %v434, 0
      %v436 = vsel %vm435, %v423, 0
      %v437 = vld [vmem:[%s1] sm:$0x3]
      %s438 = scalar_lea.vmem %s1, 2
      %v439 = vld [vmem:[%s438] sm:$0x3]
      %vm440 = vcmask 31744
      %v442 = vsel %vm440, %v417, 0
      %vm444 = vcmask 1041408
      %v446 = vsel %vm444, %v439, 0
      %448 = vmatprep.subr.bf16.mxu0 0
      %449 = vmatpush1.bf16.msra.mxu0 %v446
      %450 = vmatprep.subr.bf16.mxu0 0
      %451 = vmatpush1.bf16.msra.mxu0 0
      %452 = vmatprep.subr.bf16.mxu0 0
      %453 = vmatpush1.bf16.msra.mxu0 0
      %454 = vmatprep.subr.bf16.mxu0 0
      %455 = vmatpush1.bf16.msra.mxu0 0
      %456 = vmatprep.subr.bf16.mxu0 0
      %457 = vmatpush1.bf16.msra.mxu0 0
      %458 = vmatprep.subr.bf16.mxu0 0
      %459 = vmatpush1.bf16.msra.mxu0 0
      %460 = vmatprep.subr.bf16.mxu0 0
      %461 = vmatpush1.bf16.msra.mxu0 0
      %462 = vmatprep.subr.bf16.mxu0 0
      %463 = vmatpush1.bf16.msra.mxu0 0
      %464 = vmatprep.subr.bf16.mxu0 0
      %465 = vmatpush1.bf16.msra.mxu0 0
      %466 = vmatprep.subr.bf16.mxu0 0
      %467 = vmatpush1.bf16.msra.mxu0 0
      %468 = vmatprep.subr.bf16.mxu0 0
      %469 = vmatpush1.bf16.msra.mxu0 0
      %470 = vmatprep.subr.bf16.mxu0 0
      %471 = vmatpush1.bf16.msra.mxu0 0
      %472 = vmatprep.subr.bf16.mxu0 0
      %473 = vmatpush1.bf16.msra.mxu0 0
      %474 = vmatprep.subr.bf16.mxu0 0
      %475 = vmatpush1.bf16.msra.mxu0 0
      %476 = vmatprep.subr.bf16.mxu0 0
      %477 = vmatpush1.bf16.msra.mxu0 0
      %478 = vmatprep.subr.bf16.mxu0 0
      %479 = vmatpush1.bf16.msra.mxu0 0
      %480 = vmatprep.mubr.bf16.mxu0 0
      %481 = vmatmul.mubr.bf16.gmra.mrb[0].mxu0 %v442
      %v482 = vpop.f32.mrb[0].mxu0
      %v483 = vadd.f32 0.0, %v482
      %v484 = vpop.f32.mrb[0].mxu0
      %v485 = vpop.f32.mrb[0].mxu0
      %v486 = vadd.f32 0.0, %v485
      %v487 = vpop.f32.mrb[0].mxu0
      %488 = vdwg.mxu0
      %v490 = vsel %vm440, %v403, 0
      %v493 = vsel %vm444, %v437, 0
      %495 = vmatprep.subr.bf16.mxu0 0
      %496 = vmatpush1.bf16.msra.mxu0 %v493
      %497 = vmatprep.subr.bf16.mxu0 0
      %498 = vmatpush1.bf16.msra.mxu0 0
      %499 = vmatprep.subr.bf16.mxu0 0
      %500 = vmatpush1.bf16.msra.mxu0 0
      %501 = vmatprep.subr.bf16.mxu0 0
      %502 = vmatpush1.bf16.msra.mxu0 0
      %503 = vmatprep.subr.bf16.mxu0 0
      %504 = vmatpush1.bf16.msra.mxu0 0
      %505 = vmatprep.subr.bf16.mxu0 0
      %506 = vmatpush1.bf16.msra.mxu0 0
      %507 = vmatprep.subr.bf16.mxu0 0
      %508 = vmatpush1.bf16.msra.mxu0 0
      %509 = vmatprep.subr.bf16.mxu0 0
      %510 = vmatpush1.bf16.msra.mxu0 0
      %511 = vmatprep.subr.bf16.mxu0 0
      %512 = vmatpush1.bf16.msra.mxu0 0
      %513 = vmatprep.subr.bf16.mxu0 0
      %514 = vmatpush1.bf16.msra.mxu0 0
      %515 = vmatprep.subr.bf16.mxu0 0
      %516 = vmatpush1.bf16.msra.mxu0 0
      %517 = vmatprep.subr.bf16.mxu0 0
      %518 = vmatpush1.bf16.msra.mxu0 0
      %519 = vmatprep.subr.bf16.mxu0 0
      %520 = vmatpush1.bf16.msra.mxu0 0
      %521 = vmatprep.subr.bf16.mxu0 0
      %522 = vmatpush1.bf16.msra.mxu0 0
      %523 = vmatprep.subr.bf16.mxu0 0
      %524 = vmatpush1.bf16.msra.mxu0 0
      %525 = vmatprep.subr.bf16.mxu0 0
      %526 = vmatpush1.bf16.msra.mxu0 0
      %527 = vmatprep.mubr.bf16.mxu0 0
      %528 = vmatmul.mubr.bf16.gmra.mrb[0].mxu0 %v490
      %v529 = vpop.f32.mrb[0].mxu0
      %v530 = vadd.f32 %v483, %v529
      %v531 = vpop.f32.mrb[0].mxu0
      %v532 = vpop.f32.mrb[0].mxu0
      %v533 = vadd.f32 %v486, %v532
      %v534 = vpop.f32.mrb[0].mxu0
      %535 = vdwg.mxu0
      %s536 = scalar_lea.vmem %s1, 4
      %v537 = vld [vmem:[%s536] sm:$0x3]
      %v539 = vsel %vm440, %v436, 0
      %v542 = vsel %vm444, %v537, 0
      %544 = vmatprep.subr.bf16.mxu0 0
      %545 = vmatpush1.bf16.msra.mxu0 %v542
      %546 = vmatprep.subr.bf16.mxu0 0
      %547 = vmatpush1.bf16.msra.mxu0 0
      %548 = vmatprep.subr.bf16.mxu0 0
      %549 = vmatpush1.bf16.msra.mxu0 0
      %550 = vmatprep.subr.bf16.mxu0 0
      %551 = vmatpush1.bf16.msra.mxu0 0
      %552 = vmatprep.subr.bf16.mxu0 0
      %553 = vmatpush1.bf16.msra.mxu0 0
      %554 = vmatprep.subr.bf16.mxu0 0
      %555 = vmatpush1.bf16.msra.mxu0 0
      %556 = vmatprep.subr.bf16.mxu0 0
      %557 = vmatpush1.bf16.msra.mxu0 0
      %558 = vmatprep.subr.bf16.mxu0 0
      %559 = vmatpush1.bf16.msra.mxu0 0
      %560 = vmatprep.subr.bf16.mxu0 0
      %561 = vmatpush1.bf16.msra.mxu0 0
      %562 = vmatprep.subr.bf16.mxu0 0
      %563 = vmatpush1.bf16.msra.mxu0 0
      %564 = vmatprep.subr.bf16.mxu0 0
      %565 = vmatpush1.bf16.msra.mxu0 0
      %566 = vmatprep.subr.bf16.mxu0 0
      %567 = vmatpush1.bf16.msra.mxu0 0
      %568 = vmatprep.subr.bf16.mxu0 0
      %569 = vmatpush1.bf16.msra.mxu0 0
      %570 = vmatprep.subr.bf16.mxu0 0
      %571 = vmatpush1.bf16.msra.mxu0 0
      %572 = vmatprep.subr.bf16.mxu0 0
      %573 = vmatpush1.bf16.msra.mxu0 0
      %574 = vmatprep.subr.bf16.mxu0 0
      %575 = vmatpush1.bf16.msra.mxu0 0
      %576 = vmatprep.mubr.bf16.mxu0 0
      %577 = vmatmul.mubr.bf16.gmra.mrb[0].mxu0 %v539
      %v578 = vpop.f32.mrb[0].mxu0
      %v579 = vadd.f32 0.0, %v578
      %v580 = vpop.f32.mrb[0].mxu0
      %v581 = vpop.f32.mrb[0].mxu0
      %v582 = vadd.f32 0.0, %v581
      %v583 = vpop.f32.mrb[0].mxu0
      %584 = vdwg.mxu0
      %v585 = vadd.f32 %v530, %v579
      %v586 = vadd.f32 %v533, %v582
      %v587 = vld [vmem:[%s2] sm:$0x1]
      %v589 = vlaneseq
      %v590 = vshrl.u32 %v589, 7
      %v591 = vsub.s32 0, %v590
      %v592 = vrot.slane %v587, %v591
      %v594 = vadd.f32 %v585, %v592
      %v595 = vadd.f32 %v586, %v592
      %v596 = vmul.f32 %v594, 0.5
      %v597 = vmul.f32 %v595, 0.5
      %v598 = vmul.f32 %v594, 0.70710677
      %v599 = vmul.f32 %v595, 0.70710677
      %v600 = vand.u32 2147483647, %v598
      %v601 = vand.u32 2147483647, %v599
      %v602 = vmul.f32 %v600, 0.3275911
      %v603 = vmul.f32 %v601, 0.3275911
      %v604 = vadd.f32 %v602, 1.0
      %v605 = vadd.f32 %v603, 1.0
      %v606 = vrcp.pop %v604
      %v607 = vrcp.pop %v605
      %v608 = vmul.f32 %v606, 1.0614054
      %v609 = vmul.f32 %v607, 1.0614054
      %v610 = vadd.f32 %v608, -1.4531521
      %v611 = vadd.f32 %v609, -1.4531521
      %v612 = vmul.f32 %v610, %v606
      %v613 = vmul.f32 %v611, %v607
      %v614 = vadd.f32 %v612, 1.4214138
      %v615 = vadd.f32 %v613, 1.4214138
      %v616 = vmul.f32 %v614, %v606
      %v617 = vmul.f32 %v615, %v607
      %v618 = vadd.f32 %v616, -0.28449672
      %v619 = vadd.f32 %v617, -0.28449672
      %v620 = vmul.f32 %v618, %v606
      %v621 = vmul.f32 %v619, %v607
      %v622 = vadd.f32 %v620, 0.2548296
      %v623 = vadd.f32 %v621, 0.2548296
      %v624 = vmul.f32 %v622, %v606
      %v625 = vmul.f32 %v623, %v607
      %v626 = vsub.f32 0.0, %v600
      %v627 = vsub.f32 0.0, %v601
      %v628 = vmul.f32 %v626, %v600
      %v629 = vmul.f32 %v627, %v601
      %v630 = vmul.f32 %v628, 1.442695
      %v631 = vpow.pop %v630
      %v632 = vmul.f32 %v629, 1.442695
      %v633 = vpow.pop %v632
      %v634 = vmul.f32 %v624, %v631
      %v635 = vmul.f32 %v625, %v633
      %v636 = vsub.f32 1.0, %v634
      %v637 = vsub.f32 1.0, %v635
      %vm638 = vcmp.lt.f32.partialorder %v598, 0.0
      %vm639 = vcmp.lt.f32.partialorder %v599, 0.0
      %v640 = vsub.f32 0.0, %v636
      %v641 = vsub.f32 0.0, %v637
      %v642 = vsel %vm638, %v640, %v636
      %v643 = vsel %vm639, %v641, %v637
      %v644 = vadd.f32 %v642, 1.0
      %v645 = vadd.f32 %v643, 1.0
      %v646 = vmul.f32 %v596, %v644
      %v647 = vmul.f32 %v597, %v645
      %v648 = vrot.slane %v646, 6
      %v649 = vrot.slane %v647, 6
      %v650 = vsel %vm387, %v648, %v649
      %v651 = vsel %vm387, %v649, %v648
      %v652 = vpack.c.bf16 %v650, %v651
      %v653 = vsel %vm402, %v652, 0
      %v654 = vpack.c.bf16 %v647, %v646
      %v655 = vsel %vm416, %v654, 0
      %v656 = vrot.slane %v646, 2
      %v657 = vrot.slane %v647, 2
      %v658 = vsel %vm420, %v656, %v657
      %v659 = vsel %vm420, %v657, %v656
      %v660 = vpack.c.bf16 %v659, %v658
      %v661 = vsel %vm435, %v660, 0
      %v662 = vld [vmem:[%s3] sm:$0xf]
      %s663 = scalar_lea.vmem %s3, 4
      %v664 = vld [vmem:[%s663] sm:$0xf]
      %vm665 = vcmask 64512
      %v667 = vsel %vm665, %v655, 0
      %vm669 = vcmask 1043456
      %v671 = vsel %vm669, %v664, 0
      %673 = vmatprep.subr.bf16.mxu0 0
      %674 = vmatpush1.bf16.msra.mxu0 %v671
      %675 = vmatprep.subr.bf16.mxu0 0
      %676 = vmatpush1.bf16.msra.mxu0 0
      %677 = vmatprep.subr.bf16.mxu0 0
      %678 = vmatpush1.bf16.msra.mxu0 0
      %679 = vmatprep.subr.bf16.mxu0 0
      %680 = vmatpush1.bf16.msra.mxu0 0
      %681 = vmatprep.subr.bf16.mxu0 0
      %682 = vmatpush1.bf16.msra.mxu0 0
      %683 = vmatprep.subr.bf16.mxu0 0
      %684 = vmatpush1.bf16.msra.mxu0 0
      %685 = vmatprep.subr.bf16.mxu0 0
      %686 = vmatpush1.bf16.msra.mxu0 0
      %687 = vmatprep.subr.bf16.mxu0 0
      %688 = vmatpush1.bf16.msra.mxu0 0
      %689 = vmatprep.subr.bf16.mxu0 0
      %690 = vmatpush1.bf16.msra.mxu0 0
      %691 = vmatprep.subr.bf16.mxu0 0
      %692 = vmatpush1.bf16.msra.mxu0 0
      %693 = vmatprep.subr.bf16.mxu0 0
      %694 = vmatpush1.bf16.msra.mxu0 0
      %695 = vmatprep.subr.bf16.mxu0 0
      %696 = vmatpush1.bf16.msra.mxu0 0
      %697 = vmatprep.subr.bf16.mxu0 0
      %698 = vmatpush1.bf16.msra.mxu0 0
      %699 = vmatprep.subr.bf16.mxu0 0
      %700 = vmatpush1.bf16.msra.mxu0 0
      %701 = vmatprep.subr.bf16.mxu0 0
      %702 = vmatpush1.bf16.msra.mxu0 0
      %703 = vmatprep.subr.bf16.mxu0 0
      %704 = vmatpush1.bf16.msra.mxu0 0
      %705 = vmatprep.mubr.bf16.mxu0 0
      %706 = vmatmul.mubr.bf16.gmra.mrb[0].mxu0 %v667
      %v707 = vpop.f32.mrb[0].mxu0
      %v708 = vadd.f32 0.0, %v707
      %v709 = vpop.f32.mrb[0].mxu0
      %v710 = vpop.f32.mrb[0].mxu0
      %v711 = vadd.f32 0.0, %v710
      %v712 = vpop.f32.mrb[0].mxu0
      %713 = vdwg.mxu0
      %v715 = vsel %vm665, %v653, 0
      %v718 = vsel %vm669, %v662, 0
      %720 = vmatprep.subr.bf16.mxu0 0
      %721 = vmatpush1.bf16.msra.mxu0 %v718
      %722 = vmatprep.subr.bf16.mxu0 0
      %723 = vmatpush1.bf16.msra.mxu0 0
      %724 = vmatprep.subr.bf16.mxu0 0
      %725 = vmatpush1.bf16.msra.mxu0 0
      %726 = vmatprep.subr.bf16.mxu0 0
      %727 = vmatpush1.bf16.msra.mxu0 0
      %728 = vmatprep.subr.bf16.mxu0 0
      %729 = vmatpush1.bf16.msra.mxu0 0
      %730 = vmatprep.subr.bf16.mxu0 0
      %731 = vmatpush1.bf16.msra.mxu0 0
      %732 = vmatprep.subr.bf16.mxu0 0
      %733 = vmatpush1.bf16.msra.mxu0 0
      %734 = vmatprep.subr.bf16.mxu0 0
      %735 = vmatpush1.bf16.msra.mxu0 0
      %736 = vmatprep.subr.bf16.mxu0 0
      %737 = vmatpush1.bf16.msra.mxu0 0
      %738 = vmatprep.subr.bf16.mxu0 0
      %739 = vmatpush1.bf16.msra.mxu0 0
      %740 = vmatprep.subr.bf16.mxu0 0
      %741 = vmatpush1.bf16.msra.mxu0 0
      %742 = vmatprep.subr.bf16.mxu0 0
      %743 = vmatpush1.bf16.msra.mxu0 0
      %744 = vmatprep.subr.bf16.mxu0 0
      %745 = vmatpush1.bf16.msra.mxu0 0
      %746 = vmatprep.subr.bf16.mxu0 0
      %747 = vmatpush1.bf16.msra.mxu0 0
      %748 = vmatprep.subr.bf16.mxu0 0
      %749 = vmatpush1.bf16.msra.mxu0 0
      %750 = vmatprep.subr.bf16.mxu0 0
      %751 = vmatpush1.bf16.msra.mxu0 0
      %752 = vmatprep.mubr.bf16.mxu0 0
      %753 = vmatmul.mubr.bf16.gmra.mrb[0].mxu0 %v715
      %v754 = vpop.f32.mrb[0].mxu0
      %v755 = vadd.f32 %v708, %v754
      %v756 = vpop.f32.mrb[0].mxu0
      %v757 = vpop.f32.mrb[0].mxu0
      %v758 = vadd.f32 %v711, %v757
      %v759 = vpop.f32.mrb[0].mxu0
      %760 = vdwg.mxu0
      %s761 = scalar_lea.vmem %s3, 8
      %v762 = vld [vmem:[%s761] sm:$0xf]
      %v764 = vsel %vm665, %v661, 0
      %v767 = vsel %vm669, %v762, 0
      %769 = vmatprep.subr.bf16.mxu0 0
      %770 = vmatpush1.bf16.msra.mxu0 %v767
      %771 = vmatprep.subr.bf16.mxu0 0
      %772 = vmatpush1.bf16.msra.mxu0 0
      %773 = vmatprep.subr.bf16.mxu0 0
      %774 = vmatpush1.bf16.msra.mxu0 0
      %775 = vmatprep.subr.bf16.mxu0 0
      %776 = vmatpush1.bf16.msra.mxu0 0
      %777 = vmatprep.subr.bf16.mxu0 0
      %778 = vmatpush1.bf16.msra.mxu0 0
      %779 = vmatprep.subr.bf16.mxu0 0
      %780 = vmatpush1.bf16.msra.mxu0 0
      %781 = vmatprep.subr.bf16.mxu0 0
      %782 = vmatpush1.bf16.msra.mxu0 0
      %783 = vmatprep.subr.bf16.mxu0 0
      %784 = vmatpush1.bf16.msra.mxu0 0
      %785 = vmatprep.subr.bf16.mxu0 0
      %786 = vmatpush1.bf16.msra.mxu0 0
      %787 = vmatprep.subr.bf16.mxu0 0
      %788 = vmatpush1.bf16.msra.mxu0 0
      %789 = vmatprep.subr.bf16.mxu0 0
      %790 = vmatpush1.bf16.msra.mxu0 0
      %791 = vmatprep.subr.bf16.mxu0 0
      %792 = vmatpush1.bf16.msra.mxu0 0
      %793 = vmatprep.subr.bf16.mxu0 0
      %794 = vmatpush1.bf16.msra.mxu0 0
      %795 = vmatprep.subr.bf16.mxu0 0
      %796 = vmatpush1.bf16.msra.mxu0 0
      %797 = vmatprep.subr.bf16.mxu0 0
      %798 = vmatpush1.bf16.msra.mxu0 0
      %799 = vmatprep.subr.bf16.mxu0 0
      %800 = vmatpush1.bf16.msra.mxu0 0
      %801 = vmatprep.mubr.bf16.mxu0 0
      %802 = vmatmul.mubr.bf16.gmra.mrb[0].mxu0 %v764
      %v803 = vpop.f32.mrb[0].mxu0
      %v804 = vadd.f32 0.0, %v803
      %v805 = vpop.f32.mrb[0].mxu0
      %v806 = vpop.f32.mrb[0].mxu0
      %v807 = vadd.f32 0.0, %v806
      %v808 = vpop.f32.mrb[0].mxu0
      %809 = vdwg.mxu0
      %v810 = vadd.f32 %v755, %v804
      %v811 = vadd.f32 %v758, %v807
      %v812 = vld [vmem:[%s4] sm:$0x1]
      %v814 = vlaneseq
      %v815 = vshrl.u32 %v814, 7
      %v816 = vsub.s32 0, %v815
      %v817 = vrot.slane %v812, %v816
      %v819 = vadd.f32 %v810, %v817
      %v820 = vadd.f32 %v811, %v817
      %v821 = vpack.c.bf16 %v332, %v331
      %v822 = vld [vmem:[%s5] sm:$0x3]
      %v823 = vld [vmem:[%s6] sm:$0x1]
      %v825 = vlaneseq
      %v826 = vshrl.u32 %v825, 7
      %v827 = vsub.s32 0, %v826
      %v828 = vrot.slane %v823, %v827
      %v831 = vsel %vm440, %v821, 0
      %v834 = vsel %vm444, %v822, 0
      %836 = vmatprep.subr.bf16.mxu0 0
      %837 = vmatpush1.bf16.msra.mxu0 %v834
      %838 = vmatprep.subr.bf16.mxu0 0
      %839 = vmatpush1.bf16.msra.mxu0 0
      %840 = vmatprep.subr.bf16.mxu0 0
      %841 = vmatpush1.bf16.msra.mxu0 0
      %842 = vmatprep.subr.bf16.mxu0 0
      %843 = vmatpush1.bf16.msra.mxu0 0
      %844 = vmatprep.subr.bf16.mxu0 0
      %845 = vmatpush1.bf16.msra.mxu0 0
      %846 = vmatprep.subr.bf16.mxu0 0
      %847 = vmatpush1.bf16.msra.mxu0 0
      %848 = vmatprep.subr.bf16.mxu0 0
      %849 = vmatpush1.bf16.msra.mxu0 0
      %850 = vmatprep.subr.bf16.mxu0 0
      %851 = vmatpush1.bf16.msra.mxu0 0
      %852 = vmatprep.subr.bf16.mxu0 0
      %853 = vmatpush1.bf16.msra.mxu0 0
      %854 = vmatprep.subr.bf16.mxu0 0
      %855 = vmatpush1.bf16.msra.mxu0 0
      %856 = vmatprep.subr.bf16.mxu0 0
      %857 = vmatpush1.bf16.msra.mxu0 0
      %858 = vmatprep.subr.bf16.mxu0 0
      %859 = vmatpush1.bf16.msra.mxu0 0
      %860 = vmatprep.subr.bf16.mxu0 0
      %861 = vmatpush1.bf16.msra.mxu0 0
      %862 = vmatprep.subr.bf16.mxu0 0
      %863 = vmatpush1.bf16.msra.mxu0 0
      %864 = vmatprep.subr.bf16.mxu0 0
      %865 = vmatpush1.bf16.msra.mxu0 0
      %866 = vmatprep.subr.bf16.mxu0 0
      %867 = vmatpush1.bf16.msra.mxu0 0
      %868 = vmatprep.mubr.bf16.mxu0 0
      %869 = vmatmul.mubr.bf16.gmra.mrb[0].mxu0 %v831
      %v870 = vpop.f32.mrb[0].mxu0
      %v871 = vadd.f32 %v828, %v870
      %v872 = vpop.f32.mrb[0].mxu0
      %v873 = vpop.f32.mrb[0].mxu0
      %v874 = vadd.f32 %v828, %v873
      %v875 = vpop.f32.mrb[0].mxu0
      %876 = vdwg.mxu0
      %v877 = vadd.f32 %v819, %v871
      %v878 = vadd.f32 %v820, %v874
      %879 = vst.msk [vmem:[%s278] sm:$0xff] %vm665, %v877
      %880 = vst.msk [vmem:[%s278 + $0x8] sm:$0xff] %vm665, %v878
      %p881 = scmp.lt.s32.totalorder %s18, 1
      %s882 = scalar_select %p881, %s18, 1
      %s883 = smul.addr %s882, 2
      %s884 = smul.addr %s883, 8
      %s885 = scalar_lea.vmem %s7, %s884
      // Predicated region
      $region49: #{tpu_custom_call.1} parent=47 // pred_check
        %p886 = pneg %p188
      $region50: #{tpu_custom_call.1} parent=47 // pred_check_branch
        %888 = sbr.rel (%p886) target = $region52
      $region51: #{tpu_custom_call.1} parent=47 // pred_region
        _
      $region52: #{tpu_custom_call.1} parent=47 // pred_fallthru
        _
    $region48: #{tpu_custom_call.1} parent=5 // pred_fallthru
      _
    %p889 = scmp.le.s32.totalorder 2, %s13
    // Predicated region
    $region53: #{tpu_custom_call.1} parent=5 // pred_check
      %p890 = pneg %p889
    $region54: #{tpu_custom_call.1} parent=5 // pred_check_branch
      %892 = sbr.rel (%p890) target = $region56
    $region55: #{tpu_custom_call.1} parent=5 // pred_region
      %s893 = ssub.s32 %s13, 2
      // Predicated region
      $region57: #{tpu_custom_call.1} parent=55 // pred_check
        %p894 = pneg %p194
      $region58: #{tpu_custom_call.1} parent=55 // pred_check_branch
        %896 = sbr.rel (%p894) target = $region60
      $region59: #{tpu_custom_call.1} parent=55 // pred_region
        %p897 = scmp.lt.s32.totalorder %s19, 1
        %s898 = scalar_select %p897, %s19, 1
        %s899 = smul.addr %s898, 2
        %s900 = smul.addr %s899, 8
        %s901 = scalar_lea.vmem %s7, %s900
      $region60: #{tpu_custom_call.1} parent=55 // pred_fallthru
        _
    $region56: #{tpu_custom_call.1} parent=5 // pred_fallthru
      _
  $region6: #{tpu_custom_call.1} parent=0 // loop_footer
    %s17 = sadd.s32 1, %s13
  $region7: #{tpu_custom_call.1} parent=0 // loop_footer_branch
    %12 = sbr.rel target = $region3
  $region8: #{tpu_custom_call.1} parent=0 // loop_exit
    _

// kernel: tpu_custom_call.1
$region0: #{tpu_custom_call.1}
  #allocation0 [shape = 'u32[]', space=smem, size = 0x4, offset = 0x4, fixed_abs, tag = 'smem constant byte address 0x4 - core index']
  #allocation1 [shape = 'u32[144,128]{1,0:T(1,128)}', space=vmem, size = 0x12000, scoped, tag = 'internal scratch']
  %s0 = inlined_call_operand.vmem [shape: f32[2,16,4], index: 0, kind: input, shape index: {}]
  %s1 = inlined_call_operand.vmem [shape: bf16[3,4,8], index: 1, kind: input, shape index: {}]
  %s2 = inlined_call_operand.vmem [shape: f32[1,8], index: 2, kind: input, shape index: {}]
  %s3 = inlined_call_operand.vmem [shape: bf16[3,8,8], index: 3, kind: input, shape index: {}]
  %s4 = inlined_call_operand.vmem [shape: f32[1,8], index: 4, kind: input, shape index: {}]
  %s5 = inlined_call_operand.vmem [shape: bf16[4,8], index: 5, kind: input, shape index: {}]
  %s6 = inlined_call_operand.vmem [shape: f32[1,8], index: 6, kind: input, shape index: {}]
  %s7 = inlined_call_operand.vmem [shape: f32[2,16,8], index: 7, kind: output, shape index: {}]
  %s8 = sld [smem:[#allocation0]]
  $region61: #{tpu_custom_call.1} parent=0
    _
  %s10 = ssub.s32 1, %s8
  %s11 = scalar_select 0, %s10, %s8
  loop: start=0, step=1, limit=4
  $region2: #{tpu_custom_call.1} parent=0 // loop_pre_header
    _
  $region3: #{tpu_custom_call.1} parent=0 // loop_header
    %s13 = sphi 0, %s17
    %p14 = scmp.ge.s32.totalorder %s13, 4
    %s23 = sphi 0, %s25
    %s26 = sphi 0, %s23
    %s27 = sphi 0, %s26
    %s43 = sphi 0, %s27
    %s47 = sphi 0, %s47
    %s49 = sphi 0, %s47
    %s50 = sphi 0, %s49
    %s64 = sphi 0, %s50
    %s68 = sphi 0, %s68
    %s70 = sphi 0, %s68
    %s71 = sphi 0, %s70
    %s85 = sphi 0, %s71
    %s89 = sphi 0, %s89
    %s91 = sphi 0, %s89
    %s92 = sphi 0, %s91
    %s106 = sphi 0, %s92
    %s110 = sphi 0, %s110
    %s112 = sphi 0, %s110
    %s113 = sphi 0, %s112
    %s127 = sphi 0, %s113
    %s131 = sphi 0, %s131
    %s133 = sphi 0, %s131
    %s134 = sphi 0, %s133
    %s148 = sphi 0, %s134
    %s152 = sphi 0, %s152
    %s154 = sphi 0, %s152
    %s155 = sphi 0, %s154
    %s169 = sphi 0, %s155
    %s175 = sphi 0, %s177
    %s178 = sphi 0, %s175
    %s179 = sphi 0, %s178
    %s195 = sphi 0, %s179
  $region4: #{tpu_custom_call.1} parent=0 // loop_header_branch
    %16 = sbr.rel (%p14) target = $region8
  $region5: #{tpu_custom_call.1} parent=0 // loop_body
    %s18 = ssub.s32 %s13, 1
    %s19 = ssub.s32 %s13, 2
    %s20 = sadd.s32 %s13, 1
    %s21 = ssub.s32 %s13, %s20
    %p22 = scmp.eq.s32.totalorder %s21, 0
    %s24 = sadd.s32 %s23, 1
    %s25 = scalar_select %p22, %s23, %s24
    %p28 = pneg %p22
    %p29 = scmp.eq.s32.totalorder %s13, 1
    %p30 = por %p28, %p29
    %p31 = scmp.ne.s32.totalorder %s23, %s26
    %p32 = scmp.eq.s32.totalorder %s13, 0
    %p33 = por %p31, %p32
    %p34 = scmp.ne.s32.totalorder %s23, %s26
    %p35 = scmp.eq.s32.totalorder %s18, 1
    %p36 = por %p34, %p35
    %p37 = scmp.ne.s32.totalorder %s26, %s27
    %p38 = scmp.eq.s32.totalorder %s18, 0
    %p39 = por %p37, %p38
    %p40 = scmp.ne.s32.totalorder %s26, %s27
    %p41 = scmp.eq.s32.totalorder %s19, 1
    %p42 = por %p40, %p41
    %p44 = scmp.ne.s32.totalorder %s27, %s43
    %p45 = scmp.eq.s32.totalorder %s19, 0
    %p46 = por %p44, %p45
    %s48 = sadd.s32 %s47, 1
    %p51 = scmp.eq.s32.totalorder %s13, 1
    %p52 = scmp.ne.s32.totalorder %s47, %s49
    %p53 = scmp.eq.s32.totalorder %s13, 0
    %p54 = por %p52, %p53
    %p55 = scmp.ne.s32.totalorder %s47, %s49
    %p56 = scmp.eq.s32.totalorder %s18, 1
    %p57 = por %p55, %p56
    %p58 = scmp.ne.s32.totalorder %s49, %s50
    %p59 = scmp.eq.s32.totalorder %s18, 0
    %p60 = por %p58, %p59
    %p61 = scmp.ne.s32.totalorder %s49, %s50
    %p62 = scmp.eq.s32.totalorder %s19, 1
    %p63 = por %p61, %p62
    %p65 = scmp.ne.s32.totalorder %s50, %s64
    %p66 = scmp.eq.s32.totalorder %s19, 0
    %p67 = por %p65, %p66
    %s69 = sadd.s32 %s68, 1
    %p72 = scmp.eq.s32.totalorder %s13, 1
    %p73 = scmp.ne.s32.totalorder %s68, %s70
    %p74 = scmp.eq.s32.totalorder %s13, 0
    %p75 = por %p73, %p74
    %p76 = scmp.ne.s32.totalorder %s68, %s70
    %p77 = scmp.eq.s32.totalorder %s18, 1
    %p78 = por %p76, %p77
    %p79 = scmp.ne.s32.totalorder %s70, %s71
    %p80 = scmp.eq.s32.totalorder %s18, 0
    %p81 = por %p79, %p80
    %p82 = scmp.ne.s32.totalorder %s70, %s71
    %p83 = scmp.eq.s32.totalorder %s19, 1
    %p84 = por %p82, %p83
    %p86 = scmp.ne.s32.totalorder %s71, %s85
    %p87 = scmp.eq.s32.totalorder %s19, 0
    %p88 = por %p86, %p87
    %s90 = sadd.s32 %s89, 1
    %p93 = scmp.eq.s32.totalorder %s13, 1
    %p94 = scmp.ne.s32.totalorder %s89, %s91
    %p95 = scmp.eq.s32.totalorder %s13, 0
    %p96 = por %p94, %p95
    %p97 = scmp.ne.s32.totalorder %s89, %s91
    %p98 = scmp.eq.s32.totalorder %s18, 1
    %p99 = por %p97, %p98
    %p100 = scmp.ne.s32.totalorder %s91, %s92
    %p101 = scmp.eq.s32.totalorder %s18, 0
    %p102 = por %p100, %p101
    %p103 = scmp.ne.s32.totalorder %s91, %s92
    %p104 = scmp.eq.s32.totalorder %s19, 1
    %p105 = por %p103, %p104
    %p107 = scmp.ne.s32.totalorder %s92, %s106
    %p108 = scmp.eq.s32.totalorder %s19, 0
    %p109 = por %p107, %p108
    %s111 = sadd.s32 %s110, 1
    %p114 = scmp.eq.s32.totalorder %s13, 1
    %p115 = scmp.ne.s32.totalorder %s110, %s112
    %p116 = scmp.eq.s32.totalorder %s13, 0
    %p117 = por %p115, %p116
    %p118 = scmp.ne.s32.totalorder %s110, %s112
    %p119 = scmp.eq.s32.totalorder %s18, 1
    %p120 = por %p118, %p119
    %p121 = scmp.ne.s32.totalorder %s112, %s113
    %p122 = scmp.eq.s32.totalorder %s18, 0
    %p123 = por %p121, %p122
    %p124 = scmp.ne.s32.totalorder %s112, %s113
    %p125 = scmp.eq.s32.totalorder %s19, 1
    %p126 = por %p124, %p125
    %p128 = scmp.ne.s32.totalorder %s113, %s127
    %p129 = scmp.eq.s32.totalorder %s19, 0
    %p130 = por %p128, %p129
    %s132 = sadd.s32 %s131, 1
    %p135 = scmp.eq.s32.totalorder %s13, 1
    %p136 = scmp.ne.s32.totalorder %s131, %s133
    %p137 = scmp.eq.s32.totalorder %s13, 0
    %p138 = por %p136, %p137
    %p139 = scmp.ne.s32.totalorder %s131, %s133
    %p140 = scmp.eq.s32.totalorder %s18, 1
    %p141 = por %p139, %p140
    %p142 = scmp.ne.s32.totalorder %s133, %s134
    %p143 = scmp.eq.s32.totalorder %s18, 0
    %p144 = por %p142, %p143
    %p145 = scmp.ne.s32.totalorder %s133, %s134
    %p146 = scmp.eq.s32.totalorder %s19, 1
    %p147 = por %p145, %p146
    %p149 = scmp.ne.s32.totalorder %s134, %s148
    %p150 = scmp.eq.s32.totalorder %s19, 0
    %p151 = por %p149, %p150
    %s153 = sadd.s32 %s152, 1
    %p156 = scmp.eq.s32.totalorder %s13, 1
    %p157 = scmp.ne.s32.totalorder %s152, %s154
    %p158 = scmp.eq.s32.totalorder %s13, 0
    %p159 = por %p157, %p158
    %p160 = scmp.ne.s32.totalorder %s152, %s154
    %p161 = scmp.eq.s32.totalorder %s18, 1
    %p162 = por %p160, %p161
    %p163 = scmp.ne.s32.totalorder %s154, %s155
    %p164 = scmp.eq.s32.totalorder %s18, 0
    %p165 = por %p163, %p164
    %p166 = scmp.ne.s32.totalorder %s154, %s155
    %p167 = scmp.eq.s32.totalorder %s19, 1
    %p168 = por %p166, %p167
    %p170 = scmp.ne.s32.totalorder %s155, %s169
    %p171 = scmp.eq.s32.totalorder %s19, 0
    %p172 = por %p170, %p171
    %s173 = ssub.s32 %s13, %s20
    %p174 = scmp.eq.s32.totalorder %s173, 0
    %s176 = sadd.s32 %s175, 1
    %s177 = scalar_select %p174, %s175, %s176
    %p180 = pneg %p174
    %p181 = scmp.eq.s32.totalorder %s13, 1
    %p182 = por %p180, %p181
    %p183 = scmp.ne.s32.totalorder %s175, %s178
    %p184 = scmp.eq.s32.totalorder %s13, 0
    %p185 = por %p183, %p184
    %p186 = scmp.ne.s32.totalorder %s175, %s178
    %p187 = scmp.eq.s32.totalorder %s18, 1
    %p188 = por %p186, %p187
    %p189 = scmp.ne.s32.totalorder %s178, %s179
    %p190 = scmp.eq.s32.totalorder %s18, 0
    %p191 = por %p189, %p190
    %p192 = scmp.ne.s32.totalorder %s178, %s179
    %p193 = scmp.eq.s32.totalorder %s19, 1
    %p194 = por %p192, %p193
    %p196 = scmp.ne.s32.totalorder %s179, %s195
    %p197 = scmp.eq.s32.totalorder %s19, 0
    %p198 = por %p196, %p197
    %p199 = scmp.le.s32.totalorder 1, %s13
    %p200 = scmp.lt.s32.totalorder %s13, 3
    %p201 = pnand %p199, %p200
    %p202 = pneg %p201
    // Predicated region
    $region9: #{tpu_custom_call.1} parent=5 // pred_check
      _
    $region10: #{tpu_custom_call.1} parent=5 // pred_check_branch
      %204 = sbr.rel (%p201) target = $region12
    $region11: #{tpu_custom_call.1} parent=5 // pred_region
      %s205 = ssub.s32 %s13, 1
      // Predicated region
      $region13: #{tpu_custom_call.1} parent=11 // pred_check
        %p206 = pneg %p60
      $region14: #{tpu_custom_call.1} parent=11 // pred_check_branch
        %208 = sbr.rel (%p206) target = $region16
      $region15: #{tpu_custom_call.1} parent=11 // pred_region
        _
      $region16: #{tpu_custom_call.1} parent=11 // pred_fallthru
        _
      // Predicated region
      $region17: #{tpu_custom_call.1} parent=11 // pred_check
        %p209 = pneg %p81
      $region18: #{tpu_custom_call.1} parent=11 // pred_check_branch
        %211 = sbr.rel (%p209) target = $region20
      $region19: #{tpu_custom_call.1} parent=11 // pred_region
        _
      $region20: #{tpu_custom_call.1} parent=11 // pred_fallthru
        _
      // Predicated region
      $region21: #{tpu_custom_call.1} parent=11 // pred_check
        %p212 = pneg %p102
      $region22: #{tpu_custom_call.1} parent=11 // pred_check_branch
        %214 = sbr.rel (%p212) target = $region24
      $region23: #{tpu_custom_call.1} parent=11 // pred_region
        _
      $region24: #{tpu_custom_call.1} parent=11 // pred_fallthru
        _
      // Predicated region
      $region25: #{tpu_custom_call.1} parent=11 // pred_check
        %p215 = pneg %p123
      $region26: #{tpu_custom_call.1} parent=11 // pred_check_branch
        %217 = sbr.rel (%p215) target = $region28
      $region27: #{tpu_custom_call.1} parent=11 // pred_region
        _
      $region28: #{tpu_custom_call.1} parent=11 // pred_fallthru
        _
      // Predicated region
      $region29: #{tpu_custom_call.1} parent=11 // pred_check
        %p218 = pneg %p144
      $region30: #{tpu_custom_call.1} parent=11 // pred_check_branch
        %220 = sbr.rel (%p218) target = $region32
      $region31: #{tpu_custom_call.1} parent=11 // pred_region
        _
      $region32: #{tpu_custom_call.1} parent=11 // pred_fallthru
        _
      // Predicated region
      $region33: #{tpu_custom_call.1} parent=11 // pred_check
        %p221 = pneg %p165
      $region34: #{tpu_custom_call.1} parent=11 // pred_check_branch
        %223 = sbr.rel (%p221) target = $region36
      $region35: #{tpu_custom_call.1} parent=11 // pred_region
        _
      $region36: #{tpu_custom_call.1} parent=11 // pred_fallthru
        _
    $region12: #{tpu_custom_call.1} parent=5 // pred_fallthru
      _
    %p224 = scmp.lt.s32.totalorder %s13, 2
    // Predicated region
    $region37: #{tpu_custom_call.1} parent=5 // pred_check
      %p225 = pneg %p224
    $region38: #{tpu_custom_call.1} parent=5 // pred_check_branch
      %227 = sbr.rel (%p225) target = $region40
    $region39: #{tpu_custom_call.1} parent=5 // pred_region
      // Predicated region
      $region41: #{tpu_custom_call.1} parent=39 // pred_check
        %p228 = pneg %p33
      $region42: #{tpu_custom_call.1} parent=39 // pred_check_branch
        %230 = sbr.rel (%p228) target = $region44
      $region43: #{tpu_custom_call.1} parent=39 // pred_region
        %p231 = scmp.lt.s32.totalorder %s13, 1
        %s232 = scalar_select %p231, %s13, 1
        %s233 = smul.addr %s232, 2
        %s234 = smul.addr %s233, 8
        %s235 = scalar_lea.vmem %s0, %s234
      $region44: #{tpu_custom_call.1} parent=39 // pred_fallthru
        _
    $region40: #{tpu_custom_call.1} parent=5 // pred_fallthru
      _
    %p236 = scmp.le.s32.totalorder 1, %s13
    %p237 = scmp.lt.s32.totalorder %s13, 3
    %p238 = pnand %p236, %p237
    %p239 = pneg %p238
    // Predicated region
    $region45: #{tpu_custom_call.1} parent=5 // pred_check
      _
    $region46: #{tpu_custom_call.1} parent=5 // pred_check_branch
      %241 = sbr.rel (%p238) target = $region48
    $region47: #{tpu_custom_call.1} parent=5 // pred_region
      %s242 = ssub.s32 %s13, 1
      %p243 = scmp.lt.s32.totalorder %s18, 1
      %s244 = scalar_select %p243, %s18, 1
      %s245 = smul.addr %s244, 2
      %s246 = smul.addr %s245, 8
      %s247 = scalar_lea.vmem %s0, %s246
      %p248 = pneg %p39
      %p249 = pneg %p36
      %p250 = pneg %p60
      %p251 = pneg %p57
      %p252 = pneg %p81
      %p253 = pneg %p78
      %p254 = pneg %p102
      %p255 = pneg %p99
      %p256 = pneg %p123
      %p257 = pneg %p120
      %p258 = pneg %p144
      %p259 = pneg %p141
      %p260 = pneg %p165
      %p261 = pneg %p162
      %p262 = pneg %p191
      %p263 = pneg %p188
      %p264 = scmp.lt.s32.totalorder %s18, 1
      %s265 = scalar_select %p264, %s18, 1
      %s266 = smul.addr %s265, 2
      %s267 = smul.addr %s266, 8
      %s268 = scalar_lea.vmem %s7, %s267
      %p269 = scmp.lt.s32.totalorder %s18, 1
      %s270 = scalar_select %p269, %s18, 1
      %s271 = smul.addr %s270, 2
      %s272 = smul.addr %s271, 8
      %s273 = scalar_lea.vmem %s0, %s272
      %p274 = scmp.lt.s32.totalorder %s18, 1
      %s275 = scalar_select %p274, %s18, 1
      %s276 = smul.addr %s275, 2
      %s277 = smul.addr %s276, 8
      %s278 = scalar_lea.vmem %s7, %s277
      %v282 = vlaneseq
      %v283 = vshrl.u32 %v282, 7
      %v284 = vadd.s32 %v283, 8
      %vm285 = vcmp.lt.s32.totalorder %v283, 0
      %v286 = vsub.s32 0, %v283
      %v287 = vsel %vm285, %v286, %v283
      %v288 = vshrl.u32 %v287, 4
      %v289 = vand.u32 %v287, 15
      %v290 = vsub.s32 0, %v289
      %v291 = vsel %vm285, %v290, %v289
      %vm292 = vcmp.lt.s32.totalorder %v284, 0
      %v293 = vsub.s32 0, %v284
      %v294 = vsel %vm292, %v293, %v284
      %v295 = vshrl.u32 %v294, 4
      %v296 = vand.u32 %v294, 15
      %v297 = vsub.s32 0, %v296
      %v298 = vsel %vm292, %v297, %v296
      %vm299 = vcmp.ne.s32.totalorder %v291, 0
      %vm300 = vcmp.ne.s32.totalorder %v298, 0
      %vm301 = vcmp.lt.s32.totalorder %v291, 0
      %vm302 = vcmp.lt.s32.totalorder %v298, 0
      %vm303 = vmand %vm301, %vm299
      %vm304 = vmand %vm302, %vm300
      %v305 = vadd.s32 %v291, 16
      %v306 = vadd.s32 %v298, 16
      %v307 = vsel %vm303, %v305, %v291
      %v308 = vsel %vm304, %v306, %v298
      %v309 = vadd.s32 %v307, 4294967294
      %v310 = vadd.s32 %v308, 4294967294
      %vm311 = vcmp.ge.s32.totalorder %v309, 0
      %vm312 = vcmp.ge.s32.totalorder %v310, 0
      %vm313 = vcmp.lt.s32.totalorder %v309, 16
      %vm314 = vcmp.lt.s32.totalorder %v310, 16
      %vm315 = vmand %vm311, %vm313
      %vm316 = vmand %vm312, %vm314
      %vm317 = vcmp.ge.s32.totalorder %v307, 0
      %vm318 = vcmp.ge.s32.totalorder %v308, 0
      %vm319 = vcmp.lt.s32.totalorder %v307, 16
      %vm320 = vcmp.lt.s32.totalorder %v308, 16
      %vm321 = vmand %vm317, %vm319
      %vm322 = vmand %vm318, %vm320
      %v323 = vadd.s32 %v307, 2
      %v324 = vadd.s32 %v308, 2
      %vm325 = vcmp.ge.s32.totalorder %v323, 0
      %vm326 = vcmp.ge.s32.totalorder %v324, 0
      %vm327 = vcmp.lt.s32.totalorder %v323, 16
      %vm328 = vcmp.lt.s32.totalorder %v324, 16
      %vm329 = vmand %vm325, %vm327
      %vm330 = vmand %vm326, %vm328
      %v331 = vld [vmem:[%s273] sm:$0xff]
      %v332 = vld [vmem:[%s273 + $0x8] sm:$0xff]
      %v333 = vmul.f32 %v331, 0.5
      %v334 = vmul.f32 %v332, 0.5
      %v335 = vmul.f32 %v331, 0.70710677
      %v336 = vmul.f32 %v332, 0.70710677
      %v337 = vand.u32 2147483647, %v335
      %v338 = vand.u32 2147483647, %v336
      %v339 = vmul.f32 %v337, 0.3275911
      %v340 = vmul.f32 %v338, 0.3275911
      %v341 = vadd.f32 %v339, 1.0
      %v342 = vadd.f32 %v340, 1.0
      %v343 = vrcp.pop %v341
      %v344 = vrcp.pop %v342
      %v345 = vmul.f32 %v343, 1.0614054
      %v346 = vmul.f32 %v344, 1.0614054
      %v347 = vadd.f32 %v345, -1.4531521
      %v348 = vadd.f32 %v346, -1.4531521
      %v349 = vmul.f32 %v347, %v343
      %v350 = vmul.f32 %v348, %v344
      %v351 = vadd.f32 %v349, 1.4214138
      %v352 = vadd.f32 %v350, 1.4214138
      %v353 = vmul.f32 %v351, %v343
      %v354 = vmul.f32 %v352, %v344
      %v355 = vadd.f32 %v353, -0.28449672
      %v356 = vadd.f32 %v354, -0.28449672
      %v357 = vmul.f32 %v355, %v343
      %v358 = vmul.f32 %v356, %v344
      %v359 = vadd.f32 %v357, 0.2548296
      %v360 = vadd.f32 %v358, 0.2548296
      %v361 = vmul.f32 %v359, %v343
      %v362 = vmul.f32 %v360, %v344
      %v363 = vsub.f32 0.0, %v337
      %v364 = vsub.f32 0.0, %v338
      %v365 = vmul.f32 %v363, %v337
      %v366 = vmul.f32 %v364, %v338
      %v367 = vmul.f32 %v365, 1.442695
      %v368 = vpow.pop %v367
      %v369 = vmul.f32 %v366, 1.442695
      %v370 = vpow.pop %v369
      %v371 = vmul.f32 %v361, %v368
      %v372 = vmul.f32 %v362, %v370
      %v373 = vsub.f32 1.0, %v371
      %v374 = vsub.f32 1.0, %v372
      %vm375 = vcmp.lt.f32.partialorder %v335, 0.0
      %vm376 = vcmp.lt.f32.partialorder %v336, 0.0
      %v377 = vsub.f32 0.0, %v373
      %v378 = vsub.f32 0.0, %v374
      %v379 = vsel %vm375, %v377, %v373
      %v380 = vsel %vm376, %v378, %v374
      %v381 = vadd.f32 %v379, 1.0
      %v382 = vadd.f32 %v380, 1.0
      %v383 = vmul.f32 %v333, %v381
      %v384 = vmul.f32 %v334, %v382
      %v385 = vrot.slane %v383, 6
      %v386 = vrot.slane %v384, 6
      %vm387 = vcmp.lt.s32.totalorder %v283, 2
      %v388 = vsel %vm387, %v385, %v386
      %v389 = vsel %vm387, %v386, %v385
      %v390 = vpack.c.bf16 %v388, %v389
      %v391 = vsel %vm315, 1, 0
      %v392 = vsel %vm316, 1, 0
      %vm393 = vcmp.eq.s32.totalorder %v391, 1
      %vm394 = vcmp.eq.s32.totalorder %v392, 1
      %vm395 = vmpackc.low %vm393, %vm393
      %vm396 = vmpackc.low %vm394, %vm394
      %v397 = vsel %vm395, 65537, 0
      %v398 = vsel %vm396, 65537, 0
      %v399 = vunpack.c.l.b16 %v397
      %v400 = vunpack.c.l.b16 %v398
      %v401 = vpack.c.b16 %v400, %v399
      %vm402 = vcmp.ne.s16.totalorder %v401, 0
      %v403 = vsel %vm402, %v390, 0
      %v404 = vpack.c.bf16 %v384, %v383
      %v405 = vsel %vm321, 1, 0
      %v406 = vsel %vm322, 1, 0
      %vm407 = vcmp.eq.s32.totalorder %v405, 1
      %vm408 = vcmp.eq.s32.totalorder %v406, 1
      %vm409 = vmpackc.low %vm407, %vm407
      %vm410 = vmpackc.low %vm408, %vm408
      %v411 = vsel %vm409, 65537, 0
      %v412 = vsel %vm410, 65537, 0
      %v413 = vunpack.c.l.b16 %v411
      %v414 = vunpack.c.l.b16 %v412
      %v415 = vpack.c.b16 %v414, %v413
      %vm416 = vcmp.ne.s16.totalorder %v415, 0
      %v417 = vsel %vm416, %v404, 0
      %v418 = vrot.slane %v383, 2
      %v419 = vrot.slane %v384, 2
      %vm420 = vcmp.lt.s32.totalorder %v283, 6
      %v421 = vsel %vm420, %v418, %v419
      %v422 = vsel %vm420, %v419, %v418
      %v423 = vpack.c.bf16 %v422, %v421
      %v424 = vsel %vm329, 1, 0
      %v425 = vsel %vm330, 1, 0
      %vm426 = vcmp.eq.s32.totalorder %v424, 1
      %vm427 = vcmp.eq.s32.totalorder %v425, 1
      %vm428 = vmpackc.low %vm426, %vm426
      %vm429 = vmpackc.low %vm427, %vm427
      %v430 = vsel %vm428, 65537, 0
      %v431 = vsel %vm429, 65537, 0
      %v432 = vunpack.c.l.b16 %v430
      %v433 = vunpack.c.l.b16 %v431
      %v434 = vpack.c.b16 %v433, %v432
      %vm435 = vcmp.ne.s16.totalorder %v434, 0
      %v436 = vsel %vm435, %v423, 0
      %v437 = vld [vmem:[%s1] sm:$0x3]
      %s438 = scalar_lea.vmem %s1, 2
      %v439 = vld [vmem:[%s438] sm:$0x3]
      %vm440 = vcmask 31744
      %v442 = vsel %vm440, %v417, 0
      %vm444 = vcmask 1041408
      %v446 = vsel %vm444, %v439, 0
      %448 = vmatprep.subr.bf16.mxu0 0
      %449 = vmatpush1.bf16.msra.mxu0 %v446
      %450 = vmatprep.subr.bf16.mxu0 0
      %451 = vmatpush1.bf16.msra.mxu0 0
      %452 = vmatprep.subr.bf16.mxu0 0
      %453 = vmatpush1.bf16.msra.mxu0 0
      %454 = vmatprep.subr.bf16.mxu0 0
      %455 = vmatpush1.bf16.msra.mxu0 0
      %456 = vmatprep.subr.bf16.mxu0 0
      %457 = vmatpush1.bf16.msra.mxu0 0
      %458 = vmatprep.subr.bf16.mxu0 0
      %459 = vmatpush1.bf16.msra.mxu0 0
      %460 = vmatprep.subr.bf16.mxu0 0
      %461 = vmatpush1.bf16.msra.mxu0 0
      %462 = vmatprep.subr.bf16.mxu0 0
      %463 = vmatpush1.bf16.msra.mxu0 0
      %464 = vmatprep.subr.bf16.mxu0 0
      %465 = vmatpush1.bf16.msra.mxu0 0
      %466 = vmatprep.subr.bf16.mxu0 0
      %467 = vmatpush1.bf16.msra.mxu0 0
      %468 = vmatprep.subr.bf16.mxu0 0
      %469 = vmatpush1.bf16.msra.mxu0 0
      %470 = vmatprep.subr.bf16.mxu0 0
      %471 = vmatpush1.bf16.msra.mxu0 0
      %472 = vmatprep.subr.bf16.mxu0 0
      %473 = vmatpush1.bf16.msra.mxu0 0
      %474 = vmatprep.subr.bf16.mxu0 0
      %475 = vmatpush1.bf16.msra.mxu0 0
      %476 = vmatprep.subr.bf16.mxu0 0
      %477 = vmatpush1.bf16.msra.mxu0 0
      %478 = vmatprep.subr.bf16.mxu0 0
      %479 = vmatpush1.bf16.msra.mxu0 0
      %480 = vmatprep.mubr.bf16.mxu0 0
      %481 = vmatmul.mubr.bf16.gmra.mrb[0].mxu0 %v442
      %v482 = vpop.f32.mrb[0].mxu0
      %v483 = vadd.f32 0.0, %v482
      %v484 = vpop.f32.mrb[0].mxu0
      %v485 = vpop.f32.mrb[0].mxu0
      %v486 = vadd.f32 0.0, %v485
      %v487 = vpop.f32.mrb[0].mxu0
      %488 = vdwg.mxu0
      %v490 = vsel %vm440, %v403, 0
      %v493 = vsel %vm444, %v437, 0
      %495 = vmatprep.subr.bf16.mxu0 0
      %496 = vmatpush1.bf16.msra.mxu0 %v493
      %497 = vmatprep.subr.bf16.mxu0 0
      %498 = vmatpush1.bf16.msra.mxu0 0
      %499 = vmatprep.subr.bf16.mxu0 0
      %500 = vmatpush1.bf16.msra.mxu0 0
      %501 = vmatprep.subr.bf16.mxu0 0
      %502 = vmatpush1.bf16.msra.mxu0 0
      %503 = vmatprep.subr.bf16.mxu0 0
      %504 = vmatpush1.bf16.msra.mxu0 0
      %505 = vmatprep.subr.bf16.mxu0 0
      %506 = vmatpush1.bf16.msra.mxu0 0
      %507 = vmatprep.subr.bf16.mxu0 0
      %508 = vmatpush1.bf16.msra.mxu0 0
      %509 = vmatprep.subr.bf16.mxu0 0
      %510 = vmatpush1.bf16.msra.mxu0 0
      %511 = vmatprep.subr.bf16.mxu0 0
      %512 = vmatpush1.bf16.msra.mxu0 0
      %513 = vmatprep.subr.bf16.mxu0 0
      %514 = vmatpush1.bf16.msra.mxu0 0
      %515 = vmatprep.subr.bf16.mxu0 0
      %516 = vmatpush1.bf16.msra.mxu0 0
      %517 = vmatprep.subr.bf16.mxu0 0
      %518 = vmatpush1.bf16.msra.mxu0 0
      %519 = vmatprep.subr.bf16.mxu0 0
      %520 = vmatpush1.bf16.msra.mxu0 0
      %521 = vmatprep.subr.bf16.mxu0 0
      %522 = vmatpush1.bf16.msra.mxu0 0
      %523 = vmatprep.subr.bf16.mxu0 0
      %524 = vmatpush1.bf16.msra.mxu0 0
      %525 = vmatprep.subr.bf16.mxu0 0
      %526 = vmatpush1.bf16.msra.mxu0 0
      %527 = vmatprep.mubr.bf16.mxu0 0
      %528 = vmatmul.mubr.bf16.gmra.mrb[0].mxu0 %v490
      %v529 = vpop.f32.mrb[0].mxu0
      %v530 = vadd.f32 %v483, %v529
      %v531 = vpop.f32.mrb[0].mxu0
      %v532 = vpop.f32.mrb[0].mxu0
      %v533 = vadd.f32 %v486, %v532
      %v534 = vpop.f32.mrb[0].mxu0
      %535 = vdwg.mxu0
      %s536 = scalar_lea.vmem %s1, 4
      %v537 = vld [vmem:[%s536] sm:$0x3]
      %v539 = vsel %vm440, %v436, 0
      %v542 = vsel %vm444, %v537, 0
      %544 = vmatprep.subr.bf16.mxu0 0
      %545 = vmatpush1.bf16.msra.mxu0 %v542
      %546 = vmatprep.subr.bf16.mxu0 0
      %547 = vmatpush1.bf16.msra.mxu0 0
      %548 = vmatprep.subr.bf16.mxu0 0
      %549 = vmatpush1.bf16.msra.mxu0 0
      %550 = vmatprep.subr.bf16.mxu0 0
      %551 = vmatpush1.bf16.msra.mxu0 0
      %552 = vmatprep.subr.bf16.mxu0 0
      %553 = vmatpush1.bf16.msra.mxu0 0
      %554 = vmatprep.subr.bf16.mxu0 0
      %555 = vmatpush1.bf16.msra.mxu0 0
      %556 = vmatprep.subr.bf16.mxu0 0
      %557 = vmatpush1.bf16.msra.mxu0 0
      %558 = vmatprep.subr.bf16.mxu0 0
      %559 = vmatpush1.bf16.msra.mxu0 0
      %560 = vmatprep.subr.bf16.mxu0 0
      %561 = vmatpush1.bf16.msra.mxu0 0
      %562 = vmatprep.subr.bf16.mxu0 0
      %563 = vmatpush1.bf16.msra.mxu0 0
      %564 = vmatprep.subr.bf16.mxu0 0
      %565 = vmatpush1.bf16.msra.mxu0 0
      %566 = vmatprep.subr.bf16.mxu0 0
      %567 = vmatpush1.bf16.msra.mxu0 0
      %568 = vmatprep.subr.bf16.mxu0 0
      %569 = vmatpush1.bf16.msra.mxu0 0
      %570 = vmatprep.subr.bf16.mxu0 0
      %571 = vmatpush1.bf16.msra.mxu0 0
      %572 = vmatprep.subr.bf16.mxu0 0
      %573 = vmatpush1.bf16.msra.mxu0 0
      %574 = vmatprep.subr.bf16.mxu0 0
      %575 = vmatpush1.bf16.msra.mxu0 0
      %576 = vmatprep.mubr.bf16.mxu0 0
      %577 = vmatmul.mubr.bf16.gmra.mrb[0].mxu0 %v539
      %v578 = vpop.f32.mrb[0].mxu0
      %v579 = vadd.f32 0.0, %v578
      %v580 = vpop.f32.mrb[0].mxu0
      %v581 = vpop.f32.mrb[0].mxu0
      %v582 = vadd.f32 0.0, %v581
      %v583 = vpop.f32.mrb[0].mxu0
      %584 = vdwg.mxu0
      %v585 = vadd.f32 %v530, %v579
      %v586 = vadd.f32 %v533, %v582
      %v587 = vld [vmem:[%s2] sm:$0x1]
      %v589 = vlaneseq
      %v590 = vshrl.u32 %v589, 7
      %v591 = vsub.s32 0, %v590
      %v592 = vrot.slane %v587, %v591
      %v594 = vadd.f32 %v585, %v592
      %v595 = vadd.f32 %v586, %v592
      %v596 = vmul.f32 %v594, 0.5
      %v597 = vmul.f32 %v595, 0.5
      %v598 = vmul.f32 %v594, 0.70710677
      %v599 = vmul.f32 %v595, 0.70710677
      %v600 = vand.u32 2147483647, %v598
      %v601 = vand.u32 2147483647, %v599
      %v602 = vmul.f32 %v600, 0.3275911
      %v603 = vmul.f32 %v601, 0.3275911
      %v604 = vadd.f32 %v602, 1.0
      %v605 = vadd.f32 %v603, 1.0
      %v606 = vrcp.pop %v604
      %v607 = vrcp.pop %v605
      %v608 = vmul.f32 %v606, 1.0614054
      %v609 = vmul.f32 %v607, 1.0614054
      %v610 = vadd.f32 %v608, -1.4531521
      %v611 = vadd.f32 %v609, -1.4531521
      %v612 = vmul.f32 %v610, %v606
      %v613 = vmul.f32 %v611, %v607
      %v614 = vadd.f32 %v612, 1.4214138
      %v615 = vadd.f32 %v613, 1.4214138
      %v616 = vmul.f32 %v614, %v606
      %v617 = vmul.f32 %v615, %v607
      %v618 = vadd.f32 %v616, -0.28449672
      %v619 = vadd.f32 %v617, -0.28449672
      %v620 = vmul.f32 %v618, %v606
      %v621 = vmul.f32 %v619, %v607
      %v622 = vadd.f32 %v620, 0.2548296
      %v623 = vadd.f32 %v621, 0.2548296
      %v624 = vmul.f32 %v622, %v606
      %v625 = vmul.f32 %v623, %v607
      %v626 = vsub.f32 0.0, %v600
      %v627 = vsub.f32 0.0, %v601
      %v628 = vmul.f32 %v626, %v600
      %v629 = vmul.f32 %v627, %v601
      %v630 = vmul.f32 %v628, 1.442695
      %v631 = vpow.pop %v630
      %v632 = vmul.f32 %v629, 1.442695
      %v633 = vpow.pop %v632
      %v634 = vmul.f32 %v624, %v631
      %v635 = vmul.f32 %v625, %v633
      %v636 = vsub.f32 1.0, %v634
      %v637 = vsub.f32 1.0, %v635
      %vm638 = vcmp.lt.f32.partialorder %v598, 0.0
      %vm639 = vcmp.lt.f32.partialorder %v599, 0.0
      %v640 = vsub.f32 0.0, %v636
      %v641 = vsub.f32 0.0, %v637
      %v642 = vsel %vm638, %v640, %v636
      %v643 = vsel %vm639, %v641, %v637
      %v644 = vadd.f32 %v642, 1.0
      %v645 = vadd.f32 %v643, 1.0
      %v646 = vmul.f32 %v596, %v644
      %v647 = vmul.f32 %v597, %v645
      %v648 = vrot.slane %v646, 6
      %v649 = vrot.slane %v647, 6
      %v650 = vsel %vm387, %v648, %v649
      %v651 = vsel %vm387, %v649, %v648
      %v652 = vpack.c.bf16 %v650, %v651
      %v653 = vsel %vm402, %v652, 0
      %v654 = vpack.c.bf16 %v647, %v646
      %v655 = vsel %vm416, %v654, 0
      %v656 = vrot.slane %v646, 2
      %v657 = vrot.slane %v647, 2
      %v658 = vsel %vm420, %v656, %v657
      %v659 = vsel %vm420, %v657, %v656
      %v660 = vpack.c.bf16 %v659, %v658
      %v661 = vsel %vm435, %v660, 0
      %v662 = vld [vmem:[%s3] sm:$0xf]
      %s663 = scalar_lea.vmem %s3, 4
      %v664 = vld [vmem:[%s663] sm:$0xf]
      %vm665 = vcmask 64512
      %v667 = vsel %vm665, %v655, 0
      %vm669 = vcmask 1043456
      %v671 = vsel %vm669, %v664, 0
      %673 = vmatprep.subr.bf16.mxu0 0
      %674 = vmatpush1.bf16.msra.mxu0 %v671
      %675 = vmatprep.subr.bf16.mxu0 0
      %676 = vmatpush1.bf16.msra.mxu0 0
      %677 = vmatprep.subr.bf16.mxu0 0
      %678 = vmatpush1.bf16.msra.mxu0 0
      %679 = vmatprep.subr.bf16.mxu0 0
      %680 = vmatpush1.bf16.msra.mxu0 0
      %681 = vmatprep.subr.bf16.mxu0 0
      %682 = vmatpush1.bf16.msra.mxu0 0
      %683 = vmatprep.subr.bf16.mxu0 0
      %684 = vmatpush1.bf16.msra.mxu0 0
      %685 = vmatprep.subr.bf16.mxu0 0
      %686 = vmatpush1.bf16.msra.mxu0 0
      %687 = vmatprep.subr.bf16.mxu0 0
      %688 = vmatpush1.bf16.msra.mxu0 0
      %689 = vmatprep.subr.bf16.mxu0 0
      %690 = vmatpush1.bf16.msra.mxu0 0
      %691 = vmatprep.subr.bf16.mxu0 0
      %692 = vmatpush1.bf16.msra.mxu0 0
      %693 = vmatprep.subr.bf16.mxu0 0
      %694 = vmatpush1.bf16.msra.mxu0 0
      %695 = vmatprep.subr.bf16.mxu0 0
      %696 = vmatpush1.bf16.msra.mxu0 0
      %697 = vmatprep.subr.bf16.mxu0 0
      %698 = vmatpush1.bf16.msra.mxu0 0
      %699 = vmatprep.subr.bf16.mxu0 0
      %700 = vmatpush1.bf16.msra.mxu0 0
      %701 = vmatprep.subr.bf16.mxu0 0
      %702 = vmatpush1.bf16.msra.mxu0 0
      %703 = vmatprep.subr.bf16.mxu0 0
      %704 = vmatpush1.bf16.msra.mxu0 0
      %705 = vmatprep.mubr.bf16.mxu0 0
      %706 = vmatmul.mubr.bf16.gmra.mrb[0].mxu0 %v667
      %v707 = vpop.f32.mrb[0].mxu0
      %v708 = vadd.f32 0.0, %v707
      %v709 = vpop.f32.mrb[0].mxu0
      %v710 = vpop.f32.mrb[0].mxu0
      %v711 = vadd.f32 0.0, %v710
      %v712 = vpop.f32.mrb[0].mxu0
      %713 = vdwg.mxu0
      %v715 = vsel %vm665, %v653, 0
      %v718 = vsel %vm669, %v662, 0
      %720 = vmatprep.subr.bf16.mxu0 0
      %721 = vmatpush1.bf16.msra.mxu0 %v718
      %722 = vmatprep.subr.bf16.mxu0 0
      %723 = vmatpush1.bf16.msra.mxu0 0
      %724 = vmatprep.subr.bf16.mxu0 0
      %725 = vmatpush1.bf16.msra.mxu0 0
      %726 = vmatprep.subr.bf16.mxu0 0
      %727 = vmatpush1.bf16.msra.mxu0 0
      %728 = vmatprep.subr.bf16.mxu0 0
      %729 = vmatpush1.bf16.msra.mxu0 0
      %730 = vmatprep.subr.bf16.mxu0 0
      %731 = vmatpush1.bf16.msra.mxu0 0
      %732 = vmatprep.subr.bf16.mxu0 0
      %733 = vmatpush1.bf16.msra.mxu0 0
      %734 = vmatprep.subr.bf16.mxu0 0
      %735 = vmatpush1.bf16.msra.mxu0 0
      %736 = vmatprep.subr.bf16.mxu0 0
      %737 = vmatpush1.bf16.msra.mxu0 0
      %738 = vmatprep.subr.bf16.mxu0 0
      %739 = vmatpush1.bf16.msra.mxu0 0
      %740 = vmatprep.subr.bf16.mxu0 0
      %741 = vmatpush1.bf16.msra.mxu0 0
      %742 = vmatprep.subr.bf16.mxu0 0
      %743 = vmatpush1.bf16.msra.mxu0 0
      %744 = vmatprep.subr.bf16.mxu0 0
      %745 = vmatpush1.bf16.msra.mxu0 0
      %746 = vmatprep.subr.bf16.mxu0 0
      %747 = vmatpush1.bf16.msra.mxu0 0
      %748 = vmatprep.subr.bf16.mxu0 0
      %749 = vmatpush1.bf16.msra.mxu0 0
      %750 = vmatprep.subr.bf16.mxu0 0
      %751 = vmatpush1.bf16.msra.mxu0 0
      %752 = vmatprep.mubr.bf16.mxu0 0
      %753 = vmatmul.mubr.bf16.gmra.mrb[0].mxu0 %v715
      %v754 = vpop.f32.mrb[0].mxu0
      %v755 = vadd.f32 %v708, %v754
      %v756 = vpop.f32.mrb[0].mxu0
      %v757 = vpop.f32.mrb[0].mxu0
      %v758 = vadd.f32 %v711, %v757
      %v759 = vpop.f32.mrb[0].mxu0
      %760 = vdwg.mxu0
      %s761 = scalar_lea.vmem %s3, 8
      %v762 = vld [vmem:[%s761] sm:$0xf]
      %v764 = vsel %vm665, %v661, 0
      %v767 = vsel %vm669, %v762, 0
      %769 = vmatprep.subr.bf16.mxu0 0
      %770 = vmatpush1.bf16.msra.mxu0 %v767
      %771 = vmatprep.subr.bf16.mxu0 0
      %772 = vmatpush1.bf16.msra.mxu0 0
      %773 = vmatprep.subr.bf16.mxu0 0
      %774 = vmatpush1.bf16.msra.mxu0 0
      %775 = vmatprep.subr.bf16.mxu0 0
      %776 = vmatpush1.bf16.msra.mxu0 0
      %777 = vmatprep.subr.bf16.mxu0 0
      %778 = vmatpush1.bf16.msra.mxu0 0
      %779 = vmatprep.subr.bf16.mxu0 0
      %780 = vmatpush1.bf16.msra.mxu0 0
      %781 = vmatprep.subr.bf16.mxu0 0
      %782 = vmatpush1.bf16.msra.mxu0 0
      %783 = vmatprep.subr.bf16.mxu0 0
      %784 = vmatpush1.bf16.msra.mxu0 0
      %785 = vmatprep.subr.bf16.mxu0 0
      %786 = vmatpush1.bf16.msra.mxu0 0
      %787 = vmatprep.subr.bf16.mxu0 0
      %788 = vmatpush1.bf16.msra.mxu0 0
      %789 = vmatprep.subr.bf16.mxu0 0
      %790 = vmatpush1.bf16.msra.mxu0 0
      %791 = vmatprep.subr.bf16.mxu0 0
      %792 = vmatpush1.bf16.msra.mxu0 0
      %793 = vmatprep.subr.bf16.mxu0 0
      %794 = vmatpush1.bf16.msra.mxu0 0
      %795 = vmatprep.subr.bf16.mxu0 0
      %796 = vmatpush1.bf16.msra.mxu0 0
      %797 = vmatprep.subr.bf16.mxu0 0
      %798 = vmatpush1.bf16.msra.mxu0 0
      %799 = vmatprep.subr.bf16.mxu0 0
      %800 = vmatpush1.bf16.msra.mxu0 0
      %801 = vmatprep.mubr.bf16.mxu0 0
      %802 = vmatmul.mubr.bf16.gmra.mrb[0].mxu0 %v764
      %v803 = vpop.f32.mrb[0].mxu0
      %v804 = vadd.f32 0.0, %v803
      %v805 = vpop.f32.mrb[0].mxu0
      %v806 = vpop.f32.mrb[0].mxu0
      %v807 = vadd.f32 0.0, %v806
      %v808 = vpop.f32.mrb[0].mxu0
      %809 = vdwg.mxu0
      %v810 = vadd.f32 %v755, %v804
      %v811 = vadd.f32 %v758, %v807
      %v812 = vld [vmem:[%s4] sm:$0x1]
      %v814 = vlaneseq
      %v815 = vshrl.u32 %v814, 7
      %v816 = vsub.s32 0, %v815
      %v817 = vrot.slane %v812, %v816
      %v819 = vadd.f32 %v810, %v817
      %v820 = vadd.f32 %v811, %v817
      %v821 = vpack.c.bf16 %v332, %v331
      %v822 = vld [vmem:[%s5] sm:$0x3]
      %v823 = vld [vmem:[%s6] sm:$0x1]
      %v825 = vlaneseq
      %v826 = vshrl.u32 %v825, 7
      %v827 = vsub.s32 0, %v826
      %v828 = vrot.slane %v823, %v827
      %v831 = vsel %vm440, %v821, 0
      %v834 = vsel %vm444, %v822, 0
      %836 = vmatprep.subr.bf16.mxu0 0
      %837 = vmatpush1.bf16.msra.mxu0 %v834
      %838 = vmatprep.subr.bf16.mxu0 0
      %839 = vmatpush1.bf16.msra.mxu0 0
      %840 = vmatprep.subr.bf16.mxu0 0
      %841 = vmatpush1.bf16.msra.mxu0 0
      %842 = vmatprep.subr.bf16.mxu0 0
      %843 = vmatpush1.bf16.msra.mxu0 0
      %844 = vmatprep.subr.bf16.mxu0 0
      %845 = vmatpush1.bf16.msra.mxu0 0
      %846 = vmatprep.subr.bf16.mxu0 0
      %847 = vmatpush1.bf16.msra.mxu0 0
      %848 = vmatprep.subr.bf16.mxu0 0
      %849 = vmatpush1.bf16.msra.mxu0 0
      %850 = vmatprep.subr.bf16.mxu0 0
      %851 = vmatpush1.bf16.msra.mxu0 0
      %852 = vmatprep.subr.bf16.mxu0 0
      %853 = vmatpush1.bf16.msra.mxu0 0
      %854 = vmatprep.subr.bf16.mxu0 0
      %855 = vmatpush1.bf16.msra.mxu0 0
      %856 = vmatprep.subr.bf16.mxu0 0
      %857 = vmatpush1.bf16.msra.mxu0 0
      %858 = vmatprep.subr.bf16.mxu0 0
      %859 = vmatpush1.bf16.msra.mxu0 0
      %860 = vmatprep.subr.bf16.mxu0 0
      %861 = vmatpush1.bf16.msra.mxu0 0
      %862 = vmatprep.subr.bf16.mxu0 0
      %863 = vmatpush1.bf16.msra.mxu0 0
      %864 = vmatprep.subr.bf16.mxu0 0
      %865 = vmatpush1.bf16.msra.mxu0 0
      %866 = vmatprep.subr.bf16.mxu0 0
      %867 = vmatpush1.bf16.msra.mxu0 0
      %868 = vmatprep.mubr.bf16.mxu0 0
      %869 = vmatmul.mubr.bf16.gmra.mrb[0].mxu0 %v831
      %v870 = vpop.f32.mrb[0].mxu0
      %v871 = vadd.f32 %v828, %v870
      %v872 = vpop.f32.mrb[0].mxu0
      %v873 = vpop.f32.mrb[0].mxu0
      %v874 = vadd.f32 %v828, %v873
      %v875 = vpop.f32.mrb[0].mxu0
      %876 = vdwg.mxu0
      %v877 = vadd.f32 %v819, %v871
      %v878 = vadd.f32 %v820, %v874
      %879 = vst.msk [vmem:[%s278] sm:$0xff] %vm665, %v877
      %880 = vst.msk [vmem:[%s278 + $0x8] sm:$0xff] %vm665, %v878
      %p881 = scmp.lt.s32.totalorder %s18, 1
      %s882 = scalar_select %p881, %s18, 1
      %s883 = smul.addr %s882, 2
      %s884 = smul.addr %s883, 8
      %s885 = scalar_lea.vmem %s7, %s884
      // Predicated region
      $region49: #{tpu_custom_call.1} parent=47 // pred_check
        %p886 = pneg %p188
      $region50: #{tpu_custom_call.1} parent=47 // pred_check_branch
        %888 = sbr.rel (%p886) target = $region52
      $region51: #{tpu_custom_call.1} parent=47 // pred_region
        _
      $region52: #{tpu_custom_call.1} parent=47 // pred_fallthru
        _
    $region48: #{tpu_custom_call.1} parent=5 // pred_fallthru
      _
    %p889 = scmp.le.s32.totalorder 2, %s13
    // Predicated region
    $region53: #{tpu_custom_call.1} parent=5 // pred_check
      %p890 = pneg %p889
    $region54: #{tpu_custom_call.1} parent=5 // pred_check_branch
      %892 = sbr.rel (%p890) target = $region56
    $region55: #{tpu_custom_call.1} parent=5 // pred_region
      %s893 = ssub.s32 %s13, 2
      // Predicated region
      $region57: #{tpu_custom_call.1} parent=55 // pred_check
        %p894 = pneg %p194
      $region58: #{tpu_custom_call.1} parent=55 // pred_check_branch
        %896 = sbr.rel (%p894) target = $region60
      $region59: #{tpu_custom_call.1} parent=55 // pred_region
        %p897 = scmp.lt.s32.totalorder %s19, 1
        %s898 = scalar_select %p897, %s19, 1
        %s899 = smul.addr %s898, 2
        %s900 = smul.addr %s899, 8
        %s901 = scalar_lea.vmem %s7, %s900
      $region60: #{tpu_custom_call.1} parent=55 // pred_fallthru
        _
    $region56: #{tpu_custom_call.1} parent=5 // pred_fallthru
      _
  $region6: #{tpu_custom_call.1} parent=0 // loop_footer
    %s17 = sadd.s32 1, %s13
  $region7: #{tpu_custom_call.1} parent=0 // loop_footer_branch
    %12 = sbr.rel target = $region3
  $region8: #{tpu_custom_call.1} parent=0 // loop_exit
    _

</llo_original>
